<compile_context>
chip_gen: v6e
topology: v6e:2x2x1
jax: 0.10.0
libtpu: 0.0.40
codegen_flags: <defaults>
</compile_context>

<pallas_src>
import functools

import jax
import jax.numpy as jnp
from jax.experimental import pallas as pl
from jax.experimental.pallas import tpu as pltpu

OUT_DIM = 128
FEAT_C, FEAT_H, FEAT_W = 1280, 7, 7          # EfficientNet-b0 reduction_6
K_DIM = FEAT_C * FEAT_H * FEAT_W             # 62720
TK = 12544                                   # 128 * 98 -> lane-aligned K tile
N_SPLITS = K_DIM // TK                       # 5 independent K chunks


def _partial_matmul_kernel(x_ref, w_ref, o_ref):
    """Grid step j: partial_j = x[:, j*TK:(j+1)*TK] @ W_t[j*TK:(j+1)*TK, :].

    x_ref: (B, TK) bf16, w_ref: (TK, 128) bf16, o_ref: (1, B, 128) f32.
    bf16 inputs, f32 accumulation on the MXU.
    """
    o_ref[0] = jnp.dot(
        x_ref[...], w_ref[...], preferred_element_type=jnp.float32
    )


@jax.jit
def image_embedding_head(features_nchw, w_t, b):
    """features_nchw: [B, 1280, 7, 7] f32 -> embeddings [B, 128] f32.

    w_t is the transposed Linear weight [62720, 128]; b is [128].
    Computes out = flatten(features) @ w_t + b (== torch x @ W.T + b).
    """
    bsz = features_nchw.shape[0]
    # Flatten exactly like torch: reshape((-1, 7*7*1280)) on an NCHW tensor.
    x = features_nchw.reshape(bsz, K_DIM).astype(jnp.bfloat16)
    w = w_t.astype(jnp.bfloat16)   # weight-streaming is the roofline: halve it

    cost = pl.CostEstimate(
        flops=2 * bsz * K_DIM * OUT_DIM,
        transcendentals=0,
        bytes_accessed=(K_DIM * OUT_DIM * 2          # bf16 weights
                        + bsz * K_DIM * 2            # bf16 activations
                        + N_SPLITS * bsz * OUT_DIM * 4),  # f32 partials
    )

    partials = pl.pallas_call(
        _partial_matmul_kernel,
        out_shape=jax.ShapeDtypeStruct((N_SPLITS, bsz, OUT_DIM), jnp.float32),
        grid=(N_SPLITS,),
        in_specs=[
            pl.BlockSpec((bsz, TK), lambda j: (0, j)),       # x K-chunk
            pl.BlockSpec((TK, OUT_DIM), lambda j: (j, 0)),   # W_t K-chunk
        ],
        out_specs=pl.BlockSpec((1, bsz, OUT_DIM), lambda j: (j, 0, 0)),
        compiler_params=pltpu.CompilerParams(
            # Independent K-splits: megacore shards them across both TCs
            # on v7x; a plain serial loop on single-TC v5e/v6e.
            dimension_semantics=("parallel",),
        ),
        cost_estimate=cost,
    )(x, w)

    # Tiny epilogue in XLA: sum the 5 partials and add the bias (f32).
    return partials.sum(axis=0) + b.reshape(1, OUT_DIM)


if __name__ == "__main__":
    key = jax.random.PRNGKey(0)
    k_x, k_w, k_b = jax.random.split(key, 3)

    batch = 2
    # reduction_6 feature map produced by the (untranslated) backbone.
    features = jax.random.normal(
        k_x, (batch, FEAT_C, FEAT_H, FEAT_W), dtype=jnp.float32
    )

    # Deterministic synthetic parameters for nn.Linear(62720, 128):
    # torch weight is [128, 62720]; we store its transpose [62720, 128].
    w_t = jax.random.normal(k_w, (K_DIM, OUT_DIM), dtype=jnp.float32) * 0.01
    bias = jax.random.normal(k_b, (OUT_DIM,), dtype=jnp.float32) * 0.01

    out = jax.block_until_ready(image_embedding_head(features, w_t, bias))

    # Reference in plain JAX with the same bf16 weight/activation quantization
    # and f32 accumulation.
    x_q = features.reshape(batch, K_DIM).astype(jnp.bfloat16).astype(jnp.float32)
    w_q = w_t.astype(jnp.bfloat16).astype(jnp.float32)
    ref = jnp.dot(x_q, w_q, precision=jax.lax.Precision.HIGHEST) + bias

    assert out.shape == (batch, OUT_DIM)
    assert jnp.allclose(out, ref, atol=1e-2, rtol=1e-2), float(
        jnp.max(jnp.abs(out - ref))
    )

    print("KERNEL_OK")
</pallas_src>

<mosaic_0001>
module attributes {stable_mosaic.version = 11 : i64} {
  func.func @_partial_matmul_kernel(%arg0: i32, %arg1: memref<2x12544xbf16, #tpu.memory_space<vmem>>, %arg2: memref<12544x128xbf16, #tpu.memory_space<vmem>>, %arg3: memref<1x2x128xf32, #tpu.memory_space<vmem>>) attributes {dimension_semantics = [#tpu.dimension_semantics<parallel>], iteration_bounds = array<i64: 5>, scalar_prefetch = 0 : i64, scratch_operands = 0 : i64, tpu.core_type = #tpu.core_type<tc>, window_params = [{transform_indices = @transform_0, window_bounds = array<i64: 2, 12544>}, {transform_indices = @transform_1, window_bounds = array<i64: 12544, 128>}, {transform_indices = @transform_2, window_bounds = array<i64: 1, 2, 128>}]} {
    %c0 = arith.constant 0 : index
    %c0_0 = arith.constant 0 : index
    %0 = vector.load %arg1[%c0, %c0_0] : memref<2x12544xbf16, #tpu.memory_space<vmem>>, vector<2x12544xbf16>
    %c0_1 = arith.constant 0 : index
    %c0_2 = arith.constant 0 : index
    %1 = vector.load %arg2[%c0_1, %c0_2] : memref<12544x128xbf16, #tpu.memory_space<vmem>>, vector<12544x128xbf16>
    %cst = arith.constant dense<0.000000e+00> : vector<2x128xf32>
    %2 = tpu.matmul %0, %1, %cst {dimension_numbers = #tpu.dot_dimension_numbers<[1], [0], [0], [1], [0, 0, 1, 1], [], []>} : vector<2x12544xbf16>, vector<12544x128xbf16>, vector<2x128xf32> -> vector<2x128xf32>
    %c0_3 = arith.constant 0 : index
    %c0_4 = arith.constant 0 : index
    %c0_5 = arith.constant 0 : index
    %3 = vector.load %arg3[%c0_3, %c0_4, %c0_5] : memref<1x2x128xf32, #tpu.memory_space<vmem>>, vector<1x2x128xf32>
    %4 = vector.shape_cast %3 : vector<1x2x128xf32> to vector<2x128xf32>
    %5 = vector.shape_cast %2 : vector<2x128xf32> to vector<1x2x128xf32>
    tpu.vector_store %arg3[%c0_3, %c0_4, %c0_5], %5 {strides = array<i32>} : memref<1x2x128xf32, #tpu.memory_space<vmem>>, vector<1x2x128xf32>,
    return
  }
  func.func @transform_0(%arg0: i32) -> (i32, i32) {
    %c0_i32 = arith.constant 0 : i32
    %c0_i32_0 = arith.constant 0 : i32
    return %c0_i32, %arg0 : i32, i32
  }
  func.func @transform_1(%arg0: i32) -> (i32, i32) {
    %c0_i32 = arith.constant 0 : i32
    %c0_i32_0 = arith.constant 0 : i32
    return %arg0, %c0_i32 : i32, i32
  }
  func.func @transform_2(%arg0: i32) -> (i32, i32, i32) {
    %c0_i32 = arith.constant 0 : i32
    %c0_i32_0 = arith.constant 0 : i32
    %c0_i32_1 = arith.constant 0 : i32
    return %arg0, %c0_i32, %c0_i32_0 : i32, i32, i32
  }
}

</mosaic_0001>

<llo_original>
// kernel: image_embedding_head.1
$region0: #{image_embedding_head.1}
  #allocation0 [shape = 'u32[]', space=smem, size = 0x4, offset = 0x4, fixed_abs, tag = 'smem constant byte address 0x4 - core index']
  #allocation1 [shape = 'u32[144,128]{1,0:T(1,128)}', space=vmem, size = 0x12000, scoped, tag = 'internal scratch']
  %s0 = inlined_call_operand.vmem [shape: bf16[2,62720], index: 0, kind: input, shape index: {}]
  %s1 = inlined_call_operand.vmem [shape: bf16[62720,128], index: 1, kind: input, shape index: {}]
  %s2 = inlined_call_operand.vmem [shape: f32[5,2,128], index: 2, kind: output, shape index: {}]
  %s3 = sld [smem:[#allocation0]]
  $region41: #{image_embedding_head.1} parent=0
    _
  %s5 = ssub.s32 1, %s3
  %s6 = scalar_select 0, %s5, %s3
  loop: start=0, step=1, limit=7
  $region2: #{image_embedding_head.1} parent=0 // loop_pre_header
    _
  $region3: #{image_embedding_head.1} parent=0 // loop_header
    %s8 = sphi 0, %s12
    %p9 = scmp.ge.s32.totalorder %s8, 7
    %s18 = sphi 0, %s20
    %s21 = sphi 0, %s18
    %s22 = sphi 0, %s21
    %s38 = sphi 0, %s22
    %s44 = sphi 0, %s46
    %s47 = sphi 0, %s44
    %s48 = sphi 0, %s47
    %s64 = sphi 0, %s48
    %s70 = sphi 0, %s72
    %s73 = sphi 0, %s70
    %s74 = sphi 0, %s73
    %s90 = sphi 0, %s74
  $region4: #{image_embedding_head.1} parent=0 // loop_header_branch
    %11 = sbr.rel (%p9) target = $region8
  $region5: #{image_embedding_head.1} parent=0 // loop_body
    %s13 = ssub.s32 %s8, 1
    %s14 = ssub.s32 %s8, 2
    %s15 = sadd.s32 %s8, 1
    %s16 = ssub.s32 %s8, %s15
    %p17 = scmp.eq.s32.totalorder %s16, 0
    %s19 = sadd.s32 %s18, 1
    %s20 = scalar_select %p17, %s18, %s19
    %p23 = pneg %p17
    %p24 = scmp.eq.s32.totalorder %s8, 4
    %p25 = por %p23, %p24
    %p26 = scmp.ne.s32.totalorder %s18, %s21
    %p27 = scmp.eq.s32.totalorder %s8, 0
    %p28 = por %p26, %p27
    %p29 = scmp.ne.s32.totalorder %s18, %s21
    %p30 = scmp.eq.s32.totalorder %s13, 4
    %p31 = por %p29, %p30
    %p32 = scmp.ne.s32.totalorder %s21, %s22
    %p33 = scmp.eq.s32.totalorder %s13, 0
    %p34 = por %p32, %p33
    %p35 = scmp.ne.s32.totalorder %s21, %s22
    %p36 = scmp.eq.s32.totalorder %s14, 4
    %p37 = por %p35, %p36
    %p39 = scmp.ne.s32.totalorder %s22, %s38
    %p40 = scmp.eq.s32.totalorder %s14, 0
    %p41 = por %p39, %p40
    %s42 = ssub.s32 %s8, %s15
    %p43 = scmp.eq.s32.totalorder %s42, 0
    %s45 = sadd.s32 %s44, 1
    %s46 = scalar_select %p43, %s44, %s45
    %p49 = pneg %p43
    %p50 = scmp.eq.s32.totalorder %s8, 4
    %p51 = por %p49, %p50
    %p52 = scmp.ne.s32.totalorder %s44, %s47
    %p53 = scmp.eq.s32.totalorder %s8, 0
    %p54 = por %p52, %p53
    %p55 = scmp.ne.s32.totalorder %s44, %s47
    %p56 = scmp.eq.s32.totalorder %s13, 4
    %p57 = por %p55, %p56
    %p58 = scmp.ne.s32.totalorder %s47, %s48
    %p59 = scmp.eq.s32.totalorder %s13, 0
    %p60 = por %p58, %p59
    %p61 = scmp.ne.s32.totalorder %s47, %s48
    %p62 = scmp.eq.s32.totalorder %s14, 4
    %p63 = por %p61, %p62
    %p65 = scmp.ne.s32.totalorder %s48, %s64
    %p66 = scmp.eq.s32.totalorder %s14, 0
    %p67 = por %p65, %p66
    %s68 = ssub.s32 %s8, %s15
    %p69 = scmp.eq.s32.totalorder %s68, 0
    %s71 = sadd.s32 %s70, 1
    %s72 = scalar_select %p69, %s70, %s71
    %p75 = pneg %p69
    %p76 = scmp.eq.s32.totalorder %s8, 4
    %p77 = por %p75, %p76
    %p78 = scmp.ne.s32.totalorder %s70, %s73
    %p79 = scmp.eq.s32.totalorder %s8, 0
    %p80 = por %p78, %p79
    %p81 = scmp.ne.s32.totalorder %s70, %s73
    %p82 = scmp.eq.s32.totalorder %s13, 4
    %p83 = por %p81, %p82
    %p84 = scmp.ne.s32.totalorder %s73, %s74
    %p85 = scmp.eq.s32.totalorder %s13, 0
    %p86 = por %p84, %p85
    %p87 = scmp.ne.s32.totalorder %s73, %s74
    %p88 = scmp.eq.s32.totalorder %s14, 4
    %p89 = por %p87, %p88
    %p91 = scmp.ne.s32.totalorder %s74, %s90
    %p92 = scmp.eq.s32.totalorder %s14, 0
    %p93 = por %p91, %p92
    %p94 = scmp.le.s32.totalorder 1, %s8
    %p95 = scmp.lt.s32.totalorder %s8, 6
    %p96 = pnand %p94, %p95
    %p97 = pneg %p96
    // Predicated region
    $region9: #{image_embedding_head.1} parent=5 // pred_check
      _
    $region10: #{image_embedding_head.1} parent=5 // pred_check_branch
      %99 = sbr.rel (%p96) target = $region12
    $region11: #{image_embedding_head.1} parent=5 // pred_region
      %s100 = ssub.s32 %s8, 1
    $region12: #{image_embedding_head.1} parent=5 // pred_fallthru
      _
    %p101 = scmp.lt.s32.totalorder %s8, 5
    // Predicated region
    $region13: #{image_embedding_head.1} parent=5 // pred_check
      %p102 = pneg %p101
    $region14: #{image_embedding_head.1} parent=5 // pred_check_branch
      %104 = sbr.rel (%p102) target = $region16
    $region15: #{image_embedding_head.1} parent=5 // pred_region
      // Predicated region
      $region17: #{image_embedding_head.1} parent=15 // pred_check
        %p105 = pneg %p28
      $region18: #{image_embedding_head.1} parent=15 // pred_check_branch
        %107 = sbr.rel (%p105) target = $region20
      $region19: #{image_embedding_head.1} parent=15 // pred_region
        %s108 = smul.u32 98, %s8
        %p109 = scmp.lt.s32.totalorder %s108, 489
        %s110 = scalar_select %p109, %s108, 489
        %s111 = scalar_lea.vmem %s0, %s110
        %s112 = smul.u32 98, %s8
      $region20: #{image_embedding_head.1} parent=15 // pred_fallthru
        _
      // Predicated region
      $region21: #{image_embedding_head.1} parent=15 // pred_check
        %p113 = pneg %p54
      $region22: #{image_embedding_head.1} parent=15 // pred_check_branch
        %115 = sbr.rel (%p113) target = $region24
      $region23: #{image_embedding_head.1} parent=15 // pred_region
        %s116 = smul.u32 1568, %s8
        %p117 = scmp.lt.s32.totalorder %s116, 7839
        %s118 = scalar_select %p117, %s116, 7839
        %s119 = smul.addr %s118, 4
        %s120 = scalar_lea.vmem %s1, %s119
        %s121 = smul.u32 1568, %s8
      $region24: #{image_embedding_head.1} parent=15 // pred_fallthru
        _
    $region16: #{image_embedding_head.1} parent=5 // pred_fallthru
      _
    %p122 = scmp.le.s32.totalorder 1, %s8
    %p123 = scmp.lt.s32.totalorder %s8, 6
    %p124 = pnand %p122, %p123
    %p125 = pneg %p124
    // Predicated region
    $region25: #{image_embedding_head.1} parent=5 // pred_check
      _
    $region26: #{image_embedding_head.1} parent=5 // pred_check_branch
      %127 = sbr.rel (%p124) target = $region28
    $region27: #{image_embedding_head.1} parent=5 // pred_region
      %s128 = ssub.s32 %s8, 1
      %s129 = smul.u32 98, %s13
      %p130 = scmp.lt.s32.totalorder %s129, 489
      %s131 = scalar_select %p130, %s129, 489
      %s132 = scalar_lea.vmem %s0, %s131
      %p133 = pneg %p34
      %p134 = pneg %p31
      %s135 = smul.u32 1568, %s13
      %p136 = scmp.lt.s32.totalorder %s135, 7839
      %s137 = scalar_select %p136, %s135, 7839
      %s138 = smul.addr %s137, 4
      %s139 = scalar_lea.vmem %s1, %s138
      %p140 = pneg %p60
      %p141 = pneg %p57
      %p142 = pneg %p86
      %p143 = pneg %p83
      %p144 = scmp.lt.s32.totalorder %s13, 4
      %s145 = scalar_select %p144, %s13, 4
      %s146 = smul.addr %s145, 2
      %s147 = scalar_lea.vmem %s2, %s146
      %s148 = smul.u32 98, %s13
      %p149 = scmp.lt.s32.totalorder %s148, 489
      %s150 = scalar_select %p149, %s148, 489
      %s151 = scalar_lea.vmem %s0, %s150
      %s152 = smul.u32 98, %s13
      %s153 = smul.u32 1568, %s13
      %p154 = scmp.lt.s32.totalorder %s153, 7839
      %s155 = scalar_select %p154, %s153, 7839
      %s156 = smul.addr %s155, 4
      %s157 = scalar_lea.vmem %s1, %s156
      %s158 = smul.u32 1568, %s13
      %p159 = scmp.lt.s32.totalorder %s13, 4
      %s160 = scalar_select %p159, %s13, 4
      %s161 = smul.addr %s160, 2
      %s162 = scalar_lea.vmem %s2, %s161
      %v164 = vld [vmem:[%s151] sm:$0xff]
      %v165 = vld [vmem:[%s151 + $0x8] sm:$0xff]
      %v166 = vld [vmem:[%s151 + $0x10] sm:$0xff]
      %v167 = vld [vmem:[%s151 + $0x18] sm:$0xff]
      %v168 = vld [vmem:[%s151 + $0x20] sm:$0xff]
      %v169 = vld [vmem:[%s151 + $0x28] sm:$0xff]
      %v170 = vld [vmem:[%s151 + $0x30] sm:$0xff]
      %v171 = vld [vmem:[%s151 + $0x38] sm:$0xff]
      %v172 = vld [vmem:[%s151 + $0x40] sm:$0xff]
      %v173 = vld [vmem:[%s151 + $0x48] sm:$0xff]
      %v174 = vld [vmem:[%s151 + $0x50] sm:$0xff]
      %v175 = vld [vmem:[%s151 + $0x58] sm:$0xff]
      %v176 = vld [vmem:[%s151 + $0x60] sm:$0x3]
      %v177 = vld [vmem:[%s157] sm:$0xf]
      %v178 = vld [vmem:[%s157 + $0x4] sm:$0xf]
      %v179 = vld [vmem:[%s157 + $0x8] sm:$0xf]
      %v180 = vld [vmem:[%s157 + $0xc] sm:$0xf]
      %v181 = vld [vmem:[%s157 + $0x10] sm:$0xf]
      %v182 = vld [vmem:[%s157 + $0x14] sm:$0xf]
      %v183 = vld [vmem:[%s157 + $0x18] sm:$0xf]
      %v184 = vld [vmem:[%s157 + $0x1c] sm:$0xf]
      %v185 = vld [vmem:[%s157 + $0x20] sm:$0xf]
      %v186 = vld [vmem:[%s157 + $0x24] sm:$0xf]
      %v187 = vld [vmem:[%s157 + $0x28] sm:$0xf]
      %v188 = vld [vmem:[%s157 + $0x2c] sm:$0xf]
      %v189 = vld [vmem:[%s157 + $0x30] sm:$0xf]
      %v190 = vld [vmem:[%s157 + $0x34] sm:$0xf]
      %v191 = vld [vmem:[%s157 + $0x38] sm:$0xf]
      %v192 = vld [vmem:[%s157 + $0x3c] sm:$0xf]
      %v193 = vld [vmem:[%s157 + $0x40] sm:$0xf]
      %v194 = vld [vmem:[%s157 + $0x44] sm:$0xf]
      %v195 = vld [vmem:[%s157 + $0x48] sm:$0xf]
      %v196 = vld [vmem:[%s157 + $0x4c] sm:$0xf]
      %v197 = vld [vmem:[%s157 + $0x50] sm:$0xf]
      %v198 = vld [vmem:[%s157 + $0x54] sm:$0xf]
      %v199 = vld [vmem:[%s157 + $0x58] sm:$0xf]
      %v200 = vld [vmem:[%s157 + $0x5c] sm:$0xf]
      %v201 = vld [vmem:[%s157 + $0x60] sm:$0xf]
      %v202 = vld [vmem:[%s157 + $0x64] sm:$0xf]
      %v203 = vld [vmem:[%s157 + $0x68] sm:$0xf]
      %v204 = vld [vmem:[%s157 + $0x6c] sm:$0xf]
      %v205 = vld [vmem:[%s157 + $0x70] sm:$0xf]
      %v206 = vld [vmem:[%s157 + $0x74] sm:$0xf]
      %v207 = vld [vmem:[%s157 + $0x78] sm:$0xf]
      %v208 = vld [vmem:[%s157 + $0x7c] sm:$0xf]
      %v209 = vld [vmem:[%s157 + $0x80] sm:$0xf]
      %v210 = vld [vmem:[%s157 + $0x84] sm:$0xf]
      %v211 = vld [vmem:[%s157 + $0x88] sm:$0xf]
      %v212 = vld [vmem:[%s157 + $0x8c] sm:$0xf]
      %v213 = vld [vmem:[%s157 + $0x90] sm:$0xf]
      %v214 = vld [vmem:[%s157 + $0x94] sm:$0xf]
      %v215 = vld [vmem:[%s157 + $0x98] sm:$0xf]
      %v216 = vld [vmem:[%s157 + $0x9c] sm:$0xf]
      %v217 = vld [vmem:[%s157 + $0xa0] sm:$0xf]
      %v218 = vld [vmem:[%s157 + $0xa4] sm:$0xf]
      %v219 = vld [vmem:[%s157 + $0xa8] sm:$0xf]
      %v220 = vld [vmem:[%s157 + $0xac] sm:$0xf]
      %v221 = vld [vmem:[%s157 + $0xb0] sm:$0xf]
      %v222 = vld [vmem:[%s157 + $0xb4] sm:$0xf]
      %v223 = vld [vmem:[%s157 + $0xb8] sm:$0xf]
      %v224 = vld [vmem:[%s157 + $0xbc] sm:$0xf]
      %v225 = vld [vmem:[%s157 + $0xc0] sm:$0xf]
      %v226 = vld [vmem:[%s157 + $0xc4] sm:$0xf]
      %v227 = vld [vmem:[%s157 + $0xc8] sm:$0xf]
      %v228 = vld [vmem:[%s157 + $0xcc] sm:$0xf]
      %v229 = vld [vmem:[%s157 + $0xd0] sm:$0xf]
      %v230 = vld [vmem:[%s157 + $0xd4] sm:$0xf]
      %v231 = vld [vmem:[%s157 + $0xd8] sm:$0xf]
      %v232 = vld [vmem:[%s157 + $0xdc] sm:$0xf]
      %v233 = vld [vmem:[%s157 + $0xe0] sm:$0xf]
      %v234 = vld [vmem:[%s157 + $0xe4] sm:$0xf]
      %v235 = vld [vmem:[%s157 + $0xe8] sm:$0xf]
      %v236 = vld [vmem:[%s157 + $0xec] sm:$0xf]
      %v237 = vld [vmem:[%s157 + $0xf0] sm:$0xf]
      %v238 = vld [vmem:[%s157 + $0xf4] sm:$0xf]
      %v239 = vld [vmem:[%s157 + $0xf8] sm:$0xf]
      %v240 = vld [vmem:[%s157 + $0xfc] sm:$0xf]
      %v241 = vld [vmem:[%s157 + $0x100] sm:$0xf]
      %v242 = vld [vmem:[%s157 + $0x104] sm:$0xf]
      %v243 = vld [vmem:[%s157 + $0x108] sm:$0xf]
      %v244 = vld [vmem:[%s157 + $0x10c] sm:$0xf]
      %v245 = vld [vmem:[%s157 + $0x110] sm:$0xf]
      %v246 = vld [vmem:[%s157 + $0x114] sm:$0xf]
      %v247 = vld [vmem:[%s157 + $0x118] sm:$0xf]
      %v248 = vld [vmem:[%s157 + $0x11c] sm:$0xf]
      %v249 = vld [vmem:[%s157 + $0x120] sm:$0xf]
      %v250 = vld [vmem:[%s157 + $0x124] sm:$0xf]
      %v251 = vld [vmem:[%s157 + $0x128] sm:$0xf]
      %v252 = vld [vmem:[%s157 + $0x12c] sm:$0xf]
      %v253 = vld [vmem:[%s157 + $0x130] sm:$0xf]
      %v254 = vld [vmem:[%s157 + $0x134] sm:$0xf]
      %v255 = vld [vmem:[%s157 + $0x138] sm:$0xf]
      %v256 = vld [vmem:[%s157 + $0x13c] sm:$0xf]
      %v257 = vld [vmem:[%s157 + $0x140] sm:$0xf]
      %v258 = vld [vmem:[%s157 + $0x144] sm:$0xf]
      %v259 = vld [vmem:[%s157 + $0x148] sm:$0xf]
      %v260 = vld [vmem:[%s157 + $0x14c] sm:$0xf]
      %v261 = vld [vmem:[%s157 + $0x150] sm:$0xf]
      %v262 = vld [vmem:[%s157 + $0x154] sm:$0xf]
      %v263 = vld [vmem:[%s157 + $0x158] sm:$0xf]
      %v264 = vld [vmem:[%s157 + $0x15c] sm:$0xf]
      %v265 = vld [vmem:[%s157 + $0x160] sm:$0xf]
      %v266 = vld [vmem:[%s157 + $0x164] sm:$0xf]
      %v267 = vld [vmem:[%s157 + $0x168] sm:$0xf]
      %v268 = vld [vmem:[%s157 + $0x16c] sm:$0xf]
      %v269 = vld [vmem:[%s157 + $0x170] sm:$0xf]
      %v270 = vld [vmem:[%s157 + $0x174] sm:$0xf]
      %v271 = vld [vmem:[%s157 + $0x178] sm:$0xf]
      %v272 = vld [vmem:[%s157 + $0x17c] sm:$0xf]
      %v273 = vld [vmem:[%s157 + $0x180] sm:$0xf]
      %v274 = vld [vmem:[%s157 + $0x184] sm:$0xf]
      %v275 = vld [vmem:[%s157 + $0x188] sm:$0xf]
      %v276 = vld [vmem:[%s157 + $0x18c] sm:$0xf]
      %v277 = vld [vmem:[%s157 + $0x190] sm:$0xf]
      %v278 = vld [vmem:[%s157 + $0x194] sm:$0xf]
      %v279 = vld [vmem:[%s157 + $0x198] sm:$0xf]
      %v280 = vld [vmem:[%s157 + $0x19c] sm:$0xf]
      %v281 = vld [vmem:[%s157 + $0x1a0] sm:$0xf]
      %v282 = vld [vmem:[%s157 + $0x1a4] sm:$0xf]
      %v283 = vld [vmem:[%s157 + $0x1a8] sm:$0xf]
      %v284 = vld [vmem:[%s157 + $0x1ac] sm:$0xf]
      %v285 = vld [vmem:[%s157 + $0x1b0] sm:$0xf]
      %v286 = vld [vmem:[%s157 + $0x1b4] sm:$0xf]
      %v287 = vld [vmem:[%s157 + $0x1b8] sm:$0xf]
      %v288 = vld [vmem:[%s157 + $0x1bc] sm:$0xf]
      %v289 = vld [vmem:[%s157 + $0x1c0] sm:$0xf]
      %v290 = vld [vmem:[%s157 + $0x1c4] sm:$0xf]
      %v291 = vld [vmem:[%s157 + $0x1c8] sm:$0xf]
      %v292 = vld [vmem:[%s157 + $0x1cc] sm:$0xf]
      %v293 = vld [vmem:[%s157 + $0x1d0] sm:$0xf]
      %v294 = vld [vmem:[%s157 + $0x1d4] sm:$0xf]
      %v295 = vld [vmem:[%s157 + $0x1d8] sm:$0xf]
      %v296 = vld [vmem:[%s157 + $0x1dc] sm:$0xf]
      %v297 = vld [vmem:[%s157 + $0x1e0] sm:$0xf]
      %v298 = vld [vmem:[%s157 + $0x1e4] sm:$0xf]
      %v299 = vld [vmem:[%s157 + $0x1e8] sm:$0xf]
      %v300 = vld [vmem:[%s157 + $0x1ec] sm:$0xf]
      %v301 = vld [vmem:[%s157 + $0x1f0] sm:$0xf]
      %v302 = vld [vmem:[%s157 + $0x1f4] sm:$0xf]
      %v303 = vld [vmem:[%s157 + $0x1f8] sm:$0xf]
      %v304 = vld [vmem:[%s157 + $0x1fc] sm:$0xf]
      %v305 = vld [vmem:[%s157 + $0x200] sm:$0xf]
      %v306 = vld [vmem:[%s157 + $0x204] sm:$0xf]
      %v307 = vld [vmem:[%s157 + $0x208] sm:$0xf]
      %v308 = vld [vmem:[%s157 + $0x20c] sm:$0xf]
      %v309 = vld [vmem:[%s157 + $0x210] sm:$0xf]
      %v310 = vld [vmem:[%s157 + $0x214] sm:$0xf]
      %v311 = vld [vmem:[%s157 + $0x218] sm:$0xf]
      %v312 = vld [vmem:[%s157 + $0x21c] sm:$0xf]
      %v313 = vld [vmem:[%s157 + $0x220] sm:$0xf]
      %v314 = vld [vmem:[%s157 + $0x224] sm:$0xf]
      %v315 = vld [vmem:[%s157 + $0x228] sm:$0xf]
      %v316 = vld [vmem:[%s157 + $0x22c] sm:$0xf]
      %v317 = vld [vmem:[%s157 + $0x230] sm:$0xf]
      %v318 = vld [vmem:[%s157 + $0x234] sm:$0xf]
      %v319 = vld [vmem:[%s157 + $0x238] sm:$0xf]
      %v320 = vld [vmem:[%s157 + $0x23c] sm:$0xf]
      %v321 = vld [vmem:[%s157 + $0x240] sm:$0xf]
      %v322 = vld [vmem:[%s157 + $0x244] sm:$0xf]
      %v323 = vld [vmem:[%s157 + $0x248] sm:$0xf]
      %v324 = vld [vmem:[%s157 + $0x24c] sm:$0xf]
      %v325 = vld [vmem:[%s157 + $0x250] sm:$0xf]
      %v326 = vld [vmem:[%s157 + $0x254] sm:$0xf]
      %v327 = vld [vmem:[%s157 + $0x258] sm:$0xf]
      %v328 = vld [vmem:[%s157 + $0x25c] sm:$0xf]
      %v329 = vld [vmem:[%s157 + $0x260] sm:$0xf]
      %v330 = vld [vmem:[%s157 + $0x264] sm:$0xf]
      %v331 = vld [vmem:[%s157 + $0x268] sm:$0xf]
      %v332 = vld [vmem:[%s157 + $0x26c] sm:$0xf]
      %v333 = vld [vmem:[%s157 + $0x270] sm:$0xf]
      %v334 = vld [vmem:[%s157 + $0x274] sm:$0xf]
      %v335 = vld [vmem:[%s157 + $0x278] sm:$0xf]
      %v336 = vld [vmem:[%s157 + $0x27c] sm:$0xf]
      %v337 = vld [vmem:[%s157 + $0x280] sm:$0xf]
      %v338 = vld [vmem:[%s157 + $0x284] sm:$0xf]
      %v339 = vld [vmem:[%s157 + $0x288] sm:$0xf]
      %v340 = vld [vmem:[%s157 + $0x28c] sm:$0xf]
      %v341 = vld [vmem:[%s157 + $0x290] sm:$0xf]
      %v342 = vld [vmem:[%s157 + $0x294] sm:$0xf]
      %v343 = vld [vmem:[%s157 + $0x298] sm:$0xf]
      %v344 = vld [vmem:[%s157 + $0x29c] sm:$0xf]
      %v345 = vld [vmem:[%s157 + $0x2a0] sm:$0xf]
      %v346 = vld [vmem:[%s157 + $0x2a4] sm:$0xf]
      %v347 = vld [vmem:[%s157 + $0x2a8] sm:$0xf]
      %v348 = vld [vmem:[%s157 + $0x2ac] sm:$0xf]
      %v349 = vld [vmem:[%s157 + $0x2b0] sm:$0xf]
      %v350 = vld [vmem:[%s157 + $0x2b4] sm:$0xf]
      %v351 = vld [vmem:[%s157 + $0x2b8] sm:$0xf]
      %v352 = vld [vmem:[%s157 + $0x2bc] sm:$0xf]
      %v353 = vld [vmem:[%s157 + $0x2c0] sm:$0xf]
      %v354 = vld [vmem:[%s157 + $0x2c4] sm:$0xf]
      %v355 = vld [vmem:[%s157 + $0x2c8] sm:$0xf]
      %v356 = vld [vmem:[%s157 + $0x2cc] sm:$0xf]
      %v357 = vld [vmem:[%s157 + $0x2d0] sm:$0xf]
      %v358 = vld [vmem:[%s157 + $0x2d4] sm:$0xf]
      %v359 = vld [vmem:[%s157 + $0x2d8] sm:$0xf]
      %v360 = vld [vmem:[%s157 + $0x2dc] sm:$0xf]
      %v361 = vld [vmem:[%s157 + $0x2e0] sm:$0xf]
      %v362 = vld [vmem:[%s157 + $0x2e4] sm:$0xf]
      %v363 = vld [vmem:[%s157 + $0x2e8] sm:$0xf]
      %v364 = vld [vmem:[%s157 + $0x2ec] sm:$0xf]
      %v365 = vld [vmem:[%s157 + $0x2f0] sm:$0xf]
      %v366 = vld [vmem:[%s157 + $0x2f4] sm:$0xf]
      %v367 = vld [vmem:[%s157 + $0x2f8] sm:$0xf]
      %v368 = vld [vmem:[%s157 + $0x2fc] sm:$0xf]
      %v369 = vld [vmem:[%s157 + $0x300] sm:$0xf]
      %v370 = vld [vmem:[%s157 + $0x304] sm:$0xf]
      %v371 = vld [vmem:[%s157 + $0x308] sm:$0xf]
      %v372 = vld [vmem:[%s157 + $0x30c] sm:$0xf]
      %v373 = vld [vmem:[%s157 + $0x310] sm:$0xf]
      %v374 = vld [vmem:[%s157 + $0x314] sm:$0xf]
      %v375 = vld [vmem:[%s157 + $0x318] sm:$0xf]
      %v376 = vld [vmem:[%s157 + $0x31c] sm:$0xf]
      %v377 = vld [vmem:[%s157 + $0x320] sm:$0xf]
      %v378 = vld [vmem:[%s157 + $0x324] sm:$0xf]
      %v379 = vld [vmem:[%s157 + $0x328] sm:$0xf]
      %v380 = vld [vmem:[%s157 + $0x32c] sm:$0xf]
      %v381 = vld [vmem:[%s157 + $0x330] sm:$0xf]
      %v382 = vld [vmem:[%s157 + $0x334] sm:$0xf]
      %v383 = vld [vmem:[%s157 + $0x338] sm:$0xf]
      %v384 = vld [vmem:[%s157 + $0x33c] sm:$0xf]
      %v385 = vld [vmem:[%s157 + $0x340] sm:$0xf]
      %v386 = vld [vmem:[%s157 + $0x344] sm:$0xf]
      %v387 = vld [vmem:[%s157 + $0x348] sm:$0xf]
      %v388 = vld [vmem:[%s157 + $0x34c] sm:$0xf]
      %v389 = vld [vmem:[%s157 + $0x350] sm:$0xf]
      %v390 = vld [vmem:[%s157 + $0x354] sm:$0xf]
      %v391 = vld [vmem:[%s157 + $0x358] sm:$0xf]
      %v392 = vld [vmem:[%s157 + $0x35c] sm:$0xf]
      %v393 = vld [vmem:[%s157 + $0x360] sm:$0xf]
      %v394 = vld [vmem:[%s157 + $0x364] sm:$0xf]
      %v395 = vld [vmem:[%s157 + $0x368] sm:$0xf]
      %v396 = vld [vmem:[%s157 + $0x36c] sm:$0xf]
      %v397 = vld [vmem:[%s157 + $0x370] sm:$0xf]
      %v398 = vld [vmem:[%s157 + $0x374] sm:$0xf]
      %v399 = vld [vmem:[%s157 + $0x378] sm:$0xf]
      %v400 = vld [vmem:[%s157 + $0x37c] sm:$0xf]
      %v401 = vld [vmem:[%s157 + $0x380] sm:$0xf]
      %v402 = vld [vmem:[%s157 + $0x384] sm:$0xf]
      %v403 = vld [vmem:[%s157 + $0x388] sm:$0xf]
      %v404 = vld [vmem:[%s157 + $0x38c] sm:$0xf]
      %v405 = vld [vmem:[%s157 + $0x390] sm:$0xf]
      %v406 = vld [vmem:[%s157 + $0x394] sm:$0xf]
      %v407 = vld [vmem:[%s157 + $0x398] sm:$0xf]
      %v408 = vld [vmem:[%s157 + $0x39c] sm:$0xf]
      %v409 = vld [vmem:[%s157 + $0x3a0] sm:$0xf]
      %v410 = vld [vmem:[%s157 + $0x3a4] sm:$0xf]
      %v411 = vld [vmem:[%s157 + $0x3a8] sm:$0xf]
      %v412 = vld [vmem:[%s157 + $0x3ac] sm:$0xf]
      %v413 = vld [vmem:[%s157 + $0x3b0] sm:$0xf]
      %v414 = vld [vmem:[%s157 + $0x3b4] sm:$0xf]
      %v415 = vld [vmem:[%s157 + $0x3b8] sm:$0xf]
      %v416 = vld [vmem:[%s157 + $0x3bc] sm:$0xf]
      %v417 = vld [vmem:[%s157 + $0x3c0] sm:$0xf]
      %v418 = vld [vmem:[%s157 + $0x3c4] sm:$0xf]
      %v419 = vld [vmem:[%s157 + $0x3c8] sm:$0xf]
      %v420 = vld [vmem:[%s157 + $0x3cc] sm:$0xf]
      %v421 = vld [vmem:[%s157 + $0x3d0] sm:$0xf]
      %v422 = vld [vmem:[%s157 + $0x3d4] sm:$0xf]
      %v423 = vld [vmem:[%s157 + $0x3d8] sm:$0xf]
      %v424 = vld [vmem:[%s157 + $0x3dc] sm:$0xf]
      %v425 = vld [vmem:[%s157 + $0x3e0] sm:$0xf]
      %v426 = vld [vmem:[%s157 + $0x3e4] sm:$0xf]
      %v427 = vld [vmem:[%s157 + $0x3e8] sm:$0xf]
      %v428 = vld [vmem:[%s157 + $0x3ec] sm:$0xf]
      %v429 = vld [vmem:[%s157 + $0x3f0] sm:$0xf]
      %v430 = vld [vmem:[%s157 + $0x3f4] sm:$0xf]
      %v431 = vld [vmem:[%s157 + $0x3f8] sm:$0xf]
      %v432 = vld [vmem:[%s157 + $0x3fc] sm:$0xf]
      %v433 = vld [vmem:[%s157 + $0x400] sm:$0xf]
      %v434 = vld [vmem:[%s157 + $0x404] sm:$0xf]
      %v435 = vld [vmem:[%s157 + $0x408] sm:$0xf]
      %v436 = vld [vmem:[%s157 + $0x40c] sm:$0xf]
      %v437 = vld [vmem:[%s157 + $0x410] sm:$0xf]
      %v438 = vld [vmem:[%s157 + $0x414] sm:$0xf]
      %v439 = vld [vmem:[%s157 + $0x418] sm:$0xf]
      %v440 = vld [vmem:[%s157 + $0x41c] sm:$0xf]
      %v441 = vld [vmem:[%s157 + $0x420] sm:$0xf]
      %v442 = vld [vmem:[%s157 + $0x424] sm:$0xf]
      %v443 = vld [vmem:[%s157 + $0x428] sm:$0xf]
      %v444 = vld [vmem:[%s157 + $0x42c] sm:$0xf]
      %v445 = vld [vmem:[%s157 + $0x430] sm:$0xf]
      %v446 = vld [vmem:[%s157 + $0x434] sm:$0xf]
      %v447 = vld [vmem:[%s157 + $0x438] sm:$0xf]
      %v448 = vld [vmem:[%s157 + $0x43c] sm:$0xf]
      %v449 = vld [vmem:[%s157 + $0x440] sm:$0xf]
      %v450 = vld [vmem:[%s157 + $0x444] sm:$0xf]
      %v451 = vld [vmem:[%s157 + $0x448] sm:$0xf]
      %v452 = vld [vmem:[%s157 + $0x44c] sm:$0xf]
      %v453 = vld [vmem:[%s157 + $0x450] sm:$0xf]
      %v454 = vld [vmem:[%s157 + $0x454] sm:$0xf]
      %v455 = vld [vmem:[%s157 + $0x458] sm:$0xf]
      %v456 = vld [vmem:[%s157 + $0x45c] sm:$0xf]
      %v457 = vld [vmem:[%s157 + $0x460] sm:$0xf]
      %v458 = vld [vmem:[%s157 + $0x464] sm:$0xf]
      %v459 = vld [vmem:[%s157 + $0x468] sm:$0xf]
      %v460 = vld [vmem:[%s157 + $0x46c] sm:$0xf]
      %v461 = vld [vmem:[%s157 + $0x470] sm:$0xf]
      %v462 = vld [vmem:[%s157 + $0x474] sm:$0xf]
      %v463 = vld [vmem:[%s157 + $0x478] sm:$0xf]
      %v464 = vld [vmem:[%s157 + $0x47c] sm:$0xf]
      %v465 = vld [vmem:[%s157 + $0x480] sm:$0xf]
      %v466 = vld [vmem:[%s157 + $0x484] sm:$0xf]
      %v467 = vld [vmem:[%s157 + $0x488] sm:$0xf]
      %v468 = vld [vmem:[%s157 + $0x48c] sm:$0xf]
      %v469 = vld [vmem:[%s157 + $0x490] sm:$0xf]
      %v470 = vld [vmem:[%s157 + $0x494] sm:$0xf]
      %v471 = vld [vmem:[%s157 + $0x498] sm:$0xf]
      %v472 = vld [vmem:[%s157 + $0x49c] sm:$0xf]
      %v473 = vld [vmem:[%s157 + $0x4a0] sm:$0xf]
      %v474 = vld [vmem:[%s157 + $0x4a4] sm:$0xf]
      %v475 = vld [vmem:[%s157 + $0x4a8] sm:$0xf]
      %v476 = vld [vmem:[%s157 + $0x4ac] sm:$0xf]
      %v477 = vld [vmem:[%s157 + $0x4b0] sm:$0xf]
      %v478 = vld [vmem:[%s157 + $0x4b4] sm:$0xf]
      %v479 = vld [vmem:[%s157 + $0x4b8] sm:$0xf]
      %v480 = vld [vmem:[%s157 + $0x4bc] sm:$0xf]
      %v481 = vld [vmem:[%s157 + $0x4c0] sm:$0xf]
      %v482 = vld [vmem:[%s157 + $0x4c4] sm:$0xf]
      %v483 = vld [vmem:[%s157 + $0x4c8] sm:$0xf]
      %v484 = vld [vmem:[%s157 + $0x4cc] sm:$0xf]
      %v485 = vld [vmem:[%s157 + $0x4d0] sm:$0xf]
      %v486 = vld [vmem:[%s157 + $0x4d4] sm:$0xf]
      %v487 = vld [vmem:[%s157 + $0x4d8] sm:$0xf]
      %v488 = vld [vmem:[%s157 + $0x4dc] sm:$0xf]
      %v489 = vld [vmem:[%s157 + $0x4e0] sm:$0xf]
      %v490 = vld [vmem:[%s157 + $0x4e4] sm:$0xf]
      %v491 = vld [vmem:[%s157 + $0x4e8] sm:$0xf]
      %v492 = vld [vmem:[%s157 + $0x4ec] sm:$0xf]
      %v493 = vld [vmem:[%s157 + $0x4f0] sm:$0xf]
      %v494 = vld [vmem:[%s157 + $0x4f4] sm:$0xf]
      %v495 = vld [vmem:[%s157 + $0x4f8] sm:$0xf]
      %v496 = vld [vmem:[%s157 + $0x4fc] sm:$0xf]
      %v497 = vld [vmem:[%s157 + $0x500] sm:$0xf]
      %v498 = vld [vmem:[%s157 + $0x504] sm:$0xf]
      %v499 = vld [vmem:[%s157 + $0x508] sm:$0xf]
      %v500 = vld [vmem:[%s157 + $0x50c] sm:$0xf]
      %v501 = vld [vmem:[%s157 + $0x510] sm:$0xf]
      %v502 = vld [vmem:[%s157 + $0x514] sm:$0xf]
      %v503 = vld [vmem:[%s157 + $0x518] sm:$0xf]
      %v504 = vld [vmem:[%s157 + $0x51c] sm:$0xf]
      %v505 = vld [vmem:[%s157 + $0x520] sm:$0xf]
      %v506 = vld [vmem:[%s157 + $0x524] sm:$0xf]
      %v507 = vld [vmem:[%s157 + $0x528] sm:$0xf]
      %v508 = vld [vmem:[%s157 + $0x52c] sm:$0xf]
      %v509 = vld [vmem:[%s157 + $0x530] sm:$0xf]
      %v510 = vld [vmem:[%s157 + $0x534] sm:$0xf]
      %v511 = vld [vmem:[%s157 + $0x538] sm:$0xf]
      %v512 = vld [vmem:[%s157 + $0x53c] sm:$0xf]
      %v513 = vld [vmem:[%s157 + $0x540] sm:$0xf]
      %v514 = vld [vmem:[%s157 + $0x544] sm:$0xf]
      %v515 = vld [vmem:[%s157 + $0x548] sm:$0xf]
      %v516 = vld [vmem:[%s157 + $0x54c] sm:$0xf]
      %v517 = vld [vmem:[%s157 + $0x550] sm:$0xf]
      %v518 = vld [vmem:[%s157 + $0x554] sm:$0xf]
      %v519 = vld [vmem:[%s157 + $0x558] sm:$0xf]
      %v520 = vld [vmem:[%s157 + $0x55c] sm:$0xf]
      %v521 = vld [vmem:[%s157 + $0x560] sm:$0xf]
      %v522 = vld [vmem:[%s157 + $0x564] sm:$0xf]
      %v523 = vld [vmem:[%s157 + $0x568] sm:$0xf]
      %v524 = vld [vmem:[%s157 + $0x56c] sm:$0xf]
      %v525 = vld [vmem:[%s157 + $0x570] sm:$0xf]
      %v526 = vld [vmem:[%s157 + $0x574] sm:$0xf]
      %v527 = vld [vmem:[%s157 + $0x578] sm:$0xf]
      %v528 = vld [vmem:[%s157 + $0x57c] sm:$0xf]
      %v529 = vld [vmem:[%s157 + $0x580] sm:$0xf]
      %v530 = vld [vmem:[%s157 + $0x584] sm:$0xf]
      %v531 = vld [vmem:[%s157 + $0x588] sm:$0xf]
      %v532 = vld [vmem:[%s157 + $0x58c] sm:$0xf]
      %v533 = vld [vmem:[%s157 + $0x590] sm:$0xf]
      %v534 = vld [vmem:[%s157 + $0x594] sm:$0xf]
      %v535 = vld [vmem:[%s157 + $0x598] sm:$0xf]
      %v536 = vld [vmem:[%s157 + $0x59c] sm:$0xf]
      %v537 = vld [vmem:[%s157 + $0x5a0] sm:$0xf]
      %v538 = vld [vmem:[%s157 + $0x5a4] sm:$0xf]
      %v539 = vld [vmem:[%s157 + $0x5a8] sm:$0xf]
      %v540 = vld [vmem:[%s157 + $0x5ac] sm:$0xf]
      %v541 = vld [vmem:[%s157 + $0x5b0] sm:$0xf]
      %v542 = vld [vmem:[%s157 + $0x5b4] sm:$0xf]
      %v543 = vld [vmem:[%s157 + $0x5b8] sm:$0xf]
      %v544 = vld [vmem:[%s157 + $0x5bc] sm:$0xf]
      %v545 = vld [vmem:[%s157 + $0x5c0] sm:$0xf]
      %v546 = vld [vmem:[%s157 + $0x5c4] sm:$0xf]
      %v547 = vld [vmem:[%s157 + $0x5c8] sm:$0xf]
      %v548 = vld [vmem:[%s157 + $0x5cc] sm:$0xf]
      %v549 = vld [vmem:[%s157 + $0x5d0] sm:$0xf]
      %v550 = vld [vmem:[%s157 + $0x5d4] sm:$0xf]
      %v551 = vld [vmem:[%s157 + $0x5d8] sm:$0xf]
      %v552 = vld [vmem:[%s157 + $0x5dc] sm:$0xf]
      %v553 = vld [vmem:[%s157 + $0x5e0] sm:$0xf]
      %v554 = vld [vmem:[%s157 + $0x5e4] sm:$0xf]
      %v555 = vld [vmem:[%s157 + $0x5e8] sm:$0xf]
      %v556 = vld [vmem:[%s157 + $0x5ec] sm:$0xf]
      %v557 = vld [vmem:[%s157 + $0x5f0] sm:$0xf]
      %v558 = vld [vmem:[%s157 + $0x5f4] sm:$0xf]
      %v559 = vld [vmem:[%s157 + $0x5f8] sm:$0xf]
      %v560 = vld [vmem:[%s157 + $0x5fc] sm:$0xf]
      %v561 = vld [vmem:[%s157 + $0x600] sm:$0xf]
      %v562 = vld [vmem:[%s157 + $0x604] sm:$0xf]
      %v563 = vld [vmem:[%s157 + $0x608] sm:$0xf]
      %v564 = vld [vmem:[%s157 + $0x60c] sm:$0xf]
      %v565 = vld [vmem:[%s157 + $0x610] sm:$0xf]
      %v566 = vld [vmem:[%s157 + $0x614] sm:$0xf]
      %v567 = vld [vmem:[%s157 + $0x618] sm:$0xf]
      %v568 = vld [vmem:[%s157 + $0x61c] sm:$0xf]
      %v569 = vld [vmem:[%s157 + $0x620] sm:$0xf]
      %v570 = vld [vmem:[%s157 + $0x624] sm:$0xf]
      %v571 = vld [vmem:[%s157 + $0x628] sm:$0xf]
      %v572 = vld [vmem:[%s157 + $0x62c] sm:$0xf]
      %v573 = vld [vmem:[%s157 + $0x630] sm:$0xf]
      %v574 = vld [vmem:[%s157 + $0x634] sm:$0xf]
      %v575 = vld [vmem:[%s157 + $0x638] sm:$0xf]
      %v576 = vld [vmem:[%s157 + $0x63c] sm:$0xf]
      %v577 = vld [vmem:[%s157 + $0x640] sm:$0xf]
      %v578 = vld [vmem:[%s157 + $0x644] sm:$0xf]
      %v579 = vld [vmem:[%s157 + $0x648] sm:$0xf]
      %v580 = vld [vmem:[%s157 + $0x64c] sm:$0xf]
      %v581 = vld [vmem:[%s157 + $0x650] sm:$0xf]
      %v582 = vld [vmem:[%s157 + $0x654] sm:$0xf]
      %v583 = vld [vmem:[%s157 + $0x658] sm:$0xf]
      %v584 = vld [vmem:[%s157 + $0x65c] sm:$0xf]
      %v585 = vld [vmem:[%s157 + $0x660] sm:$0xf]
      %v586 = vld [vmem:[%s157 + $0x664] sm:$0xf]
      %v587 = vld [vmem:[%s157 + $0x668] sm:$0xf]
      %v588 = vld [vmem:[%s157 + $0x66c] sm:$0xf]
      %v589 = vld [vmem:[%s157 + $0x670] sm:$0xf]
      %v590 = vld [vmem:[%s157 + $0x674] sm:$0xf]
      %v591 = vld [vmem:[%s157 + $0x678] sm:$0xf]
      %v592 = vld [vmem:[%s157 + $0x67c] sm:$0xf]
      %v593 = vld [vmem:[%s157 + $0x680] sm:$0xf]
      %v594 = vld [vmem:[%s157 + $0x684] sm:$0xf]
      %v595 = vld [vmem:[%s157 + $0x688] sm:$0xf]
      %v596 = vld [vmem:[%s157 + $0x68c] sm:$0xf]
      %v597 = vld [vmem:[%s157 + $0x690] sm:$0xf]
      %v598 = vld [vmem:[%s157 + $0x694] sm:$0xf]
      %v599 = vld [vmem:[%s157 + $0x698] sm:$0xf]
      %v600 = vld [vmem:[%s157 + $0x69c] sm:$0xf]
      %v601 = vld [vmem:[%s157 + $0x6a0] sm:$0xf]
      %v602 = vld [vmem:[%s157 + $0x6a4] sm:$0xf]
      %v603 = vld [vmem:[%s157 + $0x6a8] sm:$0xf]
      %v604 = vld [vmem:[%s157 + $0x6ac] sm:$0xf]
      %v605 = vld [vmem:[%s157 + $0x6b0] sm:$0xf]
      %v606 = vld [vmem:[%s157 + $0x6b4] sm:$0xf]
      %v607 = vld [vmem:[%s157 + $0x6b8] sm:$0xf]
      %v608 = vld [vmem:[%s157 + $0x6bc] sm:$0xf]
      %v609 = vld [vmem:[%s157 + $0x6c0] sm:$0xf]
      %v610 = vld [vmem:[%s157 + $0x6c4] sm:$0xf]
      %v611 = vld [vmem:[%s157 + $0x6c8] sm:$0xf]
      %v612 = vld [vmem:[%s157 + $0x6cc] sm:$0xf]
      %v613 = vld [vmem:[%s157 + $0x6d0] sm:$0xf]
      %v614 = vld [vmem:[%s157 + $0x6d4] sm:$0xf]
      %v615 = vld [vmem:[%s157 + $0x6d8] sm:$0xf]
      %v616 = vld [vmem:[%s157 + $0x6dc] sm:$0xf]
      %v617 = vld [vmem:[%s157 + $0x6e0] sm:$0xf]
      %v618 = vld [vmem:[%s157 + $0x6e4] sm:$0xf]
      %v619 = vld [vmem:[%s157 + $0x6e8] sm:$0xf]
      %v620 = vld [vmem:[%s157 + $0x6ec] sm:$0xf]
      %v621 = vld [vmem:[%s157 + $0x6f0] sm:$0xf]
      %v622 = vld [vmem:[%s157 + $0x6f4] sm:$0xf]
      %v623 = vld [vmem:[%s157 + $0x6f8] sm:$0xf]
      %v624 = vld [vmem:[%s157 + $0x6fc] sm:$0xf]
      %v625 = vld [vmem:[%s157 + $0x700] sm:$0xf]
      %v626 = vld [vmem:[%s157 + $0x704] sm:$0xf]
      %v627 = vld [vmem:[%s157 + $0x708] sm:$0xf]
      %v628 = vld [vmem:[%s157 + $0x70c] sm:$0xf]
      %v629 = vld [vmem:[%s157 + $0x710] sm:$0xf]
      %v630 = vld [vmem:[%s157 + $0x714] sm:$0xf]
      %v631 = vld [vmem:[%s157 + $0x718] sm:$0xf]
      %v632 = vld [vmem:[%s157 + $0x71c] sm:$0xf]
      %v633 = vld [vmem:[%s157 + $0x720] sm:$0xf]
      %v634 = vld [vmem:[%s157 + $0x724] sm:$0xf]
      %v635 = vld [vmem:[%s157 + $0x728] sm:$0xf]
      %v636 = vld [vmem:[%s157 + $0x72c] sm:$0xf]
      %v637 = vld [vmem:[%s157 + $0x730] sm:$0xf]
      %v638 = vld [vmem:[%s157 + $0x734] sm:$0xf]
      %v639 = vld [vmem:[%s157 + $0x738] sm:$0xf]
      %v640 = vld [vmem:[%s157 + $0x73c] sm:$0xf]
      %v641 = vld [vmem:[%s157 + $0x740] sm:$0xf]
      %v642 = vld [vmem:[%s157 + $0x744] sm:$0xf]
      %v643 = vld [vmem:[%s157 + $0x748] sm:$0xf]
      %v644 = vld [vmem:[%s157 + $0x74c] sm:$0xf]
      %v645 = vld [vmem:[%s157 + $0x750] sm:$0xf]
      %v646 = vld [vmem:[%s157 + $0x754] sm:$0xf]
      %v647 = vld [vmem:[%s157 + $0x758] sm:$0xf]
      %v648 = vld [vmem:[%s157 + $0x75c] sm:$0xf]
      %v649 = vld [vmem:[%s157 + $0x760] sm:$0xf]
      %v650 = vld [vmem:[%s157 + $0x764] sm:$0xf]
      %v651 = vld [vmem:[%s157 + $0x768] sm:$0xf]
      %v652 = vld [vmem:[%s157 + $0x76c] sm:$0xf]
      %v653 = vld [vmem:[%s157 + $0x770] sm:$0xf]
      %v654 = vld [vmem:[%s157 + $0x774] sm:$0xf]
      %v655 = vld [vmem:[%s157 + $0x778] sm:$0xf]
      %v656 = vld [vmem:[%s157 + $0x77c] sm:$0xf]
      %v657 = vld [vmem:[%s157 + $0x780] sm:$0xf]
      %v658 = vld [vmem:[%s157 + $0x784] sm:$0xf]
      %v659 = vld [vmem:[%s157 + $0x788] sm:$0xf]
      %v660 = vld [vmem:[%s157 + $0x78c] sm:$0xf]
      %v661 = vld [vmem:[%s157 + $0x790] sm:$0xf]
      %v662 = vld [vmem:[%s157 + $0x794] sm:$0xf]
      %v663 = vld [vmem:[%s157 + $0x798] sm:$0xf]
      %v664 = vld [vmem:[%s157 + $0x79c] sm:$0xf]
      %v665 = vld [vmem:[%s157 + $0x7a0] sm:$0xf]
      %v666 = vld [vmem:[%s157 + $0x7a4] sm:$0xf]
      %v667 = vld [vmem:[%s157 + $0x7a8] sm:$0xf]
      %v668 = vld [vmem:[%s157 + $0x7ac] sm:$0xf]
      %v669 = vld [vmem:[%s157 + $0x7b0] sm:$0xf]
      %v670 = vld [vmem:[%s157 + $0x7b4] sm:$0xf]
      %v671 = vld [vmem:[%s157 + $0x7b8] sm:$0xf]
      %v672 = vld [vmem:[%s157 + $0x7bc] sm:$0xf]
      %v673 = vld [vmem:[%s157 + $0x7c0] sm:$0xf]
      %v674 = vld [vmem:[%s157 + $0x7c4] sm:$0xf]
      %v675 = vld [vmem:[%s157 + $0x7c8] sm:$0xf]
      %v676 = vld [vmem:[%s157 + $0x7cc] sm:$0xf]
      %v677 = vld [vmem:[%s157 + $0x7d0] sm:$0xf]
      %v678 = vld [vmem:[%s157 + $0x7d4] sm:$0xf]
      %v679 = vld [vmem:[%s157 + $0x7d8] sm:$0xf]
      %v680 = vld [vmem:[%s157 + $0x7dc] sm:$0xf]
      %v681 = vld [vmem:[%s157 + $0x7e0] sm:$0xf]
      %v682 = vld [vmem:[%s157 + $0x7e4] sm:$0xf]
      %v683 = vld [vmem:[%s157 + $0x7e8] sm:$0xf]
      %v684 = vld [vmem:[%s157 + $0x7ec] sm:$0xf]
      %v685 = vld [vmem:[%s157 + $0x7f0] sm:$0xf]
      %v686 = vld [vmem:[%s157 + $0x7f4] sm:$0xf]
      %v687 = vld [vmem:[%s157 + $0x7f8] sm:$0xf]
      %v688 = vld [vmem:[%s157 + $0x7fc] sm:$0xf]
      %v689 = vld [vmem:[%s157 + $0x800] sm:$0xf]
      %v690 = vld [vmem:[%s157 + $0x804] sm:$0xf]
      %v691 = vld [vmem:[%s157 + $0x808] sm:$0xf]
      %v692 = vld [vmem:[%s157 + $0x80c] sm:$0xf]
      %v693 = vld [vmem:[%s157 + $0x810] sm:$0xf]
      %v694 = vld [vmem:[%s157 + $0x814] sm:$0xf]
      %v695 = vld [vmem:[%s157 + $0x818] sm:$0xf]
      %v696 = vld [vmem:[%s157 + $0x81c] sm:$0xf]
      %v697 = vld [vmem:[%s157 + $0x820] sm:$0xf]
      %v698 = vld [vmem:[%s157 + $0x824] sm:$0xf]
      %v699 = vld [vmem:[%s157 + $0x828] sm:$0xf]
      %v700 = vld [vmem:[%s157 + $0x82c] sm:$0xf]
      %v701 = vld [vmem:[%s157 + $0x830] sm:$0xf]
      %v702 = vld [vmem:[%s157 + $0x834] sm:$0xf]
      %v703 = vld [vmem:[%s157 + $0x838] sm:$0xf]
      %v704 = vld [vmem:[%s157 + $0x83c] sm:$0xf]
      %v705 = vld [vmem:[%s157 + $0x840] sm:$0xf]
      %v706 = vld [vmem:[%s157 + $0x844] sm:$0xf]
      %v707 = vld [vmem:[%s157 + $0x848] sm:$0xf]
      %v708 = vld [vmem:[%s157 + $0x84c] sm:$0xf]
      %v709 = vld [vmem:[%s157 + $0x850] sm:$0xf]
      %v710 = vld [vmem:[%s157 + $0x854] sm:$0xf]
      %v711 = vld [vmem:[%s157 + $0x858] sm:$0xf]
      %v712 = vld [vmem:[%s157 + $0x85c] sm:$0xf]
      %v713 = vld [vmem:[%s157 + $0x860] sm:$0xf]
      %v714 = vld [vmem:[%s157 + $0x864] sm:$0xf]
      %v715 = vld [vmem:[%s157 + $0x868] sm:$0xf]
      %v716 = vld [vmem:[%s157 + $0x86c] sm:$0xf]
      %v717 = vld [vmem:[%s157 + $0x870] sm:$0xf]
      %v718 = vld [vmem:[%s157 + $0x874] sm:$0xf]
      %v719 = vld [vmem:[%s157 + $0x878] sm:$0xf]
      %v720 = vld [vmem:[%s157 + $0x87c] sm:$0xf]
      %v721 = vld [vmem:[%s157 + $0x880] sm:$0xf]
      %v722 = vld [vmem:[%s157 + $0x884] sm:$0xf]
      %v723 = vld [vmem:[%s157 + $0x888] sm:$0xf]
      %v724 = vld [vmem:[%s157 + $0x88c] sm:$0xf]
      %v725 = vld [vmem:[%s157 + $0x890] sm:$0xf]
      %v726 = vld [vmem:[%s157 + $0x894] sm:$0xf]
      %v727 = vld [vmem:[%s157 + $0x898] sm:$0xf]
      %v728 = vld [vmem:[%s157 + $0x89c] sm:$0xf]
      %v729 = vld [vmem:[%s157 + $0x8a0] sm:$0xf]
      %v730 = vld [vmem:[%s157 + $0x8a4] sm:$0xf]
      %v731 = vld [vmem:[%s157 + $0x8a8] sm:$0xf]
      %v732 = vld [vmem:[%s157 + $0x8ac] sm:$0xf]
      %v733 = vld [vmem:[%s157 + $0x8b0] sm:$0xf]
      %v734 = vld [vmem:[%s157 + $0x8b4] sm:$0xf]
      %v735 = vld [vmem:[%s157 + $0x8b8] sm:$0xf]
      %v736 = vld [vmem:[%s157 + $0x8bc] sm:$0xf]
      %v737 = vld [vmem:[%s157 + $0x8c0] sm:$0xf]
      %v738 = vld [vmem:[%s157 + $0x8c4] sm:$0xf]
      %v739 = vld [vmem:[%s157 + $0x8c8] sm:$0xf]
      %v740 = vld [vmem:[%s157 + $0x8cc] sm:$0xf]
      %v741 = vld [vmem:[%s157 + $0x8d0] sm:$0xf]
      %v742 = vld [vmem:[%s157 + $0x8d4] sm:$0xf]
      %v743 = vld [vmem:[%s157 + $0x8d8] sm:$0xf]
      %v744 = vld [vmem:[%s157 + $0x8dc] sm:$0xf]
      %v745 = vld [vmem:[%s157 + $0x8e0] sm:$0xf]
      %v746 = vld [vmem:[%s157 + $0x8e4] sm:$0xf]
      %v747 = vld [vmem:[%s157 + $0x8e8] sm:$0xf]
      %v748 = vld [vmem:[%s157 + $0x8ec] sm:$0xf]
      %v749 = vld [vmem:[%s157 + $0x8f0] sm:$0xf]
      %v750 = vld [vmem:[%s157 + $0x8f4] sm:$0xf]
      %v751 = vld [vmem:[%s157 + $0x8f8] sm:$0xf]
      %v752 = vld [vmem:[%s157 + $0x8fc] sm:$0xf]
      %v753 = vld [vmem:[%s157 + $0x900] sm:$0xf]
      %v754 = vld [vmem:[%s157 + $0x904] sm:$0xf]
      %v755 = vld [vmem:[%s157 + $0x908] sm:$0xf]
      %v756 = vld [vmem:[%s157 + $0x90c] sm:$0xf]
      %v757 = vld [vmem:[%s157 + $0x910] sm:$0xf]
      %v758 = vld [vmem:[%s157 + $0x914] sm:$0xf]
      %v759 = vld [vmem:[%s157 + $0x918] sm:$0xf]
      %v760 = vld [vmem:[%s157 + $0x91c] sm:$0xf]
      %v761 = vld [vmem:[%s157 + $0x920] sm:$0xf]
      %v762 = vld [vmem:[%s157 + $0x924] sm:$0xf]
      %v763 = vld [vmem:[%s157 + $0x928] sm:$0xf]
      %v764 = vld [vmem:[%s157 + $0x92c] sm:$0xf]
      %v765 = vld [vmem:[%s157 + $0x930] sm:$0xf]
      %v766 = vld [vmem:[%s157 + $0x934] sm:$0xf]
      %v767 = vld [vmem:[%s157 + $0x938] sm:$0xf]
      %v768 = vld [vmem:[%s157 + $0x93c] sm:$0xf]
      %v769 = vld [vmem:[%s157 + $0x940] sm:$0xf]
      %v770 = vld [vmem:[%s157 + $0x944] sm:$0xf]
      %v771 = vld [vmem:[%s157 + $0x948] sm:$0xf]
      %v772 = vld [vmem:[%s157 + $0x94c] sm:$0xf]
      %v773 = vld [vmem:[%s157 + $0x950] sm:$0xf]
      %v774 = vld [vmem:[%s157 + $0x954] sm:$0xf]
      %v775 = vld [vmem:[%s157 + $0x958] sm:$0xf]
      %v776 = vld [vmem:[%s157 + $0x95c] sm:$0xf]
      %v777 = vld [vmem:[%s157 + $0x960] sm:$0xf]
      %v778 = vld [vmem:[%s157 + $0x964] sm:$0xf]
      %v779 = vld [vmem:[%s157 + $0x968] sm:$0xf]
      %v780 = vld [vmem:[%s157 + $0x96c] sm:$0xf]
      %v781 = vld [vmem:[%s157 + $0x970] sm:$0xf]
      %v782 = vld [vmem:[%s157 + $0x974] sm:$0xf]
      %v783 = vld [vmem:[%s157 + $0x978] sm:$0xf]
      %v784 = vld [vmem:[%s157 + $0x97c] sm:$0xf]
      %v785 = vld [vmem:[%s157 + $0x980] sm:$0xf]
      %v786 = vld [vmem:[%s157 + $0x984] sm:$0xf]
      %v787 = vld [vmem:[%s157 + $0x988] sm:$0xf]
      %v788 = vld [vmem:[%s157 + $0x98c] sm:$0xf]
      %v789 = vld [vmem:[%s157 + $0x990] sm:$0xf]
      %v790 = vld [vmem:[%s157 + $0x994] sm:$0xf]
      %v791 = vld [vmem:[%s157 + $0x998] sm:$0xf]
      %v792 = vld [vmem:[%s157 + $0x99c] sm:$0xf]
      %v793 = vld [vmem:[%s157 + $0x9a0] sm:$0xf]
      %v794 = vld [vmem:[%s157 + $0x9a4] sm:$0xf]
      %v795 = vld [vmem:[%s157 + $0x9a8] sm:$0xf]
      %v796 = vld [vmem:[%s157 + $0x9ac] sm:$0xf]
      %v797 = vld [vmem:[%s157 + $0x9b0] sm:$0xf]
      %v798 = vld [vmem:[%s157 + $0x9b4] sm:$0xf]
      %v799 = vld [vmem:[%s157 + $0x9b8] sm:$0xf]
      %v800 = vld [vmem:[%s157 + $0x9bc] sm:$0xf]
      %v801 = vld [vmem:[%s157 + $0x9c0] sm:$0xf]
      %v802 = vld [vmem:[%s157 + $0x9c4] sm:$0xf]
      %v803 = vld [vmem:[%s157 + $0x9c8] sm:$0xf]
      %v804 = vld [vmem:[%s157 + $0x9cc] sm:$0xf]
      %v805 = vld [vmem:[%s157 + $0x9d0] sm:$0xf]
      %v806 = vld [vmem:[%s157 + $0x9d4] sm:$0xf]
      %v807 = vld [vmem:[%s157 + $0x9d8] sm:$0xf]
      %v808 = vld [vmem:[%s157 + $0x9dc] sm:$0xf]
      %v809 = vld [vmem:[%s157 + $0x9e0] sm:$0xf]
      %v810 = vld [vmem:[%s157 + $0x9e4] sm:$0xf]
      %v811 = vld [vmem:[%s157 + $0x9e8] sm:$0xf]
      %v812 = vld [vmem:[%s157 + $0x9ec] sm:$0xf]
      %v813 = vld [vmem:[%s157 + $0x9f0] sm:$0xf]
      %v814 = vld [vmem:[%s157 + $0x9f4] sm:$0xf]
      %v815 = vld [vmem:[%s157 + $0x9f8] sm:$0xf]
      %v816 = vld [vmem:[%s157 + $0x9fc] sm:$0xf]
      %v817 = vld [vmem:[%s157 + $0xa00] sm:$0xf]
      %v818 = vld [vmem:[%s157 + $0xa04] sm:$0xf]
      %v819 = vld [vmem:[%s157 + $0xa08] sm:$0xf]
      %v820 = vld [vmem:[%s157 + $0xa0c] sm:$0xf]
      %v821 = vld [vmem:[%s157 + $0xa10] sm:$0xf]
      %v822 = vld [vmem:[%s157 + $0xa14] sm:$0xf]
      %v823 = vld [vmem:[%s157 + $0xa18] sm:$0xf]
      %v824 = vld [vmem:[%s157 + $0xa1c] sm:$0xf]
      %v825 = vld [vmem:[%s157 + $0xa20] sm:$0xf]
      %v826 = vld [vmem:[%s157 + $0xa24] sm:$0xf]
      %v827 = vld [vmem:[%s157 + $0xa28] sm:$0xf]
      %v828 = vld [vmem:[%s157 + $0xa2c] sm:$0xf]
      %v829 = vld [vmem:[%s157 + $0xa30] sm:$0xf]
      %v830 = vld [vmem:[%s157 + $0xa34] sm:$0xf]
      %v831 = vld [vmem:[%s157 + $0xa38] sm:$0xf]
      %v832 = vld [vmem:[%s157 + $0xa3c] sm:$0xf]
      %v833 = vld [vmem:[%s157 + $0xa40] sm:$0xf]
      %v834 = vld [vmem:[%s157 + $0xa44] sm:$0xf]
      %v835 = vld [vmem:[%s157 + $0xa48] sm:$0xf]
      %v836 = vld [vmem:[%s157 + $0xa4c] sm:$0xf]
      %v837 = vld [vmem:[%s157 + $0xa50] sm:$0xf]
      %v838 = vld [vmem:[%s157 + $0xa54] sm:$0xf]
      %v839 = vld [vmem:[%s157 + $0xa58] sm:$0xf]
      %v840 = vld [vmem:[%s157 + $0xa5c] sm:$0xf]
      %v841 = vld [vmem:[%s157 + $0xa60] sm:$0xf]
      %v842 = vld [vmem:[%s157 + $0xa64] sm:$0xf]
      %v843 = vld [vmem:[%s157 + $0xa68] sm:$0xf]
      %v844 = vld [vmem:[%s157 + $0xa6c] sm:$0xf]
      %v845 = vld [vmem:[%s157 + $0xa70] sm:$0xf]
      %v846 = vld [vmem:[%s157 + $0xa74] sm:$0xf]
      %v847 = vld [vmem:[%s157 + $0xa78] sm:$0xf]
      %v848 = vld [vmem:[%s157 + $0xa7c] sm:$0xf]
      %v849 = vld [vmem:[%s157 + $0xa80] sm:$0xf]
      %v850 = vld [vmem:[%s157 + $0xa84] sm:$0xf]
      %v851 = vld [vmem:[%s157 + $0xa88] sm:$0xf]
      %v852 = vld [vmem:[%s157 + $0xa8c] sm:$0xf]
      %v853 = vld [vmem:[%s157 + $0xa90] sm:$0xf]
      %v854 = vld [vmem:[%s157 + $0xa94] sm:$0xf]
      %v855 = vld [vmem:[%s157 + $0xa98] sm:$0xf]
      %v856 = vld [vmem:[%s157 + $0xa9c] sm:$0xf]
      %v857 = vld [vmem:[%s157 + $0xaa0] sm:$0xf]
      %v858 = vld [vmem:[%s157 + $0xaa4] sm:$0xf]
      %v859 = vld [vmem:[%s157 + $0xaa8] sm:$0xf]
      %v860 = vld [vmem:[%s157 + $0xaac] sm:$0xf]
      %v861 = vld [vmem:[%s157 + $0xab0] sm:$0xf]
      %v862 = vld [vmem:[%s157 + $0xab4] sm:$0xf]
      %v863 = vld [vmem:[%s157 + $0xab8] sm:$0xf]
      %v864 = vld [vmem:[%s157 + $0xabc] sm:$0xf]
      %v865 = vld [vmem:[%s157 + $0xac0] sm:$0xf]
      %v866 = vld [vmem:[%s157 + $0xac4] sm:$0xf]
      %v867 = vld [vmem:[%s157 + $0xac8] sm:$0xf]
      %v868 = vld [vmem:[%s157 + $0xacc] sm:$0xf]
      %v869 = vld [vmem:[%s157 + $0xad0] sm:$0xf]
      %v870 = vld [vmem:[%s157 + $0xad4] sm:$0xf]
      %v871 = vld [vmem:[%s157 + $0xad8] sm:$0xf]
      %v872 = vld [vmem:[%s157 + $0xadc] sm:$0xf]
      %v873 = vld [vmem:[%s157 + $0xae0] sm:$0xf]
      %v874 = vld [vmem:[%s157 + $0xae4] sm:$0xf]
      %v875 = vld [vmem:[%s157 + $0xae8] sm:$0xf]
      %v876 = vld [vmem:[%s157 + $0xaec] sm:$0xf]
      %v877 = vld [vmem:[%s157 + $0xaf0] sm:$0xf]
      %v878 = vld [vmem:[%s157 + $0xaf4] sm:$0xf]
      %v879 = vld [vmem:[%s157 + $0xaf8] sm:$0xf]
      %v880 = vld [vmem:[%s157 + $0xafc] sm:$0xf]
      %v881 = vld [vmem:[%s157 + $0xb00] sm:$0xf]
      %v882 = vld [vmem:[%s157 + $0xb04] sm:$0xf]
      %v883 = vld [vmem:[%s157 + $0xb08] sm:$0xf]
      %v884 = vld [vmem:[%s157 + $0xb0c] sm:$0xf]
      %v885 = vld [vmem:[%s157 + $0xb10] sm:$0xf]
      %v886 = vld [vmem:[%s157 + $0xb14] sm:$0xf]
      %v887 = vld [vmem:[%s157 + $0xb18] sm:$0xf]
      %v888 = vld [vmem:[%s157 + $0xb1c] sm:$0xf]
      %v889 = vld [vmem:[%s157 + $0xb20] sm:$0xf]
      %v890 = vld [vmem:[%s157 + $0xb24] sm:$0xf]
      %v891 = vld [vmem:[%s157 + $0xb28] sm:$0xf]
      %v892 = vld [vmem:[%s157 + $0xb2c] sm:$0xf]
      %v893 = vld [vmem:[%s157 + $0xb30] sm:$0xf]
      %v894 = vld [vmem:[%s157 + $0xb34] sm:$0xf]
      %v895 = vld [vmem:[%s157 + $0xb38] sm:$0xf]
      %v896 = vld [vmem:[%s157 + $0xb3c] sm:$0xf]
      %v897 = vld [vmem:[%s157 + $0xb40] sm:$0xf]
      %v898 = vld [vmem:[%s157 + $0xb44] sm:$0xf]
      %v899 = vld [vmem:[%s157 + $0xb48] sm:$0xf]
      %v900 = vld [vmem:[%s157 + $0xb4c] sm:$0xf]
      %v901 = vld [vmem:[%s157 + $0xb50] sm:$0xf]
      %v902 = vld [vmem:[%s157 + $0xb54] sm:$0xf]
      %v903 = vld [vmem:[%s157 + $0xb58] sm:$0xf]
      %v904 = vld [vmem:[%s157 + $0xb5c] sm:$0xf]
      %v905 = vld [vmem:[%s157 + $0xb60] sm:$0xf]
      %v906 = vld [vmem:[%s157 + $0xb64] sm:$0xf]
      %v907 = vld [vmem:[%s157 + $0xb68] sm:$0xf]
      %v908 = vld [vmem:[%s157 + $0xb6c] sm:$0xf]
      %v909 = vld [vmem:[%s157 + $0xb70] sm:$0xf]
      %v910 = vld [vmem:[%s157 + $0xb74] sm:$0xf]
      %v911 = vld [vmem:[%s157 + $0xb78] sm:$0xf]
      %v912 = vld [vmem:[%s157 + $0xb7c] sm:$0xf]
      %v913 = vld [vmem:[%s157 + $0xb80] sm:$0xf]
      %v914 = vld [vmem:[%s157 + $0xb84] sm:$0xf]
      %v915 = vld [vmem:[%s157 + $0xb88] sm:$0xf]
      %v916 = vld [vmem:[%s157 + $0xb8c] sm:$0xf]
      %v917 = vld [vmem:[%s157 + $0xb90] sm:$0xf]
      %v918 = vld [vmem:[%s157 + $0xb94] sm:$0xf]
      %v919 = vld [vmem:[%s157 + $0xb98] sm:$0xf]
      %v920 = vld [vmem:[%s157 + $0xb9c] sm:$0xf]
      %v921 = vld [vmem:[%s157 + $0xba0] sm:$0xf]
      %v922 = vld [vmem:[%s157 + $0xba4] sm:$0xf]
      %v923 = vld [vmem:[%s157 + $0xba8] sm:$0xf]
      %v924 = vld [vmem:[%s157 + $0xbac] sm:$0xf]
      %v925 = vld [vmem:[%s157 + $0xbb0] sm:$0xf]
      %v926 = vld [vmem:[%s157 + $0xbb4] sm:$0xf]
      %v927 = vld [vmem:[%s157 + $0xbb8] sm:$0xf]
      %v928 = vld [vmem:[%s157 + $0xbbc] sm:$0xf]
      %v929 = vld [vmem:[%s157 + $0xbc0] sm:$0xf]
      %v930 = vld [vmem:[%s157 + $0xbc4] sm:$0xf]
      %v931 = vld [vmem:[%s157 + $0xbc8] sm:$0xf]
      %v932 = vld [vmem:[%s157 + $0xbcc] sm:$0xf]
      %v933 = vld [vmem:[%s157 + $0xbd0] sm:$0xf]
      %v934 = vld [vmem:[%s157 + $0xbd4] sm:$0xf]
      %v935 = vld [vmem:[%s157 + $0xbd8] sm:$0xf]
      %v936 = vld [vmem:[%s157 + $0xbdc] sm:$0xf]
      %v937 = vld [vmem:[%s157 + $0xbe0] sm:$0xf]
      %v938 = vld [vmem:[%s157 + $0xbe4] sm:$0xf]
      %v939 = vld [vmem:[%s157 + $0xbe8] sm:$0xf]
      %v940 = vld [vmem:[%s157 + $0xbec] sm:$0xf]
      %v941 = vld [vmem:[%s157 + $0xbf0] sm:$0xf]
      %v942 = vld [vmem:[%s157 + $0xbf4] sm:$0xf]
      %v943 = vld [vmem:[%s157 + $0xbf8] sm:$0xf]
      %v944 = vld [vmem:[%s157 + $0xbfc] sm:$0xf]
      %v945 = vld [vmem:[%s157 + $0xc00] sm:$0xf]
      %v946 = vld [vmem:[%s157 + $0xc04] sm:$0xf]
      %v947 = vld [vmem:[%s157 + $0xc08] sm:$0xf]
      %v948 = vld [vmem:[%s157 + $0xc0c] sm:$0xf]
      %v949 = vld [vmem:[%s157 + $0xc10] sm:$0xf]
      %v950 = vld [vmem:[%s157 + $0xc14] sm:$0xf]
      %v951 = vld [vmem:[%s157 + $0xc18] sm:$0xf]
      %v952 = vld [vmem:[%s157 + $0xc1c] sm:$0xf]
      %v953 = vld [vmem:[%s157 + $0xc20] sm:$0xf]
      %v954 = vld [vmem:[%s157 + $0xc24] sm:$0xf]
      %v955 = vld [vmem:[%s157 + $0xc28] sm:$0xf]
      %v956 = vld [vmem:[%s157 + $0xc2c] sm:$0xf]
      %v957 = vld [vmem:[%s157 + $0xc30] sm:$0xf]
      %v958 = vld [vmem:[%s157 + $0xc34] sm:$0xf]
      %v959 = vld [vmem:[%s157 + $0xc38] sm:$0xf]
      %v960 = vld [vmem:[%s157 + $0xc3c] sm:$0xf]
      %v961 = vld [vmem:[%s157 + $0xc40] sm:$0xf]
      %v962 = vld [vmem:[%s157 + $0xc44] sm:$0xf]
      %v963 = vld [vmem:[%s157 + $0xc48] sm:$0xf]
      %v964 = vld [vmem:[%s157 + $0xc4c] sm:$0xf]
      %v965 = vld [vmem:[%s157 + $0xc50] sm:$0xf]
      %v966 = vld [vmem:[%s157 + $0xc54] sm:$0xf]
      %v967 = vld [vmem:[%s157 + $0xc58] sm:$0xf]
      %v968 = vld [vmem:[%s157 + $0xc5c] sm:$0xf]
      %v969 = vld [vmem:[%s157 + $0xc60] sm:$0xf]
      %v970 = vld [vmem:[%s157 + $0xc64] sm:$0xf]
      %v971 = vld [vmem:[%s157 + $0xc68] sm:$0xf]
      %v972 = vld [vmem:[%s157 + $0xc6c] sm:$0xf]
      %v973 = vld [vmem:[%s157 + $0xc70] sm:$0xf]
      %v974 = vld [vmem:[%s157 + $0xc74] sm:$0xf]
      %v975 = vld [vmem:[%s157 + $0xc78] sm:$0xf]
      %v976 = vld [vmem:[%s157 + $0xc7c] sm:$0xf]
      %v977 = vld [vmem:[%s157 + $0xc80] sm:$0xf]
      %v978 = vld [vmem:[%s157 + $0xc84] sm:$0xf]
      %v979 = vld [vmem:[%s157 + $0xc88] sm:$0xf]
      %v980 = vld [vmem:[%s157 + $0xc8c] sm:$0xf]
      %v981 = vld [vmem:[%s157 + $0xc90] sm:$0xf]
      %v982 = vld [vmem:[%s157 + $0xc94] sm:$0xf]
      %v983 = vld [vmem:[%s157 + $0xc98] sm:$0xf]
      %v984 = vld [vmem:[%s157 + $0xc9c] sm:$0xf]
      %v985 = vld [vmem:[%s157 + $0xca0] sm:$0xf]
      %v986 = vld [vmem:[%s157 + $0xca4] sm:$0xf]
      %v987 = vld [vmem:[%s157 + $0xca8] sm:$0xf]
      %v988 = vld [vmem:[%s157 + $0xcac] sm:$0xf]
      %v989 = vld [vmem:[%s157 + $0xcb0] sm:$0xf]
      %v990 = vld [vmem:[%s157 + $0xcb4] sm:$0xf]
      %v991 = vld [vmem:[%s157 + $0xcb8] sm:$0xf]
      %v992 = vld [vmem:[%s157 + $0xcbc] sm:$0xf]
      %v993 = vld [vmem:[%s157 + $0xcc0] sm:$0xf]
      %v994 = vld [vmem:[%s157 + $0xcc4] sm:$0xf]
      %v995 = vld [vmem:[%s157 + $0xcc8] sm:$0xf]
      %v996 = vld [vmem:[%s157 + $0xccc] sm:$0xf]
      %v997 = vld [vmem:[%s157 + $0xcd0] sm:$0xf]
      %v998 = vld [vmem:[%s157 + $0xcd4] sm:$0xf]
      %v999 = vld [vmem:[%s157 + $0xcd8] sm:$0xf]
      %v1000 = vld [vmem:[%s157 + $0xcdc] sm:$0xf]
      %v1001 = vld [vmem:[%s157 + $0xce0] sm:$0xf]
      %v1002 = vld [vmem:[%s157 + $0xce4] sm:$0xf]
      %v1003 = vld [vmem:[%s157 + $0xce8] sm:$0xf]
      %v1004 = vld [vmem:[%s157 + $0xcec] sm:$0xf]
      %v1005 = vld [vmem:[%s157 + $0xcf0] sm:$0xf]
      %v1006 = vld [vmem:[%s157 + $0xcf4] sm:$0xf]
      %v1007 = vld [vmem:[%s157 + $0xcf8] sm:$0xf]
      %v1008 = vld [vmem:[%s157 + $0xcfc] sm:$0xf]
      %v1009 = vld [vmem:[%s157 + $0xd00] sm:$0xf]
      %v1010 = vld [vmem:[%s157 + $0xd04] sm:$0xf]
      %v1011 = vld [vmem:[%s157 + $0xd08] sm:$0xf]
      %v1012 = vld [vmem:[%s157 + $0xd0c] sm:$0xf]
      %v1013 = vld [vmem:[%s157 + $0xd10] sm:$0xf]
      %v1014 = vld [vmem:[%s157 + $0xd14] sm:$0xf]
      %v1015 = vld [vmem:[%s157 + $0xd18] sm:$0xf]
      %v1016 = vld [vmem:[%s157 + $0xd1c] sm:$0xf]
      %v1017 = vld [vmem:[%s157 + $0xd20] sm:$0xf]
      %v1018 = vld [vmem:[%s157 + $0xd24] sm:$0xf]
      %v1019 = vld [vmem:[%s157 + $0xd28] sm:$0xf]
      %v1020 = vld [vmem:[%s157 + $0xd2c] sm:$0xf]
      %v1021 = vld [vmem:[%s157 + $0xd30] sm:$0xf]
      %v1022 = vld [vmem:[%s157 + $0xd34] sm:$0xf]
      %v1023 = vld [vmem:[%s157 + $0xd38] sm:$0xf]
      %v1024 = vld [vmem:[%s157 + $0xd3c] sm:$0xf]
      %v1025 = vld [vmem:[%s157 + $0xd40] sm:$0xf]
      %v1026 = vld [vmem:[%s157 + $0xd44] sm:$0xf]
      %v1027 = vld [vmem:[%s157 + $0xd48] sm:$0xf]
      %v1028 = vld [vmem:[%s157 + $0xd4c] sm:$0xf]
      %v1029 = vld [vmem:[%s157 + $0xd50] sm:$0xf]
      %v1030 = vld [vmem:[%s157 + $0xd54] sm:$0xf]
      %v1031 = vld [vmem:[%s157 + $0xd58] sm:$0xf]
      %v1032 = vld [vmem:[%s157 + $0xd5c] sm:$0xf]
      %v1033 = vld [vmem:[%s157 + $0xd60] sm:$0xf]
      %v1034 = vld [vmem:[%s157 + $0xd64] sm:$0xf]
      %v1035 = vld [vmem:[%s157 + $0xd68] sm:$0xf]
      %v1036 = vld [vmem:[%s157 + $0xd6c] sm:$0xf]
      %v1037 = vld [vmem:[%s157 + $0xd70] sm:$0xf]
      %v1038 = vld [vmem:[%s157 + $0xd74] sm:$0xf]
      %v1039 = vld [vmem:[%s157 + $0xd78] sm:$0xf]
      %v1040 = vld [vmem:[%s157 + $0xd7c] sm:$0xf]
      %v1041 = vld [vmem:[%s157 + $0xd80] sm:$0xf]
      %v1042 = vld [vmem:[%s157 + $0xd84] sm:$0xf]
      %v1043 = vld [vmem:[%s157 + $0xd88] sm:$0xf]
      %v1044 = vld [vmem:[%s157 + $0xd8c] sm:$0xf]
      %v1045 = vld [vmem:[%s157 + $0xd90] sm:$0xf]
      %v1046 = vld [vmem:[%s157 + $0xd94] sm:$0xf]
      %v1047 = vld [vmem:[%s157 + $0xd98] sm:$0xf]
      %v1048 = vld [vmem:[%s157 + $0xd9c] sm:$0xf]
      %v1049 = vld [vmem:[%s157 + $0xda0] sm:$0xf]
      %v1050 = vld [vmem:[%s157 + $0xda4] sm:$0xf]
      %v1051 = vld [vmem:[%s157 + $0xda8] sm:$0xf]
      %v1052 = vld [vmem:[%s157 + $0xdac] sm:$0xf]
      %v1053 = vld [vmem:[%s157 + $0xdb0] sm:$0xf]
      %v1054 = vld [vmem:[%s157 + $0xdb4] sm:$0xf]
      %v1055 = vld [vmem:[%s157 + $0xdb8] sm:$0xf]
      %v1056 = vld [vmem:[%s157 + $0xdbc] sm:$0xf]
      %v1057 = vld [vmem:[%s157 + $0xdc0] sm:$0xf]
      %v1058 = vld [vmem:[%s157 + $0xdc4] sm:$0xf]
      %v1059 = vld [vmem:[%s157 + $0xdc8] sm:$0xf]
      %v1060 = vld [vmem:[%s157 + $0xdcc] sm:$0xf]
      %v1061 = vld [vmem:[%s157 + $0xdd0] sm:$0xf]
      %v1062 = vld [vmem:[%s157 + $0xdd4] sm:$0xf]
      %v1063 = vld [vmem:[%s157 + $0xdd8] sm:$0xf]
      %v1064 = vld [vmem:[%s157 + $0xddc] sm:$0xf]
      %v1065 = vld [vmem:[%s157 + $0xde0] sm:$0xf]
      %v1066 = vld [vmem:[%s157 + $0xde4] sm:$0xf]
      %v1067 = vld [vmem:[%s157 + $0xde8] sm:$0xf]
      %v1068 = vld [vmem:[%s157 + $0xdec] sm:$0xf]
      %v1069 = vld [vmem:[%s157 + $0xdf0] sm:$0xf]
      %v1070 = vld [vmem:[%s157 + $0xdf4] sm:$0xf]
      %v1071 = vld [vmem:[%s157 + $0xdf8] sm:$0xf]
      %v1072 = vld [vmem:[%s157 + $0xdfc] sm:$0xf]
      %v1073 = vld [vmem:[%s157 + $0xe00] sm:$0xf]
      %v1074 = vld [vmem:[%s157 + $0xe04] sm:$0xf]
      %v1075 = vld [vmem:[%s157 + $0xe08] sm:$0xf]
      %v1076 = vld [vmem:[%s157 + $0xe0c] sm:$0xf]
      %v1077 = vld [vmem:[%s157 + $0xe10] sm:$0xf]
      %v1078 = vld [vmem:[%s157 + $0xe14] sm:$0xf]
      %v1079 = vld [vmem:[%s157 + $0xe18] sm:$0xf]
      %v1080 = vld [vmem:[%s157 + $0xe1c] sm:$0xf]
      %v1081 = vld [vmem:[%s157 + $0xe20] sm:$0xf]
      %v1082 = vld [vmem:[%s157 + $0xe24] sm:$0xf]
      %v1083 = vld [vmem:[%s157 + $0xe28] sm:$0xf]
      %v1084 = vld [vmem:[%s157 + $0xe2c] sm:$0xf]
      %v1085 = vld [vmem:[%s157 + $0xe30] sm:$0xf]
      %v1086 = vld [vmem:[%s157 + $0xe34] sm:$0xf]
      %v1087 = vld [vmem:[%s157 + $0xe38] sm:$0xf]
      %v1088 = vld [vmem:[%s157 + $0xe3c] sm:$0xf]
      %v1089 = vld [vmem:[%s157 + $0xe40] sm:$0xf]
      %v1090 = vld [vmem:[%s157 + $0xe44] sm:$0xf]
      %v1091 = vld [vmem:[%s157 + $0xe48] sm:$0xf]
      %v1092 = vld [vmem:[%s157 + $0xe4c] sm:$0xf]
      %v1093 = vld [vmem:[%s157 + $0xe50] sm:$0xf]
      %v1094 = vld [vmem:[%s157 + $0xe54] sm:$0xf]
      %v1095 = vld [vmem:[%s157 + $0xe58] sm:$0xf]
      %v1096 = vld [vmem:[%s157 + $0xe5c] sm:$0xf]
      %v1097 = vld [vmem:[%s157 + $0xe60] sm:$0xf]
      %v1098 = vld [vmem:[%s157 + $0xe64] sm:$0xf]
      %v1099 = vld [vmem:[%s157 + $0xe68] sm:$0xf]
      %v1100 = vld [vmem:[%s157 + $0xe6c] sm:$0xf]
      %v1101 = vld [vmem:[%s157 + $0xe70] sm:$0xf]
      %v1102 = vld [vmem:[%s157 + $0xe74] sm:$0xf]
      %v1103 = vld [vmem:[%s157 + $0xe78] sm:$0xf]
      %v1104 = vld [vmem:[%s157 + $0xe7c] sm:$0xf]
      %v1105 = vld [vmem:[%s157 + $0xe80] sm:$0xf]
      %v1106 = vld [vmem:[%s157 + $0xe84] sm:$0xf]
      %v1107 = vld [vmem:[%s157 + $0xe88] sm:$0xf]
      %v1108 = vld [vmem:[%s157 + $0xe8c] sm:$0xf]
      %v1109 = vld [vmem:[%s157 + $0xe90] sm:$0xf]
      %v1110 = vld [vmem:[%s157 + $0xe94] sm:$0xf]
      %v1111 = vld [vmem:[%s157 + $0xe98] sm:$0xf]
      %v1112 = vld [vmem:[%s157 + $0xe9c] sm:$0xf]
      %v1113 = vld [vmem:[%s157 + $0xea0] sm:$0xf]
      %v1114 = vld [vmem:[%s157 + $0xea4] sm:$0xf]
      %v1115 = vld [vmem:[%s157 + $0xea8] sm:$0xf]
      %v1116 = vld [vmem:[%s157 + $0xeac] sm:$0xf]
      %v1117 = vld [vmem:[%s157 + $0xeb0] sm:$0xf]
      %v1118 = vld [vmem:[%s157 + $0xeb4] sm:$0xf]
      %v1119 = vld [vmem:[%s157 + $0xeb8] sm:$0xf]
      %v1120 = vld [vmem:[%s157 + $0xebc] sm:$0xf]
      %v1121 = vld [vmem:[%s157 + $0xec0] sm:$0xf]
      %v1122 = vld [vmem:[%s157 + $0xec4] sm:$0xf]
      %v1123 = vld [vmem:[%s157 + $0xec8] sm:$0xf]
      %v1124 = vld [vmem:[%s157 + $0xecc] sm:$0xf]
      %v1125 = vld [vmem:[%s157 + $0xed0] sm:$0xf]
      %v1126 = vld [vmem:[%s157 + $0xed4] sm:$0xf]
      %v1127 = vld [vmem:[%s157 + $0xed8] sm:$0xf]
      %v1128 = vld [vmem:[%s157 + $0xedc] sm:$0xf]
      %v1129 = vld [vmem:[%s157 + $0xee0] sm:$0xf]
      %v1130 = vld [vmem:[%s157 + $0xee4] sm:$0xf]
      %v1131 = vld [vmem:[%s157 + $0xee8] sm:$0xf]
      %v1132 = vld [vmem:[%s157 + $0xeec] sm:$0xf]
      %v1133 = vld [vmem:[%s157 + $0xef0] sm:$0xf]
      %v1134 = vld [vmem:[%s157 + $0xef4] sm:$0xf]
      %v1135 = vld [vmem:[%s157 + $0xef8] sm:$0xf]
      %v1136 = vld [vmem:[%s157 + $0xefc] sm:$0xf]
      %v1137 = vld [vmem:[%s157 + $0xf00] sm:$0xf]
      %v1138 = vld [vmem:[%s157 + $0xf04] sm:$0xf]
      %v1139 = vld [vmem:[%s157 + $0xf08] sm:$0xf]
      %v1140 = vld [vmem:[%s157 + $0xf0c] sm:$0xf]
      %v1141 = vld [vmem:[%s157 + $0xf10] sm:$0xf]
      %v1142 = vld [vmem:[%s157 + $0xf14] sm:$0xf]
      %v1143 = vld [vmem:[%s157 + $0xf18] sm:$0xf]
      %v1144 = vld [vmem:[%s157 + $0xf1c] sm:$0xf]
      %v1145 = vld [vmem:[%s157 + $0xf20] sm:$0xf]
      %v1146 = vld [vmem:[%s157 + $0xf24] sm:$0xf]
      %v1147 = vld [vmem:[%s157 + $0xf28] sm:$0xf]
      %v1148 = vld [vmem:[%s157 + $0xf2c] sm:$0xf]
      %v1149 = vld [vmem:[%s157 + $0xf30] sm:$0xf]
      %v1150 = vld [vmem:[%s157 + $0xf34] sm:$0xf]
      %v1151 = vld [vmem:[%s157 + $0xf38] sm:$0xf]
      %v1152 = vld [vmem:[%s157 + $0xf3c] sm:$0xf]
      %v1153 = vld [vmem:[%s157 + $0xf40] sm:$0xf]
      %v1154 = vld [vmem:[%s157 + $0xf44] sm:$0xf]
      %v1155 = vld [vmem:[%s157 + $0xf48] sm:$0xf]
      %v1156 = vld [vmem:[%s157 + $0xf4c] sm:$0xf]
      %v1157 = vld [vmem:[%s157 + $0xf50] sm:$0xf]
      %v1158 = vld [vmem:[%s157 + $0xf54] sm:$0xf]
      %v1159 = vld [vmem:[%s157 + $0xf58] sm:$0xf]
      %v1160 = vld [vmem:[%s157 + $0xf5c] sm:$0xf]
      %v1161 = vld [vmem:[%s157 + $0xf60] sm:$0xf]
      %v1162 = vld [vmem:[%s157 + $0xf64] sm:$0xf]
      %v1163 = vld [vmem:[%s157 + $0xf68] sm:$0xf]
      %v1164 = vld [vmem:[%s157 + $0xf6c] sm:$0xf]
      %v1165 = vld [vmem:[%s157 + $0xf70] sm:$0xf]
      %v1166 = vld [vmem:[%s157 + $0xf74] sm:$0xf]
      %v1167 = vld [vmem:[%s157 + $0xf78] sm:$0xf]
      %v1168 = vld [vmem:[%s157 + $0xf7c] sm:$0xf]
      %v1169 = vld [vmem:[%s157 + $0xf80] sm:$0xf]
      %v1170 = vld [vmem:[%s157 + $0xf84] sm:$0xf]
      %v1171 = vld [vmem:[%s157 + $0xf88] sm:$0xf]
      %v1172 = vld [vmem:[%s157 + $0xf8c] sm:$0xf]
      %v1173 = vld [vmem:[%s157 + $0xf90] sm:$0xf]
      %v1174 = vld [vmem:[%s157 + $0xf94] sm:$0xf]
      %v1175 = vld [vmem:[%s157 + $0xf98] sm:$0xf]
      %v1176 = vld [vmem:[%s157 + $0xf9c] sm:$0xf]
      %v1177 = vld [vmem:[%s157 + $0xfa0] sm:$0xf]
      %v1178 = vld [vmem:[%s157 + $0xfa4] sm:$0xf]
      %v1179 = vld [vmem:[%s157 + $0xfa8] sm:$0xf]
      %v1180 = vld [vmem:[%s157 + $0xfac] sm:$0xf]
      %v1181 = vld [vmem:[%s157 + $0xfb0] sm:$0xf]
      %v1182 = vld [vmem:[%s157 + $0xfb4] sm:$0xf]
      %v1183 = vld [vmem:[%s157 + $0xfb8] sm:$0xf]
      %v1184 = vld [vmem:[%s157 + $0xfbc] sm:$0xf]
      %v1185 = vld [vmem:[%s157 + $0xfc0] sm:$0xf]
      %v1186 = vld [vmem:[%s157 + $0xfc4] sm:$0xf]
      %v1187 = vld [vmem:[%s157 + $0xfc8] sm:$0xf]
      %v1188 = vld [vmem:[%s157 + $0xfcc] sm:$0xf]
      %v1189 = vld [vmem:[%s157 + $0xfd0] sm:$0xf]
      %v1190 = vld [vmem:[%s157 + $0xfd4] sm:$0xf]
      %v1191 = vld [vmem:[%s157 + $0xfd8] sm:$0xf]
      %v1192 = vld [vmem:[%s157 + $0xfdc] sm:$0xf]
      %v1193 = vld [vmem:[%s157 + $0xfe0] sm:$0xf]
      %v1194 = vld [vmem:[%s157 + $0xfe4] sm:$0xf]
      %v1195 = vld [vmem:[%s157 + $0xfe8] sm:$0xf]
      %v1196 = vld [vmem:[%s157 + $0xfec] sm:$0xf]
      %v1197 = vld [vmem:[%s157 + $0xff0] sm:$0xf]
      %v1198 = vld [vmem:[%s157 + $0xff4] sm:$0xf]
      %v1199 = vld [vmem:[%s157 + $0xff8] sm:$0xf]
      %v1200 = vld [vmem:[%s157 + $0xffc] sm:$0xf]
      %v1201 = vld [vmem:[%s157 + $0x1000] sm:$0xf]
      %v1202 = vld [vmem:[%s157 + $0x1004] sm:$0xf]
      %v1203 = vld [vmem:[%s157 + $0x1008] sm:$0xf]
      %v1204 = vld [vmem:[%s157 + $0x100c] sm:$0xf]
      %v1205 = vld [vmem:[%s157 + $0x1010] sm:$0xf]
      %v1206 = vld [vmem:[%s157 + $0x1014] sm:$0xf]
      %v1207 = vld [vmem:[%s157 + $0x1018] sm:$0xf]
      %v1208 = vld [vmem:[%s157 + $0x101c] sm:$0xf]
      %v1209 = vld [vmem:[%s157 + $0x1020] sm:$0xf]
      %v1210 = vld [vmem:[%s157 + $0x1024] sm:$0xf]
      %v1211 = vld [vmem:[%s157 + $0x1028] sm:$0xf]
      %v1212 = vld [vmem:[%s157 + $0x102c] sm:$0xf]
      %v1213 = vld [vmem:[%s157 + $0x1030] sm:$0xf]
      %v1214 = vld [vmem:[%s157 + $0x1034] sm:$0xf]
      %v1215 = vld [vmem:[%s157 + $0x1038] sm:$0xf]
      %v1216 = vld [vmem:[%s157 + $0x103c] sm:$0xf]
      %v1217 = vld [vmem:[%s157 + $0x1040] sm:$0xf]
      %v1218 = vld [vmem:[%s157 + $0x1044] sm:$0xf]
      %v1219 = vld [vmem:[%s157 + $0x1048] sm:$0xf]
      %v1220 = vld [vmem:[%s157 + $0x104c] sm:$0xf]
      %v1221 = vld [vmem:[%s157 + $0x1050] sm:$0xf]
      %v1222 = vld [vmem:[%s157 + $0x1054] sm:$0xf]
      %v1223 = vld [vmem:[%s157 + $0x1058] sm:$0xf]
      %v1224 = vld [vmem:[%s157 + $0x105c] sm:$0xf]
      %v1225 = vld [vmem:[%s157 + $0x1060] sm:$0xf]
      %v1226 = vld [vmem:[%s157 + $0x1064] sm:$0xf]
      %v1227 = vld [vmem:[%s157 + $0x1068] sm:$0xf]
      %v1228 = vld [vmem:[%s157 + $0x106c] sm:$0xf]
      %v1229 = vld [vmem:[%s157 + $0x1070] sm:$0xf]
      %v1230 = vld [vmem:[%s157 + $0x1074] sm:$0xf]
      %v1231 = vld [vmem:[%s157 + $0x1078] sm:$0xf]
      %v1232 = vld [vmem:[%s157 + $0x107c] sm:$0xf]
      %v1233 = vld [vmem:[%s157 + $0x1080] sm:$0xf]
      %v1234 = vld [vmem:[%s157 + $0x1084] sm:$0xf]
      %v1235 = vld [vmem:[%s157 + $0x1088] sm:$0xf]
      %v1236 = vld [vmem:[%s157 + $0x108c] sm:$0xf]
      %v1237 = vld [vmem:[%s157 + $0x1090] sm:$0xf]
      %v1238 = vld [vmem:[%s157 + $0x1094] sm:$0xf]
      %v1239 = vld [vmem:[%s157 + $0x1098] sm:$0xf]
      %v1240 = vld [vmem:[%s157 + $0x109c] sm:$0xf]
      %v1241 = vld [vmem:[%s157 + $0x10a0] sm:$0xf]
      %v1242 = vld [vmem:[%s157 + $0x10a4] sm:$0xf]
      %v1243 = vld [vmem:[%s157 + $0x10a8] sm:$0xf]
      %v1244 = vld [vmem:[%s157 + $0x10ac] sm:$0xf]
      %v1245 = vld [vmem:[%s157 + $0x10b0] sm:$0xf]
      %v1246 = vld [vmem:[%s157 + $0x10b4] sm:$0xf]
      %v1247 = vld [vmem:[%s157 + $0x10b8] sm:$0xf]
      %v1248 = vld [vmem:[%s157 + $0x10bc] sm:$0xf]
      %v1249 = vld [vmem:[%s157 + $0x10c0] sm:$0xf]
      %v1250 = vld [vmem:[%s157 + $0x10c4] sm:$0xf]
      %v1251 = vld [vmem:[%s157 + $0x10c8] sm:$0xf]
      %v1252 = vld [vmem:[%s157 + $0x10cc] sm:$0xf]
      %v1253 = vld [vmem:[%s157 + $0x10d0] sm:$0xf]
      %v1254 = vld [vmem:[%s157 + $0x10d4] sm:$0xf]
      %v1255 = vld [vmem:[%s157 + $0x10d8] sm:$0xf]
      %v1256 = vld [vmem:[%s157 + $0x10dc] sm:$0xf]
      %v1257 = vld [vmem:[%s157 + $0x10e0] sm:$0xf]
      %v1258 = vld [vmem:[%s157 + $0x10e4] sm:$0xf]
      %v1259 = vld [vmem:[%s157 + $0x10e8] sm:$0xf]
      %v1260 = vld [vmem:[%s157 + $0x10ec] sm:$0xf]
      %v1261 = vld [vmem:[%s157 + $0x10f0] sm:$0xf]
      %v1262 = vld [vmem:[%s157 + $0x10f4] sm:$0xf]
      %v1263 = vld [vmem:[%s157 + $0x10f8] sm:$0xf]
      %v1264 = vld [vmem:[%s157 + $0x10fc] sm:$0xf]
      %v1265 = vld [vmem:[%s157 + $0x1100] sm:$0xf]
      %v1266 = vld [vmem:[%s157 + $0x1104] sm:$0xf]
      %v1267 = vld [vmem:[%s157 + $0x1108] sm:$0xf]
      %v1268 = vld [vmem:[%s157 + $0x110c] sm:$0xf]
      %v1269 = vld [vmem:[%s157 + $0x1110] sm:$0xf]
      %v1270 = vld [vmem:[%s157 + $0x1114] sm:$0xf]
      %v1271 = vld [vmem:[%s157 + $0x1118] sm:$0xf]
      %v1272 = vld [vmem:[%s157 + $0x111c] sm:$0xf]
      %v1273 = vld [vmem:[%s157 + $0x1120] sm:$0xf]
      %v1274 = vld [vmem:[%s157 + $0x1124] sm:$0xf]
      %v1275 = vld [vmem:[%s157 + $0x1128] sm:$0xf]
      %v1276 = vld [vmem:[%s157 + $0x112c] sm:$0xf]
      %v1277 = vld [vmem:[%s157 + $0x1130] sm:$0xf]
      %v1278 = vld [vmem:[%s157 + $0x1134] sm:$0xf]
      %v1279 = vld [vmem:[%s157 + $0x1138] sm:$0xf]
      %v1280 = vld [vmem:[%s157 + $0x113c] sm:$0xf]
      %v1281 = vld [vmem:[%s157 + $0x1140] sm:$0xf]
      %v1282 = vld [vmem:[%s157 + $0x1144] sm:$0xf]
      %v1283 = vld [vmem:[%s157 + $0x1148] sm:$0xf]
      %v1284 = vld [vmem:[%s157 + $0x114c] sm:$0xf]
      %v1285 = vld [vmem:[%s157 + $0x1150] sm:$0xf]
      %v1286 = vld [vmem:[%s157 + $0x1154] sm:$0xf]
      %v1287 = vld [vmem:[%s157 + $0x1158] sm:$0xf]
      %v1288 = vld [vmem:[%s157 + $0x115c] sm:$0xf]
      %v1289 = vld [vmem:[%s157 + $0x1160] sm:$0xf]
      %v1290 = vld [vmem:[%s157 + $0x1164] sm:$0xf]
      %v1291 = vld [vmem:[%s157 + $0x1168] sm:$0xf]
      %v1292 = vld [vmem:[%s157 + $0x116c] sm:$0xf]
      %v1293 = vld [vmem:[%s157 + $0x1170] sm:$0xf]
      %v1294 = vld [vmem:[%s157 + $0x1174] sm:$0xf]
      %v1295 = vld [vmem:[%s157 + $0x1178] sm:$0xf]
      %v1296 = vld [vmem:[%s157 + $0x117c] sm:$0xf]
      %v1297 = vld [vmem:[%s157 + $0x1180] sm:$0xf]
      %v1298 = vld [vmem:[%s157 + $0x1184] sm:$0xf]
      %v1299 = vld [vmem:[%s157 + $0x1188] sm:$0xf]
      %v1300 = vld [vmem:[%s157 + $0x118c] sm:$0xf]
      %v1301 = vld [vmem:[%s157 + $0x1190] sm:$0xf]
      %v1302 = vld [vmem:[%s157 + $0x1194] sm:$0xf]
      %v1303 = vld [vmem:[%s157 + $0x1198] sm:$0xf]
      %v1304 = vld [vmem:[%s157 + $0x119c] sm:$0xf]
      %v1305 = vld [vmem:[%s157 + $0x11a0] sm:$0xf]
      %v1306 = vld [vmem:[%s157 + $0x11a4] sm:$0xf]
      %v1307 = vld [vmem:[%s157 + $0x11a8] sm:$0xf]
      %v1308 = vld [vmem:[%s157 + $0x11ac] sm:$0xf]
      %v1309 = vld [vmem:[%s157 + $0x11b0] sm:$0xf]
      %v1310 = vld [vmem:[%s157 + $0x11b4] sm:$0xf]
      %v1311 = vld [vmem:[%s157 + $0x11b8] sm:$0xf]
      %v1312 = vld [vmem:[%s157 + $0x11bc] sm:$0xf]
      %v1313 = vld [vmem:[%s157 + $0x11c0] sm:$0xf]
      %v1314 = vld [vmem:[%s157 + $0x11c4] sm:$0xf]
      %v1315 = vld [vmem:[%s157 + $0x11c8] sm:$0xf]
      %v1316 = vld [vmem:[%s157 + $0x11cc] sm:$0xf]
      %v1317 = vld [vmem:[%s157 + $0x11d0] sm:$0xf]
      %v1318 = vld [vmem:[%s157 + $0x11d4] sm:$0xf]
      %v1319 = vld [vmem:[%s157 + $0x11d8] sm:$0xf]
      %v1320 = vld [vmem:[%s157 + $0x11dc] sm:$0xf]
      %v1321 = vld [vmem:[%s157 + $0x11e0] sm:$0xf]
      %v1322 = vld [vmem:[%s157 + $0x11e4] sm:$0xf]
      %v1323 = vld [vmem:[%s157 + $0x11e8] sm:$0xf]
      %v1324 = vld [vmem:[%s157 + $0x11ec] sm:$0xf]
      %v1325 = vld [vmem:[%s157 + $0x11f0] sm:$0xf]
      %v1326 = vld [vmem:[%s157 + $0x11f4] sm:$0xf]
      %v1327 = vld [vmem:[%s157 + $0x11f8] sm:$0xf]
      %v1328 = vld [vmem:[%s157 + $0x11fc] sm:$0xf]
      %v1329 = vld [vmem:[%s157 + $0x1200] sm:$0xf]
      %v1330 = vld [vmem:[%s157 + $0x1204] sm:$0xf]
      %v1331 = vld [vmem:[%s157 + $0x1208] sm:$0xf]
      %v1332 = vld [vmem:[%s157 + $0x120c] sm:$0xf]
      %v1333 = vld [vmem:[%s157 + $0x1210] sm:$0xf]
      %v1334 = vld [vmem:[%s157 + $0x1214] sm:$0xf]
      %v1335 = vld [vmem:[%s157 + $0x1218] sm:$0xf]
      %v1336 = vld [vmem:[%s157 + $0x121c] sm:$0xf]
      %v1337 = vld [vmem:[%s157 + $0x1220] sm:$0xf]
      %v1338 = vld [vmem:[%s157 + $0x1224] sm:$0xf]
      %v1339 = vld [vmem:[%s157 + $0x1228] sm:$0xf]
      %v1340 = vld [vmem:[%s157 + $0x122c] sm:$0xf]
      %v1341 = vld [vmem:[%s157 + $0x1230] sm:$0xf]
      %v1342 = vld [vmem:[%s157 + $0x1234] sm:$0xf]
      %v1343 = vld [vmem:[%s157 + $0x1238] sm:$0xf]
      %v1344 = vld [vmem:[%s157 + $0x123c] sm:$0xf]
      %v1345 = vld [vmem:[%s157 + $0x1240] sm:$0xf]
      %v1346 = vld [vmem:[%s157 + $0x1244] sm:$0xf]
      %v1347 = vld [vmem:[%s157 + $0x1248] sm:$0xf]
      %v1348 = vld [vmem:[%s157 + $0x124c] sm:$0xf]
      %v1349 = vld [vmem:[%s157 + $0x1250] sm:$0xf]
      %v1350 = vld [vmem:[%s157 + $0x1254] sm:$0xf]
      %v1351 = vld [vmem:[%s157 + $0x1258] sm:$0xf]
      %v1352 = vld [vmem:[%s157 + $0x125c] sm:$0xf]
      %v1353 = vld [vmem:[%s157 + $0x1260] sm:$0xf]
      %v1354 = vld [vmem:[%s157 + $0x1264] sm:$0xf]
      %v1355 = vld [vmem:[%s157 + $0x1268] sm:$0xf]
      %v1356 = vld [vmem:[%s157 + $0x126c] sm:$0xf]
      %v1357 = vld [vmem:[%s157 + $0x1270] sm:$0xf]
      %v1358 = vld [vmem:[%s157 + $0x1274] sm:$0xf]
      %v1359 = vld [vmem:[%s157 + $0x1278] sm:$0xf]
      %v1360 = vld [vmem:[%s157 + $0x127c] sm:$0xf]
      %v1361 = vld [vmem:[%s157 + $0x1280] sm:$0xf]
      %v1362 = vld [vmem:[%s157 + $0x1284] sm:$0xf]
      %v1363 = vld [vmem:[%s157 + $0x1288] sm:$0xf]
      %v1364 = vld [vmem:[%s157 + $0x128c] sm:$0xf]
      %v1365 = vld [vmem:[%s157 + $0x1290] sm:$0xf]
      %v1366 = vld [vmem:[%s157 + $0x1294] sm:$0xf]
      %v1367 = vld [vmem:[%s157 + $0x1298] sm:$0xf]
      %v1368 = vld [vmem:[%s157 + $0x129c] sm:$0xf]
      %v1369 = vld [vmem:[%s157 + $0x12a0] sm:$0xf]
      %v1370 = vld [vmem:[%s157 + $0x12a4] sm:$0xf]
      %v1371 = vld [vmem:[%s157 + $0x12a8] sm:$0xf]
      %v1372 = vld [vmem:[%s157 + $0x12ac] sm:$0xf]
      %v1373 = vld [vmem:[%s157 + $0x12b0] sm:$0xf]
      %v1374 = vld [vmem:[%s157 + $0x12b4] sm:$0xf]
      %v1375 = vld [vmem:[%s157 + $0x12b8] sm:$0xf]
      %v1376 = vld [vmem:[%s157 + $0x12bc] sm:$0xf]
      %v1377 = vld [vmem:[%s157 + $0x12c0] sm:$0xf]
      %v1378 = vld [vmem:[%s157 + $0x12c4] sm:$0xf]
      %v1379 = vld [vmem:[%s157 + $0x12c8] sm:$0xf]
      %v1380 = vld [vmem:[%s157 + $0x12cc] sm:$0xf]
      %v1381 = vld [vmem:[%s157 + $0x12d0] sm:$0xf]
      %v1382 = vld [vmem:[%s157 + $0x12d4] sm:$0xf]
      %v1383 = vld [vmem:[%s157 + $0x12d8] sm:$0xf]
      %v1384 = vld [vmem:[%s157 + $0x12dc] sm:$0xf]
      %v1385 = vld [vmem:[%s157 + $0x12e0] sm:$0xf]
      %v1386 = vld [vmem:[%s157 + $0x12e4] sm:$0xf]
      %v1387 = vld [vmem:[%s157 + $0x12e8] sm:$0xf]
      %v1388 = vld [vmem:[%s157 + $0x12ec] sm:$0xf]
      %v1389 = vld [vmem:[%s157 + $0x12f0] sm:$0xf]
      %v1390 = vld [vmem:[%s157 + $0x12f4] sm:$0xf]
      %v1391 = vld [vmem:[%s157 + $0x12f8] sm:$0xf]
      %v1392 = vld [vmem:[%s157 + $0x12fc] sm:$0xf]
      %v1393 = vld [vmem:[%s157 + $0x1300] sm:$0xf]
      %v1394 = vld [vmem:[%s157 + $0x1304] sm:$0xf]
      %v1395 = vld [vmem:[%s157 + $0x1308] sm:$0xf]
      %v1396 = vld [vmem:[%s157 + $0x130c] sm:$0xf]
      %v1397 = vld [vmem:[%s157 + $0x1310] sm:$0xf]
      %v1398 = vld [vmem:[%s157 + $0x1314] sm:$0xf]
      %v1399 = vld [vmem:[%s157 + $0x1318] sm:$0xf]
      %v1400 = vld [vmem:[%s157 + $0x131c] sm:$0xf]
      %v1401 = vld [vmem:[%s157 + $0x1320] sm:$0xf]
      %v1402 = vld [vmem:[%s157 + $0x1324] sm:$0xf]
      %v1403 = vld [vmem:[%s157 + $0x1328] sm:$0xf]
      %v1404 = vld [vmem:[%s157 + $0x132c] sm:$0xf]
      %v1405 = vld [vmem:[%s157 + $0x1330] sm:$0xf]
      %v1406 = vld [vmem:[%s157 + $0x1334] sm:$0xf]
      %v1407 = vld [vmem:[%s157 + $0x1338] sm:$0xf]
      %v1408 = vld [vmem:[%s157 + $0x133c] sm:$0xf]
      %v1409 = vld [vmem:[%s157 + $0x1340] sm:$0xf]
      %v1410 = vld [vmem:[%s157 + $0x1344] sm:$0xf]
      %v1411 = vld [vmem:[%s157 + $0x1348] sm:$0xf]
      %v1412 = vld [vmem:[%s157 + $0x134c] sm:$0xf]
      %v1413 = vld [vmem:[%s157 + $0x1350] sm:$0xf]
      %v1414 = vld [vmem:[%s157 + $0x1354] sm:$0xf]
      %v1415 = vld [vmem:[%s157 + $0x1358] sm:$0xf]
      %v1416 = vld [vmem:[%s157 + $0x135c] sm:$0xf]
      %v1417 = vld [vmem:[%s157 + $0x1360] sm:$0xf]
      %v1418 = vld [vmem:[%s157 + $0x1364] sm:$0xf]
      %v1419 = vld [vmem:[%s157 + $0x1368] sm:$0xf]
      %v1420 = vld [vmem:[%s157 + $0x136c] sm:$0xf]
      %v1421 = vld [vmem:[%s157 + $0x1370] sm:$0xf]
      %v1422 = vld [vmem:[%s157 + $0x1374] sm:$0xf]
      %v1423 = vld [vmem:[%s157 + $0x1378] sm:$0xf]
      %v1424 = vld [vmem:[%s157 + $0x137c] sm:$0xf]
      %v1425 = vld [vmem:[%s157 + $0x1380] sm:$0xf]
      %v1426 = vld [vmem:[%s157 + $0x1384] sm:$0xf]
      %v1427 = vld [vmem:[%s157 + $0x1388] sm:$0xf]
      %v1428 = vld [vmem:[%s157 + $0x138c] sm:$0xf]
      %v1429 = vld [vmem:[%s157 + $0x1390] sm:$0xf]
      %v1430 = vld [vmem:[%s157 + $0x1394] sm:$0xf]
      %v1431 = vld [vmem:[%s157 + $0x1398] sm:$0xf]
      %v1432 = vld [vmem:[%s157 + $0x139c] sm:$0xf]
      %v1433 = vld [vmem:[%s157 + $0x13a0] sm:$0xf]
      %v1434 = vld [vmem:[%s157 + $0x13a4] sm:$0xf]
      %v1435 = vld [vmem:[%s157 + $0x13a8] sm:$0xf]
      %v1436 = vld [vmem:[%s157 + $0x13ac] sm:$0xf]
      %v1437 = vld [vmem:[%s157 + $0x13b0] sm:$0xf]
      %v1438 = vld [vmem:[%s157 + $0x13b4] sm:$0xf]
      %v1439 = vld [vmem:[%s157 + $0x13b8] sm:$0xf]
      %v1440 = vld [vmem:[%s157 + $0x13bc] sm:$0xf]
      %v1441 = vld [vmem:[%s157 + $0x13c0] sm:$0xf]
      %v1442 = vld [vmem:[%s157 + $0x13c4] sm:$0xf]
      %v1443 = vld [vmem:[%s157 + $0x13c8] sm:$0xf]
      %v1444 = vld [vmem:[%s157 + $0x13cc] sm:$0xf]
      %v1445 = vld [vmem:[%s157 + $0x13d0] sm:$0xf]
      %v1446 = vld [vmem:[%s157 + $0x13d4] sm:$0xf]
      %v1447 = vld [vmem:[%s157 + $0x13d8] sm:$0xf]
      %v1448 = vld [vmem:[%s157 + $0x13dc] sm:$0xf]
      %v1449 = vld [vmem:[%s157 + $0x13e0] sm:$0xf]
      %v1450 = vld [vmem:[%s157 + $0x13e4] sm:$0xf]
      %v1451 = vld [vmem:[%s157 + $0x13e8] sm:$0xf]
      %v1452 = vld [vmem:[%s157 + $0x13ec] sm:$0xf]
      %v1453 = vld [vmem:[%s157 + $0x13f0] sm:$0xf]
      %v1454 = vld [vmem:[%s157 + $0x13f4] sm:$0xf]
      %v1455 = vld [vmem:[%s157 + $0x13f8] sm:$0xf]
      %v1456 = vld [vmem:[%s157 + $0x13fc] sm:$0xf]
      %v1457 = vld [vmem:[%s157 + $0x1400] sm:$0xf]
      %v1458 = vld [vmem:[%s157 + $0x1404] sm:$0xf]
      %v1459 = vld [vmem:[%s157 + $0x1408] sm:$0xf]
      %v1460 = vld [vmem:[%s157 + $0x140c] sm:$0xf]
      %v1461 = vld [vmem:[%s157 + $0x1410] sm:$0xf]
      %v1462 = vld [vmem:[%s157 + $0x1414] sm:$0xf]
      %v1463 = vld [vmem:[%s157 + $0x1418] sm:$0xf]
      %v1464 = vld [vmem:[%s157 + $0x141c] sm:$0xf]
      %v1465 = vld [vmem:[%s157 + $0x1420] sm:$0xf]
      %v1466 = vld [vmem:[%s157 + $0x1424] sm:$0xf]
      %v1467 = vld [vmem:[%s157 + $0x1428] sm:$0xf]
      %v1468 = vld [vmem:[%s157 + $0x142c] sm:$0xf]
      %v1469 = vld [vmem:[%s157 + $0x1430] sm:$0xf]
      %v1470 = vld [vmem:[%s157 + $0x1434] sm:$0xf]
      %v1471 = vld [vmem:[%s157 + $0x1438] sm:$0xf]
      %v1472 = vld [vmem:[%s157 + $0x143c] sm:$0xf]
      %v1473 = vld [vmem:[%s157 + $0x1440] sm:$0xf]
      %v1474 = vld [vmem:[%s157 + $0x1444] sm:$0xf]
      %v1475 = vld [vmem:[%s157 + $0x1448] sm:$0xf]
      %v1476 = vld [vmem:[%s157 + $0x144c] sm:$0xf]
      %v1477 = vld [vmem:[%s157 + $0x1450] sm:$0xf]
      %v1478 = vld [vmem:[%s157 + $0x1454] sm:$0xf]
      %v1479 = vld [vmem:[%s157 + $0x1458] sm:$0xf]
      %v1480 = vld [vmem:[%s157 + $0x145c] sm:$0xf]
      %v1481 = vld [vmem:[%s157 + $0x1460] sm:$0xf]
      %v1482 = vld [vmem:[%s157 + $0x1464] sm:$0xf]
      %v1483 = vld [vmem:[%s157 + $0x1468] sm:$0xf]
      %v1484 = vld [vmem:[%s157 + $0x146c] sm:$0xf]
      %v1485 = vld [vmem:[%s157 + $0x1470] sm:$0xf]
      %v1486 = vld [vmem:[%s157 + $0x1474] sm:$0xf]
      %v1487 = vld [vmem:[%s157 + $0x1478] sm:$0xf]
      %v1488 = vld [vmem:[%s157 + $0x147c] sm:$0xf]
      %v1489 = vld [vmem:[%s157 + $0x1480] sm:$0xf]
      %v1490 = vld [vmem:[%s157 + $0x1484] sm:$0xf]
      %v1491 = vld [vmem:[%s157 + $0x1488] sm:$0xf]
      %v1492 = vld [vmem:[%s157 + $0x148c] sm:$0xf]
      %v1493 = vld [vmem:[%s157 + $0x1490] sm:$0xf]
      %v1494 = vld [vmem:[%s157 + $0x1494] sm:$0xf]
      %v1495 = vld [vmem:[%s157 + $0x1498] sm:$0xf]
      %v1496 = vld [vmem:[%s157 + $0x149c] sm:$0xf]
      %v1497 = vld [vmem:[%s157 + $0x14a0] sm:$0xf]
      %v1498 = vld [vmem:[%s157 + $0x14a4] sm:$0xf]
      %v1499 = vld [vmem:[%s157 + $0x14a8] sm:$0xf]
      %v1500 = vld [vmem:[%s157 + $0x14ac] sm:$0xf]
      %v1501 = vld [vmem:[%s157 + $0x14b0] sm:$0xf]
      %v1502 = vld [vmem:[%s157 + $0x14b4] sm:$0xf]
      %v1503 = vld [vmem:[%s157 + $0x14b8] sm:$0xf]
      %v1504 = vld [vmem:[%s157 + $0x14bc] sm:$0xf]
      %v1505 = vld [vmem:[%s157 + $0x14c0] sm:$0xf]
      %v1506 = vld [vmem:[%s157 + $0x14c4] sm:$0xf]
      %v1507 = vld [vmem:[%s157 + $0x14c8] sm:$0xf]
      %v1508 = vld [vmem:[%s157 + $0x14cc] sm:$0xf]
      %v1509 = vld [vmem:[%s157 + $0x14d0] sm:$0xf]
      %v1510 = vld [vmem:[%s157 + $0x14d4] sm:$0xf]
      %v1511 = vld [vmem:[%s157 + $0x14d8] sm:$0xf]
      %v1512 = vld [vmem:[%s157 + $0x14dc] sm:$0xf]
      %v1513 = vld [vmem:[%s157 + $0x14e0] sm:$0xf]
      %v1514 = vld [vmem:[%s157 + $0x14e4] sm:$0xf]
      %v1515 = vld [vmem:[%s157 + $0x14e8] sm:$0xf]
      %v1516 = vld [vmem:[%s157 + $0x14ec] sm:$0xf]
      %v1517 = vld [vmem:[%s157 + $0x14f0] sm:$0xf]
      %v1518 = vld [vmem:[%s157 + $0x14f4] sm:$0xf]
      %v1519 = vld [vmem:[%s157 + $0x14f8] sm:$0xf]
      %v1520 = vld [vmem:[%s157 + $0x14fc] sm:$0xf]
      %v1521 = vld [vmem:[%s157 + $0x1500] sm:$0xf]
      %v1522 = vld [vmem:[%s157 + $0x1504] sm:$0xf]
      %v1523 = vld [vmem:[%s157 + $0x1508] sm:$0xf]
      %v1524 = vld [vmem:[%s157 + $0x150c] sm:$0xf]
      %v1525 = vld [vmem:[%s157 + $0x1510] sm:$0xf]
      %v1526 = vld [vmem:[%s157 + $0x1514] sm:$0xf]
      %v1527 = vld [vmem:[%s157 + $0x1518] sm:$0xf]
      %v1528 = vld [vmem:[%s157 + $0x151c] sm:$0xf]
      %v1529 = vld [vmem:[%s157 + $0x1520] sm:$0xf]
      %v1530 = vld [vmem:[%s157 + $0x1524] sm:$0xf]
      %v1531 = vld [vmem:[%s157 + $0x1528] sm:$0xf]
      %v1532 = vld [vmem:[%s157 + $0x152c] sm:$0xf]
      %v1533 = vld [vmem:[%s157 + $0x1530] sm:$0xf]
      %v1534 = vld [vmem:[%s157 + $0x1534] sm:$0xf]
      %v1535 = vld [vmem:[%s157 + $0x1538] sm:$0xf]
      %v1536 = vld [vmem:[%s157 + $0x153c] sm:$0xf]
      %v1537 = vld [vmem:[%s157 + $0x1540] sm:$0xf]
      %v1538 = vld [vmem:[%s157 + $0x1544] sm:$0xf]
      %v1539 = vld [vmem:[%s157 + $0x1548] sm:$0xf]
      %v1540 = vld [vmem:[%s157 + $0x154c] sm:$0xf]
      %v1541 = vld [vmem:[%s157 + $0x1550] sm:$0xf]
      %v1542 = vld [vmem:[%s157 + $0x1554] sm:$0xf]
      %v1543 = vld [vmem:[%s157 + $0x1558] sm:$0xf]
      %v1544 = vld [vmem:[%s157 + $0x155c] sm:$0xf]
      %v1545 = vld [vmem:[%s157 + $0x1560] sm:$0xf]
      %v1546 = vld [vmem:[%s157 + $0x1564] sm:$0xf]
      %v1547 = vld [vmem:[%s157 + $0x1568] sm:$0xf]
      %v1548 = vld [vmem:[%s157 + $0x156c] sm:$0xf]
      %v1549 = vld [vmem:[%s157 + $0x1570] sm:$0xf]
      %v1550 = vld [vmem:[%s157 + $0x1574] sm:$0xf]
      %v1551 = vld [vmem:[%s157 + $0x1578] sm:$0xf]
      %v1552 = vld [vmem:[%s157 + $0x157c] sm:$0xf]
      %v1553 = vld [vmem:[%s157 + $0x1580] sm:$0xf]
      %v1554 = vld [vmem:[%s157 + $0x1584] sm:$0xf]
      %v1555 = vld [vmem:[%s157 + $0x1588] sm:$0xf]
      %v1556 = vld [vmem:[%s157 + $0x158c] sm:$0xf]
      %v1557 = vld [vmem:[%s157 + $0x1590] sm:$0xf]
      %v1558 = vld [vmem:[%s157 + $0x1594] sm:$0xf]
      %v1559 = vld [vmem:[%s157 + $0x1598] sm:$0xf]
      %v1560 = vld [vmem:[%s157 + $0x159c] sm:$0xf]
      %v1561 = vld [vmem:[%s157 + $0x15a0] sm:$0xf]
      %v1562 = vld [vmem:[%s157 + $0x15a4] sm:$0xf]
      %v1563 = vld [vmem:[%s157 + $0x15a8] sm:$0xf]
      %v1564 = vld [vmem:[%s157 + $0x15ac] sm:$0xf]
      %v1565 = vld [vmem:[%s157 + $0x15b0] sm:$0xf]
      %v1566 = vld [vmem:[%s157 + $0x15b4] sm:$0xf]
      %v1567 = vld [vmem:[%s157 + $0x15b8] sm:$0xf]
      %v1568 = vld [vmem:[%s157 + $0x15bc] sm:$0xf]
      %v1569 = vld [vmem:[%s157 + $0x15c0] sm:$0xf]
      %v1570 = vld [vmem:[%s157 + $0x15c4] sm:$0xf]
      %v1571 = vld [vmem:[%s157 + $0x15c8] sm:$0xf]
      %v1572 = vld [vmem:[%s157 + $0x15cc] sm:$0xf]
      %v1573 = vld [vmem:[%s157 + $0x15d0] sm:$0xf]
      %v1574 = vld [vmem:[%s157 + $0x15d4] sm:$0xf]
      %v1575 = vld [vmem:[%s157 + $0x15d8] sm:$0xf]
      %v1576 = vld [vmem:[%s157 + $0x15dc] sm:$0xf]
      %v1577 = vld [vmem:[%s157 + $0x15e0] sm:$0xf]
      %v1578 = vld [vmem:[%s157 + $0x15e4] sm:$0xf]
      %v1579 = vld [vmem:[%s157 + $0x15e8] sm:$0xf]
      %v1580 = vld [vmem:[%s157 + $0x15ec] sm:$0xf]
      %v1581 = vld [vmem:[%s157 + $0x15f0] sm:$0xf]
      %v1582 = vld [vmem:[%s157 + $0x15f4] sm:$0xf]
      %v1583 = vld [vmem:[%s157 + $0x15f8] sm:$0xf]
      %v1584 = vld [vmem:[%s157 + $0x15fc] sm:$0xf]
      %v1585 = vld [vmem:[%s157 + $0x1600] sm:$0xf]
      %v1586 = vld [vmem:[%s157 + $0x1604] sm:$0xf]
      %v1587 = vld [vmem:[%s157 + $0x1608] sm:$0xf]
      %v1588 = vld [vmem:[%s157 + $0x160c] sm:$0xf]
      %v1589 = vld [vmem:[%s157 + $0x1610] sm:$0xf]
      %v1590 = vld [vmem:[%s157 + $0x1614] sm:$0xf]
      %v1591 = vld [vmem:[%s157 + $0x1618] sm:$0xf]
      %v1592 = vld [vmem:[%s157 + $0x161c] sm:$0xf]
      %v1593 = vld [vmem:[%s157 + $0x1620] sm:$0xf]
      %v1594 = vld [vmem:[%s157 + $0x1624] sm:$0xf]
      %v1595 = vld [vmem:[%s157 + $0x1628] sm:$0xf]
      %v1596 = vld [vmem:[%s157 + $0x162c] sm:$0xf]
      %v1597 = vld [vmem:[%s157 + $0x1630] sm:$0xf]
      %v1598 = vld [vmem:[%s157 + $0x1634] sm:$0xf]
      %v1599 = vld [vmem:[%s157 + $0x1638] sm:$0xf]
      %v1600 = vld [vmem:[%s157 + $0x163c] sm:$0xf]
      %v1601 = vld [vmem:[%s157 + $0x1640] sm:$0xf]
      %v1602 = vld [vmem:[%s157 + $0x1644] sm:$0xf]
      %v1603 = vld [vmem:[%s157 + $0x1648] sm:$0xf]
      %v1604 = vld [vmem:[%s157 + $0x164c] sm:$0xf]
      %v1605 = vld [vmem:[%s157 + $0x1650] sm:$0xf]
      %v1606 = vld [vmem:[%s157 + $0x1654] sm:$0xf]
      %v1607 = vld [vmem:[%s157 + $0x1658] sm:$0xf]
      %v1608 = vld [vmem:[%s157 + $0x165c] sm:$0xf]
      %v1609 = vld [vmem:[%s157 + $0x1660] sm:$0xf]
      %v1610 = vld [vmem:[%s157 + $0x1664] sm:$0xf]
      %v1611 = vld [vmem:[%s157 + $0x1668] sm:$0xf]
      %v1612 = vld [vmem:[%s157 + $0x166c] sm:$0xf]
      %v1613 = vld [vmem:[%s157 + $0x1670] sm:$0xf]
      %v1614 = vld [vmem:[%s157 + $0x1674] sm:$0xf]
      %v1615 = vld [vmem:[%s157 + $0x1678] sm:$0xf]
      %v1616 = vld [vmem:[%s157 + $0x167c] sm:$0xf]
      %v1617 = vld [vmem:[%s157 + $0x1680] sm:$0xf]
      %v1618 = vld [vmem:[%s157 + $0x1684] sm:$0xf]
      %v1619 = vld [vmem:[%s157 + $0x1688] sm:$0xf]
      %v1620 = vld [vmem:[%s157 + $0x168c] sm:$0xf]
      %v1621 = vld [vmem:[%s157 + $0x1690] sm:$0xf]
      %v1622 = vld [vmem:[%s157 + $0x1694] sm:$0xf]
      %v1623 = vld [vmem:[%s157 + $0x1698] sm:$0xf]
      %v1624 = vld [vmem:[%s157 + $0x169c] sm:$0xf]
      %v1625 = vld [vmem:[%s157 + $0x16a0] sm:$0xf]
      %v1626 = vld [vmem:[%s157 + $0x16a4] sm:$0xf]
      %v1627 = vld [vmem:[%s157 + $0x16a8] sm:$0xf]
      %v1628 = vld [vmem:[%s157 + $0x16ac] sm:$0xf]
      %v1629 = vld [vmem:[%s157 + $0x16b0] sm:$0xf]
      %v1630 = vld [vmem:[%s157 + $0x16b4] sm:$0xf]
      %v1631 = vld [vmem:[%s157 + $0x16b8] sm:$0xf]
      %v1632 = vld [vmem:[%s157 + $0x16bc] sm:$0xf]
      %v1633 = vld [vmem:[%s157 + $0x16c0] sm:$0xf]
      %v1634 = vld [vmem:[%s157 + $0x16c4] sm:$0xf]
      %v1635 = vld [vmem:[%s157 + $0x16c8] sm:$0xf]
      %v1636 = vld [vmem:[%s157 + $0x16cc] sm:$0xf]
      %v1637 = vld [vmem:[%s157 + $0x16d0] sm:$0xf]
      %v1638 = vld [vmem:[%s157 + $0x16d4] sm:$0xf]
      %v1639 = vld [vmem:[%s157 + $0x16d8] sm:$0xf]
      %v1640 = vld [vmem:[%s157 + $0x16dc] sm:$0xf]
      %v1641 = vld [vmem:[%s157 + $0x16e0] sm:$0xf]
      %v1642 = vld [vmem:[%s157 + $0x16e4] sm:$0xf]
      %v1643 = vld [vmem:[%s157 + $0x16e8] sm:$0xf]
      %v1644 = vld [vmem:[%s157 + $0x16ec] sm:$0xf]
      %v1645 = vld [vmem:[%s157 + $0x16f0] sm:$0xf]
      %v1646 = vld [vmem:[%s157 + $0x16f4] sm:$0xf]
      %v1647 = vld [vmem:[%s157 + $0x16f8] sm:$0xf]
      %v1648 = vld [vmem:[%s157 + $0x16fc] sm:$0xf]
      %v1649 = vld [vmem:[%s157 + $0x1700] sm:$0xf]
      %v1650 = vld [vmem:[%s157 + $0x1704] sm:$0xf]
      %v1651 = vld [vmem:[%s157 + $0x1708] sm:$0xf]
      %v1652 = vld [vmem:[%s157 + $0x170c] sm:$0xf]
      %v1653 = vld [vmem:[%s157 + $0x1710] sm:$0xf]
      %v1654 = vld [vmem:[%s157 + $0x1714] sm:$0xf]
      %v1655 = vld [vmem:[%s157 + $0x1718] sm:$0xf]
      %v1656 = vld [vmem:[%s157 + $0x171c] sm:$0xf]
      %v1657 = vld [vmem:[%s157 + $0x1720] sm:$0xf]
      %v1658 = vld [vmem:[%s157 + $0x1724] sm:$0xf]
      %v1659 = vld [vmem:[%s157 + $0x1728] sm:$0xf]
      %v1660 = vld [vmem:[%s157 + $0x172c] sm:$0xf]
      %v1661 = vld [vmem:[%s157 + $0x1730] sm:$0xf]
      %v1662 = vld [vmem:[%s157 + $0x1734] sm:$0xf]
      %v1663 = vld [vmem:[%s157 + $0x1738] sm:$0xf]
      %v1664 = vld [vmem:[%s157 + $0x173c] sm:$0xf]
      %v1665 = vld [vmem:[%s157 + $0x1740] sm:$0xf]
      %v1666 = vld [vmem:[%s157 + $0x1744] sm:$0xf]
      %v1667 = vld [vmem:[%s157 + $0x1748] sm:$0xf]
      %v1668 = vld [vmem:[%s157 + $0x174c] sm:$0xf]
      %v1669 = vld [vmem:[%s157 + $0x1750] sm:$0xf]
      %v1670 = vld [vmem:[%s157 + $0x1754] sm:$0xf]
      %v1671 = vld [vmem:[%s157 + $0x1758] sm:$0xf]
      %v1672 = vld [vmem:[%s157 + $0x175c] sm:$0xf]
      %v1673 = vld [vmem:[%s157 + $0x1760] sm:$0xf]
      %v1674 = vld [vmem:[%s157 + $0x1764] sm:$0xf]
      %v1675 = vld [vmem:[%s157 + $0x1768] sm:$0xf]
      %v1676 = vld [vmem:[%s157 + $0x176c] sm:$0xf]
      %v1677 = vld [vmem:[%s157 + $0x1770] sm:$0xf]
      %v1678 = vld [vmem:[%s157 + $0x1774] sm:$0xf]
      %v1679 = vld [vmem:[%s157 + $0x1778] sm:$0xf]
      %v1680 = vld [vmem:[%s157 + $0x177c] sm:$0xf]
      %v1681 = vld [vmem:[%s157 + $0x1780] sm:$0xf]
      %v1682 = vld [vmem:[%s157 + $0x1784] sm:$0xf]
      %v1683 = vld [vmem:[%s157 + $0x1788] sm:$0xf]
      %v1684 = vld [vmem:[%s157 + $0x178c] sm:$0xf]
      %v1685 = vld [vmem:[%s157 + $0x1790] sm:$0xf]
      %v1686 = vld [vmem:[%s157 + $0x1794] sm:$0xf]
      %v1687 = vld [vmem:[%s157 + $0x1798] sm:$0xf]
      %v1688 = vld [vmem:[%s157 + $0x179c] sm:$0xf]
      %v1689 = vld [vmem:[%s157 + $0x17a0] sm:$0xf]
      %v1690 = vld [vmem:[%s157 + $0x17a4] sm:$0xf]
      %v1691 = vld [vmem:[%s157 + $0x17a8] sm:$0xf]
      %v1692 = vld [vmem:[%s157 + $0x17ac] sm:$0xf]
      %v1693 = vld [vmem:[%s157 + $0x17b0] sm:$0xf]
      %v1694 = vld [vmem:[%s157 + $0x17b4] sm:$0xf]
      %v1695 = vld [vmem:[%s157 + $0x17b8] sm:$0xf]
      %v1696 = vld [vmem:[%s157 + $0x17bc] sm:$0xf]
      %v1697 = vld [vmem:[%s157 + $0x17c0] sm:$0xf]
      %v1698 = vld [vmem:[%s157 + $0x17c4] sm:$0xf]
      %v1699 = vld [vmem:[%s157 + $0x17c8] sm:$0xf]
      %v1700 = vld [vmem:[%s157 + $0x17cc] sm:$0xf]
      %v1701 = vld [vmem:[%s157 + $0x17d0] sm:$0xf]
      %v1702 = vld [vmem:[%s157 + $0x17d4] sm:$0xf]
      %v1703 = vld [vmem:[%s157 + $0x17d8] sm:$0xf]
      %v1704 = vld [vmem:[%s157 + $0x17dc] sm:$0xf]
      %v1705 = vld [vmem:[%s157 + $0x17e0] sm:$0xf]
      %v1706 = vld [vmem:[%s157 + $0x17e4] sm:$0xf]
      %v1707 = vld [vmem:[%s157 + $0x17e8] sm:$0xf]
      %v1708 = vld [vmem:[%s157 + $0x17ec] sm:$0xf]
      %v1709 = vld [vmem:[%s157 + $0x17f0] sm:$0xf]
      %v1710 = vld [vmem:[%s157 + $0x17f4] sm:$0xf]
      %v1711 = vld [vmem:[%s157 + $0x17f8] sm:$0xf]
      %v1712 = vld [vmem:[%s157 + $0x17fc] sm:$0xf]
      %v1713 = vld [vmem:[%s157 + $0x1800] sm:$0xf]
      %v1714 = vld [vmem:[%s157 + $0x1804] sm:$0xf]
      %v1715 = vld [vmem:[%s157 + $0x1808] sm:$0xf]
      %v1716 = vld [vmem:[%s157 + $0x180c] sm:$0xf]
      %v1717 = vld [vmem:[%s157 + $0x1810] sm:$0xf]
      %v1718 = vld [vmem:[%s157 + $0x1814] sm:$0xf]
      %v1719 = vld [vmem:[%s157 + $0x1818] sm:$0xf]
      %v1720 = vld [vmem:[%s157 + $0x181c] sm:$0xf]
      %v1721 = vld [vmem:[%s157 + $0x1820] sm:$0xf]
      %v1722 = vld [vmem:[%s157 + $0x1824] sm:$0xf]
      %v1723 = vld [vmem:[%s157 + $0x1828] sm:$0xf]
      %v1724 = vld [vmem:[%s157 + $0x182c] sm:$0xf]
      %v1725 = vld [vmem:[%s157 + $0x1830] sm:$0xf]
      %v1726 = vld [vmem:[%s157 + $0x1834] sm:$0xf]
      %v1727 = vld [vmem:[%s157 + $0x1838] sm:$0xf]
      %v1728 = vld [vmem:[%s157 + $0x183c] sm:$0xf]
      %v1729 = vld [vmem:[%s157 + $0x1840] sm:$0xf]
      %v1730 = vld [vmem:[%s157 + $0x1844] sm:$0xf]
      %v1731 = vld [vmem:[%s157 + $0x1848] sm:$0xf]
      %v1732 = vld [vmem:[%s157 + $0x184c] sm:$0xf]
      %v1733 = vld [vmem:[%s157 + $0x1850] sm:$0xf]
      %v1734 = vld [vmem:[%s157 + $0x1854] sm:$0xf]
      %v1735 = vld [vmem:[%s157 + $0x1858] sm:$0xf]
      %v1736 = vld [vmem:[%s157 + $0x185c] sm:$0xf]
      %v1737 = vld [vmem:[%s157 + $0x1860] sm:$0xf]
      %v1738 = vld [vmem:[%s157 + $0x1864] sm:$0xf]
      %v1739 = vld [vmem:[%s157 + $0x1868] sm:$0xf]
      %v1740 = vld [vmem:[%s157 + $0x186c] sm:$0xf]
      %v1741 = vld [vmem:[%s157 + $0x1870] sm:$0xf]
      %v1742 = vld [vmem:[%s157 + $0x1874] sm:$0xf]
      %v1743 = vld [vmem:[%s157 + $0x1878] sm:$0xf]
      %v1744 = vld [vmem:[%s157 + $0x187c] sm:$0xf]
      %v1758 = vcombine.high %v164, %v164
      %v1760 = vunpack.c.l.s4 1966171168
      %v1761 = vunpack.c.0.s8 %v1760
      %v1762 = vlaneseq
      %v1763 = vshrl.u32 %v1762, 7
      %v1764 = vsub.s32 %v1761, %v1763
      %v1765 = vrot.slane %v164, %v1764
      %v1767 = vunpack.c.l.s4 1966171168
      %v1768 = vunpack.c.0.s8 %v1767
      %v1769 = vlaneseq
      %v1770 = vshrl.u32 %v1769, 7
      %v1771 = vsub.s32 %v1768, %v1770
      %v1772 = vrot.slane %v1758, %v1771
      %v1773 = vcombine.high %v1765, %v1765
      %v1774 = vcombine.high %v1772, %v1772
      %v1776 = vunpack.c.l.s4 1966171168
      %v1777 = vunpack.c.0.s8 %v1776
      %v1778 = vlaneseq
      %v1779 = vshrl.u32 %v1778, 7
      %v1780 = vsub.s32 %v1777, %v1779
      %v1781 = vrot.slane %v1765, %v1780
      %v1783 = vunpack.c.l.s4 1966171168
      %v1784 = vunpack.c.0.s8 %v1783
      %v1785 = vlaneseq
      %v1786 = vshrl.u32 %v1785, 7
      %v1787 = vsub.s32 %v1784, %v1786
      %v1788 = vrot.slane %v1772, %v1787
      %v1790 = vunpack.c.l.s4 1966171168
      %v1791 = vunpack.c.0.s8 %v1790
      %v1792 = vlaneseq
      %v1793 = vshrl.u32 %v1792, 7
      %v1794 = vsub.s32 %v1791, %v1793
      %v1795 = vrot.slane %v1773, %v1794
      %v1797 = vunpack.c.l.s4 1966171168
      %v1798 = vunpack.c.0.s8 %v1797
      %v1799 = vlaneseq
      %v1800 = vshrl.u32 %v1799, 7
      %v1801 = vsub.s32 %v1798, %v1800
      %v1802 = vrot.slane %v1774, %v1801
      %v1803 = vcombine.high %v1781, %v1781
      %v1804 = vcombine.high %v1788, %v1788
      %v1805 = vcombine.high %v1795, %v1795
      %v1806 = vcombine.high %v1802, %v1802
      %v1807 = vcombine.high %v165, %v165
      %v1809 = vunpack.c.l.s4 1966171168
      %v1810 = vunpack.c.0.s8 %v1809
      %v1811 = vlaneseq
      %v1812 = vshrl.u32 %v1811, 7
      %v1813 = vsub.s32 %v1810, %v1812
      %v1814 = vrot.slane %v165, %v1813
      %v1816 = vunpack.c.l.s4 1966171168
      %v1817 = vunpack.c.0.s8 %v1816
      %v1818 = vlaneseq
      %v1819 = vshrl.u32 %v1818, 7
      %v1820 = vsub.s32 %v1817, %v1819
      %v1821 = vrot.slane %v1807, %v1820
      %v1822 = vcombine.high %v1814, %v1814
      %v1823 = vcombine.high %v1821, %v1821
      %v1825 = vunpack.c.l.s4 1966171168
      %v1826 = vunpack.c.0.s8 %v1825
      %v1827 = vlaneseq
      %v1828 = vshrl.u32 %v1827, 7
      %v1829 = vsub.s32 %v1826, %v1828
      %v1830 = vrot.slane %v1814, %v1829
      %v1832 = vunpack.c.l.s4 1966171168
      %v1833 = vunpack.c.0.s8 %v1832
      %v1834 = vlaneseq
      %v1835 = vshrl.u32 %v1834, 7
      %v1836 = vsub.s32 %v1833, %v1835
      %v1837 = vrot.slane %v1821, %v1836
      %v1839 = vunpack.c.l.s4 1966171168
      %v1840 = vunpack.c.0.s8 %v1839
      %v1841 = vlaneseq
      %v1842 = vshrl.u32 %v1841, 7
      %v1843 = vsub.s32 %v1840, %v1842
      %v1844 = vrot.slane %v1822, %v1843
      %v1846 = vunpack.c.l.s4 1966171168
      %v1847 = vunpack.c.0.s8 %v1846
      %v1848 = vlaneseq
      %v1849 = vshrl.u32 %v1848, 7
      %v1850 = vsub.s32 %v1847, %v1849
      %v1851 = vrot.slane %v1823, %v1850
      %v1852 = vcombine.high %v1830, %v1830
      %v1853 = vcombine.high %v1837, %v1837
      %v1854 = vcombine.high %v1844, %v1844
      %v1855 = vcombine.high %v1851, %v1851
      %v1856 = vcombine.high %v166, %v166
      %v1858 = vunpack.c.l.s4 1966171168
      %v1859 = vunpack.c.0.s8 %v1858
      %v1860 = vlaneseq
      %v1861 = vshrl.u32 %v1860, 7
      %v1862 = vsub.s32 %v1859, %v1861
      %v1863 = vrot.slane %v166, %v1862
      %v1865 = vunpack.c.l.s4 1966171168
      %v1866 = vunpack.c.0.s8 %v1865
      %v1867 = vlaneseq
      %v1868 = vshrl.u32 %v1867, 7
      %v1869 = vsub.s32 %v1866, %v1868
      %v1870 = vrot.slane %v1856, %v1869
      %v1871 = vcombine.high %v1863, %v1863
      %v1872 = vcombine.high %v1870, %v1870
      %v1874 = vunpack.c.l.s4 1966171168
      %v1875 = vunpack.c.0.s8 %v1874
      %v1876 = vlaneseq
      %v1877 = vshrl.u32 %v1876, 7
      %v1878 = vsub.s32 %v1875, %v1877
      %v1879 = vrot.slane %v1863, %v1878
      %v1881 = vunpack.c.l.s4 1966171168
      %v1882 = vunpack.c.0.s8 %v1881
      %v1883 = vlaneseq
      %v1884 = vshrl.u32 %v1883, 7
      %v1885 = vsub.s32 %v1882, %v1884
      %v1886 = vrot.slane %v1870, %v1885
      %v1888 = vunpack.c.l.s4 1966171168
      %v1889 = vunpack.c.0.s8 %v1888
      %v1890 = vlaneseq
      %v1891 = vshrl.u32 %v1890, 7
      %v1892 = vsub.s32 %v1889, %v1891
      %v1893 = vrot.slane %v1871, %v1892
      %v1895 = vunpack.c.l.s4 1966171168
      %v1896 = vunpack.c.0.s8 %v1895
      %v1897 = vlaneseq
      %v1898 = vshrl.u32 %v1897, 7
      %v1899 = vsub.s32 %v1896, %v1898
      %v1900 = vrot.slane %v1872, %v1899
      %v1901 = vcombine.high %v1879, %v1879
      %v1902 = vcombine.high %v1886, %v1886
      %v1903 = vcombine.high %v1893, %v1893
      %v1904 = vcombine.high %v1900, %v1900
      %v1905 = vcombine.high %v167, %v167
      %v1907 = vunpack.c.l.s4 1966171168
      %v1908 = vunpack.c.0.s8 %v1907
      %v1909 = vlaneseq
      %v1910 = vshrl.u32 %v1909, 7
      %v1911 = vsub.s32 %v1908, %v1910
      %v1912 = vrot.slane %v167, %v1911
      %v1914 = vunpack.c.l.s4 1966171168
      %v1915 = vunpack.c.0.s8 %v1914
      %v1916 = vlaneseq
      %v1917 = vshrl.u32 %v1916, 7
      %v1918 = vsub.s32 %v1915, %v1917
      %v1919 = vrot.slane %v1905, %v1918
      %v1920 = vcombine.high %v1912, %v1912
      %v1921 = vcombine.high %v1919, %v1919
      %v1923 = vunpack.c.l.s4 1966171168
      %v1924 = vunpack.c.0.s8 %v1923
      %v1925 = vlaneseq
      %v1926 = vshrl.u32 %v1925, 7
      %v1927 = vsub.s32 %v1924, %v1926
      %v1928 = vrot.slane %v1912, %v1927
      %v1930 = vunpack.c.l.s4 1966171168
      %v1931 = vunpack.c.0.s8 %v1930
      %v1932 = vlaneseq
      %v1933 = vshrl.u32 %v1932, 7
      %v1934 = vsub.s32 %v1931, %v1933
      %v1935 = vrot.slane %v1919, %v1934
      %v1937 = vunpack.c.l.s4 1966171168
      %v1938 = vunpack.c.0.s8 %v1937
      %v1939 = vlaneseq
      %v1940 = vshrl.u32 %v1939, 7
      %v1941 = vsub.s32 %v1938, %v1940
      %v1942 = vrot.slane %v1920, %v1941
      %v1944 = vunpack.c.l.s4 1966171168
      %v1945 = vunpack.c.0.s8 %v1944
      %v1946 = vlaneseq
      %v1947 = vshrl.u32 %v1946, 7
      %v1948 = vsub.s32 %v1945, %v1947
      %v1949 = vrot.slane %v1921, %v1948
      %v1950 = vcombine.high %v1928, %v1928
      %v1951 = vcombine.high %v1935, %v1935
      %v1952 = vcombine.high %v1942, %v1942
      %v1953 = vcombine.high %v1949, %v1949
      %v1954 = vcombine.high %v168, %v168
      %v1956 = vunpack.c.l.s4 1966171168
      %v1957 = vunpack.c.0.s8 %v1956
      %v1958 = vlaneseq
      %v1959 = vshrl.u32 %v1958, 7
      %v1960 = vsub.s32 %v1957, %v1959
      %v1961 = vrot.slane %v168, %v1960
      %v1963 = vunpack.c.l.s4 1966171168
      %v1964 = vunpack.c.0.s8 %v1963
      %v1965 = vlaneseq
      %v1966 = vshrl.u32 %v1965, 7
      %v1967 = vsub.s32 %v1964, %v1966
      %v1968 = vrot.slane %v1954, %v1967
      %v1969 = vcombine.high %v1961, %v1961
      %v1970 = vcombine.high %v1968, %v1968
      %v1972 = vunpack.c.l.s4 1966171168
      %v1973 = vunpack.c.0.s8 %v1972
      %v1974 = vlaneseq
      %v1975 = vshrl.u32 %v1974, 7
      %v1976 = vsub.s32 %v1973, %v1975
      %v1977 = vrot.slane %v1961, %v1976
      %v1979 = vunpack.c.l.s4 1966171168
      %v1980 = vunpack.c.0.s8 %v1979
      %v1981 = vlaneseq
      %v1982 = vshrl.u32 %v1981, 7
      %v1983 = vsub.s32 %v1980, %v1982
      %v1984 = vrot.slane %v1968, %v1983
      %v1986 = vunpack.c.l.s4 1966171168
      %v1987 = vunpack.c.0.s8 %v1986
      %v1988 = vlaneseq
      %v1989 = vshrl.u32 %v1988, 7
      %v1990 = vsub.s32 %v1987, %v1989
      %v1991 = vrot.slane %v1969, %v1990
      %v1993 = vunpack.c.l.s4 1966171168
      %v1994 = vunpack.c.0.s8 %v1993
      %v1995 = vlaneseq
      %v1996 = vshrl.u32 %v1995, 7
      %v1997 = vsub.s32 %v1994, %v1996
      %v1998 = vrot.slane %v1970, %v1997
      %v1999 = vcombine.high %v1977, %v1977
      %v2000 = vcombine.high %v1984, %v1984
      %v2001 = vcombine.high %v1991, %v1991
      %v2002 = vcombine.high %v1998, %v1998
      %v2003 = vcombine.high %v169, %v169
      %v2005 = vunpack.c.l.s4 1966171168
      %v2006 = vunpack.c.0.s8 %v2005
      %v2007 = vlaneseq
      %v2008 = vshrl.u32 %v2007, 7
      %v2009 = vsub.s32 %v2006, %v2008
      %v2010 = vrot.slane %v169, %v2009
      %v2012 = vunpack.c.l.s4 1966171168
      %v2013 = vunpack.c.0.s8 %v2012
      %v2014 = vlaneseq
      %v2015 = vshrl.u32 %v2014, 7
      %v2016 = vsub.s32 %v2013, %v2015
      %v2017 = vrot.slane %v2003, %v2016
      %v2018 = vcombine.high %v2010, %v2010
      %v2019 = vcombine.high %v2017, %v2017
      %v2021 = vunpack.c.l.s4 1966171168
      %v2022 = vunpack.c.0.s8 %v2021
      %v2023 = vlaneseq
      %v2024 = vshrl.u32 %v2023, 7
      %v2025 = vsub.s32 %v2022, %v2024
      %v2026 = vrot.slane %v2010, %v2025
      %v2028 = vunpack.c.l.s4 1966171168
      %v2029 = vunpack.c.0.s8 %v2028
      %v2030 = vlaneseq
      %v2031 = vshrl.u32 %v2030, 7
      %v2032 = vsub.s32 %v2029, %v2031
      %v2033 = vrot.slane %v2017, %v2032
      %v2035 = vunpack.c.l.s4 1966171168
      %v2036 = vunpack.c.0.s8 %v2035
      %v2037 = vlaneseq
      %v2038 = vshrl.u32 %v2037, 7
      %v2039 = vsub.s32 %v2036, %v2038
      %v2040 = vrot.slane %v2018, %v2039
      %v2042 = vunpack.c.l.s4 1966171168
      %v2043 = vunpack.c.0.s8 %v2042
      %v2044 = vlaneseq
      %v2045 = vshrl.u32 %v2044, 7
      %v2046 = vsub.s32 %v2043, %v2045
      %v2047 = vrot.slane %v2019, %v2046
      %v2048 = vcombine.high %v2026, %v2026
      %v2049 = vcombine.high %v2033, %v2033
      %v2050 = vcombine.high %v2040, %v2040
      %v2051 = vcombine.high %v2047, %v2047
      %v2052 = vcombine.high %v170, %v170
      %v2054 = vunpack.c.l.s4 1966171168
      %v2055 = vunpack.c.0.s8 %v2054
      %v2056 = vlaneseq
      %v2057 = vshrl.u32 %v2056, 7
      %v2058 = vsub.s32 %v2055, %v2057
      %v2059 = vrot.slane %v170, %v2058
      %v2061 = vunpack.c.l.s4 1966171168
      %v2062 = vunpack.c.0.s8 %v2061
      %v2063 = vlaneseq
      %v2064 = vshrl.u32 %v2063, 7
      %v2065 = vsub.s32 %v2062, %v2064
      %v2066 = vrot.slane %v2052, %v2065
      %v2067 = vcombine.high %v2059, %v2059
      %v2068 = vcombine.high %v2066, %v2066
      %v2070 = vunpack.c.l.s4 1966171168
      %v2071 = vunpack.c.0.s8 %v2070
      %v2072 = vlaneseq
      %v2073 = vshrl.u32 %v2072, 7
      %v2074 = vsub.s32 %v2071, %v2073
      %v2075 = vrot.slane %v2059, %v2074
      %v2077 = vunpack.c.l.s4 1966171168
      %v2078 = vunpack.c.0.s8 %v2077
      %v2079 = vlaneseq
      %v2080 = vshrl.u32 %v2079, 7
      %v2081 = vsub.s32 %v2078, %v2080
      %v2082 = vrot.slane %v2066, %v2081
      %v2084 = vunpack.c.l.s4 1966171168
      %v2085 = vunpack.c.0.s8 %v2084
      %v2086 = vlaneseq
      %v2087 = vshrl.u32 %v2086, 7
      %v2088 = vsub.s32 %v2085, %v2087
      %v2089 = vrot.slane %v2067, %v2088
      %v2091 = vunpack.c.l.s4 1966171168
      %v2092 = vunpack.c.0.s8 %v2091
      %v2093 = vlaneseq
      %v2094 = vshrl.u32 %v2093, 7
      %v2095 = vsub.s32 %v2092, %v2094
      %v2096 = vrot.slane %v2068, %v2095
      %v2097 = vcombine.high %v2075, %v2075
      %v2098 = vcombine.high %v2082, %v2082
      %v2099 = vcombine.high %v2089, %v2089
      %v2100 = vcombine.high %v2096, %v2096
      %v2101 = vcombine.high %v171, %v171
      %v2103 = vunpack.c.l.s4 1966171168
      %v2104 = vunpack.c.0.s8 %v2103
      %v2105 = vlaneseq
      %v2106 = vshrl.u32 %v2105, 7
      %v2107 = vsub.s32 %v2104, %v2106
      %v2108 = vrot.slane %v171, %v2107
      %v2110 = vunpack.c.l.s4 1966171168
      %v2111 = vunpack.c.0.s8 %v2110
      %v2112 = vlaneseq
      %v2113 = vshrl.u32 %v2112, 7
      %v2114 = vsub.s32 %v2111, %v2113
      %v2115 = vrot.slane %v2101, %v2114
      %v2116 = vcombine.high %v2108, %v2108
      %v2117 = vcombine.high %v2115, %v2115
      %v2119 = vunpack.c.l.s4 1966171168
      %v2120 = vunpack.c.0.s8 %v2119
      %v2121 = vlaneseq
      %v2122 = vshrl.u32 %v2121, 7
      %v2123 = vsub.s32 %v2120, %v2122
      %v2124 = vrot.slane %v2108, %v2123
      %v2126 = vunpack.c.l.s4 1966171168
      %v2127 = vunpack.c.0.s8 %v2126
      %v2128 = vlaneseq
      %v2129 = vshrl.u32 %v2128, 7
      %v2130 = vsub.s32 %v2127, %v2129
      %v2131 = vrot.slane %v2115, %v2130
      %v2133 = vunpack.c.l.s4 1966171168
      %v2134 = vunpack.c.0.s8 %v2133
      %v2135 = vlaneseq
      %v2136 = vshrl.u32 %v2135, 7
      %v2137 = vsub.s32 %v2134, %v2136
      %v2138 = vrot.slane %v2116, %v2137
      %v2140 = vunpack.c.l.s4 1966171168
      %v2141 = vunpack.c.0.s8 %v2140
      %v2142 = vlaneseq
      %v2143 = vshrl.u32 %v2142, 7
      %v2144 = vsub.s32 %v2141, %v2143
      %v2145 = vrot.slane %v2117, %v2144
      %v2146 = vcombine.high %v2124, %v2124
      %v2147 = vcombine.high %v2131, %v2131
      %v2148 = vcombine.high %v2138, %v2138
      %v2149 = vcombine.high %v2145, %v2145
      %v2150 = vcombine.high %v172, %v172
      %v2152 = vunpack.c.l.s4 1966171168
      %v2153 = vunpack.c.0.s8 %v2152
      %v2154 = vlaneseq
      %v2155 = vshrl.u32 %v2154, 7
      %v2156 = vsub.s32 %v2153, %v2155
      %v2157 = vrot.slane %v172, %v2156
      %v2159 = vunpack.c.l.s4 1966171168
      %v2160 = vunpack.c.0.s8 %v2159
      %v2161 = vlaneseq
      %v2162 = vshrl.u32 %v2161, 7
      %v2163 = vsub.s32 %v2160, %v2162
      %v2164 = vrot.slane %v2150, %v2163
      %v2165 = vcombine.high %v2157, %v2157
      %v2166 = vcombine.high %v2164, %v2164
      %v2168 = vunpack.c.l.s4 1966171168
      %v2169 = vunpack.c.0.s8 %v2168
      %v2170 = vlaneseq
      %v2171 = vshrl.u32 %v2170, 7
      %v2172 = vsub.s32 %v2169, %v2171
      %v2173 = vrot.slane %v2157, %v2172
      %v2175 = vunpack.c.l.s4 1966171168
      %v2176 = vunpack.c.0.s8 %v2175
      %v2177 = vlaneseq
      %v2178 = vshrl.u32 %v2177, 7
      %v2179 = vsub.s32 %v2176, %v2178
      %v2180 = vrot.slane %v2164, %v2179
      %v2182 = vunpack.c.l.s4 1966171168
      %v2183 = vunpack.c.0.s8 %v2182
      %v2184 = vlaneseq
      %v2185 = vshrl.u32 %v2184, 7
      %v2186 = vsub.s32 %v2183, %v2185
      %v2187 = vrot.slane %v2165, %v2186
      %v2189 = vunpack.c.l.s4 1966171168
      %v2190 = vunpack.c.0.s8 %v2189
      %v2191 = vlaneseq
      %v2192 = vshrl.u32 %v2191, 7
      %v2193 = vsub.s32 %v2190, %v2192
      %v2194 = vrot.slane %v2166, %v2193
      %v2195 = vcombine.high %v2173, %v2173
      %v2196 = vcombine.high %v2180, %v2180
      %v2197 = vcombine.high %v2187, %v2187
      %v2198 = vcombine.high %v2194, %v2194
      %v2199 = vcombine.high %v173, %v173
      %v2201 = vunpack.c.l.s4 1966171168
      %v2202 = vunpack.c.0.s8 %v2201
      %v2203 = vlaneseq
      %v2204 = vshrl.u32 %v2203, 7
      %v2205 = vsub.s32 %v2202, %v2204
      %v2206 = vrot.slane %v173, %v2205
      %v2208 = vunpack.c.l.s4 1966171168
      %v2209 = vunpack.c.0.s8 %v2208
      %v2210 = vlaneseq
      %v2211 = vshrl.u32 %v2210, 7
      %v2212 = vsub.s32 %v2209, %v2211
      %v2213 = vrot.slane %v2199, %v2212
      %v2214 = vcombine.high %v2206, %v2206
      %v2215 = vcombine.high %v2213, %v2213
      %v2217 = vunpack.c.l.s4 1966171168
      %v2218 = vunpack.c.0.s8 %v2217
      %v2219 = vlaneseq
      %v2220 = vshrl.u32 %v2219, 7
      %v2221 = vsub.s32 %v2218, %v2220
      %v2222 = vrot.slane %v2206, %v2221
      %v2224 = vunpack.c.l.s4 1966171168
      %v2225 = vunpack.c.0.s8 %v2224
      %v2226 = vlaneseq
      %v2227 = vshrl.u32 %v2226, 7
      %v2228 = vsub.s32 %v2225, %v2227
      %v2229 = vrot.slane %v2213, %v2228
      %v2231 = vunpack.c.l.s4 1966171168
      %v2232 = vunpack.c.0.s8 %v2231
      %v2233 = vlaneseq
      %v2234 = vshrl.u32 %v2233, 7
      %v2235 = vsub.s32 %v2232, %v2234
      %v2236 = vrot.slane %v2214, %v2235
      %v2238 = vunpack.c.l.s4 1966171168
      %v2239 = vunpack.c.0.s8 %v2238
      %v2240 = vlaneseq
      %v2241 = vshrl.u32 %v2240, 7
      %v2242 = vsub.s32 %v2239, %v2241
      %v2243 = vrot.slane %v2215, %v2242
      %v2244 = vcombine.high %v2222, %v2222
      %v2245 = vcombine.high %v2229, %v2229
      %v2246 = vcombine.high %v2236, %v2236
      %v2247 = vcombine.high %v2243, %v2243
      %v2248 = vcombine.high %v174, %v174
      %v2250 = vunpack.c.l.s4 1966171168
      %v2251 = vunpack.c.0.s8 %v2250
      %v2252 = vlaneseq
      %v2253 = vshrl.u32 %v2252, 7
      %v2254 = vsub.s32 %v2251, %v2253
      %v2255 = vrot.slane %v174, %v2254
      %v2257 = vunpack.c.l.s4 1966171168
      %v2258 = vunpack.c.0.s8 %v2257
      %v2259 = vlaneseq
      %v2260 = vshrl.u32 %v2259, 7
      %v2261 = vsub.s32 %v2258, %v2260
      %v2262 = vrot.slane %v2248, %v2261
      %v2263 = vcombine.high %v2255, %v2255
      %v2264 = vcombine.high %v2262, %v2262
      %v2266 = vunpack.c.l.s4 1966171168
      %v2267 = vunpack.c.0.s8 %v2266
      %v2268 = vlaneseq
      %v2269 = vshrl.u32 %v2268, 7
      %v2270 = vsub.s32 %v2267, %v2269
      %v2271 = vrot.slane %v2255, %v2270
      %v2273 = vunpack.c.l.s4 1966171168
      %v2274 = vunpack.c.0.s8 %v2273
      %v2275 = vlaneseq
      %v2276 = vshrl.u32 %v2275, 7
      %v2277 = vsub.s32 %v2274, %v2276
      %v2278 = vrot.slane %v2262, %v2277
      %v2280 = vunpack.c.l.s4 1966171168
      %v2281 = vunpack.c.0.s8 %v2280
      %v2282 = vlaneseq
      %v2283 = vshrl.u32 %v2282, 7
      %v2284 = vsub.s32 %v2281, %v2283
      %v2285 = vrot.slane %v2263, %v2284
      %v2287 = vunpack.c.l.s4 1966171168
      %v2288 = vunpack.c.0.s8 %v2287
      %v2289 = vlaneseq
      %v2290 = vshrl.u32 %v2289, 7
      %v2291 = vsub.s32 %v2288, %v2290
      %v2292 = vrot.slane %v2264, %v2291
      %v2293 = vcombine.high %v2271, %v2271
      %v2294 = vcombine.high %v2278, %v2278
      %v2295 = vcombine.high %v2285, %v2285
      %v2296 = vcombine.high %v2292, %v2292
      %v2297 = vcombine.high %v175, %v175
      %v2299 = vunpack.c.l.s4 1966171168
      %v2300 = vunpack.c.0.s8 %v2299
      %v2301 = vlaneseq
      %v2302 = vshrl.u32 %v2301, 7
      %v2303 = vsub.s32 %v2300, %v2302
      %v2304 = vrot.slane %v175, %v2303
      %v2306 = vunpack.c.l.s4 1966171168
      %v2307 = vunpack.c.0.s8 %v2306
      %v2308 = vlaneseq
      %v2309 = vshrl.u32 %v2308, 7
      %v2310 = vsub.s32 %v2307, %v2309
      %v2311 = vrot.slane %v2297, %v2310
      %v2312 = vcombine.high %v2304, %v2304
      %v2313 = vcombine.high %v2311, %v2311
      %v2315 = vunpack.c.l.s4 1966171168
      %v2316 = vunpack.c.0.s8 %v2315
      %v2317 = vlaneseq
      %v2318 = vshrl.u32 %v2317, 7
      %v2319 = vsub.s32 %v2316, %v2318
      %v2320 = vrot.slane %v2304, %v2319
      %v2322 = vunpack.c.l.s4 1966171168
      %v2323 = vunpack.c.0.s8 %v2322
      %v2324 = vlaneseq
      %v2325 = vshrl.u32 %v2324, 7
      %v2326 = vsub.s32 %v2323, %v2325
      %v2327 = vrot.slane %v2311, %v2326
      %v2329 = vunpack.c.l.s4 1966171168
      %v2330 = vunpack.c.0.s8 %v2329
      %v2331 = vlaneseq
      %v2332 = vshrl.u32 %v2331, 7
      %v2333 = vsub.s32 %v2330, %v2332
      %v2334 = vrot.slane %v2312, %v2333
      %v2336 = vunpack.c.l.s4 1966171168
      %v2337 = vunpack.c.0.s8 %v2336
      %v2338 = vlaneseq
      %v2339 = vshrl.u32 %v2338, 7
      %v2340 = vsub.s32 %v2337, %v2339
      %v2341 = vrot.slane %v2313, %v2340
      %v2342 = vcombine.high %v2320, %v2320
      %v2343 = vcombine.high %v2327, %v2327
      %v2344 = vcombine.high %v2334, %v2334
      %v2345 = vcombine.high %v2341, %v2341
      %v2347 = vunpack.c.l.s4 1966171168
      %v2348 = vunpack.c.0.s8 %v2347
      %v2349 = vlaneseq
      %v2350 = vshrl.u32 %v2349, 7
      %v2351 = vsub.s32 %v2348, %v2350
      %v2352 = vrot.slane %v176, %v2351
      %v2353 = vcombine.high %v2352, %v2352
      %v2355 = vunpack.c.l.s4 1966171168
      %v2356 = vunpack.c.0.s8 %v2355
      %v2357 = vlaneseq
      %v2358 = vshrl.u32 %v2357, 7
      %v2359 = vsub.s32 %v2356, %v2358
      %v2360 = vrot.slane %v2352, %v2359
      %v2362 = vunpack.c.l.s4 1966171168
      %v2363 = vunpack.c.0.s8 %v2362
      %v2364 = vlaneseq
      %v2365 = vshrl.u32 %v2364, 7
      %v2366 = vsub.s32 %v2363, %v2365
      %v2367 = vrot.slane %v2353, %v2366
      %v4034 = vunpack.c.l.b16 %v177
      %v4035 = vunpack.c.l.b16 %v178
      %v4036 = vunpack.c.l.b16 %v179
      %v4037 = vunpack.c.l.b16 %v180
      %v4038 = vunpack.c.l.b16 %v181
      %v4039 = vunpack.c.l.b16 %v182
      %v4040 = vunpack.c.l.b16 %v183
      %v4041 = vunpack.c.l.b16 %v184
      %v4042 = vunpack.c.l.b16 %v185
      %v4043 = vunpack.c.l.b16 %v186
      %v4044 = vunpack.c.l.b16 %v187
      %v4045 = vunpack.c.l.b16 %v188
      %v4046 = vunpack.c.l.b16 %v189
      %v4047 = vunpack.c.l.b16 %v190
      %v4048 = vunpack.c.l.b16 %v191
      %v4049 = vunpack.c.l.b16 %v192
      %v4050 = vunpack.c.l.b16 %v193
      %v4051 = vunpack.c.l.b16 %v194
      %v4052 = vunpack.c.l.b16 %v195
      %v4053 = vunpack.c.l.b16 %v196
      %v4054 = vunpack.c.l.b16 %v197
      %v4055 = vunpack.c.l.b16 %v198
      %v4056 = vunpack.c.l.b16 %v199
      %v4057 = vunpack.c.l.b16 %v200
      %v4058 = vunpack.c.l.b16 %v201
      %v4059 = vunpack.c.l.b16 %v202
      %v4060 = vunpack.c.l.b16 %v203
      %v4061 = vunpack.c.l.b16 %v204
      %v4062 = vunpack.c.l.b16 %v205
      %v4063 = vunpack.c.l.b16 %v206
      %v4064 = vunpack.c.l.b16 %v207
      %v4065 = vunpack.c.l.b16 %v208
      %v4066 = vunpack.c.l.b16 %v209
      %v4067 = vunpack.c.l.b16 %v210
      %v4068 = vunpack.c.l.b16 %v211
      %v4069 = vunpack.c.l.b16 %v212
      %v4070 = vunpack.c.l.b16 %v213
      %v4071 = vunpack.c.l.b16 %v214
      %v4072 = vunpack.c.l.b16 %v215
      %v4073 = vunpack.c.l.b16 %v216
      %v4074 = vunpack.c.l.b16 %v217
      %v4075 = vunpack.c.l.b16 %v218
      %v4076 = vunpack.c.l.b16 %v219
      %v4077 = vunpack.c.l.b16 %v220
      %v4078 = vunpack.c.l.b16 %v221
      %v4079 = vunpack.c.l.b16 %v222
      %v4080 = vunpack.c.l.b16 %v223
      %v4081 = vunpack.c.l.b16 %v224
      %v4082 = vunpack.c.l.b16 %v225
      %v4083 = vunpack.c.l.b16 %v226
      %v4084 = vunpack.c.l.b16 %v227
      %v4085 = vunpack.c.l.b16 %v228
      %v4086 = vunpack.c.l.b16 %v229
      %v4087 = vunpack.c.l.b16 %v230
      %v4088 = vunpack.c.l.b16 %v231
      %v4089 = vunpack.c.l.b16 %v232
      %v4090 = vunpack.c.l.b16 %v233
      %v4091 = vunpack.c.l.b16 %v234
      %v4092 = vunpack.c.l.b16 %v235
      %v4093 = vunpack.c.l.b16 %v236
      %v4094 = vunpack.c.l.b16 %v237
      %v4095 = vunpack.c.l.b16 %v238
      %v4096 = vunpack.c.l.b16 %v239
      %v4097 = vunpack.c.l.b16 %v240
      %v4098 = vunpack.c.l.b16 %v241
      %v4099 = vunpack.c.l.b16 %v242
      %v4100 = vunpack.c.l.b16 %v243
      %v4101 = vunpack.c.l.b16 %v244
      %v4102 = vunpack.c.l.b16 %v245
      %v4103 = vunpack.c.l.b16 %v246
      %v4104 = vunpack.c.l.b16 %v247
      %v4105 = vunpack.c.l.b16 %v248
      %v4106 = vunpack.c.l.b16 %v249
      %v4107 = vunpack.c.l.b16 %v250
      %v4108 = vunpack.c.l.b16 %v251
      %v4109 = vunpack.c.l.b16 %v252
      %v4110 = vunpack.c.l.b16 %v253
      %v4111 = vunpack.c.l.b16 %v254
      %v4112 = vunpack.c.l.b16 %v255
      %v4113 = vunpack.c.l.b16 %v256
      %v4114 = vunpack.c.l.b16 %v257
      %v4115 = vunpack.c.l.b16 %v258
      %v4116 = vunpack.c.l.b16 %v259
      %v4117 = vunpack.c.l.b16 %v260
      %v4118 = vunpack.c.l.b16 %v261
      %v4119 = vunpack.c.l.b16 %v262
      %v4120 = vunpack.c.l.b16 %v263
      %v4121 = vunpack.c.l.b16 %v264
      %v4122 = vunpack.c.l.b16 %v265
      %v4123 = vunpack.c.l.b16 %v266
      %v4124 = vunpack.c.l.b16 %v267
      %v4125 = vunpack.c.l.b16 %v268
      %v4126 = vunpack.c.l.b16 %v269
      %v4127 = vunpack.c.l.b16 %v270
      %v4128 = vunpack.c.l.b16 %v271
      %v4129 = vunpack.c.l.b16 %v272
      %v4130 = vunpack.c.l.b16 %v273
      %v4131 = vunpack.c.l.b16 %v274
      %v4132 = vunpack.c.l.b16 %v275
      %v4133 = vunpack.c.l.b16 %v276
      %v4134 = vunpack.c.l.b16 %v277
      %v4135 = vunpack.c.l.b16 %v278
      %v4136 = vunpack.c.l.b16 %v279
      %v4137 = vunpack.c.l.b16 %v280
      %v4138 = vunpack.c.l.b16 %v281
      %v4139 = vunpack.c.l.b16 %v282
      %v4140 = vunpack.c.l.b16 %v283
      %v4141 = vunpack.c.l.b16 %v284
      %v4142 = vunpack.c.l.b16 %v285
      %v4143 = vunpack.c.l.b16 %v286
      %v4144 = vunpack.c.l.b16 %v287
      %v4145 = vunpack.c.l.b16 %v288
      %v4146 = vunpack.c.l.b16 %v289
      %v4147 = vunpack.c.l.b16 %v290
      %v4148 = vunpack.c.l.b16 %v291
      %v4149 = vunpack.c.l.b16 %v292
      %v4150 = vunpack.c.l.b16 %v293
      %v4151 = vunpack.c.l.b16 %v294
      %v4152 = vunpack.c.l.b16 %v295
      %v4153 = vunpack.c.l.b16 %v296
      %v4154 = vunpack.c.l.b16 %v297
      %v4155 = vunpack.c.l.b16 %v298
      %v4156 = vunpack.c.l.b16 %v299
      %v4157 = vunpack.c.l.b16 %v300
      %v4158 = vunpack.c.l.b16 %v301
      %v4159 = vunpack.c.l.b16 %v302
      %v4160 = vunpack.c.l.b16 %v303
      %v4161 = vunpack.c.l.b16 %v304
      %v4162 = vunpack.c.l.b16 %v305
      %v4163 = vunpack.c.l.b16 %v306
      %v4164 = vunpack.c.l.b16 %v307
      %v4165 = vunpack.c.l.b16 %v308
      %v4166 = vunpack.c.l.b16 %v309
      %v4167 = vunpack.c.l.b16 %v310
      %v4168 = vunpack.c.l.b16 %v311
      %v4169 = vunpack.c.l.b16 %v312
      %v4170 = vunpack.c.l.b16 %v313
      %v4171 = vunpack.c.l.b16 %v314
      %v4172 = vunpack.c.l.b16 %v315
      %v4173 = vunpack.c.l.b16 %v316
      %v4174 = vunpack.c.l.b16 %v317
      %v4175 = vunpack.c.l.b16 %v318
      %v4176 = vunpack.c.l.b16 %v319
      %v4177 = vunpack.c.l.b16 %v320
      %v4178 = vunpack.c.l.b16 %v321
      %v4179 = vunpack.c.l.b16 %v322
      %v4180 = vunpack.c.l.b16 %v323
      %v4181 = vunpack.c.l.b16 %v324
      %v4182 = vunpack.c.l.b16 %v325
      %v4183 = vunpack.c.l.b16 %v326
      %v4184 = vunpack.c.l.b16 %v327
      %v4185 = vunpack.c.l.b16 %v328
      %v4186 = vunpack.c.l.b16 %v329
      %v4187 = vunpack.c.l.b16 %v330
      %v4188 = vunpack.c.l.b16 %v331
      %v4189 = vunpack.c.l.b16 %v332
      %v4190 = vunpack.c.l.b16 %v333
      %v4191 = vunpack.c.l.b16 %v334
      %v4192 = vunpack.c.l.b16 %v335
      %v4193 = vunpack.c.l.b16 %v336
      %v4194 = vunpack.c.l.b16 %v337
      %v4195 = vunpack.c.l.b16 %v338
      %v4196 = vunpack.c.l.b16 %v339
      %v4197 = vunpack.c.l.b16 %v340
      %v4198 = vunpack.c.l.b16 %v341
      %v4199 = vunpack.c.l.b16 %v342
      %v4200 = vunpack.c.l.b16 %v343
      %v4201 = vunpack.c.l.b16 %v344
      %v4202 = vunpack.c.l.b16 %v345
      %v4203 = vunpack.c.l.b16 %v346
      %v4204 = vunpack.c.l.b16 %v347
      %v4205 = vunpack.c.l.b16 %v348
      %v4206 = vunpack.c.l.b16 %v349
      %v4207 = vunpack.c.l.b16 %v350
      %v4208 = vunpack.c.l.b16 %v351
      %v4209 = vunpack.c.l.b16 %v352
      %v4210 = vunpack.c.l.b16 %v353
      %v4211 = vunpack.c.l.b16 %v354
      %v4212 = vunpack.c.l.b16 %v355
      %v4213 = vunpack.c.l.b16 %v356
      %v4214 = vunpack.c.l.b16 %v357
      %v4215 = vunpack.c.l.b16 %v358
      %v4216 = vunpack.c.l.b16 %v359
      %v4217 = vunpack.c.l.b16 %v360
      %v4218 = vunpack.c.l.b16 %v361
      %v4219 = vunpack.c.l.b16 %v362
      %v4220 = vunpack.c.l.b16 %v363
      %v4221 = vunpack.c.l.b16 %v364
      %v4222 = vunpack.c.l.b16 %v365
      %v4223 = vunpack.c.l.b16 %v366
      %v4224 = vunpack.c.l.b16 %v367
      %v4225 = vunpack.c.l.b16 %v368
      %v4226 = vunpack.c.l.b16 %v369
      %v4227 = vunpack.c.l.b16 %v370
      %v4228 = vunpack.c.l.b16 %v371
      %v4229 = vunpack.c.l.b16 %v372
      %v4230 = vunpack.c.l.b16 %v373
      %v4231 = vunpack.c.l.b16 %v374
      %v4232 = vunpack.c.l.b16 %v375
      %v4233 = vunpack.c.l.b16 %v376
      %v4234 = vunpack.c.l.b16 %v377
      %v4235 = vunpack.c.l.b16 %v378
      %v4236 = vunpack.c.l.b16 %v379
      %v4237 = vunpack.c.l.b16 %v380
      %v4238 = vunpack.c.l.b16 %v381
      %v4239 = vunpack.c.l.b16 %v382
      %v4240 = vunpack.c.l.b16 %v383
      %v4241 = vunpack.c.l.b16 %v384
      %v4242 = vunpack.c.l.b16 %v385
      %v4243 = vunpack.c.l.b16 %v386
      %v4244 = vunpack.c.l.b16 %v387
      %v4245 = vunpack.c.l.b16 %v388
      %v4246 = vunpack.c.l.b16 %v389
      %v4247 = vunpack.c.l.b16 %v390
      %v4248 = vunpack.c.l.b16 %v391
      %v4249 = vunpack.c.l.b16 %v392
      %v4250 = vunpack.c.l.b16 %v393
      %v4251 = vunpack.c.l.b16 %v394
      %v4252 = vunpack.c.l.b16 %v395
      %v4253 = vunpack.c.l.b16 %v396
      %v4254 = vunpack.c.l.b16 %v397
      %v4255 = vunpack.c.l.b16 %v398
      %v4256 = vunpack.c.l.b16 %v399
      %v4257 = vunpack.c.l.b16 %v400
      %v4258 = vunpack.c.l.b16 %v401
      %v4259 = vunpack.c.l.b16 %v402
      %v4260 = vunpack.c.l.b16 %v403
      %v4261 = vunpack.c.l.b16 %v404
      %v4262 = vunpack.c.l.b16 %v405
      %v4263 = vunpack.c.l.b16 %v406
      %v4264 = vunpack.c.l.b16 %v407
      %v4265 = vunpack.c.l.b16 %v408
      %v4266 = vunpack.c.l.b16 %v409
      %v4267 = vunpack.c.l.b16 %v410
      %v4268 = vunpack.c.l.b16 %v411
      %v4269 = vunpack.c.l.b16 %v412
      %v4270 = vunpack.c.l.b16 %v413
      %v4271 = vunpack.c.l.b16 %v414
      %v4272 = vunpack.c.l.b16 %v415
      %v4273 = vunpack.c.l.b16 %v416
      %v4274 = vunpack.c.l.b16 %v417
      %v4275 = vunpack.c.l.b16 %v418
      %v4276 = vunpack.c.l.b16 %v419
      %v4277 = vunpack.c.l.b16 %v420
      %v4278 = vunpack.c.l.b16 %v421
      %v4279 = vunpack.c.l.b16 %v422
      %v4280 = vunpack.c.l.b16 %v423
      %v4281 = vunpack.c.l.b16 %v424
      %v4282 = vunpack.c.l.b16 %v425
      %v4283 = vunpack.c.l.b16 %v426
      %v4284 = vunpack.c.l.b16 %v427
      %v4285 = vunpack.c.l.b16 %v428
      %v4286 = vunpack.c.l.b16 %v429
      %v4287 = vunpack.c.l.b16 %v430
      %v4288 = vunpack.c.l.b16 %v431
      %v4289 = vunpack.c.l.b16 %v432
      %v4290 = vunpack.c.l.b16 %v433
      %v4291 = vunpack.c.l.b16 %v434
      %v4292 = vunpack.c.l.b16 %v435
      %v4293 = vunpack.c.l.b16 %v436
      %v4294 = vunpack.c.l.b16 %v437
      %v4295 = vunpack.c.l.b16 %v438
      %v4296 = vunpack.c.l.b16 %v439
      %v4297 = vunpack.c.l.b16 %v440
      %v4298 = vunpack.c.l.b16 %v441
      %v4299 = vunpack.c.l.b16 %v442
      %v4300 = vunpack.c.l.b16 %v443
      %v4301 = vunpack.c.l.b16 %v444
      %v4302 = vunpack.c.l.b16 %v445
      %v4303 = vunpack.c.l.b16 %v446
      %v4304 = vunpack.c.l.b16 %v447
      %v4305 = vunpack.c.l.b16 %v448
      %v4306 = vunpack.c.l.b16 %v449
      %v4307 = vunpack.c.l.b16 %v450
      %v4308 = vunpack.c.l.b16 %v451
      %v4309 = vunpack.c.l.b16 %v452
      %v4310 = vunpack.c.l.b16 %v453
      %v4311 = vunpack.c.l.b16 %v454
      %v4312 = vunpack.c.l.b16 %v455
      %v4313 = vunpack.c.l.b16 %v456
      %v4314 = vunpack.c.l.b16 %v457
      %v4315 = vunpack.c.l.b16 %v458
      %v4316 = vunpack.c.l.b16 %v459
      %v4317 = vunpack.c.l.b16 %v460
      %v4318 = vunpack.c.l.b16 %v461
      %v4319 = vunpack.c.l.b16 %v462
      %v4320 = vunpack.c.l.b16 %v463
      %v4321 = vunpack.c.l.b16 %v464
      %v4322 = vunpack.c.l.b16 %v465
      %v4323 = vunpack.c.l.b16 %v466
      %v4324 = vunpack.c.l.b16 %v467
      %v4325 = vunpack.c.l.b16 %v468
      %v4326 = vunpack.c.l.b16 %v469
      %v4327 = vunpack.c.l.b16 %v470
      %v4328 = vunpack.c.l.b16 %v471
      %v4329 = vunpack.c.l.b16 %v472
      %v4330 = vunpack.c.l.b16 %v473
      %v4331 = vunpack.c.l.b16 %v474
      %v4332 = vunpack.c.l.b16 %v475
      %v4333 = vunpack.c.l.b16 %v476
      %v4334 = vunpack.c.l.b16 %v477
      %v4335 = vunpack.c.l.b16 %v478
      %v4336 = vunpack.c.l.b16 %v479
      %v4337 = vunpack.c.l.b16 %v480
      %v4338 = vunpack.c.l.b16 %v481
      %v4339 = vunpack.c.l.b16 %v482
      %v4340 = vunpack.c.l.b16 %v483
      %v4341 = vunpack.c.l.b16 %v484
      %v4342 = vunpack.c.l.b16 %v485
      %v4343 = vunpack.c.l.b16 %v486
      %v4344 = vunpack.c.l.b16 %v487
      %v4345 = vunpack.c.l.b16 %v488
      %v4346 = vunpack.c.l.b16 %v489
      %v4347 = vunpack.c.l.b16 %v490
      %v4348 = vunpack.c.l.b16 %v491
      %v4349 = vunpack.c.l.b16 %v492
      %v4350 = vunpack.c.l.b16 %v493
      %v4351 = vunpack.c.l.b16 %v494
      %v4352 = vunpack.c.l.b16 %v495
      %v4353 = vunpack.c.l.b16 %v496
      %v4354 = vunpack.c.l.b16 %v497
      %v4355 = vunpack.c.l.b16 %v498
      %v4356 = vunpack.c.l.b16 %v499
      %v4357 = vunpack.c.l.b16 %v500
      %v4358 = vunpack.c.l.b16 %v501
      %v4359 = vunpack.c.l.b16 %v502
      %v4360 = vunpack.c.l.b16 %v503
      %v4361 = vunpack.c.l.b16 %v504
      %v4362 = vunpack.c.l.b16 %v505
      %v4363 = vunpack.c.l.b16 %v506
      %v4364 = vunpack.c.l.b16 %v507
      %v4365 = vunpack.c.l.b16 %v508
      %v4366 = vunpack.c.l.b16 %v509
      %v4367 = vunpack.c.l.b16 %v510
      %v4368 = vunpack.c.l.b16 %v511
      %v4369 = vunpack.c.l.b16 %v512
      %v4370 = vunpack.c.l.b16 %v513
      %v4371 = vunpack.c.l.b16 %v514
      %v4372 = vunpack.c.l.b16 %v515
      %v4373 = vunpack.c.l.b16 %v516
      %v4374 = vunpack.c.l.b16 %v517
      %v4375 = vunpack.c.l.b16 %v518
      %v4376 = vunpack.c.l.b16 %v519
      %v4377 = vunpack.c.l.b16 %v520
      %v4378 = vunpack.c.l.b16 %v521
      %v4379 = vunpack.c.l.b16 %v522
      %v4380 = vunpack.c.l.b16 %v523
      %v4381 = vunpack.c.l.b16 %v524
      %v4382 = vunpack.c.l.b16 %v525
      %v4383 = vunpack.c.l.b16 %v526
      %v4384 = vunpack.c.l.b16 %v527
      %v4385 = vunpack.c.l.b16 %v528
      %v4386 = vunpack.c.l.b16 %v529
      %v4387 = vunpack.c.l.b16 %v530
      %v4388 = vunpack.c.l.b16 %v531
      %v4389 = vunpack.c.l.b16 %v532
      %v4390 = vunpack.c.l.b16 %v533
      %v4391 = vunpack.c.l.b16 %v534
      %v4392 = vunpack.c.l.b16 %v535
      %v4393 = vunpack.c.l.b16 %v536
      %v4394 = vunpack.c.l.b16 %v537
      %v4395 = vunpack.c.l.b16 %v538
      %v4396 = vunpack.c.l.b16 %v539
      %v4397 = vunpack.c.l.b16 %v540
      %v4398 = vunpack.c.l.b16 %v541
      %v4399 = vunpack.c.l.b16 %v542
      %v4400 = vunpack.c.l.b16 %v543
      %v4401 = vunpack.c.l.b16 %v544
      %v4402 = vunpack.c.l.b16 %v545
      %v4403 = vunpack.c.l.b16 %v546
      %v4404 = vunpack.c.l.b16 %v547
      %v4405 = vunpack.c.l.b16 %v548
      %v4406 = vunpack.c.l.b16 %v549
      %v4407 = vunpack.c.l.b16 %v550
      %v4408 = vunpack.c.l.b16 %v551
      %v4409 = vunpack.c.l.b16 %v552
      %v4410 = vunpack.c.l.b16 %v553
      %v4411 = vunpack.c.l.b16 %v554
      %v4412 = vunpack.c.l.b16 %v555
      %v4413 = vunpack.c.l.b16 %v556
      %v4414 = vunpack.c.l.b16 %v557
      %v4415 = vunpack.c.l.b16 %v558
      %v4416 = vunpack.c.l.b16 %v559
      %v4417 = vunpack.c.l.b16 %v560
      %v4418 = vunpack.c.l.b16 %v561
      %v4419 = vunpack.c.l.b16 %v562
      %v4420 = vunpack.c.l.b16 %v563
      %v4421 = vunpack.c.l.b16 %v564
      %v4422 = vunpack.c.l.b16 %v565
      %v4423 = vunpack.c.l.b16 %v566
      %v4424 = vunpack.c.l.b16 %v567
      %v4425 = vunpack.c.l.b16 %v568
      %v4426 = vunpack.c.l.b16 %v569
      %v4427 = vunpack.c.l.b16 %v570
      %v4428 = vunpack.c.l.b16 %v571
      %v4429 = vunpack.c.l.b16 %v572
      %v4430 = vunpack.c.l.b16 %v573
      %v4431 = vunpack.c.l.b16 %v574
      %v4432 = vunpack.c.l.b16 %v575
      %v4433 = vunpack.c.l.b16 %v576
      %v4434 = vunpack.c.l.b16 %v577
      %v4435 = vunpack.c.l.b16 %v578
      %v4436 = vunpack.c.l.b16 %v579
      %v4437 = vunpack.c.l.b16 %v580
      %v4438 = vunpack.c.l.b16 %v581
      %v4439 = vunpack.c.l.b16 %v582
      %v4440 = vunpack.c.l.b16 %v583
      %v4441 = vunpack.c.l.b16 %v584
      %v4442 = vunpack.c.l.b16 %v585
      %v4443 = vunpack.c.l.b16 %v586
      %v4444 = vunpack.c.l.b16 %v587
      %v4445 = vunpack.c.l.b16 %v588
      %v4446 = vunpack.c.l.b16 %v589
      %v4447 = vunpack.c.l.b16 %v590
      %v4448 = vunpack.c.l.b16 %v591
      %v4449 = vunpack.c.l.b16 %v592
      %v4450 = vunpack.c.l.b16 %v593
      %v4451 = vunpack.c.l.b16 %v594
      %v4452 = vunpack.c.l.b16 %v595
      %v4453 = vunpack.c.l.b16 %v596
      %v4454 = vunpack.c.l.b16 %v597
      %v4455 = vunpack.c.l.b16 %v598
      %v4456 = vunpack.c.l.b16 %v599
      %v4457 = vunpack.c.l.b16 %v600
      %v4458 = vunpack.c.l.b16 %v601
      %v4459 = vunpack.c.l.b16 %v602
      %v4460 = vunpack.c.l.b16 %v603
      %v4461 = vunpack.c.l.b16 %v604
      %v4462 = vunpack.c.l.b16 %v605
      %v4463 = vunpack.c.l.b16 %v606
      %v4464 = vunpack.c.l.b16 %v607
      %v4465 = vunpack.c.l.b16 %v608
      %v4466 = vunpack.c.l.b16 %v609
      %v4467 = vunpack.c.l.b16 %v610
      %v4468 = vunpack.c.l.b16 %v611
      %v4469 = vunpack.c.l.b16 %v612
      %v4470 = vunpack.c.l.b16 %v613
      %v4471 = vunpack.c.l.b16 %v614
      %v4472 = vunpack.c.l.b16 %v615
      %v4473 = vunpack.c.l.b16 %v616
      %v4474 = vunpack.c.l.b16 %v617
      %v4475 = vunpack.c.l.b16 %v618
      %v4476 = vunpack.c.l.b16 %v619
      %v4477 = vunpack.c.l.b16 %v620
      %v4478 = vunpack.c.l.b16 %v621
      %v4479 = vunpack.c.l.b16 %v622
      %v4480 = vunpack.c.l.b16 %v623
      %v4481 = vunpack.c.l.b16 %v624
      %v4482 = vunpack.c.l.b16 %v625
      %v4483 = vunpack.c.l.b16 %v626
      %v4484 = vunpack.c.l.b16 %v627
      %v4485 = vunpack.c.l.b16 %v628
      %v4486 = vunpack.c.l.b16 %v629
      %v4487 = vunpack.c.l.b16 %v630
      %v4488 = vunpack.c.l.b16 %v631
      %v4489 = vunpack.c.l.b16 %v632
      %v4490 = vunpack.c.l.b16 %v633
      %v4491 = vunpack.c.l.b16 %v634
      %v4492 = vunpack.c.l.b16 %v635
      %v4493 = vunpack.c.l.b16 %v636
      %v4494 = vunpack.c.l.b16 %v637
      %v4495 = vunpack.c.l.b16 %v638
      %v4496 = vunpack.c.l.b16 %v639
      %v4497 = vunpack.c.l.b16 %v640
      %v4498 = vunpack.c.l.b16 %v641
      %v4499 = vunpack.c.l.b16 %v642
      %v4500 = vunpack.c.l.b16 %v643
      %v4501 = vunpack.c.l.b16 %v644
      %v4502 = vunpack.c.l.b16 %v645
      %v4503 = vunpack.c.l.b16 %v646
      %v4504 = vunpack.c.l.b16 %v647
      %v4505 = vunpack.c.l.b16 %v648
      %v4506 = vunpack.c.l.b16 %v649
      %v4507 = vunpack.c.l.b16 %v650
      %v4508 = vunpack.c.l.b16 %v651
      %v4509 = vunpack.c.l.b16 %v652
      %v4510 = vunpack.c.l.b16 %v653
      %v4511 = vunpack.c.l.b16 %v654
      %v4512 = vunpack.c.l.b16 %v655
      %v4513 = vunpack.c.l.b16 %v656
      %v4514 = vunpack.c.l.b16 %v657
      %v4515 = vunpack.c.l.b16 %v658
      %v4516 = vunpack.c.l.b16 %v659
      %v4517 = vunpack.c.l.b16 %v660
      %v4518 = vunpack.c.l.b16 %v661
      %v4519 = vunpack.c.l.b16 %v662
      %v4520 = vunpack.c.l.b16 %v663
      %v4521 = vunpack.c.l.b16 %v664
      %v4522 = vunpack.c.l.b16 %v665
      %v4523 = vunpack.c.l.b16 %v666
      %v4524 = vunpack.c.l.b16 %v667
      %v4525 = vunpack.c.l.b16 %v668
      %v4526 = vunpack.c.l.b16 %v669
      %v4527 = vunpack.c.l.b16 %v670
      %v4528 = vunpack.c.l.b16 %v671
      %v4529 = vunpack.c.l.b16 %v672
      %v4530 = vunpack.c.l.b16 %v673
      %v4531 = vunpack.c.l.b16 %v674
      %v4532 = vunpack.c.l.b16 %v675
      %v4533 = vunpack.c.l.b16 %v676
      %v4534 = vunpack.c.l.b16 %v677
      %v4535 = vunpack.c.l.b16 %v678
      %v4536 = vunpack.c.l.b16 %v679
      %v4537 = vunpack.c.l.b16 %v680
      %v4538 = vunpack.c.l.b16 %v681
      %v4539 = vunpack.c.l.b16 %v682
      %v4540 = vunpack.c.l.b16 %v683
      %v4541 = vunpack.c.l.b16 %v684
      %v4542 = vunpack.c.l.b16 %v685
      %v4543 = vunpack.c.l.b16 %v686
      %v4544 = vunpack.c.l.b16 %v687
      %v4545 = vunpack.c.l.b16 %v688
      %v4546 = vunpack.c.l.b16 %v689
      %v4547 = vunpack.c.l.b16 %v690
      %v4548 = vunpack.c.l.b16 %v691
      %v4549 = vunpack.c.l.b16 %v692
      %v4550 = vunpack.c.l.b16 %v693
      %v4551 = vunpack.c.l.b16 %v694
      %v4552 = vunpack.c.l.b16 %v695
      %v4553 = vunpack.c.l.b16 %v696
      %v4554 = vunpack.c.l.b16 %v697
      %v4555 = vunpack.c.l.b16 %v698
      %v4556 = vunpack.c.l.b16 %v699
      %v4557 = vunpack.c.l.b16 %v700
      %v4558 = vunpack.c.l.b16 %v701
      %v4559 = vunpack.c.l.b16 %v702
      %v4560 = vunpack.c.l.b16 %v703
      %v4561 = vunpack.c.l.b16 %v704
      %v4562 = vunpack.c.l.b16 %v705
      %v4563 = vunpack.c.l.b16 %v706
      %v4564 = vunpack.c.l.b16 %v707
      %v4565 = vunpack.c.l.b16 %v708
      %v4566 = vunpack.c.l.b16 %v709
      %v4567 = vunpack.c.l.b16 %v710
      %v4568 = vunpack.c.l.b16 %v711
      %v4569 = vunpack.c.l.b16 %v712
      %v4570 = vunpack.c.l.b16 %v713
      %v4571 = vunpack.c.l.b16 %v714
      %v4572 = vunpack.c.l.b16 %v715
      %v4573 = vunpack.c.l.b16 %v716
      %v4574 = vunpack.c.l.b16 %v717
      %v4575 = vunpack.c.l.b16 %v718
      %v4576 = vunpack.c.l.b16 %v719
      %v4577 = vunpack.c.l.b16 %v720
      %v4578 = vunpack.c.l.b16 %v721
      %v4579 = vunpack.c.l.b16 %v722
      %v4580 = vunpack.c.l.b16 %v723
      %v4581 = vunpack.c.l.b16 %v724
      %v4582 = vunpack.c.l.b16 %v725
      %v4583 = vunpack.c.l.b16 %v726
      %v4584 = vunpack.c.l.b16 %v727
      %v4585 = vunpack.c.l.b16 %v728
      %v4586 = vunpack.c.l.b16 %v729
      %v4587 = vunpack.c.l.b16 %v730
      %v4588 = vunpack.c.l.b16 %v731
      %v4589 = vunpack.c.l.b16 %v732
      %v4590 = vunpack.c.l.b16 %v733
      %v4591 = vunpack.c.l.b16 %v734
      %v4592 = vunpack.c.l.b16 %v735
      %v4593 = vunpack.c.l.b16 %v736
      %v4594 = vunpack.c.l.b16 %v737
      %v4595 = vunpack.c.l.b16 %v738
      %v4596 = vunpack.c.l.b16 %v739
      %v4597 = vunpack.c.l.b16 %v740
      %v4598 = vunpack.c.l.b16 %v741
      %v4599 = vunpack.c.l.b16 %v742
      %v4600 = vunpack.c.l.b16 %v743
      %v4601 = vunpack.c.l.b16 %v744
      %v4602 = vunpack.c.l.b16 %v745
      %v4603 = vunpack.c.l.b16 %v746
      %v4604 = vunpack.c.l.b16 %v747
      %v4605 = vunpack.c.l.b16 %v748
      %v4606 = vunpack.c.l.b16 %v749
      %v4607 = vunpack.c.l.b16 %v750
      %v4608 = vunpack.c.l.b16 %v751
      %v4609 = vunpack.c.l.b16 %v752
      %v4610 = vunpack.c.l.b16 %v753
      %v4611 = vunpack.c.l.b16 %v754
      %v4612 = vunpack.c.l.b16 %v755
      %v4613 = vunpack.c.l.b16 %v756
      %v4614 = vunpack.c.l.b16 %v757
      %v4615 = vunpack.c.l.b16 %v758
      %v4616 = vunpack.c.l.b16 %v759
      %v4617 = vunpack.c.l.b16 %v760
      %v4618 = vunpack.c.l.b16 %v761
      %v4619 = vunpack.c.l.b16 %v762
      %v4620 = vunpack.c.l.b16 %v763
      %v4621 = vunpack.c.l.b16 %v764
      %v4622 = vunpack.c.l.b16 %v765
      %v4623 = vunpack.c.l.b16 %v766
      %v4624 = vunpack.c.l.b16 %v767
      %v4625 = vunpack.c.l.b16 %v768
      %v4626 = vunpack.c.l.b16 %v769
      %v4627 = vunpack.c.l.b16 %v770
      %v4628 = vunpack.c.l.b16 %v771
      %v4629 = vunpack.c.l.b16 %v772
      %v4630 = vunpack.c.l.b16 %v773
      %v4631 = vunpack.c.l.b16 %v774
      %v4632 = vunpack.c.l.b16 %v775
      %v4633 = vunpack.c.l.b16 %v776
      %v4634 = vunpack.c.l.b16 %v777
      %v4635 = vunpack.c.l.b16 %v778
      %v4636 = vunpack.c.l.b16 %v779
      %v4637 = vunpack.c.l.b16 %v780
      %v4638 = vunpack.c.l.b16 %v781
      %v4639 = vunpack.c.l.b16 %v782
      %v4640 = vunpack.c.l.b16 %v783
      %v4641 = vunpack.c.l.b16 %v784
      %v4642 = vunpack.c.l.b16 %v785
      %v4643 = vunpack.c.l.b16 %v786
      %v4644 = vunpack.c.l.b16 %v787
      %v4645 = vunpack.c.l.b16 %v788
      %v4646 = vunpack.c.l.b16 %v789
      %v4647 = vunpack.c.l.b16 %v790
      %v4648 = vunpack.c.l.b16 %v791
      %v4649 = vunpack.c.l.b16 %v792
      %v4650 = vunpack.c.l.b16 %v793
      %v4651 = vunpack.c.l.b16 %v794
      %v4652 = vunpack.c.l.b16 %v795
      %v4653 = vunpack.c.l.b16 %v796
      %v4654 = vunpack.c.l.b16 %v797
      %v4655 = vunpack.c.l.b16 %v798
      %v4656 = vunpack.c.l.b16 %v799
      %v4657 = vunpack.c.l.b16 %v800
      %v4658 = vunpack.c.l.b16 %v801
      %v4659 = vunpack.c.l.b16 %v802
      %v4660 = vunpack.c.l.b16 %v803
      %v4661 = vunpack.c.l.b16 %v804
      %v4662 = vunpack.c.l.b16 %v805
      %v4663 = vunpack.c.l.b16 %v806
      %v4664 = vunpack.c.l.b16 %v807
      %v4665 = vunpack.c.l.b16 %v808
      %v4666 = vunpack.c.l.b16 %v809
      %v4667 = vunpack.c.l.b16 %v810
      %v4668 = vunpack.c.l.b16 %v811
      %v4669 = vunpack.c.l.b16 %v812
      %v4670 = vunpack.c.l.b16 %v813
      %v4671 = vunpack.c.l.b16 %v814
      %v4672 = vunpack.c.l.b16 %v815
      %v4673 = vunpack.c.l.b16 %v816
      %v4674 = vunpack.c.l.b16 %v817
      %v4675 = vunpack.c.l.b16 %v818
      %v4676 = vunpack.c.l.b16 %v819
      %v4677 = vunpack.c.l.b16 %v820
      %v4678 = vunpack.c.l.b16 %v821
      %v4679 = vunpack.c.l.b16 %v822
      %v4680 = vunpack.c.l.b16 %v823
      %v4681 = vunpack.c.l.b16 %v824
      %v4682 = vunpack.c.l.b16 %v825
      %v4683 = vunpack.c.l.b16 %v826
      %v4684 = vunpack.c.l.b16 %v827
      %v4685 = vunpack.c.l.b16 %v828
      %v4686 = vunpack.c.l.b16 %v829
      %v4687 = vunpack.c.l.b16 %v830
      %v4688 = vunpack.c.l.b16 %v831
      %v4689 = vunpack.c.l.b16 %v832
      %v4690 = vunpack.c.l.b16 %v833
      %v4691 = vunpack.c.l.b16 %v834
      %v4692 = vunpack.c.l.b16 %v835
      %v4693 = vunpack.c.l.b16 %v836
      %v4694 = vunpack.c.l.b16 %v837
      %v4695 = vunpack.c.l.b16 %v838
      %v4696 = vunpack.c.l.b16 %v839
      %v4697 = vunpack.c.l.b16 %v840
      %v4698 = vunpack.c.l.b16 %v841
      %v4699 = vunpack.c.l.b16 %v842
      %v4700 = vunpack.c.l.b16 %v843
      %v4701 = vunpack.c.l.b16 %v844
      %v4702 = vunpack.c.l.b16 %v845
      %v4703 = vunpack.c.l.b16 %v846
      %v4704 = vunpack.c.l.b16 %v847
      %v4705 = vunpack.c.l.b16 %v848
      %v4706 = vunpack.c.l.b16 %v849
      %v4707 = vunpack.c.l.b16 %v850
      %v4708 = vunpack.c.l.b16 %v851
      %v4709 = vunpack.c.l.b16 %v852
      %v4710 = vunpack.c.l.b16 %v853
      %v4711 = vunpack.c.l.b16 %v854
      %v4712 = vunpack.c.l.b16 %v855
      %v4713 = vunpack.c.l.b16 %v856
      %v4714 = vunpack.c.l.b16 %v857
      %v4715 = vunpack.c.l.b16 %v858
      %v4716 = vunpack.c.l.b16 %v859
      %v4717 = vunpack.c.l.b16 %v860
      %v4718 = vunpack.c.l.b16 %v861
      %v4719 = vunpack.c.l.b16 %v862
      %v4720 = vunpack.c.l.b16 %v863
      %v4721 = vunpack.c.l.b16 %v864
      %v4722 = vunpack.c.l.b16 %v865
      %v4723 = vunpack.c.l.b16 %v866
      %v4724 = vunpack.c.l.b16 %v867
      %v4725 = vunpack.c.l.b16 %v868
      %v4726 = vunpack.c.l.b16 %v869
      %v4727 = vunpack.c.l.b16 %v870
      %v4728 = vunpack.c.l.b16 %v871
      %v4729 = vunpack.c.l.b16 %v872
      %v4730 = vunpack.c.l.b16 %v873
      %v4731 = vunpack.c.l.b16 %v874
      %v4732 = vunpack.c.l.b16 %v875
      %v4733 = vunpack.c.l.b16 %v876
      %v4734 = vunpack.c.l.b16 %v877
      %v4735 = vunpack.c.l.b16 %v878
      %v4736 = vunpack.c.l.b16 %v879
      %v4737 = vunpack.c.l.b16 %v880
      %v4738 = vunpack.c.l.b16 %v881
      %v4739 = vunpack.c.l.b16 %v882
      %v4740 = vunpack.c.l.b16 %v883
      %v4741 = vunpack.c.l.b16 %v884
      %v4742 = vunpack.c.l.b16 %v885
      %v4743 = vunpack.c.l.b16 %v886
      %v4744 = vunpack.c.l.b16 %v887
      %v4745 = vunpack.c.l.b16 %v888
      %v4746 = vunpack.c.l.b16 %v889
      %v4747 = vunpack.c.l.b16 %v890
      %v4748 = vunpack.c.l.b16 %v891
      %v4749 = vunpack.c.l.b16 %v892
      %v4750 = vunpack.c.l.b16 %v893
      %v4751 = vunpack.c.l.b16 %v894
      %v4752 = vunpack.c.l.b16 %v895
      %v4753 = vunpack.c.l.b16 %v896
      %v4754 = vunpack.c.l.b16 %v897
      %v4755 = vunpack.c.l.b16 %v898
      %v4756 = vunpack.c.l.b16 %v899
      %v4757 = vunpack.c.l.b16 %v900
      %v4758 = vunpack.c.l.b16 %v901
      %v4759 = vunpack.c.l.b16 %v902
      %v4760 = vunpack.c.l.b16 %v903
      %v4761 = vunpack.c.l.b16 %v904
      %v4762 = vunpack.c.l.b16 %v905
      %v4763 = vunpack.c.l.b16 %v906
      %v4764 = vunpack.c.l.b16 %v907
      %v4765 = vunpack.c.l.b16 %v908
      %v4766 = vunpack.c.l.b16 %v909
      %v4767 = vunpack.c.l.b16 %v910
      %v4768 = vunpack.c.l.b16 %v911
      %v4769 = vunpack.c.l.b16 %v912
      %v4770 = vunpack.c.l.b16 %v913
      %v4771 = vunpack.c.l.b16 %v914
      %v4772 = vunpack.c.l.b16 %v915
      %v4773 = vunpack.c.l.b16 %v916
      %v4774 = vunpack.c.l.b16 %v917
      %v4775 = vunpack.c.l.b16 %v918
      %v4776 = vunpack.c.l.b16 %v919
      %v4777 = vunpack.c.l.b16 %v920
      %v4778 = vunpack.c.l.b16 %v921
      %v4779 = vunpack.c.l.b16 %v922
      %v4780 = vunpack.c.l.b16 %v923
      %v4781 = vunpack.c.l.b16 %v924
      %v4782 = vunpack.c.l.b16 %v925
      %v4783 = vunpack.c.l.b16 %v926
      %v4784 = vunpack.c.l.b16 %v927
      %v4785 = vunpack.c.l.b16 %v928
      %v4786 = vunpack.c.l.b16 %v929
      %v4787 = vunpack.c.l.b16 %v930
      %v4788 = vunpack.c.l.b16 %v931
      %v4789 = vunpack.c.l.b16 %v932
      %v4790 = vunpack.c.l.b16 %v933
      %v4791 = vunpack.c.l.b16 %v934
      %v4792 = vunpack.c.l.b16 %v935
      %v4793 = vunpack.c.l.b16 %v936
      %v4794 = vunpack.c.l.b16 %v937
      %v4795 = vunpack.c.l.b16 %v938
      %v4796 = vunpack.c.l.b16 %v939
      %v4797 = vunpack.c.l.b16 %v940
      %v4798 = vunpack.c.l.b16 %v941
      %v4799 = vunpack.c.l.b16 %v942
      %v4800 = vunpack.c.l.b16 %v943
      %v4801 = vunpack.c.l.b16 %v944
      %v4802 = vunpack.c.l.b16 %v945
      %v4803 = vunpack.c.l.b16 %v946
      %v4804 = vunpack.c.l.b16 %v947
      %v4805 = vunpack.c.l.b16 %v948
      %v4806 = vunpack.c.l.b16 %v949
      %v4807 = vunpack.c.l.b16 %v950
      %v4808 = vunpack.c.l.b16 %v951
      %v4809 = vunpack.c.l.b16 %v952
      %v4810 = vunpack.c.l.b16 %v953
      %v4811 = vunpack.c.l.b16 %v954
      %v4812 = vunpack.c.l.b16 %v955
      %v4813 = vunpack.c.l.b16 %v956
      %v4814 = vunpack.c.l.b16 %v957
      %v4815 = vunpack.c.l.b16 %v958
      %v4816 = vunpack.c.l.b16 %v959
      %v4817 = vunpack.c.l.b16 %v960
      %v4818 = vunpack.c.l.b16 %v961
      %v4819 = vunpack.c.l.b16 %v962
      %v4820 = vunpack.c.l.b16 %v963
      %v4821 = vunpack.c.l.b16 %v964
      %v4822 = vunpack.c.l.b16 %v965
      %v4823 = vunpack.c.l.b16 %v966
      %v4824 = vunpack.c.l.b16 %v967
      %v4825 = vunpack.c.l.b16 %v968
      %v4826 = vunpack.c.l.b16 %v969
      %v4827 = vunpack.c.l.b16 %v970
      %v4828 = vunpack.c.l.b16 %v971
      %v4829 = vunpack.c.l.b16 %v972
      %v4830 = vunpack.c.l.b16 %v973
      %v4831 = vunpack.c.l.b16 %v974
      %v4832 = vunpack.c.l.b16 %v975
      %v4833 = vunpack.c.l.b16 %v976
      %v4834 = vunpack.c.l.b16 %v977
      %v4835 = vunpack.c.l.b16 %v978
      %v4836 = vunpack.c.l.b16 %v979
      %v4837 = vunpack.c.l.b16 %v980
      %v4838 = vunpack.c.l.b16 %v981
      %v4839 = vunpack.c.l.b16 %v982
      %v4840 = vunpack.c.l.b16 %v983
      %v4841 = vunpack.c.l.b16 %v984
      %v4842 = vunpack.c.l.b16 %v985
      %v4843 = vunpack.c.l.b16 %v986
      %v4844 = vunpack.c.l.b16 %v987
      %v4845 = vunpack.c.l.b16 %v988
      %v4846 = vunpack.c.l.b16 %v989
      %v4847 = vunpack.c.l.b16 %v990
      %v4848 = vunpack.c.l.b16 %v991
      %v4849 = vunpack.c.l.b16 %v992
      %v4850 = vunpack.c.l.b16 %v993
      %v4851 = vunpack.c.l.b16 %v994
      %v4852 = vunpack.c.l.b16 %v995
      %v4853 = vunpack.c.l.b16 %v996
      %v4854 = vunpack.c.l.b16 %v997
      %v4855 = vunpack.c.l.b16 %v998
      %v4856 = vunpack.c.l.b16 %v999
      %v4857 = vunpack.c.l.b16 %v1000
      %v4858 = vunpack.c.l.b16 %v1001
      %v4859 = vunpack.c.l.b16 %v1002
      %v4860 = vunpack.c.l.b16 %v1003
      %v4861 = vunpack.c.l.b16 %v1004
      %v4862 = vunpack.c.l.b16 %v1005
      %v4863 = vunpack.c.l.b16 %v1006
      %v4864 = vunpack.c.l.b16 %v1007
      %v4865 = vunpack.c.l.b16 %v1008
      %v4866 = vunpack.c.l.b16 %v1009
      %v4867 = vunpack.c.l.b16 %v1010
      %v4868 = vunpack.c.l.b16 %v1011
      %v4869 = vunpack.c.l.b16 %v1012
      %v4870 = vunpack.c.l.b16 %v1013
      %v4871 = vunpack.c.l.b16 %v1014
      %v4872 = vunpack.c.l.b16 %v1015
      %v4873 = vunpack.c.l.b16 %v1016
      %v4874 = vunpack.c.l.b16 %v1017
      %v4875 = vunpack.c.l.b16 %v1018
      %v4876 = vunpack.c.l.b16 %v1019
      %v4877 = vunpack.c.l.b16 %v1020
      %v4878 = vunpack.c.l.b16 %v1021
      %v4879 = vunpack.c.l.b16 %v1022
      %v4880 = vunpack.c.l.b16 %v1023
      %v4881 = vunpack.c.l.b16 %v1024
      %v4882 = vunpack.c.l.b16 %v1025
      %v4883 = vunpack.c.l.b16 %v1026
      %v4884 = vunpack.c.l.b16 %v1027
      %v4885 = vunpack.c.l.b16 %v1028
      %v4886 = vunpack.c.l.b16 %v1029
      %v4887 = vunpack.c.l.b16 %v1030
      %v4888 = vunpack.c.l.b16 %v1031
      %v4889 = vunpack.c.l.b16 %v1032
      %v4890 = vunpack.c.l.b16 %v1033
      %v4891 = vunpack.c.l.b16 %v1034
      %v4892 = vunpack.c.l.b16 %v1035
      %v4893 = vunpack.c.l.b16 %v1036
      %v4894 = vunpack.c.l.b16 %v1037
      %v4895 = vunpack.c.l.b16 %v1038
      %v4896 = vunpack.c.l.b16 %v1039
      %v4897 = vunpack.c.l.b16 %v1040
      %v4898 = vunpack.c.l.b16 %v1041
      %v4899 = vunpack.c.l.b16 %v1042
      %v4900 = vunpack.c.l.b16 %v1043
      %v4901 = vunpack.c.l.b16 %v1044
      %v4902 = vunpack.c.l.b16 %v1045
      %v4903 = vunpack.c.l.b16 %v1046
      %v4904 = vunpack.c.l.b16 %v1047
      %v4905 = vunpack.c.l.b16 %v1048
      %v4906 = vunpack.c.l.b16 %v1049
      %v4907 = vunpack.c.l.b16 %v1050
      %v4908 = vunpack.c.l.b16 %v1051
      %v4909 = vunpack.c.l.b16 %v1052
      %v4910 = vunpack.c.l.b16 %v1053
      %v4911 = vunpack.c.l.b16 %v1054
      %v4912 = vunpack.c.l.b16 %v1055
      %v4913 = vunpack.c.l.b16 %v1056
      %v4914 = vunpack.c.l.b16 %v1057
      %v4915 = vunpack.c.l.b16 %v1058
      %v4916 = vunpack.c.l.b16 %v1059
      %v4917 = vunpack.c.l.b16 %v1060
      %v4918 = vunpack.c.l.b16 %v1061
      %v4919 = vunpack.c.l.b16 %v1062
      %v4920 = vunpack.c.l.b16 %v1063
      %v4921 = vunpack.c.l.b16 %v1064
      %v4922 = vunpack.c.l.b16 %v1065
      %v4923 = vunpack.c.l.b16 %v1066
      %v4924 = vunpack.c.l.b16 %v1067
      %v4925 = vunpack.c.l.b16 %v1068
      %v4926 = vunpack.c.l.b16 %v1069
      %v4927 = vunpack.c.l.b16 %v1070
      %v4928 = vunpack.c.l.b16 %v1071
      %v4929 = vunpack.c.l.b16 %v1072
      %v4930 = vunpack.c.l.b16 %v1073
      %v4931 = vunpack.c.l.b16 %v1074
      %v4932 = vunpack.c.l.b16 %v1075
      %v4933 = vunpack.c.l.b16 %v1076
      %v4934 = vunpack.c.l.b16 %v1077
      %v4935 = vunpack.c.l.b16 %v1078
      %v4936 = vunpack.c.l.b16 %v1079
      %v4937 = vunpack.c.l.b16 %v1080
      %v4938 = vunpack.c.l.b16 %v1081
      %v4939 = vunpack.c.l.b16 %v1082
      %v4940 = vunpack.c.l.b16 %v1083
      %v4941 = vunpack.c.l.b16 %v1084
      %v4942 = vunpack.c.l.b16 %v1085
      %v4943 = vunpack.c.l.b16 %v1086
      %v4944 = vunpack.c.l.b16 %v1087
      %v4945 = vunpack.c.l.b16 %v1088
      %v4946 = vunpack.c.l.b16 %v1089
      %v4947 = vunpack.c.l.b16 %v1090
      %v4948 = vunpack.c.l.b16 %v1091
      %v4949 = vunpack.c.l.b16 %v1092
      %v4950 = vunpack.c.l.b16 %v1093
      %v4951 = vunpack.c.l.b16 %v1094
      %v4952 = vunpack.c.l.b16 %v1095
      %v4953 = vunpack.c.l.b16 %v1096
      %v4954 = vunpack.c.l.b16 %v1097
      %v4955 = vunpack.c.l.b16 %v1098
      %v4956 = vunpack.c.l.b16 %v1099
      %v4957 = vunpack.c.l.b16 %v1100
      %v4958 = vunpack.c.l.b16 %v1101
      %v4959 = vunpack.c.l.b16 %v1102
      %v4960 = vunpack.c.l.b16 %v1103
      %v4961 = vunpack.c.l.b16 %v1104
      %v4962 = vunpack.c.l.b16 %v1105
      %v4963 = vunpack.c.l.b16 %v1106
      %v4964 = vunpack.c.l.b16 %v1107
      %v4965 = vunpack.c.l.b16 %v1108
      %v4966 = vunpack.c.l.b16 %v1109
      %v4967 = vunpack.c.l.b16 %v1110
      %v4968 = vunpack.c.l.b16 %v1111
      %v4969 = vunpack.c.l.b16 %v1112
      %v4970 = vunpack.c.l.b16 %v1113
      %v4971 = vunpack.c.l.b16 %v1114
      %v4972 = vunpack.c.l.b16 %v1115
      %v4973 = vunpack.c.l.b16 %v1116
      %v4974 = vunpack.c.l.b16 %v1117
      %v4975 = vunpack.c.l.b16 %v1118
      %v4976 = vunpack.c.l.b16 %v1119
      %v4977 = vunpack.c.l.b16 %v1120
      %v4978 = vunpack.c.l.b16 %v1121
      %v4979 = vunpack.c.l.b16 %v1122
      %v4980 = vunpack.c.l.b16 %v1123
      %v4981 = vunpack.c.l.b16 %v1124
      %v4982 = vunpack.c.l.b16 %v1125
      %v4983 = vunpack.c.l.b16 %v1126
      %v4984 = vunpack.c.l.b16 %v1127
      %v4985 = vunpack.c.l.b16 %v1128
      %v4986 = vunpack.c.l.b16 %v1129
      %v4987 = vunpack.c.l.b16 %v1130
      %v4988 = vunpack.c.l.b16 %v1131
      %v4989 = vunpack.c.l.b16 %v1132
      %v4990 = vunpack.c.l.b16 %v1133
      %v4991 = vunpack.c.l.b16 %v1134
      %v4992 = vunpack.c.l.b16 %v1135
      %v4993 = vunpack.c.l.b16 %v1136
      %v4994 = vunpack.c.l.b16 %v1137
      %v4995 = vunpack.c.l.b16 %v1138
      %v4996 = vunpack.c.l.b16 %v1139
      %v4997 = vunpack.c.l.b16 %v1140
      %v4998 = vunpack.c.l.b16 %v1141
      %v4999 = vunpack.c.l.b16 %v1142
      %v5000 = vunpack.c.l.b16 %v1143
      %v5001 = vunpack.c.l.b16 %v1144
      %v5002 = vunpack.c.l.b16 %v1145
      %v5003 = vunpack.c.l.b16 %v1146
      %v5004 = vunpack.c.l.b16 %v1147
      %v5005 = vunpack.c.l.b16 %v1148
      %v5006 = vunpack.c.l.b16 %v1149
      %v5007 = vunpack.c.l.b16 %v1150
      %v5008 = vunpack.c.l.b16 %v1151
      %v5009 = vunpack.c.l.b16 %v1152
      %v5010 = vunpack.c.l.b16 %v1153
      %v5011 = vunpack.c.l.b16 %v1154
      %v5012 = vunpack.c.l.b16 %v1155
      %v5013 = vunpack.c.l.b16 %v1156
      %v5014 = vunpack.c.l.b16 %v1157
      %v5015 = vunpack.c.l.b16 %v1158
      %v5016 = vunpack.c.l.b16 %v1159
      %v5017 = vunpack.c.l.b16 %v1160
      %v5018 = vunpack.c.l.b16 %v1161
      %v5019 = vunpack.c.l.b16 %v1162
      %v5020 = vunpack.c.l.b16 %v1163
      %v5021 = vunpack.c.l.b16 %v1164
      %v5022 = vunpack.c.l.b16 %v1165
      %v5023 = vunpack.c.l.b16 %v1166
      %v5024 = vunpack.c.l.b16 %v1167
      %v5025 = vunpack.c.l.b16 %v1168
      %v5026 = vunpack.c.l.b16 %v1169
      %v5027 = vunpack.c.l.b16 %v1170
      %v5028 = vunpack.c.l.b16 %v1171
      %v5029 = vunpack.c.l.b16 %v1172
      %v5030 = vunpack.c.l.b16 %v1173
      %v5031 = vunpack.c.l.b16 %v1174
      %v5032 = vunpack.c.l.b16 %v1175
      %v5033 = vunpack.c.l.b16 %v1176
      %v5034 = vunpack.c.l.b16 %v1177
      %v5035 = vunpack.c.l.b16 %v1178
      %v5036 = vunpack.c.l.b16 %v1179
      %v5037 = vunpack.c.l.b16 %v1180
      %v5038 = vunpack.c.l.b16 %v1181
      %v5039 = vunpack.c.l.b16 %v1182
      %v5040 = vunpack.c.l.b16 %v1183
      %v5041 = vunpack.c.l.b16 %v1184
      %v5042 = vunpack.c.l.b16 %v1185
      %v5043 = vunpack.c.l.b16 %v1186
      %v5044 = vunpack.c.l.b16 %v1187
      %v5045 = vunpack.c.l.b16 %v1188
      %v5046 = vunpack.c.l.b16 %v1189
      %v5047 = vunpack.c.l.b16 %v1190
      %v5048 = vunpack.c.l.b16 %v1191
      %v5049 = vunpack.c.l.b16 %v1192
      %v5050 = vunpack.c.l.b16 %v1193
      %v5051 = vunpack.c.l.b16 %v1194
      %v5052 = vunpack.c.l.b16 %v1195
      %v5053 = vunpack.c.l.b16 %v1196
      %v5054 = vunpack.c.l.b16 %v1197
      %v5055 = vunpack.c.l.b16 %v1198
      %v5056 = vunpack.c.l.b16 %v1199
      %v5057 = vunpack.c.l.b16 %v1200
      %v5058 = vunpack.c.l.b16 %v1201
      %v5059 = vunpack.c.l.b16 %v1202
      %v5060 = vunpack.c.l.b16 %v1203
      %v5061 = vunpack.c.l.b16 %v1204
      %v5062 = vunpack.c.l.b16 %v1205
      %v5063 = vunpack.c.l.b16 %v1206
      %v5064 = vunpack.c.l.b16 %v1207
      %v5065 = vunpack.c.l.b16 %v1208
      %v5066 = vunpack.c.l.b16 %v1209
      %v5067 = vunpack.c.l.b16 %v1210
      %v5068 = vunpack.c.l.b16 %v1211
      %v5069 = vunpack.c.l.b16 %v1212
      %v5070 = vunpack.c.l.b16 %v1213
      %v5071 = vunpack.c.l.b16 %v1214
      %v5072 = vunpack.c.l.b16 %v1215
      %v5073 = vunpack.c.l.b16 %v1216
      %v5074 = vunpack.c.l.b16 %v1217
      %v5075 = vunpack.c.l.b16 %v1218
      %v5076 = vunpack.c.l.b16 %v1219
      %v5077 = vunpack.c.l.b16 %v1220
      %v5078 = vunpack.c.l.b16 %v1221
      %v5079 = vunpack.c.l.b16 %v1222
      %v5080 = vunpack.c.l.b16 %v1223
      %v5081 = vunpack.c.l.b16 %v1224
      %v5082 = vunpack.c.l.b16 %v1225
      %v5083 = vunpack.c.l.b16 %v1226
      %v5084 = vunpack.c.l.b16 %v1227
      %v5085 = vunpack.c.l.b16 %v1228
      %v5086 = vunpack.c.l.b16 %v1229
      %v5087 = vunpack.c.l.b16 %v1230
      %v5088 = vunpack.c.l.b16 %v1231
      %v5089 = vunpack.c.l.b16 %v1232
      %v5090 = vunpack.c.l.b16 %v1233
      %v5091 = vunpack.c.l.b16 %v1234
      %v5092 = vunpack.c.l.b16 %v1235
      %v5093 = vunpack.c.l.b16 %v1236
      %v5094 = vunpack.c.l.b16 %v1237
      %v5095 = vunpack.c.l.b16 %v1238
      %v5096 = vunpack.c.l.b16 %v1239
      %v5097 = vunpack.c.l.b16 %v1240
      %v5098 = vunpack.c.l.b16 %v1241
      %v5099 = vunpack.c.l.b16 %v1242
      %v5100 = vunpack.c.l.b16 %v1243
      %v5101 = vunpack.c.l.b16 %v1244
      %v5102 = vunpack.c.l.b16 %v1245
      %v5103 = vunpack.c.l.b16 %v1246
      %v5104 = vunpack.c.l.b16 %v1247
      %v5105 = vunpack.c.l.b16 %v1248
      %v5106 = vunpack.c.l.b16 %v1249
      %v5107 = vunpack.c.l.b16 %v1250
      %v5108 = vunpack.c.l.b16 %v1251
      %v5109 = vunpack.c.l.b16 %v1252
      %v5110 = vunpack.c.l.b16 %v1253
      %v5111 = vunpack.c.l.b16 %v1254
      %v5112 = vunpack.c.l.b16 %v1255
      %v5113 = vunpack.c.l.b16 %v1256
      %v5114 = vunpack.c.l.b16 %v1257
      %v5115 = vunpack.c.l.b16 %v1258
      %v5116 = vunpack.c.l.b16 %v1259
      %v5117 = vunpack.c.l.b16 %v1260
      %v5118 = vunpack.c.l.b16 %v1261
      %v5119 = vunpack.c.l.b16 %v1262
      %v5120 = vunpack.c.l.b16 %v1263
      %v5121 = vunpack.c.l.b16 %v1264
      %v5122 = vunpack.c.l.b16 %v1265
      %v5123 = vunpack.c.l.b16 %v1266
      %v5124 = vunpack.c.l.b16 %v1267
      %v5125 = vunpack.c.l.b16 %v1268
      %v5126 = vunpack.c.l.b16 %v1269
      %v5127 = vunpack.c.l.b16 %v1270
      %v5128 = vunpack.c.l.b16 %v1271
      %v5129 = vunpack.c.l.b16 %v1272
      %v5130 = vunpack.c.l.b16 %v1273
      %v5131 = vunpack.c.l.b16 %v1274
      %v5132 = vunpack.c.l.b16 %v1275
      %v5133 = vunpack.c.l.b16 %v1276
      %v5134 = vunpack.c.l.b16 %v1277
      %v5135 = vunpack.c.l.b16 %v1278
      %v5136 = vunpack.c.l.b16 %v1279
      %v5137 = vunpack.c.l.b16 %v1280
      %v5138 = vunpack.c.l.b16 %v1281
      %v5139 = vunpack.c.l.b16 %v1282
      %v5140 = vunpack.c.l.b16 %v1283
      %v5141 = vunpack.c.l.b16 %v1284
      %v5142 = vunpack.c.l.b16 %v1285
      %v5143 = vunpack.c.l.b16 %v1286
      %v5144 = vunpack.c.l.b16 %v1287
      %v5145 = vunpack.c.l.b16 %v1288
      %v5146 = vunpack.c.l.b16 %v1289
      %v5147 = vunpack.c.l.b16 %v1290
      %v5148 = vunpack.c.l.b16 %v1291
      %v5149 = vunpack.c.l.b16 %v1292
      %v5150 = vunpack.c.l.b16 %v1293
      %v5151 = vunpack.c.l.b16 %v1294
      %v5152 = vunpack.c.l.b16 %v1295
      %v5153 = vunpack.c.l.b16 %v1296
      %v5154 = vunpack.c.l.b16 %v1297
      %v5155 = vunpack.c.l.b16 %v1298
      %v5156 = vunpack.c.l.b16 %v1299
      %v5157 = vunpack.c.l.b16 %v1300
      %v5158 = vunpack.c.l.b16 %v1301
      %v5159 = vunpack.c.l.b16 %v1302
      %v5160 = vunpack.c.l.b16 %v1303
      %v5161 = vunpack.c.l.b16 %v1304
      %v5162 = vunpack.c.l.b16 %v1305
      %v5163 = vunpack.c.l.b16 %v1306
      %v5164 = vunpack.c.l.b16 %v1307
      %v5165 = vunpack.c.l.b16 %v1308
      %v5166 = vunpack.c.l.b16 %v1309
      %v5167 = vunpack.c.l.b16 %v1310
      %v5168 = vunpack.c.l.b16 %v1311
      %v5169 = vunpack.c.l.b16 %v1312
      %v5170 = vunpack.c.l.b16 %v1313
      %v5171 = vunpack.c.l.b16 %v1314
      %v5172 = vunpack.c.l.b16 %v1315
      %v5173 = vunpack.c.l.b16 %v1316
      %v5174 = vunpack.c.l.b16 %v1317
      %v5175 = vunpack.c.l.b16 %v1318
      %v5176 = vunpack.c.l.b16 %v1319
      %v5177 = vunpack.c.l.b16 %v1320
      %v5178 = vunpack.c.l.b16 %v1321
      %v5179 = vunpack.c.l.b16 %v1322
      %v5180 = vunpack.c.l.b16 %v1323
      %v5181 = vunpack.c.l.b16 %v1324
      %v5182 = vunpack.c.l.b16 %v1325
      %v5183 = vunpack.c.l.b16 %v1326
      %v5184 = vunpack.c.l.b16 %v1327
      %v5185 = vunpack.c.l.b16 %v1328
      %v5186 = vunpack.c.l.b16 %v1329
      %v5187 = vunpack.c.l.b16 %v1330
      %v5188 = vunpack.c.l.b16 %v1331
      %v5189 = vunpack.c.l.b16 %v1332
      %v5190 = vunpack.c.l.b16 %v1333
      %v5191 = vunpack.c.l.b16 %v1334
      %v5192 = vunpack.c.l.b16 %v1335
      %v5193 = vunpack.c.l.b16 %v1336
      %v5194 = vunpack.c.l.b16 %v1337
      %v5195 = vunpack.c.l.b16 %v1338
      %v5196 = vunpack.c.l.b16 %v1339
      %v5197 = vunpack.c.l.b16 %v1340
      %v5198 = vunpack.c.l.b16 %v1341
      %v5199 = vunpack.c.l.b16 %v1342
      %v5200 = vunpack.c.l.b16 %v1343
      %v5201 = vunpack.c.l.b16 %v1344
      %v5202 = vunpack.c.l.b16 %v1345
      %v5203 = vunpack.c.l.b16 %v1346
      %v5204 = vunpack.c.l.b16 %v1347
      %v5205 = vunpack.c.l.b16 %v1348
      %v5206 = vunpack.c.l.b16 %v1349
      %v5207 = vunpack.c.l.b16 %v1350
      %v5208 = vunpack.c.l.b16 %v1351
      %v5209 = vunpack.c.l.b16 %v1352
      %v5210 = vunpack.c.l.b16 %v1353
      %v5211 = vunpack.c.l.b16 %v1354
      %v5212 = vunpack.c.l.b16 %v1355
      %v5213 = vunpack.c.l.b16 %v1356
      %v5214 = vunpack.c.l.b16 %v1357
      %v5215 = vunpack.c.l.b16 %v1358
      %v5216 = vunpack.c.l.b16 %v1359
      %v5217 = vunpack.c.l.b16 %v1360
      %v5218 = vunpack.c.l.b16 %v1361
      %v5219 = vunpack.c.l.b16 %v1362
      %v5220 = vunpack.c.l.b16 %v1363
      %v5221 = vunpack.c.l.b16 %v1364
      %v5222 = vunpack.c.l.b16 %v1365
      %v5223 = vunpack.c.l.b16 %v1366
      %v5224 = vunpack.c.l.b16 %v1367
      %v5225 = vunpack.c.l.b16 %v1368
      %v5226 = vunpack.c.l.b16 %v1369
      %v5227 = vunpack.c.l.b16 %v1370
      %v5228 = vunpack.c.l.b16 %v1371
      %v5229 = vunpack.c.l.b16 %v1372
      %v5230 = vunpack.c.l.b16 %v1373
      %v5231 = vunpack.c.l.b16 %v1374
      %v5232 = vunpack.c.l.b16 %v1375
      %v5233 = vunpack.c.l.b16 %v1376
      %v5234 = vunpack.c.l.b16 %v1377
      %v5235 = vunpack.c.l.b16 %v1378
      %v5236 = vunpack.c.l.b16 %v1379
      %v5237 = vunpack.c.l.b16 %v1380
      %v5238 = vunpack.c.l.b16 %v1381
      %v5239 = vunpack.c.l.b16 %v1382
      %v5240 = vunpack.c.l.b16 %v1383
      %v5241 = vunpack.c.l.b16 %v1384
      %v5242 = vunpack.c.l.b16 %v1385
      %v5243 = vunpack.c.l.b16 %v1386
      %v5244 = vunpack.c.l.b16 %v1387
      %v5245 = vunpack.c.l.b16 %v1388
      %v5246 = vunpack.c.l.b16 %v1389
      %v5247 = vunpack.c.l.b16 %v1390
      %v5248 = vunpack.c.l.b16 %v1391
      %v5249 = vunpack.c.l.b16 %v1392
      %v5250 = vunpack.c.l.b16 %v1393
      %v5251 = vunpack.c.l.b16 %v1394
      %v5252 = vunpack.c.l.b16 %v1395
      %v5253 = vunpack.c.l.b16 %v1396
      %v5254 = vunpack.c.l.b16 %v1397
      %v5255 = vunpack.c.l.b16 %v1398
      %v5256 = vunpack.c.l.b16 %v1399
      %v5257 = vunpack.c.l.b16 %v1400
      %v5258 = vunpack.c.l.b16 %v1401
      %v5259 = vunpack.c.l.b16 %v1402
      %v5260 = vunpack.c.l.b16 %v1403
      %v5261 = vunpack.c.l.b16 %v1404
      %v5262 = vunpack.c.l.b16 %v1405
      %v5263 = vunpack.c.l.b16 %v1406
      %v5264 = vunpack.c.l.b16 %v1407
      %v5265 = vunpack.c.l.b16 %v1408
      %v5266 = vunpack.c.l.b16 %v1409
      %v5267 = vunpack.c.l.b16 %v1410
      %v5268 = vunpack.c.l.b16 %v1411
      %v5269 = vunpack.c.l.b16 %v1412
      %v5270 = vunpack.c.l.b16 %v1413
      %v5271 = vunpack.c.l.b16 %v1414
      %v5272 = vunpack.c.l.b16 %v1415
      %v5273 = vunpack.c.l.b16 %v1416
      %v5274 = vunpack.c.l.b16 %v1417
      %v5275 = vunpack.c.l.b16 %v1418
      %v5276 = vunpack.c.l.b16 %v1419
      %v5277 = vunpack.c.l.b16 %v1420
      %v5278 = vunpack.c.l.b16 %v1421
      %v5279 = vunpack.c.l.b16 %v1422
      %v5280 = vunpack.c.l.b16 %v1423
      %v5281 = vunpack.c.l.b16 %v1424
      %v5282 = vunpack.c.l.b16 %v1425
      %v5283 = vunpack.c.l.b16 %v1426
      %v5284 = vunpack.c.l.b16 %v1427
      %v5285 = vunpack.c.l.b16 %v1428
      %v5286 = vunpack.c.l.b16 %v1429
      %v5287 = vunpack.c.l.b16 %v1430
      %v5288 = vunpack.c.l.b16 %v1431
      %v5289 = vunpack.c.l.b16 %v1432
      %v5290 = vunpack.c.l.b16 %v1433
      %v5291 = vunpack.c.l.b16 %v1434
      %v5292 = vunpack.c.l.b16 %v1435
      %v5293 = vunpack.c.l.b16 %v1436
      %v5294 = vunpack.c.l.b16 %v1437
      %v5295 = vunpack.c.l.b16 %v1438
      %v5296 = vunpack.c.l.b16 %v1439
      %v5297 = vunpack.c.l.b16 %v1440
      %v5298 = vunpack.c.l.b16 %v1441
      %v5299 = vunpack.c.l.b16 %v1442
      %v5300 = vunpack.c.l.b16 %v1443
      %v5301 = vunpack.c.l.b16 %v1444
      %v5302 = vunpack.c.l.b16 %v1445
      %v5303 = vunpack.c.l.b16 %v1446
      %v5304 = vunpack.c.l.b16 %v1447
      %v5305 = vunpack.c.l.b16 %v1448
      %v5306 = vunpack.c.l.b16 %v1449
      %v5307 = vunpack.c.l.b16 %v1450
      %v5308 = vunpack.c.l.b16 %v1451
      %v5309 = vunpack.c.l.b16 %v1452
      %v5310 = vunpack.c.l.b16 %v1453
      %v5311 = vunpack.c.l.b16 %v1454
      %v5312 = vunpack.c.l.b16 %v1455
      %v5313 = vunpack.c.l.b16 %v1456
      %v5314 = vunpack.c.l.b16 %v1457
      %v5315 = vunpack.c.l.b16 %v1458
      %v5316 = vunpack.c.l.b16 %v1459
      %v5317 = vunpack.c.l.b16 %v1460
      %v5318 = vunpack.c.l.b16 %v1461
      %v5319 = vunpack.c.l.b16 %v1462
      %v5320 = vunpack.c.l.b16 %v1463
      %v5321 = vunpack.c.l.b16 %v1464
      %v5322 = vunpack.c.l.b16 %v1465
      %v5323 = vunpack.c.l.b16 %v1466
      %v5324 = vunpack.c.l.b16 %v1467
      %v5325 = vunpack.c.l.b16 %v1468
      %v5326 = vunpack.c.l.b16 %v1469
      %v5327 = vunpack.c.l.b16 %v1470
      %v5328 = vunpack.c.l.b16 %v1471
      %v5329 = vunpack.c.l.b16 %v1472
      %v5330 = vunpack.c.l.b16 %v1473
      %v5331 = vunpack.c.l.b16 %v1474
      %v5332 = vunpack.c.l.b16 %v1475
      %v5333 = vunpack.c.l.b16 %v1476
      %v5334 = vunpack.c.l.b16 %v1477
      %v5335 = vunpack.c.l.b16 %v1478
      %v5336 = vunpack.c.l.b16 %v1479
      %v5337 = vunpack.c.l.b16 %v1480
      %v5338 = vunpack.c.l.b16 %v1481
      %v5339 = vunpack.c.l.b16 %v1482
      %v5340 = vunpack.c.l.b16 %v1483
      %v5341 = vunpack.c.l.b16 %v1484
      %v5342 = vunpack.c.l.b16 %v1485
      %v5343 = vunpack.c.l.b16 %v1486
      %v5344 = vunpack.c.l.b16 %v1487
      %v5345 = vunpack.c.l.b16 %v1488
      %v5346 = vunpack.c.l.b16 %v1489
      %v5347 = vunpack.c.l.b16 %v1490
      %v5348 = vunpack.c.l.b16 %v1491
      %v5349 = vunpack.c.l.b16 %v1492
      %v5350 = vunpack.c.l.b16 %v1493
      %v5351 = vunpack.c.l.b16 %v1494
      %v5352 = vunpack.c.l.b16 %v1495
      %v5353 = vunpack.c.l.b16 %v1496
      %v5354 = vunpack.c.l.b16 %v1497
      %v5355 = vunpack.c.l.b16 %v1498
      %v5356 = vunpack.c.l.b16 %v1499
      %v5357 = vunpack.c.l.b16 %v1500
      %v5358 = vunpack.c.l.b16 %v1501
      %v5359 = vunpack.c.l.b16 %v1502
      %v5360 = vunpack.c.l.b16 %v1503
      %v5361 = vunpack.c.l.b16 %v1504
      %v5362 = vunpack.c.l.b16 %v1505
      %v5363 = vunpack.c.l.b16 %v1506
      %v5364 = vunpack.c.l.b16 %v1507
      %v5365 = vunpack.c.l.b16 %v1508
      %v5366 = vunpack.c.l.b16 %v1509
      %v5367 = vunpack.c.l.b16 %v1510
      %v5368 = vunpack.c.l.b16 %v1511
      %v5369 = vunpack.c.l.b16 %v1512
      %v5370 = vunpack.c.l.b16 %v1513
      %v5371 = vunpack.c.l.b16 %v1514
      %v5372 = vunpack.c.l.b16 %v1515
      %v5373 = vunpack.c.l.b16 %v1516
      %v5374 = vunpack.c.l.b16 %v1517
      %v5375 = vunpack.c.l.b16 %v1518
      %v5376 = vunpack.c.l.b16 %v1519
      %v5377 = vunpack.c.l.b16 %v1520
      %v5378 = vunpack.c.l.b16 %v1521
      %v5379 = vunpack.c.l.b16 %v1522
      %v5380 = vunpack.c.l.b16 %v1523
      %v5381 = vunpack.c.l.b16 %v1524
      %v5382 = vunpack.c.l.b16 %v1525
      %v5383 = vunpack.c.l.b16 %v1526
      %v5384 = vunpack.c.l.b16 %v1527
      %v5385 = vunpack.c.l.b16 %v1528
      %v5386 = vunpack.c.l.b16 %v1529
      %v5387 = vunpack.c.l.b16 %v1530
      %v5388 = vunpack.c.l.b16 %v1531
      %v5389 = vunpack.c.l.b16 %v1532
      %v5390 = vunpack.c.l.b16 %v1533
      %v5391 = vunpack.c.l.b16 %v1534
      %v5392 = vunpack.c.l.b16 %v1535
      %v5393 = vunpack.c.l.b16 %v1536
      %v5394 = vunpack.c.l.b16 %v1537
      %v5395 = vunpack.c.l.b16 %v1538
      %v5396 = vunpack.c.l.b16 %v1539
      %v5397 = vunpack.c.l.b16 %v1540
      %v5398 = vunpack.c.l.b16 %v1541
      %v5399 = vunpack.c.l.b16 %v1542
      %v5400 = vunpack.c.l.b16 %v1543
      %v5401 = vunpack.c.l.b16 %v1544
      %v5402 = vunpack.c.l.b16 %v1545
      %v5403 = vunpack.c.l.b16 %v1546
      %v5404 = vunpack.c.l.b16 %v1547
      %v5405 = vunpack.c.l.b16 %v1548
      %v5406 = vunpack.c.l.b16 %v1549
      %v5407 = vunpack.c.l.b16 %v1550
      %v5408 = vunpack.c.l.b16 %v1551
      %v5409 = vunpack.c.l.b16 %v1552
      %v5410 = vunpack.c.l.b16 %v1553
      %v5411 = vunpack.c.l.b16 %v1554
      %v5412 = vunpack.c.l.b16 %v1555
      %v5413 = vunpack.c.l.b16 %v1556
      %v5414 = vunpack.c.l.b16 %v1557
      %v5415 = vunpack.c.l.b16 %v1558
      %v5416 = vunpack.c.l.b16 %v1559
      %v5417 = vunpack.c.l.b16 %v1560
      %v5418 = vunpack.c.l.b16 %v1561
      %v5419 = vunpack.c.l.b16 %v1562
      %v5420 = vunpack.c.l.b16 %v1563
      %v5421 = vunpack.c.l.b16 %v1564
      %v5422 = vunpack.c.l.b16 %v1565
      %v5423 = vunpack.c.l.b16 %v1566
      %v5424 = vunpack.c.l.b16 %v1567
      %v5425 = vunpack.c.l.b16 %v1568
      %v5426 = vunpack.c.l.b16 %v1569
      %v5427 = vunpack.c.l.b16 %v1570
      %v5428 = vunpack.c.l.b16 %v1571
      %v5429 = vunpack.c.l.b16 %v1572
      %v5430 = vunpack.c.l.b16 %v1573
      %v5431 = vunpack.c.l.b16 %v1574
      %v5432 = vunpack.c.l.b16 %v1575
      %v5433 = vunpack.c.l.b16 %v1576
      %v5434 = vunpack.c.l.b16 %v1577
      %v5435 = vunpack.c.l.b16 %v1578
      %v5436 = vunpack.c.l.b16 %v1579
      %v5437 = vunpack.c.l.b16 %v1580
      %v5438 = vunpack.c.l.b16 %v1581
      %v5439 = vunpack.c.l.b16 %v1582
      %v5440 = vunpack.c.l.b16 %v1583
      %v5441 = vunpack.c.l.b16 %v1584
      %v5442 = vunpack.c.l.b16 %v1585
      %v5443 = vunpack.c.l.b16 %v1586
      %v5444 = vunpack.c.l.b16 %v1587
      %v5445 = vunpack.c.l.b16 %v1588
      %v5446 = vunpack.c.l.b16 %v1589
      %v5447 = vunpack.c.l.b16 %v1590
      %v5448 = vunpack.c.l.b16 %v1591
      %v5449 = vunpack.c.l.b16 %v1592
      %v5450 = vunpack.c.l.b16 %v1593
      %v5451 = vunpack.c.l.b16 %v1594
      %v5452 = vunpack.c.l.b16 %v1595
      %v5453 = vunpack.c.l.b16 %v1596
      %v5454 = vunpack.c.l.b16 %v1597
      %v5455 = vunpack.c.l.b16 %v1598
      %v5456 = vunpack.c.l.b16 %v1599
      %v5457 = vunpack.c.l.b16 %v1600
      %v5458 = vunpack.c.l.b16 %v1601
      %v5459 = vunpack.c.l.b16 %v1602
      %v5460 = vunpack.c.l.b16 %v1603
      %v5461 = vunpack.c.l.b16 %v1604
      %v5462 = vunpack.c.l.b16 %v1605
      %v5463 = vunpack.c.l.b16 %v1606
      %v5464 = vunpack.c.l.b16 %v1607
      %v5465 = vunpack.c.l.b16 %v1608
      %v5466 = vunpack.c.l.b16 %v1609
      %v5467 = vunpack.c.l.b16 %v1610
      %v5468 = vunpack.c.l.b16 %v1611
      %v5469 = vunpack.c.l.b16 %v1612
      %v5470 = vunpack.c.l.b16 %v1613
      %v5471 = vunpack.c.l.b16 %v1614
      %v5472 = vunpack.c.l.b16 %v1615
      %v5473 = vunpack.c.l.b16 %v1616
      %v5474 = vunpack.c.l.b16 %v1617
      %v5475 = vunpack.c.l.b16 %v1618
      %v5476 = vunpack.c.l.b16 %v1619
      %v5477 = vunpack.c.l.b16 %v1620
      %v5478 = vunpack.c.l.b16 %v1621
      %v5479 = vunpack.c.l.b16 %v1622
      %v5480 = vunpack.c.l.b16 %v1623
      %v5481 = vunpack.c.l.b16 %v1624
      %v5482 = vunpack.c.l.b16 %v1625
      %v5483 = vunpack.c.l.b16 %v1626
      %v5484 = vunpack.c.l.b16 %v1627
      %v5485 = vunpack.c.l.b16 %v1628
      %v5486 = vunpack.c.l.b16 %v1629
      %v5487 = vunpack.c.l.b16 %v1630
      %v5488 = vunpack.c.l.b16 %v1631
      %v5489 = vunpack.c.l.b16 %v1632
      %v5490 = vunpack.c.l.b16 %v1633
      %v5491 = vunpack.c.l.b16 %v1634
      %v5492 = vunpack.c.l.b16 %v1635
      %v5493 = vunpack.c.l.b16 %v1636
      %v5494 = vunpack.c.l.b16 %v1637
      %v5495 = vunpack.c.l.b16 %v1638
      %v5496 = vunpack.c.l.b16 %v1639
      %v5497 = vunpack.c.l.b16 %v1640
      %v5498 = vunpack.c.l.b16 %v1641
      %v5499 = vunpack.c.l.b16 %v1642
      %v5500 = vunpack.c.l.b16 %v1643
      %v5501 = vunpack.c.l.b16 %v1644
      %v5502 = vunpack.c.l.b16 %v1645
      %v5503 = vunpack.c.l.b16 %v1646
      %v5504 = vunpack.c.l.b16 %v1647
      %v5505 = vunpack.c.l.b16 %v1648
      %v5506 = vunpack.c.l.b16 %v1649
      %v5507 = vunpack.c.l.b16 %v1650
      %v5508 = vunpack.c.l.b16 %v1651
      %v5509 = vunpack.c.l.b16 %v1652
      %v5510 = vunpack.c.l.b16 %v1653
      %v5511 = vunpack.c.l.b16 %v1654
      %v5512 = vunpack.c.l.b16 %v1655
      %v5513 = vunpack.c.l.b16 %v1656
      %v5514 = vunpack.c.l.b16 %v1657
      %v5515 = vunpack.c.l.b16 %v1658
      %v5516 = vunpack.c.l.b16 %v1659
      %v5517 = vunpack.c.l.b16 %v1660
      %v5518 = vunpack.c.l.b16 %v1661
      %v5519 = vunpack.c.l.b16 %v1662
      %v5520 = vunpack.c.l.b16 %v1663
      %v5521 = vunpack.c.l.b16 %v1664
      %v5522 = vunpack.c.l.b16 %v1665
      %v5523 = vunpack.c.l.b16 %v1666
      %v5524 = vunpack.c.l.b16 %v1667
      %v5525 = vunpack.c.l.b16 %v1668
      %v5526 = vunpack.c.l.b16 %v1669
      %v5527 = vunpack.c.l.b16 %v1670
      %v5528 = vunpack.c.l.b16 %v1671
      %v5529 = vunpack.c.l.b16 %v1672
      %v5530 = vunpack.c.l.b16 %v1673
      %v5531 = vunpack.c.l.b16 %v1674
      %v5532 = vunpack.c.l.b16 %v1675
      %v5533 = vunpack.c.l.b16 %v1676
      %v5534 = vunpack.c.l.b16 %v1677
      %v5535 = vunpack.c.l.b16 %v1678
      %v5536 = vunpack.c.l.b16 %v1679
      %v5537 = vunpack.c.l.b16 %v1680
      %v5538 = vunpack.c.l.b16 %v1681
      %v5539 = vunpack.c.l.b16 %v1682
      %v5540 = vunpack.c.l.b16 %v1683
      %v5541 = vunpack.c.l.b16 %v1684
      %v5542 = vunpack.c.l.b16 %v1685
      %v5543 = vunpack.c.l.b16 %v1686
      %v5544 = vunpack.c.l.b16 %v1687
      %v5545 = vunpack.c.l.b16 %v1688
      %v5546 = vunpack.c.l.b16 %v1689
      %v5547 = vunpack.c.l.b16 %v1690
      %v5548 = vunpack.c.l.b16 %v1691
      %v5549 = vunpack.c.l.b16 %v1692
      %v5550 = vunpack.c.l.b16 %v1693
      %v5551 = vunpack.c.l.b16 %v1694
      %v5552 = vunpack.c.l.b16 %v1695
      %v5553 = vunpack.c.l.b16 %v1696
      %v5554 = vunpack.c.l.b16 %v1697
      %v5555 = vunpack.c.l.b16 %v1698
      %v5556 = vunpack.c.l.b16 %v1699
      %v5557 = vunpack.c.l.b16 %v1700
      %v5558 = vunpack.c.l.b16 %v1701
      %v5559 = vunpack.c.l.b16 %v1702
      %v5560 = vunpack.c.l.b16 %v1703
      %v5561 = vunpack.c.l.b16 %v1704
      %v5562 = vunpack.c.l.b16 %v1705
      %v5563 = vunpack.c.l.b16 %v1706
      %v5564 = vunpack.c.l.b16 %v1707
      %v5565 = vunpack.c.l.b16 %v1708
      %v5566 = vunpack.c.l.b16 %v1709
      %v5567 = vunpack.c.l.b16 %v1710
      %v5568 = vunpack.c.l.b16 %v1711
      %v5569 = vunpack.c.l.b16 %v1712
      %v5570 = vunpack.c.l.b16 %v1713
      %v5571 = vunpack.c.l.b16 %v1714
      %v5572 = vunpack.c.l.b16 %v1715
      %v5573 = vunpack.c.l.b16 %v1716
      %v5574 = vunpack.c.l.b16 %v1717
      %v5575 = vunpack.c.l.b16 %v1718
      %v5576 = vunpack.c.l.b16 %v1719
      %v5577 = vunpack.c.l.b16 %v1720
      %v5578 = vunpack.c.l.b16 %v1721
      %v5579 = vunpack.c.l.b16 %v1722
      %v5580 = vunpack.c.l.b16 %v1723
      %v5581 = vunpack.c.l.b16 %v1724
      %v5582 = vunpack.c.l.b16 %v1725
      %v5583 = vunpack.c.l.b16 %v1726
      %v5584 = vunpack.c.l.b16 %v1727
      %v5585 = vunpack.c.l.b16 %v1728
      %v5586 = vunpack.c.l.b16 %v1729
      %v5587 = vunpack.c.l.b16 %v1730
      %v5588 = vunpack.c.l.b16 %v1731
      %v5589 = vunpack.c.l.b16 %v1732
      %v5590 = vunpack.c.l.b16 %v1733
      %v5591 = vunpack.c.l.b16 %v1734
      %v5592 = vunpack.c.l.b16 %v1735
      %v5593 = vunpack.c.l.b16 %v1736
      %v5594 = vunpack.c.l.b16 %v1737
      %v5595 = vunpack.c.l.b16 %v1738
      %v5596 = vunpack.c.l.b16 %v1739
      %v5597 = vunpack.c.l.b16 %v1740
      %v5598 = vunpack.c.l.b16 %v1741
      %v5599 = vunpack.c.l.b16 %v1742
      %v5600 = vunpack.c.l.b16 %v1743
      %v5601 = vunpack.c.l.b16 %v1744
      %v5602 = vpack.c.b16 %v4035, %v4034
      %v5603 = vpack.c.b16 %v4037, %v4036
      %v5604 = vpack.c.b16 %v4039, %v4038
      %v5605 = vpack.c.b16 %v4041, %v4040
      %v5606 = vpack.c.b16 %v4043, %v4042
      %v5607 = vpack.c.b16 %v4045, %v4044
      %v5608 = vpack.c.b16 %v4047, %v4046
      %v5609 = vpack.c.b16 %v4049, %v4048
      %v5610 = vpack.c.b16 %v4051, %v4050
      %v5611 = vpack.c.b16 %v4053, %v4052
      %v5612 = vpack.c.b16 %v4055, %v4054
      %v5613 = vpack.c.b16 %v4057, %v4056
      %v5614 = vpack.c.b16 %v4059, %v4058
      %v5615 = vpack.c.b16 %v4061, %v4060
      %v5616 = vpack.c.b16 %v4063, %v4062
      %v5617 = vpack.c.b16 %v4065, %v4064
      %v5618 = vpack.c.b16 %v4067, %v4066
      %v5619 = vpack.c.b16 %v4069, %v4068
      %v5620 = vpack.c.b16 %v4071, %v4070
      %v5621 = vpack.c.b16 %v4073, %v4072
      %v5622 = vpack.c.b16 %v4075, %v4074
      %v5623 = vpack.c.b16 %v4077, %v4076
      %v5624 = vpack.c.b16 %v4079, %v4078
      %v5625 = vpack.c.b16 %v4081, %v4080
      %v5626 = vpack.c.b16 %v4083, %v4082
      %v5627 = vpack.c.b16 %v4085, %v4084
      %v5628 = vpack.c.b16 %v4087, %v4086
      %v5629 = vpack.c.b16 %v4089, %v4088
      %v5630 = vpack.c.b16 %v4091, %v4090
      %v5631 = vpack.c.b16 %v4093, %v4092
      %v5632 = vpack.c.b16 %v4095, %v4094
      %v5633 = vpack.c.b16 %v4097, %v4096
      %v5634 = vpack.c.b16 %v4099, %v4098
      %v5635 = vpack.c.b16 %v4101, %v4100
      %v5636 = vpack.c.b16 %v4103, %v4102
      %v5637 = vpack.c.b16 %v4105, %v4104
      %v5638 = vpack.c.b16 %v4107, %v4106
      %v5639 = vpack.c.b16 %v4109, %v4108
      %v5640 = vpack.c.b16 %v4111, %v4110
      %v5641 = vpack.c.b16 %v4113, %v4112
      %v5642 = vpack.c.b16 %v4115, %v4114
      %v5643 = vpack.c.b16 %v4117, %v4116
      %v5644 = vpack.c.b16 %v4119, %v4118
      %v5645 = vpack.c.b16 %v4121, %v4120
      %v5646 = vpack.c.b16 %v4123, %v4122
      %v5647 = vpack.c.b16 %v4125, %v4124
      %v5648 = vpack.c.b16 %v4127, %v4126
      %v5649 = vpack.c.b16 %v4129, %v4128
      %v5650 = vpack.c.b16 %v4131, %v4130
      %v5651 = vpack.c.b16 %v4133, %v4132
      %v5652 = vpack.c.b16 %v4135, %v4134
      %v5653 = vpack.c.b16 %v4137, %v4136
      %v5654 = vpack.c.b16 %v4139, %v4138
      %v5655 = vpack.c.b16 %v4141, %v4140
      %v5656 = vpack.c.b16 %v4143, %v4142
      %v5657 = vpack.c.b16 %v4145, %v4144
      %v5658 = vpack.c.b16 %v4147, %v4146
      %v5659 = vpack.c.b16 %v4149, %v4148
      %v5660 = vpack.c.b16 %v4151, %v4150
      %v5661 = vpack.c.b16 %v4153, %v4152
      %v5662 = vpack.c.b16 %v4155, %v4154
      %v5663 = vpack.c.b16 %v4157, %v4156
      %v5664 = vpack.c.b16 %v4159, %v4158
      %v5665 = vpack.c.b16 %v4161, %v4160
      %v5666 = vpack.c.b16 %v4163, %v4162
      %v5667 = vpack.c.b16 %v4165, %v4164
      %v5668 = vpack.c.b16 %v4167, %v4166
      %v5669 = vpack.c.b16 %v4169, %v4168
      %v5670 = vpack.c.b16 %v4171, %v4170
      %v5671 = vpack.c.b16 %v4173, %v4172
      %v5672 = vpack.c.b16 %v4175, %v4174
      %v5673 = vpack.c.b16 %v4177, %v4176
      %v5674 = vpack.c.b16 %v4179, %v4178
      %v5675 = vpack.c.b16 %v4181, %v4180
      %v5676 = vpack.c.b16 %v4183, %v4182
      %v5677 = vpack.c.b16 %v4185, %v4184
      %v5678 = vpack.c.b16 %v4187, %v4186
      %v5679 = vpack.c.b16 %v4189, %v4188
      %v5680 = vpack.c.b16 %v4191, %v4190
      %v5681 = vpack.c.b16 %v4193, %v4192
      %v5682 = vpack.c.b16 %v4195, %v4194
      %v5683 = vpack.c.b16 %v4197, %v4196
      %v5684 = vpack.c.b16 %v4199, %v4198
      %v5685 = vpack.c.b16 %v4201, %v4200
      %v5686 = vpack.c.b16 %v4203, %v4202
      %v5687 = vpack.c.b16 %v4205, %v4204
      %v5688 = vpack.c.b16 %v4207, %v4206
      %v5689 = vpack.c.b16 %v4209, %v4208
      %v5690 = vpack.c.b16 %v4211, %v4210
      %v5691 = vpack.c.b16 %v4213, %v4212
      %v5692 = vpack.c.b16 %v4215, %v4214
      %v5693 = vpack.c.b16 %v4217, %v4216
      %v5694 = vpack.c.b16 %v4219, %v4218
      %v5695 = vpack.c.b16 %v4221, %v4220
      %v5696 = vpack.c.b16 %v4223, %v4222
      %v5697 = vpack.c.b16 %v4225, %v4224
      %v5698 = vpack.c.b16 %v4227, %v4226
      %v5699 = vpack.c.b16 %v4229, %v4228
      %v5700 = vpack.c.b16 %v4231, %v4230
      %v5701 = vpack.c.b16 %v4233, %v4232
      %v5702 = vpack.c.b16 %v4235, %v4234
      %v5703 = vpack.c.b16 %v4237, %v4236
      %v5704 = vpack.c.b16 %v4239, %v4238
      %v5705 = vpack.c.b16 %v4241, %v4240
      %v5706 = vpack.c.b16 %v4243, %v4242
      %v5707 = vpack.c.b16 %v4245, %v4244
      %v5708 = vpack.c.b16 %v4247, %v4246
      %v5709 = vpack.c.b16 %v4249, %v4248
      %v5710 = vpack.c.b16 %v4251, %v4250
      %v5711 = vpack.c.b16 %v4253, %v4252
      %v5712 = vpack.c.b16 %v4255, %v4254
      %v5713 = vpack.c.b16 %v4257, %v4256
      %v5714 = vpack.c.b16 %v4259, %v4258
      %v5715 = vpack.c.b16 %v4261, %v4260
      %v5716 = vpack.c.b16 %v4263, %v4262
      %v5717 = vpack.c.b16 %v4265, %v4264
      %v5718 = vpack.c.b16 %v4267, %v4266
      %v5719 = vpack.c.b16 %v4269, %v4268
      %v5720 = vpack.c.b16 %v4271, %v4270
      %v5721 = vpack.c.b16 %v4273, %v4272
      %v5722 = vpack.c.b16 %v4275, %v4274
      %v5723 = vpack.c.b16 %v4277, %v4276
      %v5724 = vpack.c.b16 %v4279, %v4278
      %v5725 = vpack.c.b16 %v4281, %v4280
      %v5726 = vpack.c.b16 %v4283, %v4282
      %v5727 = vpack.c.b16 %v4285, %v4284
      %v5728 = vpack.c.b16 %v4287, %v4286
      %v5729 = vpack.c.b16 %v4289, %v4288
      %v5730 = vpack.c.b16 %v4291, %v4290
      %v5731 = vpack.c.b16 %v4293, %v4292
      %v5732 = vpack.c.b16 %v4295, %v4294
      %v5733 = vpack.c.b16 %v4297, %v4296
      %v5734 = vpack.c.b16 %v4299, %v4298
      %v5735 = vpack.c.b16 %v4301, %v4300
      %v5736 = vpack.c.b16 %v4303, %v4302
      %v5737 = vpack.c.b16 %v4305, %v4304
      %v5738 = vpack.c.b16 %v4307, %v4306
      %v5739 = vpack.c.b16 %v4309, %v4308
      %v5740 = vpack.c.b16 %v4311, %v4310
      %v5741 = vpack.c.b16 %v4313, %v4312
      %v5742 = vpack.c.b16 %v4315, %v4314
      %v5743 = vpack.c.b16 %v4317, %v4316
      %v5744 = vpack.c.b16 %v4319, %v4318
      %v5745 = vpack.c.b16 %v4321, %v4320
      %v5746 = vpack.c.b16 %v4323, %v4322
      %v5747 = vpack.c.b16 %v4325, %v4324
      %v5748 = vpack.c.b16 %v4327, %v4326
      %v5749 = vpack.c.b16 %v4329, %v4328
      %v5750 = vpack.c.b16 %v4331, %v4330
      %v5751 = vpack.c.b16 %v4333, %v4332
      %v5752 = vpack.c.b16 %v4335, %v4334
      %v5753 = vpack.c.b16 %v4337, %v4336
      %v5754 = vpack.c.b16 %v4339, %v4338
      %v5755 = vpack.c.b16 %v4341, %v4340
      %v5756 = vpack.c.b16 %v4343, %v4342
      %v5757 = vpack.c.b16 %v4345, %v4344
      %v5758 = vpack.c.b16 %v4347, %v4346
      %v5759 = vpack.c.b16 %v4349, %v4348
      %v5760 = vpack.c.b16 %v4351, %v4350
      %v5761 = vpack.c.b16 %v4353, %v4352
      %v5762 = vpack.c.b16 %v4355, %v4354
      %v5763 = vpack.c.b16 %v4357, %v4356
      %v5764 = vpack.c.b16 %v4359, %v4358
      %v5765 = vpack.c.b16 %v4361, %v4360
      %v5766 = vpack.c.b16 %v4363, %v4362
      %v5767 = vpack.c.b16 %v4365, %v4364
      %v5768 = vpack.c.b16 %v4367, %v4366
      %v5769 = vpack.c.b16 %v4369, %v4368
      %v5770 = vpack.c.b16 %v4371, %v4370
      %v5771 = vpack.c.b16 %v4373, %v4372
      %v5772 = vpack.c.b16 %v4375, %v4374
      %v5773 = vpack.c.b16 %v4377, %v4376
      %v5774 = vpack.c.b16 %v4379, %v4378
      %v5775 = vpack.c.b16 %v4381, %v4380
      %v5776 = vpack.c.b16 %v4383, %v4382
      %v5777 = vpack.c.b16 %v4385, %v4384
      %v5778 = vpack.c.b16 %v4387, %v4386
      %v5779 = vpack.c.b16 %v4389, %v4388
      %v5780 = vpack.c.b16 %v4391, %v4390
      %v5781 = vpack.c.b16 %v4393, %v4392
      %v5782 = vpack.c.b16 %v4395, %v4394
      %v5783 = vpack.c.b16 %v4397, %v4396
      %v5784 = vpack.c.b16 %v4399, %v4398
      %v5785 = vpack.c.b16 %v4401, %v4400
      %v5786 = vpack.c.b16 %v4403, %v4402
      %v5787 = vpack.c.b16 %v4405, %v4404
      %v5788 = vpack.c.b16 %v4407, %v4406
      %v5789 = vpack.c.b16 %v4409, %v4408
      %v5790 = vpack.c.b16 %v4411, %v4410
      %v5791 = vpack.c.b16 %v4413, %v4412
      %v5792 = vpack.c.b16 %v4415, %v4414
      %v5793 = vpack.c.b16 %v4417, %v4416
      %v5794 = vpack.c.b16 %v4419, %v4418
      %v5795 = vpack.c.b16 %v4421, %v4420
      %v5796 = vpack.c.b16 %v4423, %v4422
      %v5797 = vpack.c.b16 %v4425, %v4424
      %v5798 = vpack.c.b16 %v4427, %v4426
      %v5799 = vpack.c.b16 %v4429, %v4428
      %v5800 = vpack.c.b16 %v4431, %v4430
      %v5801 = vpack.c.b16 %v4433, %v4432
      %v5802 = vpack.c.b16 %v4435, %v4434
      %v5803 = vpack.c.b16 %v4437, %v4436
      %v5804 = vpack.c.b16 %v4439, %v4438
      %v5805 = vpack.c.b16 %v4441, %v4440
      %v5806 = vpack.c.b16 %v4443, %v4442
      %v5807 = vpack.c.b16 %v4445, %v4444
      %v5808 = vpack.c.b16 %v4447, %v4446
      %v5809 = vpack.c.b16 %v4449, %v4448
      %v5810 = vpack.c.b16 %v4451, %v4450
      %v5811 = vpack.c.b16 %v4453, %v4452
      %v5812 = vpack.c.b16 %v4455, %v4454
      %v5813 = vpack.c.b16 %v4457, %v4456
      %v5814 = vpack.c.b16 %v4459, %v4458
      %v5815 = vpack.c.b16 %v4461, %v4460
      %v5816 = vpack.c.b16 %v4463, %v4462
      %v5817 = vpack.c.b16 %v4465, %v4464
      %v5818 = vpack.c.b16 %v4467, %v4466
      %v5819 = vpack.c.b16 %v4469, %v4468
      %v5820 = vpack.c.b16 %v4471, %v4470
      %v5821 = vpack.c.b16 %v4473, %v4472
      %v5822 = vpack.c.b16 %v4475, %v4474
      %v5823 = vpack.c.b16 %v4477, %v4476
      %v5824 = vpack.c.b16 %v4479, %v4478
      %v5825 = vpack.c.b16 %v4481, %v4480
      %v5826 = vpack.c.b16 %v4483, %v4482
      %v5827 = vpack.c.b16 %v4485, %v4484
      %v5828 = vpack.c.b16 %v4487, %v4486
      %v5829 = vpack.c.b16 %v4489, %v4488
      %v5830 = vpack.c.b16 %v4491, %v4490
      %v5831 = vpack.c.b16 %v4493, %v4492
      %v5832 = vpack.c.b16 %v4495, %v4494
      %v5833 = vpack.c.b16 %v4497, %v4496
      %v5834 = vpack.c.b16 %v4499, %v4498
      %v5835 = vpack.c.b16 %v4501, %v4500
      %v5836 = vpack.c.b16 %v4503, %v4502
      %v5837 = vpack.c.b16 %v4505, %v4504
      %v5838 = vpack.c.b16 %v4507, %v4506
      %v5839 = vpack.c.b16 %v4509, %v4508
      %v5840 = vpack.c.b16 %v4511, %v4510
      %v5841 = vpack.c.b16 %v4513, %v4512
      %v5842 = vpack.c.b16 %v4515, %v4514
      %v5843 = vpack.c.b16 %v4517, %v4516
      %v5844 = vpack.c.b16 %v4519, %v4518
      %v5845 = vpack.c.b16 %v4521, %v4520
      %v5846 = vpack.c.b16 %v4523, %v4522
      %v5847 = vpack.c.b16 %v4525, %v4524
      %v5848 = vpack.c.b16 %v4527, %v4526
      %v5849 = vpack.c.b16 %v4529, %v4528
      %v5850 = vpack.c.b16 %v4531, %v4530
      %v5851 = vpack.c.b16 %v4533, %v4532
      %v5852 = vpack.c.b16 %v4535, %v4534
      %v5853 = vpack.c.b16 %v4537, %v4536
      %v5854 = vpack.c.b16 %v4539, %v4538
      %v5855 = vpack.c.b16 %v4541, %v4540
      %v5856 = vpack.c.b16 %v4543, %v4542
      %v5857 = vpack.c.b16 %v4545, %v4544
      %v5858 = vpack.c.b16 %v4547, %v4546
      %v5859 = vpack.c.b16 %v4549, %v4548
      %v5860 = vpack.c.b16 %v4551, %v4550
      %v5861 = vpack.c.b16 %v4553, %v4552
      %v5862 = vpack.c.b16 %v4555, %v4554
      %v5863 = vpack.c.b16 %v4557, %v4556
      %v5864 = vpack.c.b16 %v4559, %v4558
      %v5865 = vpack.c.b16 %v4561, %v4560
      %v5866 = vpack.c.b16 %v4563, %v4562
      %v5867 = vpack.c.b16 %v4565, %v4564
      %v5868 = vpack.c.b16 %v4567, %v4566
      %v5869 = vpack.c.b16 %v4569, %v4568
      %v5870 = vpack.c.b16 %v4571, %v4570
      %v5871 = vpack.c.b16 %v4573, %v4572
      %v5872 = vpack.c.b16 %v4575, %v4574
      %v5873 = vpack.c.b16 %v4577, %v4576
      %v5874 = vpack.c.b16 %v4579, %v4578
      %v5875 = vpack.c.b16 %v4581, %v4580
      %v5876 = vpack.c.b16 %v4583, %v4582
      %v5877 = vpack.c.b16 %v4585, %v4584
      %v5878 = vpack.c.b16 %v4587, %v4586
      %v5879 = vpack.c.b16 %v4589, %v4588
      %v5880 = vpack.c.b16 %v4591, %v4590
      %v5881 = vpack.c.b16 %v4593, %v4592
      %v5882 = vpack.c.b16 %v4595, %v4594
      %v5883 = vpack.c.b16 %v4597, %v4596
      %v5884 = vpack.c.b16 %v4599, %v4598
      %v5885 = vpack.c.b16 %v4601, %v4600
      %v5886 = vpack.c.b16 %v4603, %v4602
      %v5887 = vpack.c.b16 %v4605, %v4604
      %v5888 = vpack.c.b16 %v4607, %v4606
      %v5889 = vpack.c.b16 %v4609, %v4608
      %v5890 = vpack.c.b16 %v4611, %v4610
      %v5891 = vpack.c.b16 %v4613, %v4612
      %v5892 = vpack.c.b16 %v4615, %v4614
      %v5893 = vpack.c.b16 %v4617, %v4616
      %v5894 = vpack.c.b16 %v4619, %v4618
      %v5895 = vpack.c.b16 %v4621, %v4620
      %v5896 = vpack.c.b16 %v4623, %v4622
      %v5897 = vpack.c.b16 %v4625, %v4624
      %v5898 = vpack.c.b16 %v4627, %v4626
      %v5899 = vpack.c.b16 %v4629, %v4628
      %v5900 = vpack.c.b16 %v4631, %v4630
      %v5901 = vpack.c.b16 %v4633, %v4632
      %v5902 = vpack.c.b16 %v4635, %v4634
      %v5903 = vpack.c.b16 %v4637, %v4636
      %v5904 = vpack.c.b16 %v4639, %v4638
      %v5905 = vpack.c.b16 %v4641, %v4640
      %v5906 = vpack.c.b16 %v4643, %v4642
      %v5907 = vpack.c.b16 %v4645, %v4644
      %v5908 = vpack.c.b16 %v4647, %v4646
      %v5909 = vpack.c.b16 %v4649, %v4648
      %v5910 = vpack.c.b16 %v4651, %v4650
      %v5911 = vpack.c.b16 %v4653, %v4652
      %v5912 = vpack.c.b16 %v4655, %v4654
      %v5913 = vpack.c.b16 %v4657, %v4656
      %v5914 = vpack.c.b16 %v4659, %v4658
      %v5915 = vpack.c.b16 %v4661, %v4660
      %v5916 = vpack.c.b16 %v4663, %v4662
      %v5917 = vpack.c.b16 %v4665, %v4664
      %v5918 = vpack.c.b16 %v4667, %v4666
      %v5919 = vpack.c.b16 %v4669, %v4668
      %v5920 = vpack.c.b16 %v4671, %v4670
      %v5921 = vpack.c.b16 %v4673, %v4672
      %v5922 = vpack.c.b16 %v4675, %v4674
      %v5923 = vpack.c.b16 %v4677, %v4676
      %v5924 = vpack.c.b16 %v4679, %v4678
      %v5925 = vpack.c.b16 %v4681, %v4680
      %v5926 = vpack.c.b16 %v4683, %v4682
      %v5927 = vpack.c.b16 %v4685, %v4684
      %v5928 = vpack.c.b16 %v4687, %v4686
      %v5929 = vpack.c.b16 %v4689, %v4688
      %v5930 = vpack.c.b16 %v4691, %v4690
      %v5931 = vpack.c.b16 %v4693, %v4692
      %v5932 = vpack.c.b16 %v4695, %v4694
      %v5933 = vpack.c.b16 %v4697, %v4696
      %v5934 = vpack.c.b16 %v4699, %v4698
      %v5935 = vpack.c.b16 %v4701, %v4700
      %v5936 = vpack.c.b16 %v4703, %v4702
      %v5937 = vpack.c.b16 %v4705, %v4704
      %v5938 = vpack.c.b16 %v4707, %v4706
      %v5939 = vpack.c.b16 %v4709, %v4708
      %v5940 = vpack.c.b16 %v4711, %v4710
      %v5941 = vpack.c.b16 %v4713, %v4712
      %v5942 = vpack.c.b16 %v4715, %v4714
      %v5943 = vpack.c.b16 %v4717, %v4716
      %v5944 = vpack.c.b16 %v4719, %v4718
      %v5945 = vpack.c.b16 %v4721, %v4720
      %v5946 = vpack.c.b16 %v4723, %v4722
      %v5947 = vpack.c.b16 %v4725, %v4724
      %v5948 = vpack.c.b16 %v4727, %v4726
      %v5949 = vpack.c.b16 %v4729, %v4728
      %v5950 = vpack.c.b16 %v4731, %v4730
      %v5951 = vpack.c.b16 %v4733, %v4732
      %v5952 = vpack.c.b16 %v4735, %v4734
      %v5953 = vpack.c.b16 %v4737, %v4736
      %v5954 = vpack.c.b16 %v4739, %v4738
      %v5955 = vpack.c.b16 %v4741, %v4740
      %v5956 = vpack.c.b16 %v4743, %v4742
      %v5957 = vpack.c.b16 %v4745, %v4744
      %v5958 = vpack.c.b16 %v4747, %v4746
      %v5959 = vpack.c.b16 %v4749, %v4748
      %v5960 = vpack.c.b16 %v4751, %v4750
      %v5961 = vpack.c.b16 %v4753, %v4752
      %v5962 = vpack.c.b16 %v4755, %v4754
      %v5963 = vpack.c.b16 %v4757, %v4756
      %v5964 = vpack.c.b16 %v4759, %v4758
      %v5965 = vpack.c.b16 %v4761, %v4760
      %v5966 = vpack.c.b16 %v4763, %v4762
      %v5967 = vpack.c.b16 %v4765, %v4764
      %v5968 = vpack.c.b16 %v4767, %v4766
      %v5969 = vpack.c.b16 %v4769, %v4768
      %v5970 = vpack.c.b16 %v4771, %v4770
      %v5971 = vpack.c.b16 %v4773, %v4772
      %v5972 = vpack.c.b16 %v4775, %v4774
      %v5973 = vpack.c.b16 %v4777, %v4776
      %v5974 = vpack.c.b16 %v4779, %v4778
      %v5975 = vpack.c.b16 %v4781, %v4780
      %v5976 = vpack.c.b16 %v4783, %v4782
      %v5977 = vpack.c.b16 %v4785, %v4784
      %v5978 = vpack.c.b16 %v4787, %v4786
      %v5979 = vpack.c.b16 %v4789, %v4788
      %v5980 = vpack.c.b16 %v4791, %v4790
      %v5981 = vpack.c.b16 %v4793, %v4792
      %v5982 = vpack.c.b16 %v4795, %v4794
      %v5983 = vpack.c.b16 %v4797, %v4796
      %v5984 = vpack.c.b16 %v4799, %v4798
      %v5985 = vpack.c.b16 %v4801, %v4800
      %v5986 = vpack.c.b16 %v4803, %v4802
      %v5987 = vpack.c.b16 %v4805, %v4804
      %v5988 = vpack.c.b16 %v4807, %v4806
      %v5989 = vpack.c.b16 %v4809, %v4808
      %v5990 = vpack.c.b16 %v4811, %v4810
      %v5991 = vpack.c.b16 %v4813, %v4812
      %v5992 = vpack.c.b16 %v4815, %v4814
      %v5993 = vpack.c.b16 %v4817, %v4816
      %v5994 = vpack.c.b16 %v4819, %v4818
      %v5995 = vpack.c.b16 %v4821, %v4820
      %v5996 = vpack.c.b16 %v4823, %v4822
      %v5997 = vpack.c.b16 %v4825, %v4824
      %v5998 = vpack.c.b16 %v4827, %v4826
      %v5999 = vpack.c.b16 %v4829, %v4828
      %v6000 = vpack.c.b16 %v4831, %v4830
      %v6001 = vpack.c.b16 %v4833, %v4832
      %v6002 = vpack.c.b16 %v4835, %v4834
      %v6003 = vpack.c.b16 %v4837, %v4836
      %v6004 = vpack.c.b16 %v4839, %v4838
      %v6005 = vpack.c.b16 %v4841, %v4840
      %v6006 = vpack.c.b16 %v4843, %v4842
      %v6007 = vpack.c.b16 %v4845, %v4844
      %v6008 = vpack.c.b16 %v4847, %v4846
      %v6009 = vpack.c.b16 %v4849, %v4848
      %v6010 = vpack.c.b16 %v4851, %v4850
      %v6011 = vpack.c.b16 %v4853, %v4852
      %v6012 = vpack.c.b16 %v4855, %v4854
      %v6013 = vpack.c.b16 %v4857, %v4856
      %v6014 = vpack.c.b16 %v4859, %v4858
      %v6015 = vpack.c.b16 %v4861, %v4860
      %v6016 = vpack.c.b16 %v4863, %v4862
      %v6017 = vpack.c.b16 %v4865, %v4864
      %v6018 = vpack.c.b16 %v4867, %v4866
      %v6019 = vpack.c.b16 %v4869, %v4868
      %v6020 = vpack.c.b16 %v4871, %v4870
      %v6021 = vpack.c.b16 %v4873, %v4872
      %v6022 = vpack.c.b16 %v4875, %v4874
      %v6023 = vpack.c.b16 %v4877, %v4876
      %v6024 = vpack.c.b16 %v4879, %v4878
      %v6025 = vpack.c.b16 %v4881, %v4880
      %v6026 = vpack.c.b16 %v4883, %v4882
      %v6027 = vpack.c.b16 %v4885, %v4884
      %v6028 = vpack.c.b16 %v4887, %v4886
      %v6029 = vpack.c.b16 %v4889, %v4888
      %v6030 = vpack.c.b16 %v4891, %v4890
      %v6031 = vpack.c.b16 %v4893, %v4892
      %v6032 = vpack.c.b16 %v4895, %v4894
      %v6033 = vpack.c.b16 %v4897, %v4896
      %v6034 = vpack.c.b16 %v4899, %v4898
      %v6035 = vpack.c.b16 %v4901, %v4900
      %v6036 = vpack.c.b16 %v4903, %v4902
      %v6037 = vpack.c.b16 %v4905, %v4904
      %v6038 = vpack.c.b16 %v4907, %v4906
      %v6039 = vpack.c.b16 %v4909, %v4908
      %v6040 = vpack.c.b16 %v4911, %v4910
      %v6041 = vpack.c.b16 %v4913, %v4912
      %v6042 = vpack.c.b16 %v4915, %v4914
      %v6043 = vpack.c.b16 %v4917, %v4916
      %v6044 = vpack.c.b16 %v4919, %v4918
      %v6045 = vpack.c.b16 %v4921, %v4920
      %v6046 = vpack.c.b16 %v4923, %v4922
      %v6047 = vpack.c.b16 %v4925, %v4924
      %v6048 = vpack.c.b16 %v4927, %v4926
      %v6049 = vpack.c.b16 %v4929, %v4928
      %v6050 = vpack.c.b16 %v4931, %v4930
      %v6051 = vpack.c.b16 %v4933, %v4932
      %v6052 = vpack.c.b16 %v4935, %v4934
      %v6053 = vpack.c.b16 %v4937, %v4936
      %v6054 = vpack.c.b16 %v4939, %v4938
      %v6055 = vpack.c.b16 %v4941, %v4940
      %v6056 = vpack.c.b16 %v4943, %v4942
      %v6057 = vpack.c.b16 %v4945, %v4944
      %v6058 = vpack.c.b16 %v4947, %v4946
      %v6059 = vpack.c.b16 %v4949, %v4948
      %v6060 = vpack.c.b16 %v4951, %v4950
      %v6061 = vpack.c.b16 %v4953, %v4952
      %v6062 = vpack.c.b16 %v4955, %v4954
      %v6063 = vpack.c.b16 %v4957, %v4956
      %v6064 = vpack.c.b16 %v4959, %v4958
      %v6065 = vpack.c.b16 %v4961, %v4960
      %v6066 = vpack.c.b16 %v4963, %v4962
      %v6067 = vpack.c.b16 %v4965, %v4964
      %v6068 = vpack.c.b16 %v4967, %v4966
      %v6069 = vpack.c.b16 %v4969, %v4968
      %v6070 = vpack.c.b16 %v4971, %v4970
      %v6071 = vpack.c.b16 %v4973, %v4972
      %v6072 = vpack.c.b16 %v4975, %v4974
      %v6073 = vpack.c.b16 %v4977, %v4976
      %v6074 = vpack.c.b16 %v4979, %v4978
      %v6075 = vpack.c.b16 %v4981, %v4980
      %v6076 = vpack.c.b16 %v4983, %v4982
      %v6077 = vpack.c.b16 %v4985, %v4984
      %v6078 = vpack.c.b16 %v4987, %v4986
      %v6079 = vpack.c.b16 %v4989, %v4988
      %v6080 = vpack.c.b16 %v4991, %v4990
      %v6081 = vpack.c.b16 %v4993, %v4992
      %v6082 = vpack.c.b16 %v4995, %v4994
      %v6083 = vpack.c.b16 %v4997, %v4996
      %v6084 = vpack.c.b16 %v4999, %v4998
      %v6085 = vpack.c.b16 %v5001, %v5000
      %v6086 = vpack.c.b16 %v5003, %v5002
      %v6087 = vpack.c.b16 %v5005, %v5004
      %v6088 = vpack.c.b16 %v5007, %v5006
      %v6089 = vpack.c.b16 %v5009, %v5008
      %v6090 = vpack.c.b16 %v5011, %v5010
      %v6091 = vpack.c.b16 %v5013, %v5012
      %v6092 = vpack.c.b16 %v5015, %v5014
      %v6093 = vpack.c.b16 %v5017, %v5016
      %v6094 = vpack.c.b16 %v5019, %v5018
      %v6095 = vpack.c.b16 %v5021, %v5020
      %v6096 = vpack.c.b16 %v5023, %v5022
      %v6097 = vpack.c.b16 %v5025, %v5024
      %v6098 = vpack.c.b16 %v5027, %v5026
      %v6099 = vpack.c.b16 %v5029, %v5028
      %v6100 = vpack.c.b16 %v5031, %v5030
      %v6101 = vpack.c.b16 %v5033, %v5032
      %v6102 = vpack.c.b16 %v5035, %v5034
      %v6103 = vpack.c.b16 %v5037, %v5036
      %v6104 = vpack.c.b16 %v5039, %v5038
      %v6105 = vpack.c.b16 %v5041, %v5040
      %v6106 = vpack.c.b16 %v5043, %v5042
      %v6107 = vpack.c.b16 %v5045, %v5044
      %v6108 = vpack.c.b16 %v5047, %v5046
      %v6109 = vpack.c.b16 %v5049, %v5048
      %v6110 = vpack.c.b16 %v5051, %v5050
      %v6111 = vpack.c.b16 %v5053, %v5052
      %v6112 = vpack.c.b16 %v5055, %v5054
      %v6113 = vpack.c.b16 %v5057, %v5056
      %v6114 = vpack.c.b16 %v5059, %v5058
      %v6115 = vpack.c.b16 %v5061, %v5060
      %v6116 = vpack.c.b16 %v5063, %v5062
      %v6117 = vpack.c.b16 %v5065, %v5064
      %v6118 = vpack.c.b16 %v5067, %v5066
      %v6119 = vpack.c.b16 %v5069, %v5068
      %v6120 = vpack.c.b16 %v5071, %v5070
      %v6121 = vpack.c.b16 %v5073, %v5072
      %v6122 = vpack.c.b16 %v5075, %v5074
      %v6123 = vpack.c.b16 %v5077, %v5076
      %v6124 = vpack.c.b16 %v5079, %v5078
      %v6125 = vpack.c.b16 %v5081, %v5080
      %v6126 = vpack.c.b16 %v5083, %v5082
      %v6127 = vpack.c.b16 %v5085, %v5084
      %v6128 = vpack.c.b16 %v5087, %v5086
      %v6129 = vpack.c.b16 %v5089, %v5088
      %v6130 = vpack.c.b16 %v5091, %v5090
      %v6131 = vpack.c.b16 %v5093, %v5092
      %v6132 = vpack.c.b16 %v5095, %v5094
      %v6133 = vpack.c.b16 %v5097, %v5096
      %v6134 = vpack.c.b16 %v5099, %v5098
      %v6135 = vpack.c.b16 %v5101, %v5100
      %v6136 = vpack.c.b16 %v5103, %v5102
      %v6137 = vpack.c.b16 %v5105, %v5104
      %v6138 = vpack.c.b16 %v5107, %v5106
      %v6139 = vpack.c.b16 %v5109, %v5108
      %v6140 = vpack.c.b16 %v5111, %v5110
      %v6141 = vpack.c.b16 %v5113, %v5112
      %v6142 = vpack.c.b16 %v5115, %v5114
      %v6143 = vpack.c.b16 %v5117, %v5116
      %v6144 = vpack.c.b16 %v5119, %v5118
      %v6145 = vpack.c.b16 %v5121, %v5120
      %v6146 = vpack.c.b16 %v5123, %v5122
      %v6147 = vpack.c.b16 %v5125, %v5124
      %v6148 = vpack.c.b16 %v5127, %v5126
      %v6149 = vpack.c.b16 %v5129, %v5128
      %v6150 = vpack.c.b16 %v5131, %v5130
      %v6151 = vpack.c.b16 %v5133, %v5132
      %v6152 = vpack.c.b16 %v5135, %v5134
      %v6153 = vpack.c.b16 %v5137, %v5136
      %v6154 = vpack.c.b16 %v5139, %v5138
      %v6155 = vpack.c.b16 %v5141, %v5140
      %v6156 = vpack.c.b16 %v5143, %v5142
      %v6157 = vpack.c.b16 %v5145, %v5144
      %v6158 = vpack.c.b16 %v5147, %v5146
      %v6159 = vpack.c.b16 %v5149, %v5148
      %v6160 = vpack.c.b16 %v5151, %v5150
      %v6161 = vpack.c.b16 %v5153, %v5152
      %v6162 = vpack.c.b16 %v5155, %v5154
      %v6163 = vpack.c.b16 %v5157, %v5156
      %v6164 = vpack.c.b16 %v5159, %v5158
      %v6165 = vpack.c.b16 %v5161, %v5160
      %v6166 = vpack.c.b16 %v5163, %v5162
      %v6167 = vpack.c.b16 %v5165, %v5164
      %v6168 = vpack.c.b16 %v5167, %v5166
      %v6169 = vpack.c.b16 %v5169, %v5168
      %v6170 = vpack.c.b16 %v5171, %v5170
      %v6171 = vpack.c.b16 %v5173, %v5172
      %v6172 = vpack.c.b16 %v5175, %v5174
      %v6173 = vpack.c.b16 %v5177, %v5176
      %v6174 = vpack.c.b16 %v5179, %v5178
      %v6175 = vpack.c.b16 %v5181, %v5180
      %v6176 = vpack.c.b16 %v5183, %v5182
      %v6177 = vpack.c.b16 %v5185, %v5184
      %v6178 = vpack.c.b16 %v5187, %v5186
      %v6179 = vpack.c.b16 %v5189, %v5188
      %v6180 = vpack.c.b16 %v5191, %v5190
      %v6181 = vpack.c.b16 %v5193, %v5192
      %v6182 = vpack.c.b16 %v5195, %v5194
      %v6183 = vpack.c.b16 %v5197, %v5196
      %v6184 = vpack.c.b16 %v5199, %v5198
      %v6185 = vpack.c.b16 %v5201, %v5200
      %v6186 = vpack.c.b16 %v5203, %v5202
      %v6187 = vpack.c.b16 %v5205, %v5204
      %v6188 = vpack.c.b16 %v5207, %v5206
      %v6189 = vpack.c.b16 %v5209, %v5208
      %v6190 = vpack.c.b16 %v5211, %v5210
      %v6191 = vpack.c.b16 %v5213, %v5212
      %v6192 = vpack.c.b16 %v5215, %v5214
      %v6193 = vpack.c.b16 %v5217, %v5216
      %v6194 = vpack.c.b16 %v5219, %v5218
      %v6195 = vpack.c.b16 %v5221, %v5220
      %v6196 = vpack.c.b16 %v5223, %v5222
      %v6197 = vpack.c.b16 %v5225, %v5224
      %v6198 = vpack.c.b16 %v5227, %v5226
      %v6199 = vpack.c.b16 %v5229, %v5228
      %v6200 = vpack.c.b16 %v5231, %v5230
      %v6201 = vpack.c.b16 %v5233, %v5232
      %v6202 = vpack.c.b16 %v5235, %v5234
      %v6203 = vpack.c.b16 %v5237, %v5236
      %v6204 = vpack.c.b16 %v5239, %v5238
      %v6205 = vpack.c.b16 %v5241, %v5240
      %v6206 = vpack.c.b16 %v5243, %v5242
      %v6207 = vpack.c.b16 %v5245, %v5244
      %v6208 = vpack.c.b16 %v5247, %v5246
      %v6209 = vpack.c.b16 %v5249, %v5248
      %v6210 = vpack.c.b16 %v5251, %v5250
      %v6211 = vpack.c.b16 %v5253, %v5252
      %v6212 = vpack.c.b16 %v5255, %v5254
      %v6213 = vpack.c.b16 %v5257, %v5256
      %v6214 = vpack.c.b16 %v5259, %v5258
      %v6215 = vpack.c.b16 %v5261, %v5260
      %v6216 = vpack.c.b16 %v5263, %v5262
      %v6217 = vpack.c.b16 %v5265, %v5264
      %v6218 = vpack.c.b16 %v5267, %v5266
      %v6219 = vpack.c.b16 %v5269, %v5268
      %v6220 = vpack.c.b16 %v5271, %v5270
      %v6221 = vpack.c.b16 %v5273, %v5272
      %v6222 = vpack.c.b16 %v5275, %v5274
      %v6223 = vpack.c.b16 %v5277, %v5276
      %v6224 = vpack.c.b16 %v5279, %v5278
      %v6225 = vpack.c.b16 %v5281, %v5280
      %v6226 = vpack.c.b16 %v5283, %v5282
      %v6227 = vpack.c.b16 %v5285, %v5284
      %v6228 = vpack.c.b16 %v5287, %v5286
      %v6229 = vpack.c.b16 %v5289, %v5288
      %v6230 = vpack.c.b16 %v5291, %v5290
      %v6231 = vpack.c.b16 %v5293, %v5292
      %v6232 = vpack.c.b16 %v5295, %v5294
      %v6233 = vpack.c.b16 %v5297, %v5296
      %v6234 = vpack.c.b16 %v5299, %v5298
      %v6235 = vpack.c.b16 %v5301, %v5300
      %v6236 = vpack.c.b16 %v5303, %v5302
      %v6237 = vpack.c.b16 %v5305, %v5304
      %v6238 = vpack.c.b16 %v5307, %v5306
      %v6239 = vpack.c.b16 %v5309, %v5308
      %v6240 = vpack.c.b16 %v5311, %v5310
      %v6241 = vpack.c.b16 %v5313, %v5312
      %v6242 = vpack.c.b16 %v5315, %v5314
      %v6243 = vpack.c.b16 %v5317, %v5316
      %v6244 = vpack.c.b16 %v5319, %v5318
      %v6245 = vpack.c.b16 %v5321, %v5320
      %v6246 = vpack.c.b16 %v5323, %v5322
      %v6247 = vpack.c.b16 %v5325, %v5324
      %v6248 = vpack.c.b16 %v5327, %v5326
      %v6249 = vpack.c.b16 %v5329, %v5328
      %v6250 = vpack.c.b16 %v5331, %v5330
      %v6251 = vpack.c.b16 %v5333, %v5332
      %v6252 = vpack.c.b16 %v5335, %v5334
      %v6253 = vpack.c.b16 %v5337, %v5336
      %v6254 = vpack.c.b16 %v5339, %v5338
      %v6255 = vpack.c.b16 %v5341, %v5340
      %v6256 = vpack.c.b16 %v5343, %v5342
      %v6257 = vpack.c.b16 %v5345, %v5344
      %v6258 = vpack.c.b16 %v5347, %v5346
      %v6259 = vpack.c.b16 %v5349, %v5348
      %v6260 = vpack.c.b16 %v5351, %v5350
      %v6261 = vpack.c.b16 %v5353, %v5352
      %v6262 = vpack.c.b16 %v5355, %v5354
      %v6263 = vpack.c.b16 %v5357, %v5356
      %v6264 = vpack.c.b16 %v5359, %v5358
      %v6265 = vpack.c.b16 %v5361, %v5360
      %v6266 = vpack.c.b16 %v5363, %v5362
      %v6267 = vpack.c.b16 %v5365, %v5364
      %v6268 = vpack.c.b16 %v5367, %v5366
      %v6269 = vpack.c.b16 %v5369, %v5368
      %v6270 = vpack.c.b16 %v5371, %v5370
      %v6271 = vpack.c.b16 %v5373, %v5372
      %v6272 = vpack.c.b16 %v5375, %v5374
      %v6273 = vpack.c.b16 %v5377, %v5376
      %v6274 = vpack.c.b16 %v5379, %v5378
      %v6275 = vpack.c.b16 %v5381, %v5380
      %v6276 = vpack.c.b16 %v5383, %v5382
      %v6277 = vpack.c.b16 %v5385, %v5384
      %v6278 = vpack.c.b16 %v5387, %v5386
      %v6279 = vpack.c.b16 %v5389, %v5388
      %v6280 = vpack.c.b16 %v5391, %v5390
      %v6281 = vpack.c.b16 %v5393, %v5392
      %v6282 = vpack.c.b16 %v5395, %v5394
      %v6283 = vpack.c.b16 %v5397, %v5396
      %v6284 = vpack.c.b16 %v5399, %v5398
      %v6285 = vpack.c.b16 %v5401, %v5400
      %v6286 = vpack.c.b16 %v5403, %v5402
      %v6287 = vpack.c.b16 %v5405, %v5404
      %v6288 = vpack.c.b16 %v5407, %v5406
      %v6289 = vpack.c.b16 %v5409, %v5408
      %v6290 = vpack.c.b16 %v5411, %v5410
      %v6291 = vpack.c.b16 %v5413, %v5412
      %v6292 = vpack.c.b16 %v5415, %v5414
      %v6293 = vpack.c.b16 %v5417, %v5416
      %v6294 = vpack.c.b16 %v5419, %v5418
      %v6295 = vpack.c.b16 %v5421, %v5420
      %v6296 = vpack.c.b16 %v5423, %v5422
      %v6297 = vpack.c.b16 %v5425, %v5424
      %v6298 = vpack.c.b16 %v5427, %v5426
      %v6299 = vpack.c.b16 %v5429, %v5428
      %v6300 = vpack.c.b16 %v5431, %v5430
      %v6301 = vpack.c.b16 %v5433, %v5432
      %v6302 = vpack.c.b16 %v5435, %v5434
      %v6303 = vpack.c.b16 %v5437, %v5436
      %v6304 = vpack.c.b16 %v5439, %v5438
      %v6305 = vpack.c.b16 %v5441, %v5440
      %v6306 = vpack.c.b16 %v5443, %v5442
      %v6307 = vpack.c.b16 %v5445, %v5444
      %v6308 = vpack.c.b16 %v5447, %v5446
      %v6309 = vpack.c.b16 %v5449, %v5448
      %v6310 = vpack.c.b16 %v5451, %v5450
      %v6311 = vpack.c.b16 %v5453, %v5452
      %v6312 = vpack.c.b16 %v5455, %v5454
      %v6313 = vpack.c.b16 %v5457, %v5456
      %v6314 = vpack.c.b16 %v5459, %v5458
      %v6315 = vpack.c.b16 %v5461, %v5460
      %v6316 = vpack.c.b16 %v5463, %v5462
      %v6317 = vpack.c.b16 %v5465, %v5464
      %v6318 = vpack.c.b16 %v5467, %v5466
      %v6319 = vpack.c.b16 %v5469, %v5468
      %v6320 = vpack.c.b16 %v5471, %v5470
      %v6321 = vpack.c.b16 %v5473, %v5472
      %v6322 = vpack.c.b16 %v5475, %v5474
      %v6323 = vpack.c.b16 %v5477, %v5476
      %v6324 = vpack.c.b16 %v5479, %v5478
      %v6325 = vpack.c.b16 %v5481, %v5480
      %v6326 = vpack.c.b16 %v5483, %v5482
      %v6327 = vpack.c.b16 %v5485, %v5484
      %v6328 = vpack.c.b16 %v5487, %v5486
      %v6329 = vpack.c.b16 %v5489, %v5488
      %v6330 = vpack.c.b16 %v5491, %v5490
      %v6331 = vpack.c.b16 %v5493, %v5492
      %v6332 = vpack.c.b16 %v5495, %v5494
      %v6333 = vpack.c.b16 %v5497, %v5496
      %v6334 = vpack.c.b16 %v5499, %v5498
      %v6335 = vpack.c.b16 %v5501, %v5500
      %v6336 = vpack.c.b16 %v5503, %v5502
      %v6337 = vpack.c.b16 %v5505, %v5504
      %v6338 = vpack.c.b16 %v5507, %v5506
      %v6339 = vpack.c.b16 %v5509, %v5508
      %v6340 = vpack.c.b16 %v5511, %v5510
      %v6341 = vpack.c.b16 %v5513, %v5512
      %v6342 = vpack.c.b16 %v5515, %v5514
      %v6343 = vpack.c.b16 %v5517, %v5516
      %v6344 = vpack.c.b16 %v5519, %v5518
      %v6345 = vpack.c.b16 %v5521, %v5520
      %v6346 = vpack.c.b16 %v5523, %v5522
      %v6347 = vpack.c.b16 %v5525, %v5524
      %v6348 = vpack.c.b16 %v5527, %v5526
      %v6349 = vpack.c.b16 %v5529, %v5528
      %v6350 = vpack.c.b16 %v5531, %v5530
      %v6351 = vpack.c.b16 %v5533, %v5532
      %v6352 = vpack.c.b16 %v5535, %v5534
      %v6353 = vpack.c.b16 %v5537, %v5536
      %v6354 = vpack.c.b16 %v5539, %v5538
      %v6355 = vpack.c.b16 %v5541, %v5540
      %v6356 = vpack.c.b16 %v5543, %v5542
      %v6357 = vpack.c.b16 %v5545, %v5544
      %v6358 = vpack.c.b16 %v5547, %v5546
      %v6359 = vpack.c.b16 %v5549, %v5548
      %v6360 = vpack.c.b16 %v5551, %v5550
      %v6361 = vpack.c.b16 %v5553, %v5552
      %v6362 = vpack.c.b16 %v5555, %v5554
      %v6363 = vpack.c.b16 %v5557, %v5556
      %v6364 = vpack.c.b16 %v5559, %v5558
      %v6365 = vpack.c.b16 %v5561, %v5560
      %v6366 = vpack.c.b16 %v5563, %v5562
      %v6367 = vpack.c.b16 %v5565, %v5564
      %v6368 = vpack.c.b16 %v5567, %v5566
      %v6369 = vpack.c.b16 %v5569, %v5568
      %v6370 = vpack.c.b16 %v5571, %v5570
      %v6371 = vpack.c.b16 %v5573, %v5572
      %v6372 = vpack.c.b16 %v5575, %v5574
      %v6373 = vpack.c.b16 %v5577, %v5576
      %v6374 = vpack.c.b16 %v5579, %v5578
      %v6375 = vpack.c.b16 %v5581, %v5580
      %v6376 = vpack.c.b16 %v5583, %v5582
      %v6377 = vpack.c.b16 %v5585, %v5584
      %v6378 = vpack.c.b16 %v5587, %v5586
      %v6379 = vpack.c.b16 %v5589, %v5588
      %v6380 = vpack.c.b16 %v5591, %v5590
      %v6381 = vpack.c.b16 %v5593, %v5592
      %v6382 = vpack.c.b16 %v5595, %v5594
      %v6383 = vpack.c.b16 %v5597, %v5596
      %v6384 = vpack.c.b16 %v5599, %v5598
      %v6385 = vpack.c.b16 %v5601, %v5600
      %7170 = vmatprep.subr.bf16.mxu0 0
      %7171 = vmatpush1.bf16.msra.mxu0 %v5609
      %7172 = vmatprep.subr.bf16.mxu0 0
      %7173 = vmatpush1.bf16.msra.mxu0 %v5608
      %7174 = vmatprep.subr.bf16.mxu0 0
      %7175 = vmatpush1.bf16.msra.mxu0 %v5607
      %7176 = vmatprep.subr.bf16.mxu0 0
      %7177 = vmatpush1.bf16.msra.mxu0 %v5606
      %7178 = vmatprep.subr.bf16.mxu0 0
      %7179 = vmatpush1.bf16.msra.mxu0 %v5605
      %7180 = vmatprep.subr.bf16.mxu0 0
      %7181 = vmatpush1.bf16.msra.mxu0 %v5604
      %7182 = vmatprep.subr.bf16.mxu0 0
      %7183 = vmatpush1.bf16.msra.mxu0 %v5603
      %7184 = vmatprep.subr.bf16.mxu0 0
      %7185 = vmatpush1.bf16.msra.mxu0 %v5602
      %7186 = vmatprep.subr.bf16.mxu0 0
      %7187 = vmatpush2.bf16.msra.mxu0 %v5617
      %7188 = vmatprep.subr.bf16.mxu0 0
      %7189 = vmatpush2.bf16.msra.mxu0 %v5616
      %7190 = vmatprep.subr.bf16.mxu0 0
      %7191 = vmatpush2.bf16.msra.mxu0 %v5615
      %7192 = vmatprep.subr.bf16.mxu0 0
      %7193 = vmatpush2.bf16.msra.mxu0 %v5614
      %7194 = vmatprep.subr.bf16.mxu0 0
      %7195 = vmatpush2.bf16.msra.mxu0 %v5613
      %7196 = vmatprep.subr.bf16.mxu0 0
      %7197 = vmatpush2.bf16.msra.mxu0 %v5612
      %7198 = vmatprep.subr.bf16.mxu0 0
      %7199 = vmatpush2.bf16.msra.mxu0 %v5611
      %7200 = vmatprep.subr.bf16.mxu0 0
      %7201 = vmatpush2.bf16.msra.mxu0 %v5610
      %7202 = vmatprep.mubr.bf16.mxu0 %v1795
      %7203 = vmatmul.mubr.bf16.gmra.mxu0 %v1781
      %v7204 = vpop.f32.mrf.mxu0
      %v7205 = vadd.f32 0.0, %v7204
      %v7206 = vpop.f32.mrf.mxu0
      %v7207 = vpop.f32.mrf.mxu0
      %v7208 = vpop.f32.mrf.mxu0
      %7209 = vdwg.mxu0
      %7210 = vmatprep.subr.bf16.mxu0 0
      %7211 = vmatpush1.bf16.msra.mxu0 %v5625
      %7212 = vmatprep.subr.bf16.mxu0 0
      %7213 = vmatpush1.bf16.msra.mxu0 %v5624
      %7214 = vmatprep.subr.bf16.mxu0 0
      %7215 = vmatpush1.bf16.msra.mxu0 %v5623
      %7216 = vmatprep.subr.bf16.mxu0 0
      %7217 = vmatpush1.bf16.msra.mxu0 %v5622
      %7218 = vmatprep.subr.bf16.mxu0 0
      %7219 = vmatpush1.bf16.msra.mxu0 %v5621
      %7220 = vmatprep.subr.bf16.mxu0 0
      %7221 = vmatpush1.bf16.msra.mxu0 %v5620
      %7222 = vmatprep.subr.bf16.mxu0 0
      %7223 = vmatpush1.bf16.msra.mxu0 %v5619
      %7224 = vmatprep.subr.bf16.mxu0 0
      %7225 = vmatpush1.bf16.msra.mxu0 %v5618
      %7226 = vmatprep.subr.bf16.mxu0 0
      %7227 = vmatpush2.bf16.msra.mxu0 %v5633
      %7228 = vmatprep.subr.bf16.mxu0 0
      %7229 = vmatpush2.bf16.msra.mxu0 %v5632
      %7230 = vmatprep.subr.bf16.mxu0 0
      %7231 = vmatpush2.bf16.msra.mxu0 %v5631
      %7232 = vmatprep.subr.bf16.mxu0 0
      %7233 = vmatpush2.bf16.msra.mxu0 %v5630
      %7234 = vmatprep.subr.bf16.mxu0 0
      %7235 = vmatpush2.bf16.msra.mxu0 %v5629
      %7236 = vmatprep.subr.bf16.mxu0 0
      %7237 = vmatpush2.bf16.msra.mxu0 %v5628
      %7238 = vmatprep.subr.bf16.mxu0 0
      %7239 = vmatpush2.bf16.msra.mxu0 %v5627
      %7240 = vmatprep.subr.bf16.mxu0 0
      %7241 = vmatpush2.bf16.msra.mxu0 %v5626
      %7242 = vmatprep.mubr.bf16.mxu0 %v1805
      %7243 = vmatmul.mubr.bf16.gmra.mxu0 %v1803
      %v7244 = vpop.f32.mrf.mxu0
      %v7245 = vadd.f32 %v7205, %v7244
      %v7246 = vpop.f32.mrf.mxu0
      %v7247 = vpop.f32.mrf.mxu0
      %v7248 = vpop.f32.mrf.mxu0
      %7249 = vdwg.mxu0
      %7250 = vmatprep.subr.bf16.mxu0 0
      %7251 = vmatpush1.bf16.msra.mxu0 %v5641
      %7252 = vmatprep.subr.bf16.mxu0 0
      %7253 = vmatpush1.bf16.msra.mxu0 %v5640
      %7254 = vmatprep.subr.bf16.mxu0 0
      %7255 = vmatpush1.bf16.msra.mxu0 %v5639
      %7256 = vmatprep.subr.bf16.mxu0 0
      %7257 = vmatpush1.bf16.msra.mxu0 %v5638
      %7258 = vmatprep.subr.bf16.mxu0 0
      %7259 = vmatpush1.bf16.msra.mxu0 %v5637
      %7260 = vmatprep.subr.bf16.mxu0 0
      %7261 = vmatpush1.bf16.msra.mxu0 %v5636
      %7262 = vmatprep.subr.bf16.mxu0 0
      %7263 = vmatpush1.bf16.msra.mxu0 %v5635
      %7264 = vmatprep.subr.bf16.mxu0 0
      %7265 = vmatpush1.bf16.msra.mxu0 %v5634
      %7266 = vmatprep.subr.bf16.mxu0 0
      %7267 = vmatpush2.bf16.msra.mxu0 %v5649
      %7268 = vmatprep.subr.bf16.mxu0 0
      %7269 = vmatpush2.bf16.msra.mxu0 %v5648
      %7270 = vmatprep.subr.bf16.mxu0 0
      %7271 = vmatpush2.bf16.msra.mxu0 %v5647
      %7272 = vmatprep.subr.bf16.mxu0 0
      %7273 = vmatpush2.bf16.msra.mxu0 %v5646
      %7274 = vmatprep.subr.bf16.mxu0 0
      %7275 = vmatpush2.bf16.msra.mxu0 %v5645
      %7276 = vmatprep.subr.bf16.mxu0 0
      %7277 = vmatpush2.bf16.msra.mxu0 %v5644
      %7278 = vmatprep.subr.bf16.mxu0 0
      %7279 = vmatpush2.bf16.msra.mxu0 %v5643
      %7280 = vmatprep.subr.bf16.mxu0 0
      %7281 = vmatpush2.bf16.msra.mxu0 %v5642
      %7282 = vmatprep.mubr.bf16.mxu0 %v1802
      %7283 = vmatmul.mubr.bf16.gmra.mxu0 %v1788
      %v7284 = vpop.f32.mrf.mxu0
      %v7285 = vadd.f32 %v7245, %v7284
      %v7286 = vpop.f32.mrf.mxu0
      %v7287 = vpop.f32.mrf.mxu0
      %v7288 = vpop.f32.mrf.mxu0
      %7289 = vdwg.mxu0
      %7290 = vmatprep.subr.bf16.mxu0 0
      %7291 = vmatpush1.bf16.msra.mxu0 %v5657
      %7292 = vmatprep.subr.bf16.mxu0 0
      %7293 = vmatpush1.bf16.msra.mxu0 %v5656
      %7294 = vmatprep.subr.bf16.mxu0 0
      %7295 = vmatpush1.bf16.msra.mxu0 %v5655
      %7296 = vmatprep.subr.bf16.mxu0 0
      %7297 = vmatpush1.bf16.msra.mxu0 %v5654
      %7298 = vmatprep.subr.bf16.mxu0 0
      %7299 = vmatpush1.bf16.msra.mxu0 %v5653
      %7300 = vmatprep.subr.bf16.mxu0 0
      %7301 = vmatpush1.bf16.msra.mxu0 %v5652
      %7302 = vmatprep.subr.bf16.mxu0 0
      %7303 = vmatpush1.bf16.msra.mxu0 %v5651
      %7304 = vmatprep.subr.bf16.mxu0 0
      %7305 = vmatpush1.bf16.msra.mxu0 %v5650
      %7306 = vmatprep.subr.bf16.mxu0 0
      %7307 = vmatpush2.bf16.msra.mxu0 %v5665
      %7308 = vmatprep.subr.bf16.mxu0 0
      %7309 = vmatpush2.bf16.msra.mxu0 %v5664
      %7310 = vmatprep.subr.bf16.mxu0 0
      %7311 = vmatpush2.bf16.msra.mxu0 %v5663
      %7312 = vmatprep.subr.bf16.mxu0 0
      %7313 = vmatpush2.bf16.msra.mxu0 %v5662
      %7314 = vmatprep.subr.bf16.mxu0 0
      %7315 = vmatpush2.bf16.msra.mxu0 %v5661
      %7316 = vmatprep.subr.bf16.mxu0 0
      %7317 = vmatpush2.bf16.msra.mxu0 %v5660
      %7318 = vmatprep.subr.bf16.mxu0 0
      %7319 = vmatpush2.bf16.msra.mxu0 %v5659
      %7320 = vmatprep.subr.bf16.mxu0 0
      %7321 = vmatpush2.bf16.msra.mxu0 %v5658
      %7322 = vmatprep.mubr.bf16.mxu0 %v1806
      %7323 = vmatmul.mubr.bf16.gmra.mxu0 %v1804
      %v7324 = vpop.f32.mrf.mxu0
      %v7325 = vadd.f32 %v7285, %v7324
      %v7326 = vpop.f32.mrf.mxu0
      %v7327 = vpop.f32.mrf.mxu0
      %v7328 = vpop.f32.mrf.mxu0
      %7329 = vdwg.mxu0
      %7330 = vmatprep.subr.bf16.mxu0 0
      %7331 = vmatpush1.bf16.msra.mxu0 %v5673
      %7332 = vmatprep.subr.bf16.mxu0 0
      %7333 = vmatpush1.bf16.msra.mxu0 %v5672
      %7334 = vmatprep.subr.bf16.mxu0 0
      %7335 = vmatpush1.bf16.msra.mxu0 %v5671
      %7336 = vmatprep.subr.bf16.mxu0 0
      %7337 = vmatpush1.bf16.msra.mxu0 %v5670
      %7338 = vmatprep.subr.bf16.mxu0 0
      %7339 = vmatpush1.bf16.msra.mxu0 %v5669
      %7340 = vmatprep.subr.bf16.mxu0 0
      %7341 = vmatpush1.bf16.msra.mxu0 %v5668
      %7342 = vmatprep.subr.bf16.mxu0 0
      %7343 = vmatpush1.bf16.msra.mxu0 %v5667
      %7344 = vmatprep.subr.bf16.mxu0 0
      %7345 = vmatpush1.bf16.msra.mxu0 %v5666
      %7346 = vmatprep.subr.bf16.mxu0 0
      %7347 = vmatpush2.bf16.msra.mxu0 %v5681
      %7348 = vmatprep.subr.bf16.mxu0 0
      %7349 = vmatpush2.bf16.msra.mxu0 %v5680
      %7350 = vmatprep.subr.bf16.mxu0 0
      %7351 = vmatpush2.bf16.msra.mxu0 %v5679
      %7352 = vmatprep.subr.bf16.mxu0 0
      %7353 = vmatpush2.bf16.msra.mxu0 %v5678
      %7354 = vmatprep.subr.bf16.mxu0 0
      %7355 = vmatpush2.bf16.msra.mxu0 %v5677
      %7356 = vmatprep.subr.bf16.mxu0 0
      %7357 = vmatpush2.bf16.msra.mxu0 %v5676
      %7358 = vmatprep.subr.bf16.mxu0 0
      %7359 = vmatpush2.bf16.msra.mxu0 %v5675
      %7360 = vmatprep.subr.bf16.mxu0 0
      %7361 = vmatpush2.bf16.msra.mxu0 %v5674
      %7362 = vmatprep.mubr.bf16.mxu0 %v1844
      %7363 = vmatmul.mubr.bf16.gmra.mxu0 %v1830
      %v7364 = vpop.f32.mrf.mxu0
      %v7365 = vadd.f32 %v7325, %v7364
      %v7366 = vpop.f32.mrf.mxu0
      %v7367 = vpop.f32.mrf.mxu0
      %v7368 = vpop.f32.mrf.mxu0
      %7369 = vdwg.mxu0
      %7370 = vmatprep.subr.bf16.mxu0 0
      %7371 = vmatpush1.bf16.msra.mxu0 %v5689
      %7372 = vmatprep.subr.bf16.mxu0 0
      %7373 = vmatpush1.bf16.msra.mxu0 %v5688
      %7374 = vmatprep.subr.bf16.mxu0 0
      %7375 = vmatpush1.bf16.msra.mxu0 %v5687
      %7376 = vmatprep.subr.bf16.mxu0 0
      %7377 = vmatpush1.bf16.msra.mxu0 %v5686
      %7378 = vmatprep.subr.bf16.mxu0 0
      %7379 = vmatpush1.bf16.msra.mxu0 %v5685
      %7380 = vmatprep.subr.bf16.mxu0 0
      %7381 = vmatpush1.bf16.msra.mxu0 %v5684
      %7382 = vmatprep.subr.bf16.mxu0 0
      %7383 = vmatpush1.bf16.msra.mxu0 %v5683
      %7384 = vmatprep.subr.bf16.mxu0 0
      %7385 = vmatpush1.bf16.msra.mxu0 %v5682
      %7386 = vmatprep.subr.bf16.mxu0 0
      %7387 = vmatpush2.bf16.msra.mxu0 %v5697
      %7388 = vmatprep.subr.bf16.mxu0 0
      %7389 = vmatpush2.bf16.msra.mxu0 %v5696
      %7390 = vmatprep.subr.bf16.mxu0 0
      %7391 = vmatpush2.bf16.msra.mxu0 %v5695
      %7392 = vmatprep.subr.bf16.mxu0 0
      %7393 = vmatpush2.bf16.msra.mxu0 %v5694
      %7394 = vmatprep.subr.bf16.mxu0 0
      %7395 = vmatpush2.bf16.msra.mxu0 %v5693
      %7396 = vmatprep.subr.bf16.mxu0 0
      %7397 = vmatpush2.bf16.msra.mxu0 %v5692
      %7398 = vmatprep.subr.bf16.mxu0 0
      %7399 = vmatpush2.bf16.msra.mxu0 %v5691
      %7400 = vmatprep.subr.bf16.mxu0 0
      %7401 = vmatpush2.bf16.msra.mxu0 %v5690
      %7402 = vmatprep.mubr.bf16.mxu0 %v1854
      %7403 = vmatmul.mubr.bf16.gmra.mxu0 %v1852
      %v7404 = vpop.f32.mrf.mxu0
      %v7405 = vadd.f32 %v7365, %v7404
      %v7406 = vpop.f32.mrf.mxu0
      %v7407 = vpop.f32.mrf.mxu0
      %v7408 = vpop.f32.mrf.mxu0
      %7409 = vdwg.mxu0
      %7410 = vmatprep.subr.bf16.mxu0 0
      %7411 = vmatpush1.bf16.msra.mxu0 %v5705
      %7412 = vmatprep.subr.bf16.mxu0 0
      %7413 = vmatpush1.bf16.msra.mxu0 %v5704
      %7414 = vmatprep.subr.bf16.mxu0 0
      %7415 = vmatpush1.bf16.msra.mxu0 %v5703
      %7416 = vmatprep.subr.bf16.mxu0 0
      %7417 = vmatpush1.bf16.msra.mxu0 %v5702
      %7418 = vmatprep.subr.bf16.mxu0 0
      %7419 = vmatpush1.bf16.msra.mxu0 %v5701
      %7420 = vmatprep.subr.bf16.mxu0 0
      %7421 = vmatpush1.bf16.msra.mxu0 %v5700
      %7422 = vmatprep.subr.bf16.mxu0 0
      %7423 = vmatpush1.bf16.msra.mxu0 %v5699
      %7424 = vmatprep.subr.bf16.mxu0 0
      %7425 = vmatpush1.bf16.msra.mxu0 %v5698
      %7426 = vmatprep.subr.bf16.mxu0 0
      %7427 = vmatpush2.bf16.msra.mxu0 %v5713
      %7428 = vmatprep.subr.bf16.mxu0 0
      %7429 = vmatpush2.bf16.msra.mxu0 %v5712
      %7430 = vmatprep.subr.bf16.mxu0 0
      %7431 = vmatpush2.bf16.msra.mxu0 %v5711
      %7432 = vmatprep.subr.bf16.mxu0 0
      %7433 = vmatpush2.bf16.msra.mxu0 %v5710
      %7434 = vmatprep.subr.bf16.mxu0 0
      %7435 = vmatpush2.bf16.msra.mxu0 %v5709
      %7436 = vmatprep.subr.bf16.mxu0 0
      %7437 = vmatpush2.bf16.msra.mxu0 %v5708
      %7438 = vmatprep.subr.bf16.mxu0 0
      %7439 = vmatpush2.bf16.msra.mxu0 %v5707
      %7440 = vmatprep.subr.bf16.mxu0 0
      %7441 = vmatpush2.bf16.msra.mxu0 %v5706
      %7442 = vmatprep.mubr.bf16.mxu0 %v1851
      %7443 = vmatmul.mubr.bf16.gmra.mxu0 %v1837
      %v7444 = vpop.f32.mrf.mxu0
      %v7445 = vadd.f32 %v7405, %v7444
      %v7446 = vpop.f32.mrf.mxu0
      %v7447 = vpop.f32.mrf.mxu0
      %v7448 = vpop.f32.mrf.mxu0
      %7449 = vdwg.mxu0
      %7450 = vmatprep.subr.bf16.mxu0 0
      %7451 = vmatpush1.bf16.msra.mxu0 %v5721
      %7452 = vmatprep.subr.bf16.mxu0 0
      %7453 = vmatpush1.bf16.msra.mxu0 %v5720
      %7454 = vmatprep.subr.bf16.mxu0 0
      %7455 = vmatpush1.bf16.msra.mxu0 %v5719
      %7456 = vmatprep.subr.bf16.mxu0 0
      %7457 = vmatpush1.bf16.msra.mxu0 %v5718
      %7458 = vmatprep.subr.bf16.mxu0 0
      %7459 = vmatpush1.bf16.msra.mxu0 %v5717
      %7460 = vmatprep.subr.bf16.mxu0 0
      %7461 = vmatpush1.bf16.msra.mxu0 %v5716
      %7462 = vmatprep.subr.bf16.mxu0 0
      %7463 = vmatpush1.bf16.msra.mxu0 %v5715
      %7464 = vmatprep.subr.bf16.mxu0 0
      %7465 = vmatpush1.bf16.msra.mxu0 %v5714
      %7466 = vmatprep.subr.bf16.mxu0 0
      %7467 = vmatpush2.bf16.msra.mxu0 %v5729
      %7468 = vmatprep.subr.bf16.mxu0 0
      %7469 = vmatpush2.bf16.msra.mxu0 %v5728
      %7470 = vmatprep.subr.bf16.mxu0 0
      %7471 = vmatpush2.bf16.msra.mxu0 %v5727
      %7472 = vmatprep.subr.bf16.mxu0 0
      %7473 = vmatpush2.bf16.msra.mxu0 %v5726
      %7474 = vmatprep.subr.bf16.mxu0 0
      %7475 = vmatpush2.bf16.msra.mxu0 %v5725
      %7476 = vmatprep.subr.bf16.mxu0 0
      %7477 = vmatpush2.bf16.msra.mxu0 %v5724
      %7478 = vmatprep.subr.bf16.mxu0 0
      %7479 = vmatpush2.bf16.msra.mxu0 %v5723
      %7480 = vmatprep.subr.bf16.mxu0 0
      %7481 = vmatpush2.bf16.msra.mxu0 %v5722
      %7482 = vmatprep.mubr.bf16.mxu0 %v1855
      %7483 = vmatmul.mubr.bf16.gmra.mxu0 %v1853
      %v7484 = vpop.f32.mrf.mxu0
      %v7485 = vadd.f32 %v7445, %v7484
      %v7486 = vpop.f32.mrf.mxu0
      %v7487 = vpop.f32.mrf.mxu0
      %v7488 = vpop.f32.mrf.mxu0
      %7489 = vdwg.mxu0
      %7490 = vmatprep.subr.bf16.mxu0 0
      %7491 = vmatpush1.bf16.msra.mxu0 %v5737
      %7492 = vmatprep.subr.bf16.mxu0 0
      %7493 = vmatpush1.bf16.msra.mxu0 %v5736
      %7494 = vmatprep.subr.bf16.mxu0 0
      %7495 = vmatpush1.bf16.msra.mxu0 %v5735
      %7496 = vmatprep.subr.bf16.mxu0 0
      %7497 = vmatpush1.bf16.msra.mxu0 %v5734
      %7498 = vmatprep.subr.bf16.mxu0 0
      %7499 = vmatpush1.bf16.msra.mxu0 %v5733
      %7500 = vmatprep.subr.bf16.mxu0 0
      %7501 = vmatpush1.bf16.msra.mxu0 %v5732
      %7502 = vmatprep.subr.bf16.mxu0 0
      %7503 = vmatpush1.bf16.msra.mxu0 %v5731
      %7504 = vmatprep.subr.bf16.mxu0 0
      %7505 = vmatpush1.bf16.msra.mxu0 %v5730
      %7506 = vmatprep.subr.bf16.mxu0 0
      %7507 = vmatpush2.bf16.msra.mxu0 %v5745
      %7508 = vmatprep.subr.bf16.mxu0 0
      %7509 = vmatpush2.bf16.msra.mxu0 %v5744
      %7510 = vmatprep.subr.bf16.mxu0 0
      %7511 = vmatpush2.bf16.msra.mxu0 %v5743
      %7512 = vmatprep.subr.bf16.mxu0 0
      %7513 = vmatpush2.bf16.msra.mxu0 %v5742
      %7514 = vmatprep.subr.bf16.mxu0 0
      %7515 = vmatpush2.bf16.msra.mxu0 %v5741
      %7516 = vmatprep.subr.bf16.mxu0 0
      %7517 = vmatpush2.bf16.msra.mxu0 %v5740
      %7518 = vmatprep.subr.bf16.mxu0 0
      %7519 = vmatpush2.bf16.msra.mxu0 %v5739
      %7520 = vmatprep.subr.bf16.mxu0 0
      %7521 = vmatpush2.bf16.msra.mxu0 %v5738
      %7522 = vmatprep.mubr.bf16.mxu0 %v1893
      %7523 = vmatmul.mubr.bf16.gmra.mxu0 %v1879
      %v7524 = vpop.f32.mrf.mxu0
      %v7525 = vadd.f32 %v7485, %v7524
      %v7526 = vpop.f32.mrf.mxu0
      %v7527 = vpop.f32.mrf.mxu0
      %v7528 = vpop.f32.mrf.mxu0
      %7529 = vdwg.mxu0
      %7530 = vmatprep.subr.bf16.mxu0 0
      %7531 = vmatpush1.bf16.msra.mxu0 %v5753
      %7532 = vmatprep.subr.bf16.mxu0 0
      %7533 = vmatpush1.bf16.msra.mxu0 %v5752
      %7534 = vmatprep.subr.bf16.mxu0 0
      %7535 = vmatpush1.bf16.msra.mxu0 %v5751
      %7536 = vmatprep.subr.bf16.mxu0 0
      %7537 = vmatpush1.bf16.msra.mxu0 %v5750
      %7538 = vmatprep.subr.bf16.mxu0 0
      %7539 = vmatpush1.bf16.msra.mxu0 %v5749
      %7540 = vmatprep.subr.bf16.mxu0 0
      %7541 = vmatpush1.bf16.msra.mxu0 %v5748
      %7542 = vmatprep.subr.bf16.mxu0 0
      %7543 = vmatpush1.bf16.msra.mxu0 %v5747
      %7544 = vmatprep.subr.bf16.mxu0 0
      %7545 = vmatpush1.bf16.msra.mxu0 %v5746
      %7546 = vmatprep.subr.bf16.mxu0 0
      %7547 = vmatpush2.bf16.msra.mxu0 %v5761
      %7548 = vmatprep.subr.bf16.mxu0 0
      %7549 = vmatpush2.bf16.msra.mxu0 %v5760
      %7550 = vmatprep.subr.bf16.mxu0 0
      %7551 = vmatpush2.bf16.msra.mxu0 %v5759
      %7552 = vmatprep.subr.bf16.mxu0 0
      %7553 = vmatpush2.bf16.msra.mxu0 %v5758
      %7554 = vmatprep.subr.bf16.mxu0 0
      %7555 = vmatpush2.bf16.msra.mxu0 %v5757
      %7556 = vmatprep.subr.bf16.mxu0 0
      %7557 = vmatpush2.bf16.msra.mxu0 %v5756
      %7558 = vmatprep.subr.bf16.mxu0 0
      %7559 = vmatpush2.bf16.msra.mxu0 %v5755
      %7560 = vmatprep.subr.bf16.mxu0 0
      %7561 = vmatpush2.bf16.msra.mxu0 %v5754
      %7562 = vmatprep.mubr.bf16.mxu0 %v1903
      %7563 = vmatmul.mubr.bf16.gmra.mxu0 %v1901
      %v7564 = vpop.f32.mrf.mxu0
      %v7565 = vadd.f32 %v7525, %v7564
      %v7566 = vpop.f32.mrf.mxu0
      %v7567 = vpop.f32.mrf.mxu0
      %v7568 = vpop.f32.mrf.mxu0
      %7569 = vdwg.mxu0
      %7570 = vmatprep.subr.bf16.mxu0 0
      %7571 = vmatpush1.bf16.msra.mxu0 %v5769
      %7572 = vmatprep.subr.bf16.mxu0 0
      %7573 = vmatpush1.bf16.msra.mxu0 %v5768
      %7574 = vmatprep.subr.bf16.mxu0 0
      %7575 = vmatpush1.bf16.msra.mxu0 %v5767
      %7576 = vmatprep.subr.bf16.mxu0 0
      %7577 = vmatpush1.bf16.msra.mxu0 %v5766
      %7578 = vmatprep.subr.bf16.mxu0 0
      %7579 = vmatpush1.bf16.msra.mxu0 %v5765
      %7580 = vmatprep.subr.bf16.mxu0 0
      %7581 = vmatpush1.bf16.msra.mxu0 %v5764
      %7582 = vmatprep.subr.bf16.mxu0 0
      %7583 = vmatpush1.bf16.msra.mxu0 %v5763
      %7584 = vmatprep.subr.bf16.mxu0 0
      %7585 = vmatpush1.bf16.msra.mxu0 %v5762
      %7586 = vmatprep.subr.bf16.mxu0 0
      %7587 = vmatpush2.bf16.msra.mxu0 %v5777
      %7588 = vmatprep.subr.bf16.mxu0 0
      %7589 = vmatpush2.bf16.msra.mxu0 %v5776
      %7590 = vmatprep.subr.bf16.mxu0 0
      %7591 = vmatpush2.bf16.msra.mxu0 %v5775
      %7592 = vmatprep.subr.bf16.mxu0 0
      %7593 = vmatpush2.bf16.msra.mxu0 %v5774
      %7594 = vmatprep.subr.bf16.mxu0 0
      %7595 = vmatpush2.bf16.msra.mxu0 %v5773
      %7596 = vmatprep.subr.bf16.mxu0 0
      %7597 = vmatpush2.bf16.msra.mxu0 %v5772
      %7598 = vmatprep.subr.bf16.mxu0 0
      %7599 = vmatpush2.bf16.msra.mxu0 %v5771
      %7600 = vmatprep.subr.bf16.mxu0 0
      %7601 = vmatpush2.bf16.msra.mxu0 %v5770
      %7602 = vmatprep.mubr.bf16.mxu0 %v1900
      %7603 = vmatmul.mubr.bf16.gmra.mxu0 %v1886
      %v7604 = vpop.f32.mrf.mxu0
      %v7605 = vadd.f32 %v7565, %v7604
      %v7606 = vpop.f32.mrf.mxu0
      %v7607 = vpop.f32.mrf.mxu0
      %v7608 = vpop.f32.mrf.mxu0
      %7609 = vdwg.mxu0
      %7610 = vmatprep.subr.bf16.mxu0 0
      %7611 = vmatpush1.bf16.msra.mxu0 %v5785
      %7612 = vmatprep.subr.bf16.mxu0 0
      %7613 = vmatpush1.bf16.msra.mxu0 %v5784
      %7614 = vmatprep.subr.bf16.mxu0 0
      %7615 = vmatpush1.bf16.msra.mxu0 %v5783
      %7616 = vmatprep.subr.bf16.mxu0 0
      %7617 = vmatpush1.bf16.msra.mxu0 %v5782
      %7618 = vmatprep.subr.bf16.mxu0 0
      %7619 = vmatpush1.bf16.msra.mxu0 %v5781
      %7620 = vmatprep.subr.bf16.mxu0 0
      %7621 = vmatpush1.bf16.msra.mxu0 %v5780
      %7622 = vmatprep.subr.bf16.mxu0 0
      %7623 = vmatpush1.bf16.msra.mxu0 %v5779
      %7624 = vmatprep.subr.bf16.mxu0 0
      %7625 = vmatpush1.bf16.msra.mxu0 %v5778
      %7626 = vmatprep.subr.bf16.mxu0 0
      %7627 = vmatpush2.bf16.msra.mxu0 %v5793
      %7628 = vmatprep.subr.bf16.mxu0 0
      %7629 = vmatpush2.bf16.msra.mxu0 %v5792
      %7630 = vmatprep.subr.bf16.mxu0 0
      %7631 = vmatpush2.bf16.msra.mxu0 %v5791
      %7632 = vmatprep.subr.bf16.mxu0 0
      %7633 = vmatpush2.bf16.msra.mxu0 %v5790
      %7634 = vmatprep.subr.bf16.mxu0 0
      %7635 = vmatpush2.bf16.msra.mxu0 %v5789
      %7636 = vmatprep.subr.bf16.mxu0 0
      %7637 = vmatpush2.bf16.msra.mxu0 %v5788
      %7638 = vmatprep.subr.bf16.mxu0 0
      %7639 = vmatpush2.bf16.msra.mxu0 %v5787
      %7640 = vmatprep.subr.bf16.mxu0 0
      %7641 = vmatpush2.bf16.msra.mxu0 %v5786
      %7642 = vmatprep.mubr.bf16.mxu0 %v1904
      %7643 = vmatmul.mubr.bf16.gmra.mxu0 %v1902
      %v7644 = vpop.f32.mrf.mxu0
      %v7645 = vadd.f32 %v7605, %v7644
      %v7646 = vpop.f32.mrf.mxu0
      %v7647 = vpop.f32.mrf.mxu0
      %v7648 = vpop.f32.mrf.mxu0
      %7649 = vdwg.mxu0
      %7650 = vmatprep.subr.bf16.mxu0 0
      %7651 = vmatpush1.bf16.msra.mxu0 %v5801
      %7652 = vmatprep.subr.bf16.mxu0 0
      %7653 = vmatpush1.bf16.msra.mxu0 %v5800
      %7654 = vmatprep.subr.bf16.mxu0 0
      %7655 = vmatpush1.bf16.msra.mxu0 %v5799
      %7656 = vmatprep.subr.bf16.mxu0 0
      %7657 = vmatpush1.bf16.msra.mxu0 %v5798
      %7658 = vmatprep.subr.bf16.mxu0 0
      %7659 = vmatpush1.bf16.msra.mxu0 %v5797
      %7660 = vmatprep.subr.bf16.mxu0 0
      %7661 = vmatpush1.bf16.msra.mxu0 %v5796
      %7662 = vmatprep.subr.bf16.mxu0 0
      %7663 = vmatpush1.bf16.msra.mxu0 %v5795
      %7664 = vmatprep.subr.bf16.mxu0 0
      %7665 = vmatpush1.bf16.msra.mxu0 %v5794
      %7666 = vmatprep.subr.bf16.mxu0 0
      %7667 = vmatpush2.bf16.msra.mxu0 %v5809
      %7668 = vmatprep.subr.bf16.mxu0 0
      %7669 = vmatpush2.bf16.msra.mxu0 %v5808
      %7670 = vmatprep.subr.bf16.mxu0 0
      %7671 = vmatpush2.bf16.msra.mxu0 %v5807
      %7672 = vmatprep.subr.bf16.mxu0 0
      %7673 = vmatpush2.bf16.msra.mxu0 %v5806
      %7674 = vmatprep.subr.bf16.mxu0 0
      %7675 = vmatpush2.bf16.msra.mxu0 %v5805
      %7676 = vmatprep.subr.bf16.mxu0 0
      %7677 = vmatpush2.bf16.msra.mxu0 %v5804
      %7678 = vmatprep.subr.bf16.mxu0 0
      %7679 = vmatpush2.bf16.msra.mxu0 %v5803
      %7680 = vmatprep.subr.bf16.mxu0 0
      %7681 = vmatpush2.bf16.msra.mxu0 %v5802
      %7682 = vmatprep.mubr.bf16.mxu0 %v1942
      %7683 = vmatmul.mubr.bf16.gmra.mxu0 %v1928
      %v7684 = vpop.f32.mrf.mxu0
      %v7685 = vadd.f32 %v7645, %v7684
      %v7686 = vpop.f32.mrf.mxu0
      %v7687 = vpop.f32.mrf.mxu0
      %v7688 = vpop.f32.mrf.mxu0
      %7689 = vdwg.mxu0
      %7690 = vmatprep.subr.bf16.mxu0 0
      %7691 = vmatpush1.bf16.msra.mxu0 %v5817
      %7692 = vmatprep.subr.bf16.mxu0 0
      %7693 = vmatpush1.bf16.msra.mxu0 %v5816
      %7694 = vmatprep.subr.bf16.mxu0 0
      %7695 = vmatpush1.bf16.msra.mxu0 %v5815
      %7696 = vmatprep.subr.bf16.mxu0 0
      %7697 = vmatpush1.bf16.msra.mxu0 %v5814
      %7698 = vmatprep.subr.bf16.mxu0 0
      %7699 = vmatpush1.bf16.msra.mxu0 %v5813
      %7700 = vmatprep.subr.bf16.mxu0 0
      %7701 = vmatpush1.bf16.msra.mxu0 %v5812
      %7702 = vmatprep.subr.bf16.mxu0 0
      %7703 = vmatpush1.bf16.msra.mxu0 %v5811
      %7704 = vmatprep.subr.bf16.mxu0 0
      %7705 = vmatpush1.bf16.msra.mxu0 %v5810
      %7706 = vmatprep.subr.bf16.mxu0 0
      %7707 = vmatpush2.bf16.msra.mxu0 %v5825
      %7708 = vmatprep.subr.bf16.mxu0 0
      %7709 = vmatpush2.bf16.msra.mxu0 %v5824
      %7710 = vmatprep.subr.bf16.mxu0 0
      %7711 = vmatpush2.bf16.msra.mxu0 %v5823
      %7712 = vmatprep.subr.bf16.mxu0 0
      %7713 = vmatpush2.bf16.msra.mxu0 %v5822
      %7714 = vmatprep.subr.bf16.mxu0 0
      %7715 = vmatpush2.bf16.msra.mxu0 %v5821
      %7716 = vmatprep.subr.bf16.mxu0 0
      %7717 = vmatpush2.bf16.msra.mxu0 %v5820
      %7718 = vmatprep.subr.bf16.mxu0 0
      %7719 = vmatpush2.bf16.msra.mxu0 %v5819
      %7720 = vmatprep.subr.bf16.mxu0 0
      %7721 = vmatpush2.bf16.msra.mxu0 %v5818
      %7722 = vmatprep.mubr.bf16.mxu0 %v1952
      %7723 = vmatmul.mubr.bf16.gmra.mxu0 %v1950
      %v7724 = vpop.f32.mrf.mxu0
      %v7725 = vadd.f32 %v7685, %v7724
      %v7726 = vpop.f32.mrf.mxu0
      %v7727 = vpop.f32.mrf.mxu0
      %v7728 = vpop.f32.mrf.mxu0
      %7729 = vdwg.mxu0
      %7730 = vmatprep.subr.bf16.mxu0 0
      %7731 = vmatpush1.bf16.msra.mxu0 %v5833
      %7732 = vmatprep.subr.bf16.mxu0 0
      %7733 = vmatpush1.bf16.msra.mxu0 %v5832
      %7734 = vmatprep.subr.bf16.mxu0 0
      %7735 = vmatpush1.bf16.msra.mxu0 %v5831
      %7736 = vmatprep.subr.bf16.mxu0 0
      %7737 = vmatpush1.bf16.msra.mxu0 %v5830
      %7738 = vmatprep.subr.bf16.mxu0 0
      %7739 = vmatpush1.bf16.msra.mxu0 %v5829
      %7740 = vmatprep.subr.bf16.mxu0 0
      %7741 = vmatpush1.bf16.msra.mxu0 %v5828
      %7742 = vmatprep.subr.bf16.mxu0 0
      %7743 = vmatpush1.bf16.msra.mxu0 %v5827
      %7744 = vmatprep.subr.bf16.mxu0 0
      %7745 = vmatpush1.bf16.msra.mxu0 %v5826
      %7746 = vmatprep.subr.bf16.mxu0 0
      %7747 = vmatpush2.bf16.msra.mxu0 %v5841
      %7748 = vmatprep.subr.bf16.mxu0 0
      %7749 = vmatpush2.bf16.msra.mxu0 %v5840
      %7750 = vmatprep.subr.bf16.mxu0 0
      %7751 = vmatpush2.bf16.msra.mxu0 %v5839
      %7752 = vmatprep.subr.bf16.mxu0 0
      %7753 = vmatpush2.bf16.msra.mxu0 %v5838
      %7754 = vmatprep.subr.bf16.mxu0 0
      %7755 = vmatpush2.bf16.msra.mxu0 %v5837
      %7756 = vmatprep.subr.bf16.mxu0 0
      %7757 = vmatpush2.bf16.msra.mxu0 %v5836
      %7758 = vmatprep.subr.bf16.mxu0 0
      %7759 = vmatpush2.bf16.msra.mxu0 %v5835
      %7760 = vmatprep.subr.bf16.mxu0 0
      %7761 = vmatpush2.bf16.msra.mxu0 %v5834
      %7762 = vmatprep.mubr.bf16.mxu0 %v1949
      %7763 = vmatmul.mubr.bf16.gmra.mxu0 %v1935
      %v7764 = vpop.f32.mrf.mxu0
      %v7765 = vadd.f32 %v7725, %v7764
      %v7766 = vpop.f32.mrf.mxu0
      %v7767 = vpop.f32.mrf.mxu0
      %v7768 = vpop.f32.mrf.mxu0
      %7769 = vdwg.mxu0
      %7770 = vmatprep.subr.bf16.mxu0 0
      %7771 = vmatpush1.bf16.msra.mxu0 %v5849
      %7772 = vmatprep.subr.bf16.mxu0 0
      %7773 = vmatpush1.bf16.msra.mxu0 %v5848
      %7774 = vmatprep.subr.bf16.mxu0 0
      %7775 = vmatpush1.bf16.msra.mxu0 %v5847
      %7776 = vmatprep.subr.bf16.mxu0 0
      %7777 = vmatpush1.bf16.msra.mxu0 %v5846
      %7778 = vmatprep.subr.bf16.mxu0 0
      %7779 = vmatpush1.bf16.msra.mxu0 %v5845
      %7780 = vmatprep.subr.bf16.mxu0 0
      %7781 = vmatpush1.bf16.msra.mxu0 %v5844
      %7782 = vmatprep.subr.bf16.mxu0 0
      %7783 = vmatpush1.bf16.msra.mxu0 %v5843
      %7784 = vmatprep.subr.bf16.mxu0 0
      %7785 = vmatpush1.bf16.msra.mxu0 %v5842
      %7786 = vmatprep.subr.bf16.mxu0 0
      %7787 = vmatpush2.bf16.msra.mxu0 %v5857
      %7788 = vmatprep.subr.bf16.mxu0 0
      %7789 = vmatpush2.bf16.msra.mxu0 %v5856
      %7790 = vmatprep.subr.bf16.mxu0 0
      %7791 = vmatpush2.bf16.msra.mxu0 %v5855
      %7792 = vmatprep.subr.bf16.mxu0 0
      %7793 = vmatpush2.bf16.msra.mxu0 %v5854
      %7794 = vmatprep.subr.bf16.mxu0 0
      %7795 = vmatpush2.bf16.msra.mxu0 %v5853
      %7796 = vmatprep.subr.bf16.mxu0 0
      %7797 = vmatpush2.bf16.msra.mxu0 %v5852
      %7798 = vmatprep.subr.bf16.mxu0 0
      %7799 = vmatpush2.bf16.msra.mxu0 %v5851
      %7800 = vmatprep.subr.bf16.mxu0 0
      %7801 = vmatpush2.bf16.msra.mxu0 %v5850
      %7802 = vmatprep.mubr.bf16.mxu0 %v1953
      %7803 = vmatmul.mubr.bf16.gmra.mxu0 %v1951
      %v7804 = vpop.f32.mrf.mxu0
      %v7805 = vadd.f32 %v7765, %v7804
      %v7806 = vpop.f32.mrf.mxu0
      %v7807 = vpop.f32.mrf.mxu0
      %v7808 = vpop.f32.mrf.mxu0
      %7809 = vdwg.mxu0
      %7810 = vmatprep.subr.bf16.mxu0 0
      %7811 = vmatpush1.bf16.msra.mxu0 %v5865
      %7812 = vmatprep.subr.bf16.mxu0 0
      %7813 = vmatpush1.bf16.msra.mxu0 %v5864
      %7814 = vmatprep.subr.bf16.mxu0 0
      %7815 = vmatpush1.bf16.msra.mxu0 %v5863
      %7816 = vmatprep.subr.bf16.mxu0 0
      %7817 = vmatpush1.bf16.msra.mxu0 %v5862
      %7818 = vmatprep.subr.bf16.mxu0 0
      %7819 = vmatpush1.bf16.msra.mxu0 %v5861
      %7820 = vmatprep.subr.bf16.mxu0 0
      %7821 = vmatpush1.bf16.msra.mxu0 %v5860
      %7822 = vmatprep.subr.bf16.mxu0 0
      %7823 = vmatpush1.bf16.msra.mxu0 %v5859
      %7824 = vmatprep.subr.bf16.mxu0 0
      %7825 = vmatpush1.bf16.msra.mxu0 %v5858
      %7826 = vmatprep.subr.bf16.mxu0 0
      %7827 = vmatpush2.bf16.msra.mxu0 %v5873
      %7828 = vmatprep.subr.bf16.mxu0 0
      %7829 = vmatpush2.bf16.msra.mxu0 %v5872
      %7830 = vmatprep.subr.bf16.mxu0 0
      %7831 = vmatpush2.bf16.msra.mxu0 %v5871
      %7832 = vmatprep.subr.bf16.mxu0 0
      %7833 = vmatpush2.bf16.msra.mxu0 %v5870
      %7834 = vmatprep.subr.bf16.mxu0 0
      %7835 = vmatpush2.bf16.msra.mxu0 %v5869
      %7836 = vmatprep.subr.bf16.mxu0 0
      %7837 = vmatpush2.bf16.msra.mxu0 %v5868
      %7838 = vmatprep.subr.bf16.mxu0 0
      %7839 = vmatpush2.bf16.msra.mxu0 %v5867
      %7840 = vmatprep.subr.bf16.mxu0 0
      %7841 = vmatpush2.bf16.msra.mxu0 %v5866
      %7842 = vmatprep.mubr.bf16.mxu0 %v1991
      %7843 = vmatmul.mubr.bf16.gmra.mxu0 %v1977
      %v7844 = vpop.f32.mrf.mxu0
      %v7845 = vadd.f32 %v7805, %v7844
      %v7846 = vpop.f32.mrf.mxu0
      %v7847 = vpop.f32.mrf.mxu0
      %v7848 = vpop.f32.mrf.mxu0
      %7849 = vdwg.mxu0
      %7850 = vmatprep.subr.bf16.mxu0 0
      %7851 = vmatpush1.bf16.msra.mxu0 %v5881
      %7852 = vmatprep.subr.bf16.mxu0 0
      %7853 = vmatpush1.bf16.msra.mxu0 %v5880
      %7854 = vmatprep.subr.bf16.mxu0 0
      %7855 = vmatpush1.bf16.msra.mxu0 %v5879
      %7856 = vmatprep.subr.bf16.mxu0 0
      %7857 = vmatpush1.bf16.msra.mxu0 %v5878
      %7858 = vmatprep.subr.bf16.mxu0 0
      %7859 = vmatpush1.bf16.msra.mxu0 %v5877
      %7860 = vmatprep.subr.bf16.mxu0 0
      %7861 = vmatpush1.bf16.msra.mxu0 %v5876
      %7862 = vmatprep.subr.bf16.mxu0 0
      %7863 = vmatpush1.bf16.msra.mxu0 %v5875
      %7864 = vmatprep.subr.bf16.mxu0 0
      %7865 = vmatpush1.bf16.msra.mxu0 %v5874
      %7866 = vmatprep.subr.bf16.mxu0 0
      %7867 = vmatpush2.bf16.msra.mxu0 %v5889
      %7868 = vmatprep.subr.bf16.mxu0 0
      %7869 = vmatpush2.bf16.msra.mxu0 %v5888
      %7870 = vmatprep.subr.bf16.mxu0 0
      %7871 = vmatpush2.bf16.msra.mxu0 %v5887
      %7872 = vmatprep.subr.bf16.mxu0 0
      %7873 = vmatpush2.bf16.msra.mxu0 %v5886
      %7874 = vmatprep.subr.bf16.mxu0 0
      %7875 = vmatpush2.bf16.msra.mxu0 %v5885
      %7876 = vmatprep.subr.bf16.mxu0 0
      %7877 = vmatpush2.bf16.msra.mxu0 %v5884
      %7878 = vmatprep.subr.bf16.mxu0 0
      %7879 = vmatpush2.bf16.msra.mxu0 %v5883
      %7880 = vmatprep.subr.bf16.mxu0 0
      %7881 = vmatpush2.bf16.msra.mxu0 %v5882
      %7882 = vmatprep.mubr.bf16.mxu0 %v2001
      %7883 = vmatmul.mubr.bf16.gmra.mxu0 %v1999
      %v7884 = vpop.f32.mrf.mxu0
      %v7885 = vadd.f32 %v7845, %v7884
      %v7886 = vpop.f32.mrf.mxu0
      %v7887 = vpop.f32.mrf.mxu0
      %v7888 = vpop.f32.mrf.mxu0
      %7889 = vdwg.mxu0
      %7890 = vmatprep.subr.bf16.mxu0 0
      %7891 = vmatpush1.bf16.msra.mxu0 %v5897
      %7892 = vmatprep.subr.bf16.mxu0 0
      %7893 = vmatpush1.bf16.msra.mxu0 %v5896
      %7894 = vmatprep.subr.bf16.mxu0 0
      %7895 = vmatpush1.bf16.msra.mxu0 %v5895
      %7896 = vmatprep.subr.bf16.mxu0 0
      %7897 = vmatpush1.bf16.msra.mxu0 %v5894
      %7898 = vmatprep.subr.bf16.mxu0 0
      %7899 = vmatpush1.bf16.msra.mxu0 %v5893
      %7900 = vmatprep.subr.bf16.mxu0 0
      %7901 = vmatpush1.bf16.msra.mxu0 %v5892
      %7902 = vmatprep.subr.bf16.mxu0 0
      %7903 = vmatpush1.bf16.msra.mxu0 %v5891
      %7904 = vmatprep.subr.bf16.mxu0 0
      %7905 = vmatpush1.bf16.msra.mxu0 %v5890
      %7906 = vmatprep.subr.bf16.mxu0 0
      %7907 = vmatpush2.bf16.msra.mxu0 %v5905
      %7908 = vmatprep.subr.bf16.mxu0 0
      %7909 = vmatpush2.bf16.msra.mxu0 %v5904
      %7910 = vmatprep.subr.bf16.mxu0 0
      %7911 = vmatpush2.bf16.msra.mxu0 %v5903
      %7912 = vmatprep.subr.bf16.mxu0 0
      %7913 = vmatpush2.bf16.msra.mxu0 %v5902
      %7914 = vmatprep.subr.bf16.mxu0 0
      %7915 = vmatpush2.bf16.msra.mxu0 %v5901
      %7916 = vmatprep.subr.bf16.mxu0 0
      %7917 = vmatpush2.bf16.msra.mxu0 %v5900
      %7918 = vmatprep.subr.bf16.mxu0 0
      %7919 = vmatpush2.bf16.msra.mxu0 %v5899
      %7920 = vmatprep.subr.bf16.mxu0 0
      %7921 = vmatpush2.bf16.msra.mxu0 %v5898
      %7922 = vmatprep.mubr.bf16.mxu0 %v1998
      %7923 = vmatmul.mubr.bf16.gmra.mxu0 %v1984
      %v7924 = vpop.f32.mrf.mxu0
      %v7925 = vadd.f32 %v7885, %v7924
      %v7926 = vpop.f32.mrf.mxu0
      %v7927 = vpop.f32.mrf.mxu0
      %v7928 = vpop.f32.mrf.mxu0
      %7929 = vdwg.mxu0
      %7930 = vmatprep.subr.bf16.mxu0 0
      %7931 = vmatpush1.bf16.msra.mxu0 %v5913
      %7932 = vmatprep.subr.bf16.mxu0 0
      %7933 = vmatpush1.bf16.msra.mxu0 %v5912
      %7934 = vmatprep.subr.bf16.mxu0 0
      %7935 = vmatpush1.bf16.msra.mxu0 %v5911
      %7936 = vmatprep.subr.bf16.mxu0 0
      %7937 = vmatpush1.bf16.msra.mxu0 %v5910
      %7938 = vmatprep.subr.bf16.mxu0 0
      %7939 = vmatpush1.bf16.msra.mxu0 %v5909
      %7940 = vmatprep.subr.bf16.mxu0 0
      %7941 = vmatpush1.bf16.msra.mxu0 %v5908
      %7942 = vmatprep.subr.bf16.mxu0 0
      %7943 = vmatpush1.bf16.msra.mxu0 %v5907
      %7944 = vmatprep.subr.bf16.mxu0 0
      %7945 = vmatpush1.bf16.msra.mxu0 %v5906
      %7946 = vmatprep.subr.bf16.mxu0 0
      %7947 = vmatpush2.bf16.msra.mxu0 %v5921
      %7948 = vmatprep.subr.bf16.mxu0 0
      %7949 = vmatpush2.bf16.msra.mxu0 %v5920
      %7950 = vmatprep.subr.bf16.mxu0 0
      %7951 = vmatpush2.bf16.msra.mxu0 %v5919
      %7952 = vmatprep.subr.bf16.mxu0 0
      %7953 = vmatpush2.bf16.msra.mxu0 %v5918
      %7954 = vmatprep.subr.bf16.mxu0 0
      %7955 = vmatpush2.bf16.msra.mxu0 %v5917
      %7956 = vmatprep.subr.bf16.mxu0 0
      %7957 = vmatpush2.bf16.msra.mxu0 %v5916
      %7958 = vmatprep.subr.bf16.mxu0 0
      %7959 = vmatpush2.bf16.msra.mxu0 %v5915
      %7960 = vmatprep.subr.bf16.mxu0 0
      %7961 = vmatpush2.bf16.msra.mxu0 %v5914
      %7962 = vmatprep.mubr.bf16.mxu0 %v2002
      %7963 = vmatmul.mubr.bf16.gmra.mxu0 %v2000
      %v7964 = vpop.f32.mrf.mxu0
      %v7965 = vadd.f32 %v7925, %v7964
      %v7966 = vpop.f32.mrf.mxu0
      %v7967 = vpop.f32.mrf.mxu0
      %v7968 = vpop.f32.mrf.mxu0
      %7969 = vdwg.mxu0
      %7970 = vmatprep.subr.bf16.mxu0 0
      %7971 = vmatpush1.bf16.msra.mxu0 %v5929
      %7972 = vmatprep.subr.bf16.mxu0 0
      %7973 = vmatpush1.bf16.msra.mxu0 %v5928
      %7974 = vmatprep.subr.bf16.mxu0 0
      %7975 = vmatpush1.bf16.msra.mxu0 %v5927
      %7976 = vmatprep.subr.bf16.mxu0 0
      %7977 = vmatpush1.bf16.msra.mxu0 %v5926
      %7978 = vmatprep.subr.bf16.mxu0 0
      %7979 = vmatpush1.bf16.msra.mxu0 %v5925
      %7980 = vmatprep.subr.bf16.mxu0 0
      %7981 = vmatpush1.bf16.msra.mxu0 %v5924
      %7982 = vmatprep.subr.bf16.mxu0 0
      %7983 = vmatpush1.bf16.msra.mxu0 %v5923
      %7984 = vmatprep.subr.bf16.mxu0 0
      %7985 = vmatpush1.bf16.msra.mxu0 %v5922
      %7986 = vmatprep.subr.bf16.mxu0 0
      %7987 = vmatpush2.bf16.msra.mxu0 %v5937
      %7988 = vmatprep.subr.bf16.mxu0 0
      %7989 = vmatpush2.bf16.msra.mxu0 %v5936
      %7990 = vmatprep.subr.bf16.mxu0 0
      %7991 = vmatpush2.bf16.msra.mxu0 %v5935
      %7992 = vmatprep.subr.bf16.mxu0 0
      %7993 = vmatpush2.bf16.msra.mxu0 %v5934
      %7994 = vmatprep.subr.bf16.mxu0 0
      %7995 = vmatpush2.bf16.msra.mxu0 %v5933
      %7996 = vmatprep.subr.bf16.mxu0 0
      %7997 = vmatpush2.bf16.msra.mxu0 %v5932
      %7998 = vmatprep.subr.bf16.mxu0 0
      %7999 = vmatpush2.bf16.msra.mxu0 %v5931
      %8000 = vmatprep.subr.bf16.mxu0 0
      %8001 = vmatpush2.bf16.msra.mxu0 %v5930
      %8002 = vmatprep.mubr.bf16.mxu0 %v2040
      %8003 = vmatmul.mubr.bf16.gmra.mxu0 %v2026
      %v8004 = vpop.f32.mrf.mxu0
      %v8005 = vadd.f32 %v7965, %v8004
      %v8006 = vpop.f32.mrf.mxu0
      %v8007 = vpop.f32.mrf.mxu0
      %v8008 = vpop.f32.mrf.mxu0
      %8009 = vdwg.mxu0
      %8010 = vmatprep.subr.bf16.mxu0 0
      %8011 = vmatpush1.bf16.msra.mxu0 %v5945
      %8012 = vmatprep.subr.bf16.mxu0 0
      %8013 = vmatpush1.bf16.msra.mxu0 %v5944
      %8014 = vmatprep.subr.bf16.mxu0 0
      %8015 = vmatpush1.bf16.msra.mxu0 %v5943
      %8016 = vmatprep.subr.bf16.mxu0 0
      %8017 = vmatpush1.bf16.msra.mxu0 %v5942
      %8018 = vmatprep.subr.bf16.mxu0 0
      %8019 = vmatpush1.bf16.msra.mxu0 %v5941
      %8020 = vmatprep.subr.bf16.mxu0 0
      %8021 = vmatpush1.bf16.msra.mxu0 %v5940
      %8022 = vmatprep.subr.bf16.mxu0 0
      %8023 = vmatpush1.bf16.msra.mxu0 %v5939
      %8024 = vmatprep.subr.bf16.mxu0 0
      %8025 = vmatpush1.bf16.msra.mxu0 %v5938
      %8026 = vmatprep.subr.bf16.mxu0 0
      %8027 = vmatpush2.bf16.msra.mxu0 %v5953
      %8028 = vmatprep.subr.bf16.mxu0 0
      %8029 = vmatpush2.bf16.msra.mxu0 %v5952
      %8030 = vmatprep.subr.bf16.mxu0 0
      %8031 = vmatpush2.bf16.msra.mxu0 %v5951
      %8032 = vmatprep.subr.bf16.mxu0 0
      %8033 = vmatpush2.bf16.msra.mxu0 %v5950
      %8034 = vmatprep.subr.bf16.mxu0 0
      %8035 = vmatpush2.bf16.msra.mxu0 %v5949
      %8036 = vmatprep.subr.bf16.mxu0 0
      %8037 = vmatpush2.bf16.msra.mxu0 %v5948
      %8038 = vmatprep.subr.bf16.mxu0 0
      %8039 = vmatpush2.bf16.msra.mxu0 %v5947
      %8040 = vmatprep.subr.bf16.mxu0 0
      %8041 = vmatpush2.bf16.msra.mxu0 %v5946
      %8042 = vmatprep.mubr.bf16.mxu0 %v2050
      %8043 = vmatmul.mubr.bf16.gmra.mxu0 %v2048
      %v8044 = vpop.f32.mrf.mxu0
      %v8045 = vadd.f32 %v8005, %v8044
      %v8046 = vpop.f32.mrf.mxu0
      %v8047 = vpop.f32.mrf.mxu0
      %v8048 = vpop.f32.mrf.mxu0
      %8049 = vdwg.mxu0
      %8050 = vmatprep.subr.bf16.mxu0 0
      %8051 = vmatpush1.bf16.msra.mxu0 %v5961
      %8052 = vmatprep.subr.bf16.mxu0 0
      %8053 = vmatpush1.bf16.msra.mxu0 %v5960
      %8054 = vmatprep.subr.bf16.mxu0 0
      %8055 = vmatpush1.bf16.msra.mxu0 %v5959
      %8056 = vmatprep.subr.bf16.mxu0 0
      %8057 = vmatpush1.bf16.msra.mxu0 %v5958
      %8058 = vmatprep.subr.bf16.mxu0 0
      %8059 = vmatpush1.bf16.msra.mxu0 %v5957
      %8060 = vmatprep.subr.bf16.mxu0 0
      %8061 = vmatpush1.bf16.msra.mxu0 %v5956
      %8062 = vmatprep.subr.bf16.mxu0 0
      %8063 = vmatpush1.bf16.msra.mxu0 %v5955
      %8064 = vmatprep.subr.bf16.mxu0 0
      %8065 = vmatpush1.bf16.msra.mxu0 %v5954
      %8066 = vmatprep.subr.bf16.mxu0 0
      %8067 = vmatpush2.bf16.msra.mxu0 %v5969
      %8068 = vmatprep.subr.bf16.mxu0 0
      %8069 = vmatpush2.bf16.msra.mxu0 %v5968
      %8070 = vmatprep.subr.bf16.mxu0 0
      %8071 = vmatpush2.bf16.msra.mxu0 %v5967
      %8072 = vmatprep.subr.bf16.mxu0 0
      %8073 = vmatpush2.bf16.msra.mxu0 %v5966
      %8074 = vmatprep.subr.bf16.mxu0 0
      %8075 = vmatpush2.bf16.msra.mxu0 %v5965
      %8076 = vmatprep.subr.bf16.mxu0 0
      %8077 = vmatpush2.bf16.msra.mxu0 %v5964
      %8078 = vmatprep.subr.bf16.mxu0 0
      %8079 = vmatpush2.bf16.msra.mxu0 %v5963
      %8080 = vmatprep.subr.bf16.mxu0 0
      %8081 = vmatpush2.bf16.msra.mxu0 %v5962
      %8082 = vmatprep.mubr.bf16.mxu0 %v2047
      %8083 = vmatmul.mubr.bf16.gmra.mxu0 %v2033
      %v8084 = vpop.f32.mrf.mxu0
      %v8085 = vadd.f32 %v8045, %v8084
      %v8086 = vpop.f32.mrf.mxu0
      %v8087 = vpop.f32.mrf.mxu0
      %v8088 = vpop.f32.mrf.mxu0
      %8089 = vdwg.mxu0
      %8090 = vmatprep.subr.bf16.mxu0 0
      %8091 = vmatpush1.bf16.msra.mxu0 %v5977
      %8092 = vmatprep.subr.bf16.mxu0 0
      %8093 = vmatpush1.bf16.msra.mxu0 %v5976
      %8094 = vmatprep.subr.bf16.mxu0 0
      %8095 = vmatpush1.bf16.msra.mxu0 %v5975
      %8096 = vmatprep.subr.bf16.mxu0 0
      %8097 = vmatpush1.bf16.msra.mxu0 %v5974
      %8098 = vmatprep.subr.bf16.mxu0 0
      %8099 = vmatpush1.bf16.msra.mxu0 %v5973
      %8100 = vmatprep.subr.bf16.mxu0 0
      %8101 = vmatpush1.bf16.msra.mxu0 %v5972
      %8102 = vmatprep.subr.bf16.mxu0 0
      %8103 = vmatpush1.bf16.msra.mxu0 %v5971
      %8104 = vmatprep.subr.bf16.mxu0 0
      %8105 = vmatpush1.bf16.msra.mxu0 %v5970
      %8106 = vmatprep.subr.bf16.mxu0 0
      %8107 = vmatpush2.bf16.msra.mxu0 %v5985
      %8108 = vmatprep.subr.bf16.mxu0 0
      %8109 = vmatpush2.bf16.msra.mxu0 %v5984
      %8110 = vmatprep.subr.bf16.mxu0 0
      %8111 = vmatpush2.bf16.msra.mxu0 %v5983
      %8112 = vmatprep.subr.bf16.mxu0 0
      %8113 = vmatpush2.bf16.msra.mxu0 %v5982
      %8114 = vmatprep.subr.bf16.mxu0 0
      %8115 = vmatpush2.bf16.msra.mxu0 %v5981
      %8116 = vmatprep.subr.bf16.mxu0 0
      %8117 = vmatpush2.bf16.msra.mxu0 %v5980
      %8118 = vmatprep.subr.bf16.mxu0 0
      %8119 = vmatpush2.bf16.msra.mxu0 %v5979
      %8120 = vmatprep.subr.bf16.mxu0 0
      %8121 = vmatpush2.bf16.msra.mxu0 %v5978
      %8122 = vmatprep.mubr.bf16.mxu0 %v2051
      %8123 = vmatmul.mubr.bf16.gmra.mxu0 %v2049
      %v8124 = vpop.f32.mrf.mxu0
      %v8125 = vadd.f32 %v8085, %v8124
      %v8126 = vpop.f32.mrf.mxu0
      %v8127 = vpop.f32.mrf.mxu0
      %v8128 = vpop.f32.mrf.mxu0
      %8129 = vdwg.mxu0
      %8130 = vmatprep.subr.bf16.mxu0 0
      %8131 = vmatpush1.bf16.msra.mxu0 %v5993
      %8132 = vmatprep.subr.bf16.mxu0 0
      %8133 = vmatpush1.bf16.msra.mxu0 %v5992
      %8134 = vmatprep.subr.bf16.mxu0 0
      %8135 = vmatpush1.bf16.msra.mxu0 %v5991
      %8136 = vmatprep.subr.bf16.mxu0 0
      %8137 = vmatpush1.bf16.msra.mxu0 %v5990
      %8138 = vmatprep.subr.bf16.mxu0 0
      %8139 = vmatpush1.bf16.msra.mxu0 %v5989
      %8140 = vmatprep.subr.bf16.mxu0 0
      %8141 = vmatpush1.bf16.msra.mxu0 %v5988
      %8142 = vmatprep.subr.bf16.mxu0 0
      %8143 = vmatpush1.bf16.msra.mxu0 %v5987
      %8144 = vmatprep.subr.bf16.mxu0 0
      %8145 = vmatpush1.bf16.msra.mxu0 %v5986
      %8146 = vmatprep.subr.bf16.mxu0 0
      %8147 = vmatpush2.bf16.msra.mxu0 %v6001
      %8148 = vmatprep.subr.bf16.mxu0 0
      %8149 = vmatpush2.bf16.msra.mxu0 %v6000
      %8150 = vmatprep.subr.bf16.mxu0 0
      %8151 = vmatpush2.bf16.msra.mxu0 %v5999
      %8152 = vmatprep.subr.bf16.mxu0 0
      %8153 = vmatpush2.bf16.msra.mxu0 %v5998
      %8154 = vmatprep.subr.bf16.mxu0 0
      %8155 = vmatpush2.bf16.msra.mxu0 %v5997
      %8156 = vmatprep.subr.bf16.mxu0 0
      %8157 = vmatpush2.bf16.msra.mxu0 %v5996
      %8158 = vmatprep.subr.bf16.mxu0 0
      %8159 = vmatpush2.bf16.msra.mxu0 %v5995
      %8160 = vmatprep.subr.bf16.mxu0 0
      %8161 = vmatpush2.bf16.msra.mxu0 %v5994
      %8162 = vmatprep.mubr.bf16.mxu0 %v2089
      %8163 = vmatmul.mubr.bf16.gmra.mxu0 %v2075
      %v8164 = vpop.f32.mrf.mxu0
      %v8165 = vadd.f32 %v8125, %v8164
      %v8166 = vpop.f32.mrf.mxu0
      %v8167 = vpop.f32.mrf.mxu0
      %v8168 = vpop.f32.mrf.mxu0
      %8169 = vdwg.mxu0
      %8170 = vmatprep.subr.bf16.mxu0 0
      %8171 = vmatpush1.bf16.msra.mxu0 %v6009
      %8172 = vmatprep.subr.bf16.mxu0 0
      %8173 = vmatpush1.bf16.msra.mxu0 %v6008
      %8174 = vmatprep.subr.bf16.mxu0 0
      %8175 = vmatpush1.bf16.msra.mxu0 %v6007
      %8176 = vmatprep.subr.bf16.mxu0 0
      %8177 = vmatpush1.bf16.msra.mxu0 %v6006
      %8178 = vmatprep.subr.bf16.mxu0 0
      %8179 = vmatpush1.bf16.msra.mxu0 %v6005
      %8180 = vmatprep.subr.bf16.mxu0 0
      %8181 = vmatpush1.bf16.msra.mxu0 %v6004
      %8182 = vmatprep.subr.bf16.mxu0 0
      %8183 = vmatpush1.bf16.msra.mxu0 %v6003
      %8184 = vmatprep.subr.bf16.mxu0 0
      %8185 = vmatpush1.bf16.msra.mxu0 %v6002
      %8186 = vmatprep.subr.bf16.mxu0 0
      %8187 = vmatpush2.bf16.msra.mxu0 %v6017
      %8188 = vmatprep.subr.bf16.mxu0 0
      %8189 = vmatpush2.bf16.msra.mxu0 %v6016
      %8190 = vmatprep.subr.bf16.mxu0 0
      %8191 = vmatpush2.bf16.msra.mxu0 %v6015
      %8192 = vmatprep.subr.bf16.mxu0 0
      %8193 = vmatpush2.bf16.msra.mxu0 %v6014
      %8194 = vmatprep.subr.bf16.mxu0 0
      %8195 = vmatpush2.bf16.msra.mxu0 %v6013
      %8196 = vmatprep.subr.bf16.mxu0 0
      %8197 = vmatpush2.bf16.msra.mxu0 %v6012
      %8198 = vmatprep.subr.bf16.mxu0 0
      %8199 = vmatpush2.bf16.msra.mxu0 %v6011
      %8200 = vmatprep.subr.bf16.mxu0 0
      %8201 = vmatpush2.bf16.msra.mxu0 %v6010
      %8202 = vmatprep.mubr.bf16.mxu0 %v2099
      %8203 = vmatmul.mubr.bf16.gmra.mxu0 %v2097
      %v8204 = vpop.f32.mrf.mxu0
      %v8205 = vadd.f32 %v8165, %v8204
      %v8206 = vpop.f32.mrf.mxu0
      %v8207 = vpop.f32.mrf.mxu0
      %v8208 = vpop.f32.mrf.mxu0
      %8209 = vdwg.mxu0
      %8210 = vmatprep.subr.bf16.mxu0 0
      %8211 = vmatpush1.bf16.msra.mxu0 %v6025
      %8212 = vmatprep.subr.bf16.mxu0 0
      %8213 = vmatpush1.bf16.msra.mxu0 %v6024
      %8214 = vmatprep.subr.bf16.mxu0 0
      %8215 = vmatpush1.bf16.msra.mxu0 %v6023
      %8216 = vmatprep.subr.bf16.mxu0 0
      %8217 = vmatpush1.bf16.msra.mxu0 %v6022
      %8218 = vmatprep.subr.bf16.mxu0 0
      %8219 = vmatpush1.bf16.msra.mxu0 %v6021
      %8220 = vmatprep.subr.bf16.mxu0 0
      %8221 = vmatpush1.bf16.msra.mxu0 %v6020
      %8222 = vmatprep.subr.bf16.mxu0 0
      %8223 = vmatpush1.bf16.msra.mxu0 %v6019
      %8224 = vmatprep.subr.bf16.mxu0 0
      %8225 = vmatpush1.bf16.msra.mxu0 %v6018
      %8226 = vmatprep.subr.bf16.mxu0 0
      %8227 = vmatpush2.bf16.msra.mxu0 %v6033
      %8228 = vmatprep.subr.bf16.mxu0 0
      %8229 = vmatpush2.bf16.msra.mxu0 %v6032
      %8230 = vmatprep.subr.bf16.mxu0 0
      %8231 = vmatpush2.bf16.msra.mxu0 %v6031
      %8232 = vmatprep.subr.bf16.mxu0 0
      %8233 = vmatpush2.bf16.msra.mxu0 %v6030
      %8234 = vmatprep.subr.bf16.mxu0 0
      %8235 = vmatpush2.bf16.msra.mxu0 %v6029
      %8236 = vmatprep.subr.bf16.mxu0 0
      %8237 = vmatpush2.bf16.msra.mxu0 %v6028
      %8238 = vmatprep.subr.bf16.mxu0 0
      %8239 = vmatpush2.bf16.msra.mxu0 %v6027
      %8240 = vmatprep.subr.bf16.mxu0 0
      %8241 = vmatpush2.bf16.msra.mxu0 %v6026
      %8242 = vmatprep.mubr.bf16.mxu0 %v2096
      %8243 = vmatmul.mubr.bf16.gmra.mxu0 %v2082
      %v8244 = vpop.f32.mrf.mxu0
      %v8245 = vadd.f32 %v8205, %v8244
      %v8246 = vpop.f32.mrf.mxu0
      %v8247 = vpop.f32.mrf.mxu0
      %v8248 = vpop.f32.mrf.mxu0
      %8249 = vdwg.mxu0
      %8250 = vmatprep.subr.bf16.mxu0 0
      %8251 = vmatpush1.bf16.msra.mxu0 %v6041
      %8252 = vmatprep.subr.bf16.mxu0 0
      %8253 = vmatpush1.bf16.msra.mxu0 %v6040
      %8254 = vmatprep.subr.bf16.mxu0 0
      %8255 = vmatpush1.bf16.msra.mxu0 %v6039
      %8256 = vmatprep.subr.bf16.mxu0 0
      %8257 = vmatpush1.bf16.msra.mxu0 %v6038
      %8258 = vmatprep.subr.bf16.mxu0 0
      %8259 = vmatpush1.bf16.msra.mxu0 %v6037
      %8260 = vmatprep.subr.bf16.mxu0 0
      %8261 = vmatpush1.bf16.msra.mxu0 %v6036
      %8262 = vmatprep.subr.bf16.mxu0 0
      %8263 = vmatpush1.bf16.msra.mxu0 %v6035
      %8264 = vmatprep.subr.bf16.mxu0 0
      %8265 = vmatpush1.bf16.msra.mxu0 %v6034
      %8266 = vmatprep.subr.bf16.mxu0 0
      %8267 = vmatpush2.bf16.msra.mxu0 %v6049
      %8268 = vmatprep.subr.bf16.mxu0 0
      %8269 = vmatpush2.bf16.msra.mxu0 %v6048
      %8270 = vmatprep.subr.bf16.mxu0 0
      %8271 = vmatpush2.bf16.msra.mxu0 %v6047
      %8272 = vmatprep.subr.bf16.mxu0 0
      %8273 = vmatpush2.bf16.msra.mxu0 %v6046
      %8274 = vmatprep.subr.bf16.mxu0 0
      %8275 = vmatpush2.bf16.msra.mxu0 %v6045
      %8276 = vmatprep.subr.bf16.mxu0 0
      %8277 = vmatpush2.bf16.msra.mxu0 %v6044
      %8278 = vmatprep.subr.bf16.mxu0 0
      %8279 = vmatpush2.bf16.msra.mxu0 %v6043
      %8280 = vmatprep.subr.bf16.mxu0 0
      %8281 = vmatpush2.bf16.msra.mxu0 %v6042
      %8282 = vmatprep.mubr.bf16.mxu0 %v2100
      %8283 = vmatmul.mubr.bf16.gmra.mxu0 %v2098
      %v8284 = vpop.f32.mrf.mxu0
      %v8285 = vadd.f32 %v8245, %v8284
      %v8286 = vpop.f32.mrf.mxu0
      %v8287 = vpop.f32.mrf.mxu0
      %v8288 = vpop.f32.mrf.mxu0
      %8289 = vdwg.mxu0
      %8290 = vmatprep.subr.bf16.mxu0 0
      %8291 = vmatpush1.bf16.msra.mxu0 %v6057
      %8292 = vmatprep.subr.bf16.mxu0 0
      %8293 = vmatpush1.bf16.msra.mxu0 %v6056
      %8294 = vmatprep.subr.bf16.mxu0 0
      %8295 = vmatpush1.bf16.msra.mxu0 %v6055
      %8296 = vmatprep.subr.bf16.mxu0 0
      %8297 = vmatpush1.bf16.msra.mxu0 %v6054
      %8298 = vmatprep.subr.bf16.mxu0 0
      %8299 = vmatpush1.bf16.msra.mxu0 %v6053
      %8300 = vmatprep.subr.bf16.mxu0 0
      %8301 = vmatpush1.bf16.msra.mxu0 %v6052
      %8302 = vmatprep.subr.bf16.mxu0 0
      %8303 = vmatpush1.bf16.msra.mxu0 %v6051
      %8304 = vmatprep.subr.bf16.mxu0 0
      %8305 = vmatpush1.bf16.msra.mxu0 %v6050
      %8306 = vmatprep.subr.bf16.mxu0 0
      %8307 = vmatpush2.bf16.msra.mxu0 %v6065
      %8308 = vmatprep.subr.bf16.mxu0 0
      %8309 = vmatpush2.bf16.msra.mxu0 %v6064
      %8310 = vmatprep.subr.bf16.mxu0 0
      %8311 = vmatpush2.bf16.msra.mxu0 %v6063
      %8312 = vmatprep.subr.bf16.mxu0 0
      %8313 = vmatpush2.bf16.msra.mxu0 %v6062
      %8314 = vmatprep.subr.bf16.mxu0 0
      %8315 = vmatpush2.bf16.msra.mxu0 %v6061
      %8316 = vmatprep.subr.bf16.mxu0 0
      %8317 = vmatpush2.bf16.msra.mxu0 %v6060
      %8318 = vmatprep.subr.bf16.mxu0 0
      %8319 = vmatpush2.bf16.msra.mxu0 %v6059
      %8320 = vmatprep.subr.bf16.mxu0 0
      %8321 = vmatpush2.bf16.msra.mxu0 %v6058
      %8322 = vmatprep.mubr.bf16.mxu0 %v2138
      %8323 = vmatmul.mubr.bf16.gmra.mxu0 %v2124
      %v8324 = vpop.f32.mrf.mxu0
      %v8325 = vadd.f32 %v8285, %v8324
      %v8326 = vpop.f32.mrf.mxu0
      %v8327 = vpop.f32.mrf.mxu0
      %v8328 = vpop.f32.mrf.mxu0
      %8329 = vdwg.mxu0
      %8330 = vmatprep.subr.bf16.mxu0 0
      %8331 = vmatpush1.bf16.msra.mxu0 %v6073
      %8332 = vmatprep.subr.bf16.mxu0 0
      %8333 = vmatpush1.bf16.msra.mxu0 %v6072
      %8334 = vmatprep.subr.bf16.mxu0 0
      %8335 = vmatpush1.bf16.msra.mxu0 %v6071
      %8336 = vmatprep.subr.bf16.mxu0 0
      %8337 = vmatpush1.bf16.msra.mxu0 %v6070
      %8338 = vmatprep.subr.bf16.mxu0 0
      %8339 = vmatpush1.bf16.msra.mxu0 %v6069
      %8340 = vmatprep.subr.bf16.mxu0 0
      %8341 = vmatpush1.bf16.msra.mxu0 %v6068
      %8342 = vmatprep.subr.bf16.mxu0 0
      %8343 = vmatpush1.bf16.msra.mxu0 %v6067
      %8344 = vmatprep.subr.bf16.mxu0 0
      %8345 = vmatpush1.bf16.msra.mxu0 %v6066
      %8346 = vmatprep.subr.bf16.mxu0 0
      %8347 = vmatpush2.bf16.msra.mxu0 %v6081
      %8348 = vmatprep.subr.bf16.mxu0 0
      %8349 = vmatpush2.bf16.msra.mxu0 %v6080
      %8350 = vmatprep.subr.bf16.mxu0 0
      %8351 = vmatpush2.bf16.msra.mxu0 %v6079
      %8352 = vmatprep.subr.bf16.mxu0 0
      %8353 = vmatpush2.bf16.msra.mxu0 %v6078
      %8354 = vmatprep.subr.bf16.mxu0 0
      %8355 = vmatpush2.bf16.msra.mxu0 %v6077
      %8356 = vmatprep.subr.bf16.mxu0 0
      %8357 = vmatpush2.bf16.msra.mxu0 %v6076
      %8358 = vmatprep.subr.bf16.mxu0 0
      %8359 = vmatpush2.bf16.msra.mxu0 %v6075
      %8360 = vmatprep.subr.bf16.mxu0 0
      %8361 = vmatpush2.bf16.msra.mxu0 %v6074
      %8362 = vmatprep.mubr.bf16.mxu0 %v2148
      %8363 = vmatmul.mubr.bf16.gmra.mxu0 %v2146
      %v8364 = vpop.f32.mrf.mxu0
      %v8365 = vadd.f32 %v8325, %v8364
      %v8366 = vpop.f32.mrf.mxu0
      %v8367 = vpop.f32.mrf.mxu0
      %v8368 = vpop.f32.mrf.mxu0
      %8369 = vdwg.mxu0
      %8370 = vmatprep.subr.bf16.mxu0 0
      %8371 = vmatpush1.bf16.msra.mxu0 %v6089
      %8372 = vmatprep.subr.bf16.mxu0 0
      %8373 = vmatpush1.bf16.msra.mxu0 %v6088
      %8374 = vmatprep.subr.bf16.mxu0 0
      %8375 = vmatpush1.bf16.msra.mxu0 %v6087
      %8376 = vmatprep.subr.bf16.mxu0 0
      %8377 = vmatpush1.bf16.msra.mxu0 %v6086
      %8378 = vmatprep.subr.bf16.mxu0 0
      %8379 = vmatpush1.bf16.msra.mxu0 %v6085
      %8380 = vmatprep.subr.bf16.mxu0 0
      %8381 = vmatpush1.bf16.msra.mxu0 %v6084
      %8382 = vmatprep.subr.bf16.mxu0 0
      %8383 = vmatpush1.bf16.msra.mxu0 %v6083
      %8384 = vmatprep.subr.bf16.mxu0 0
      %8385 = vmatpush1.bf16.msra.mxu0 %v6082
      %8386 = vmatprep.subr.bf16.mxu0 0
      %8387 = vmatpush2.bf16.msra.mxu0 %v6097
      %8388 = vmatprep.subr.bf16.mxu0 0
      %8389 = vmatpush2.bf16.msra.mxu0 %v6096
      %8390 = vmatprep.subr.bf16.mxu0 0
      %8391 = vmatpush2.bf16.msra.mxu0 %v6095
      %8392 = vmatprep.subr.bf16.mxu0 0
      %8393 = vmatpush2.bf16.msra.mxu0 %v6094
      %8394 = vmatprep.subr.bf16.mxu0 0
      %8395 = vmatpush2.bf16.msra.mxu0 %v6093
      %8396 = vmatprep.subr.bf16.mxu0 0
      %8397 = vmatpush2.bf16.msra.mxu0 %v6092
      %8398 = vmatprep.subr.bf16.mxu0 0
      %8399 = vmatpush2.bf16.msra.mxu0 %v6091
      %8400 = vmatprep.subr.bf16.mxu0 0
      %8401 = vmatpush2.bf16.msra.mxu0 %v6090
      %8402 = vmatprep.mubr.bf16.mxu0 %v2145
      %8403 = vmatmul.mubr.bf16.gmra.mxu0 %v2131
      %v8404 = vpop.f32.mrf.mxu0
      %v8405 = vadd.f32 %v8365, %v8404
      %v8406 = vpop.f32.mrf.mxu0
      %v8407 = vpop.f32.mrf.mxu0
      %v8408 = vpop.f32.mrf.mxu0
      %8409 = vdwg.mxu0
      %8410 = vmatprep.subr.bf16.mxu0 0
      %8411 = vmatpush1.bf16.msra.mxu0 %v6105
      %8412 = vmatprep.subr.bf16.mxu0 0
      %8413 = vmatpush1.bf16.msra.mxu0 %v6104
      %8414 = vmatprep.subr.bf16.mxu0 0
      %8415 = vmatpush1.bf16.msra.mxu0 %v6103
      %8416 = vmatprep.subr.bf16.mxu0 0
      %8417 = vmatpush1.bf16.msra.mxu0 %v6102
      %8418 = vmatprep.subr.bf16.mxu0 0
      %8419 = vmatpush1.bf16.msra.mxu0 %v6101
      %8420 = vmatprep.subr.bf16.mxu0 0
      %8421 = vmatpush1.bf16.msra.mxu0 %v6100
      %8422 = vmatprep.subr.bf16.mxu0 0
      %8423 = vmatpush1.bf16.msra.mxu0 %v6099
      %8424 = vmatprep.subr.bf16.mxu0 0
      %8425 = vmatpush1.bf16.msra.mxu0 %v6098
      %8426 = vmatprep.subr.bf16.mxu0 0
      %8427 = vmatpush2.bf16.msra.mxu0 %v6113
      %8428 = vmatprep.subr.bf16.mxu0 0
      %8429 = vmatpush2.bf16.msra.mxu0 %v6112
      %8430 = vmatprep.subr.bf16.mxu0 0
      %8431 = vmatpush2.bf16.msra.mxu0 %v6111
      %8432 = vmatprep.subr.bf16.mxu0 0
      %8433 = vmatpush2.bf16.msra.mxu0 %v6110
      %8434 = vmatprep.subr.bf16.mxu0 0
      %8435 = vmatpush2.bf16.msra.mxu0 %v6109
      %8436 = vmatprep.subr.bf16.mxu0 0
      %8437 = vmatpush2.bf16.msra.mxu0 %v6108
      %8438 = vmatprep.subr.bf16.mxu0 0
      %8439 = vmatpush2.bf16.msra.mxu0 %v6107
      %8440 = vmatprep.subr.bf16.mxu0 0
      %8441 = vmatpush2.bf16.msra.mxu0 %v6106
      %8442 = vmatprep.mubr.bf16.mxu0 %v2149
      %8443 = vmatmul.mubr.bf16.gmra.mxu0 %v2147
      %v8444 = vpop.f32.mrf.mxu0
      %v8445 = vadd.f32 %v8405, %v8444
      %v8446 = vpop.f32.mrf.mxu0
      %v8447 = vpop.f32.mrf.mxu0
      %v8448 = vpop.f32.mrf.mxu0
      %8449 = vdwg.mxu0
      %8450 = vmatprep.subr.bf16.mxu0 0
      %8451 = vmatpush1.bf16.msra.mxu0 %v6121
      %8452 = vmatprep.subr.bf16.mxu0 0
      %8453 = vmatpush1.bf16.msra.mxu0 %v6120
      %8454 = vmatprep.subr.bf16.mxu0 0
      %8455 = vmatpush1.bf16.msra.mxu0 %v6119
      %8456 = vmatprep.subr.bf16.mxu0 0
      %8457 = vmatpush1.bf16.msra.mxu0 %v6118
      %8458 = vmatprep.subr.bf16.mxu0 0
      %8459 = vmatpush1.bf16.msra.mxu0 %v6117
      %8460 = vmatprep.subr.bf16.mxu0 0
      %8461 = vmatpush1.bf16.msra.mxu0 %v6116
      %8462 = vmatprep.subr.bf16.mxu0 0
      %8463 = vmatpush1.bf16.msra.mxu0 %v6115
      %8464 = vmatprep.subr.bf16.mxu0 0
      %8465 = vmatpush1.bf16.msra.mxu0 %v6114
      %8466 = vmatprep.subr.bf16.mxu0 0
      %8467 = vmatpush2.bf16.msra.mxu0 %v6129
      %8468 = vmatprep.subr.bf16.mxu0 0
      %8469 = vmatpush2.bf16.msra.mxu0 %v6128
      %8470 = vmatprep.subr.bf16.mxu0 0
      %8471 = vmatpush2.bf16.msra.mxu0 %v6127
      %8472 = vmatprep.subr.bf16.mxu0 0
      %8473 = vmatpush2.bf16.msra.mxu0 %v6126
      %8474 = vmatprep.subr.bf16.mxu0 0
      %8475 = vmatpush2.bf16.msra.mxu0 %v6125
      %8476 = vmatprep.subr.bf16.mxu0 0
      %8477 = vmatpush2.bf16.msra.mxu0 %v6124
      %8478 = vmatprep.subr.bf16.mxu0 0
      %8479 = vmatpush2.bf16.msra.mxu0 %v6123
      %8480 = vmatprep.subr.bf16.mxu0 0
      %8481 = vmatpush2.bf16.msra.mxu0 %v6122
      %8482 = vmatprep.mubr.bf16.mxu0 %v2187
      %8483 = vmatmul.mubr.bf16.gmra.mxu0 %v2173
      %v8484 = vpop.f32.mrf.mxu0
      %v8485 = vadd.f32 %v8445, %v8484
      %v8486 = vpop.f32.mrf.mxu0
      %v8487 = vpop.f32.mrf.mxu0
      %v8488 = vpop.f32.mrf.mxu0
      %8489 = vdwg.mxu0
      %8490 = vmatprep.subr.bf16.mxu0 0
      %8491 = vmatpush1.bf16.msra.mxu0 %v6137
      %8492 = vmatprep.subr.bf16.mxu0 0
      %8493 = vmatpush1.bf16.msra.mxu0 %v6136
      %8494 = vmatprep.subr.bf16.mxu0 0
      %8495 = vmatpush1.bf16.msra.mxu0 %v6135
      %8496 = vmatprep.subr.bf16.mxu0 0
      %8497 = vmatpush1.bf16.msra.mxu0 %v6134
      %8498 = vmatprep.subr.bf16.mxu0 0
      %8499 = vmatpush1.bf16.msra.mxu0 %v6133
      %8500 = vmatprep.subr.bf16.mxu0 0
      %8501 = vmatpush1.bf16.msra.mxu0 %v6132
      %8502 = vmatprep.subr.bf16.mxu0 0
      %8503 = vmatpush1.bf16.msra.mxu0 %v6131
      %8504 = vmatprep.subr.bf16.mxu0 0
      %8505 = vmatpush1.bf16.msra.mxu0 %v6130
      %8506 = vmatprep.subr.bf16.mxu0 0
      %8507 = vmatpush2.bf16.msra.mxu0 %v6145
      %8508 = vmatprep.subr.bf16.mxu0 0
      %8509 = vmatpush2.bf16.msra.mxu0 %v6144
      %8510 = vmatprep.subr.bf16.mxu0 0
      %8511 = vmatpush2.bf16.msra.mxu0 %v6143
      %8512 = vmatprep.subr.bf16.mxu0 0
      %8513 = vmatpush2.bf16.msra.mxu0 %v6142
      %8514 = vmatprep.subr.bf16.mxu0 0
      %8515 = vmatpush2.bf16.msra.mxu0 %v6141
      %8516 = vmatprep.subr.bf16.mxu0 0
      %8517 = vmatpush2.bf16.msra.mxu0 %v6140
      %8518 = vmatprep.subr.bf16.mxu0 0
      %8519 = vmatpush2.bf16.msra.mxu0 %v6139
      %8520 = vmatprep.subr.bf16.mxu0 0
      %8521 = vmatpush2.bf16.msra.mxu0 %v6138
      %8522 = vmatprep.mubr.bf16.mxu0 %v2197
      %8523 = vmatmul.mubr.bf16.gmra.mxu0 %v2195
      %v8524 = vpop.f32.mrf.mxu0
      %v8525 = vadd.f32 %v8485, %v8524
      %v8526 = vpop.f32.mrf.mxu0
      %v8527 = vpop.f32.mrf.mxu0
      %v8528 = vpop.f32.mrf.mxu0
      %8529 = vdwg.mxu0
      %8530 = vmatprep.subr.bf16.mxu0 0
      %8531 = vmatpush1.bf16.msra.mxu0 %v6153
      %8532 = vmatprep.subr.bf16.mxu0 0
      %8533 = vmatpush1.bf16.msra.mxu0 %v6152
      %8534 = vmatprep.subr.bf16.mxu0 0
      %8535 = vmatpush1.bf16.msra.mxu0 %v6151
      %8536 = vmatprep.subr.bf16.mxu0 0
      %8537 = vmatpush1.bf16.msra.mxu0 %v6150
      %8538 = vmatprep.subr.bf16.mxu0 0
      %8539 = vmatpush1.bf16.msra.mxu0 %v6149
      %8540 = vmatprep.subr.bf16.mxu0 0
      %8541 = vmatpush1.bf16.msra.mxu0 %v6148
      %8542 = vmatprep.subr.bf16.mxu0 0
      %8543 = vmatpush1.bf16.msra.mxu0 %v6147
      %8544 = vmatprep.subr.bf16.mxu0 0
      %8545 = vmatpush1.bf16.msra.mxu0 %v6146
      %8546 = vmatprep.subr.bf16.mxu0 0
      %8547 = vmatpush2.bf16.msra.mxu0 %v6161
      %8548 = vmatprep.subr.bf16.mxu0 0
      %8549 = vmatpush2.bf16.msra.mxu0 %v6160
      %8550 = vmatprep.subr.bf16.mxu0 0
      %8551 = vmatpush2.bf16.msra.mxu0 %v6159
      %8552 = vmatprep.subr.bf16.mxu0 0
      %8553 = vmatpush2.bf16.msra.mxu0 %v6158
      %8554 = vmatprep.subr.bf16.mxu0 0
      %8555 = vmatpush2.bf16.msra.mxu0 %v6157
      %8556 = vmatprep.subr.bf16.mxu0 0
      %8557 = vmatpush2.bf16.msra.mxu0 %v6156
      %8558 = vmatprep.subr.bf16.mxu0 0
      %8559 = vmatpush2.bf16.msra.mxu0 %v6155
      %8560 = vmatprep.subr.bf16.mxu0 0
      %8561 = vmatpush2.bf16.msra.mxu0 %v6154
      %8562 = vmatprep.mubr.bf16.mxu0 %v2194
      %8563 = vmatmul.mubr.bf16.gmra.mxu0 %v2180
      %v8564 = vpop.f32.mrf.mxu0
      %v8565 = vadd.f32 %v8525, %v8564
      %v8566 = vpop.f32.mrf.mxu0
      %v8567 = vpop.f32.mrf.mxu0
      %v8568 = vpop.f32.mrf.mxu0
      %8569 = vdwg.mxu0
      %8570 = vmatprep.subr.bf16.mxu0 0
      %8571 = vmatpush1.bf16.msra.mxu0 %v6169
      %8572 = vmatprep.subr.bf16.mxu0 0
      %8573 = vmatpush1.bf16.msra.mxu0 %v6168
      %8574 = vmatprep.subr.bf16.mxu0 0
      %8575 = vmatpush1.bf16.msra.mxu0 %v6167
      %8576 = vmatprep.subr.bf16.mxu0 0
      %8577 = vmatpush1.bf16.msra.mxu0 %v6166
      %8578 = vmatprep.subr.bf16.mxu0 0
      %8579 = vmatpush1.bf16.msra.mxu0 %v6165
      %8580 = vmatprep.subr.bf16.mxu0 0
      %8581 = vmatpush1.bf16.msra.mxu0 %v6164
      %8582 = vmatprep.subr.bf16.mxu0 0
      %8583 = vmatpush1.bf16.msra.mxu0 %v6163
      %8584 = vmatprep.subr.bf16.mxu0 0
      %8585 = vmatpush1.bf16.msra.mxu0 %v6162
      %8586 = vmatprep.subr.bf16.mxu0 0
      %8587 = vmatpush2.bf16.msra.mxu0 %v6177
      %8588 = vmatprep.subr.bf16.mxu0 0
      %8589 = vmatpush2.bf16.msra.mxu0 %v6176
      %8590 = vmatprep.subr.bf16.mxu0 0
      %8591 = vmatpush2.bf16.msra.mxu0 %v6175
      %8592 = vmatprep.subr.bf16.mxu0 0
      %8593 = vmatpush2.bf16.msra.mxu0 %v6174
      %8594 = vmatprep.subr.bf16.mxu0 0
      %8595 = vmatpush2.bf16.msra.mxu0 %v6173
      %8596 = vmatprep.subr.bf16.mxu0 0
      %8597 = vmatpush2.bf16.msra.mxu0 %v6172
      %8598 = vmatprep.subr.bf16.mxu0 0
      %8599 = vmatpush2.bf16.msra.mxu0 %v6171
      %8600 = vmatprep.subr.bf16.mxu0 0
      %8601 = vmatpush2.bf16.msra.mxu0 %v6170
      %8602 = vmatprep.mubr.bf16.mxu0 %v2198
      %8603 = vmatmul.mubr.bf16.gmra.mxu0 %v2196
      %v8604 = vpop.f32.mrf.mxu0
      %v8605 = vadd.f32 %v8565, %v8604
      %v8606 = vpop.f32.mrf.mxu0
      %v8607 = vpop.f32.mrf.mxu0
      %v8608 = vpop.f32.mrf.mxu0
      %8609 = vdwg.mxu0
      %8610 = vmatprep.subr.bf16.mxu0 0
      %8611 = vmatpush1.bf16.msra.mxu0 %v6185
      %8612 = vmatprep.subr.bf16.mxu0 0
      %8613 = vmatpush1.bf16.msra.mxu0 %v6184
      %8614 = vmatprep.subr.bf16.mxu0 0
      %8615 = vmatpush1.bf16.msra.mxu0 %v6183
      %8616 = vmatprep.subr.bf16.mxu0 0
      %8617 = vmatpush1.bf16.msra.mxu0 %v6182
      %8618 = vmatprep.subr.bf16.mxu0 0
      %8619 = vmatpush1.bf16.msra.mxu0 %v6181
      %8620 = vmatprep.subr.bf16.mxu0 0
      %8621 = vmatpush1.bf16.msra.mxu0 %v6180
      %8622 = vmatprep.subr.bf16.mxu0 0
      %8623 = vmatpush1.bf16.msra.mxu0 %v6179
      %8624 = vmatprep.subr.bf16.mxu0 0
      %8625 = vmatpush1.bf16.msra.mxu0 %v6178
      %8626 = vmatprep.subr.bf16.mxu0 0
      %8627 = vmatpush2.bf16.msra.mxu0 %v6193
      %8628 = vmatprep.subr.bf16.mxu0 0
      %8629 = vmatpush2.bf16.msra.mxu0 %v6192
      %8630 = vmatprep.subr.bf16.mxu0 0
      %8631 = vmatpush2.bf16.msra.mxu0 %v6191
      %8632 = vmatprep.subr.bf16.mxu0 0
      %8633 = vmatpush2.bf16.msra.mxu0 %v6190
      %8634 = vmatprep.subr.bf16.mxu0 0
      %8635 = vmatpush2.bf16.msra.mxu0 %v6189
      %8636 = vmatprep.subr.bf16.mxu0 0
      %8637 = vmatpush2.bf16.msra.mxu0 %v6188
      %8638 = vmatprep.subr.bf16.mxu0 0
      %8639 = vmatpush2.bf16.msra.mxu0 %v6187
      %8640 = vmatprep.subr.bf16.mxu0 0
      %8641 = vmatpush2.bf16.msra.mxu0 %v6186
      %8642 = vmatprep.mubr.bf16.mxu0 %v2236
      %8643 = vmatmul.mubr.bf16.gmra.mxu0 %v2222
      %v8644 = vpop.f32.mrf.mxu0
      %v8645 = vadd.f32 %v8605, %v8644
      %v8646 = vpop.f32.mrf.mxu0
      %v8647 = vpop.f32.mrf.mxu0
      %v8648 = vpop.f32.mrf.mxu0
      %8649 = vdwg.mxu0
      %8650 = vmatprep.subr.bf16.mxu0 0
      %8651 = vmatpush1.bf16.msra.mxu0 %v6201
      %8652 = vmatprep.subr.bf16.mxu0 0
      %8653 = vmatpush1.bf16.msra.mxu0 %v6200
      %8654 = vmatprep.subr.bf16.mxu0 0
      %8655 = vmatpush1.bf16.msra.mxu0 %v6199
      %8656 = vmatprep.subr.bf16.mxu0 0
      %8657 = vmatpush1.bf16.msra.mxu0 %v6198
      %8658 = vmatprep.subr.bf16.mxu0 0
      %8659 = vmatpush1.bf16.msra.mxu0 %v6197
      %8660 = vmatprep.subr.bf16.mxu0 0
      %8661 = vmatpush1.bf16.msra.mxu0 %v6196
      %8662 = vmatprep.subr.bf16.mxu0 0
      %8663 = vmatpush1.bf16.msra.mxu0 %v6195
      %8664 = vmatprep.subr.bf16.mxu0 0
      %8665 = vmatpush1.bf16.msra.mxu0 %v6194
      %8666 = vmatprep.subr.bf16.mxu0 0
      %8667 = vmatpush2.bf16.msra.mxu0 %v6209
      %8668 = vmatprep.subr.bf16.mxu0 0
      %8669 = vmatpush2.bf16.msra.mxu0 %v6208
      %8670 = vmatprep.subr.bf16.mxu0 0
      %8671 = vmatpush2.bf16.msra.mxu0 %v6207
      %8672 = vmatprep.subr.bf16.mxu0 0
      %8673 = vmatpush2.bf16.msra.mxu0 %v6206
      %8674 = vmatprep.subr.bf16.mxu0 0
      %8675 = vmatpush2.bf16.msra.mxu0 %v6205
      %8676 = vmatprep.subr.bf16.mxu0 0
      %8677 = vmatpush2.bf16.msra.mxu0 %v6204
      %8678 = vmatprep.subr.bf16.mxu0 0
      %8679 = vmatpush2.bf16.msra.mxu0 %v6203
      %8680 = vmatprep.subr.bf16.mxu0 0
      %8681 = vmatpush2.bf16.msra.mxu0 %v6202
      %8682 = vmatprep.mubr.bf16.mxu0 %v2246
      %8683 = vmatmul.mubr.bf16.gmra.mxu0 %v2244
      %v8684 = vpop.f32.mrf.mxu0
      %v8685 = vadd.f32 %v8645, %v8684
      %v8686 = vpop.f32.mrf.mxu0
      %v8687 = vpop.f32.mrf.mxu0
      %v8688 = vpop.f32.mrf.mxu0
      %8689 = vdwg.mxu0
      %8690 = vmatprep.subr.bf16.mxu0 0
      %8691 = vmatpush1.bf16.msra.mxu0 %v6217
      %8692 = vmatprep.subr.bf16.mxu0 0
      %8693 = vmatpush1.bf16.msra.mxu0 %v6216
      %8694 = vmatprep.subr.bf16.mxu0 0
      %8695 = vmatpush1.bf16.msra.mxu0 %v6215
      %8696 = vmatprep.subr.bf16.mxu0 0
      %8697 = vmatpush1.bf16.msra.mxu0 %v6214
      %8698 = vmatprep.subr.bf16.mxu0 0
      %8699 = vmatpush1.bf16.msra.mxu0 %v6213
      %8700 = vmatprep.subr.bf16.mxu0 0
      %8701 = vmatpush1.bf16.msra.mxu0 %v6212
      %8702 = vmatprep.subr.bf16.mxu0 0
      %8703 = vmatpush1.bf16.msra.mxu0 %v6211
      %8704 = vmatprep.subr.bf16.mxu0 0
      %8705 = vmatpush1.bf16.msra.mxu0 %v6210
      %8706 = vmatprep.subr.bf16.mxu0 0
      %8707 = vmatpush2.bf16.msra.mxu0 %v6225
      %8708 = vmatprep.subr.bf16.mxu0 0
      %8709 = vmatpush2.bf16.msra.mxu0 %v6224
      %8710 = vmatprep.subr.bf16.mxu0 0
      %8711 = vmatpush2.bf16.msra.mxu0 %v6223
      %8712 = vmatprep.subr.bf16.mxu0 0
      %8713 = vmatpush2.bf16.msra.mxu0 %v6222
      %8714 = vmatprep.subr.bf16.mxu0 0
      %8715 = vmatpush2.bf16.msra.mxu0 %v6221
      %8716 = vmatprep.subr.bf16.mxu0 0
      %8717 = vmatpush2.bf16.msra.mxu0 %v6220
      %8718 = vmatprep.subr.bf16.mxu0 0
      %8719 = vmatpush2.bf16.msra.mxu0 %v6219
      %8720 = vmatprep.subr.bf16.mxu0 0
      %8721 = vmatpush2.bf16.msra.mxu0 %v6218
      %8722 = vmatprep.mubr.bf16.mxu0 %v2243
      %8723 = vmatmul.mubr.bf16.gmra.mxu0 %v2229
      %v8724 = vpop.f32.mrf.mxu0
      %v8725 = vadd.f32 %v8685, %v8724
      %v8726 = vpop.f32.mrf.mxu0
      %v8727 = vpop.f32.mrf.mxu0
      %v8728 = vpop.f32.mrf.mxu0
      %8729 = vdwg.mxu0
      %8730 = vmatprep.subr.bf16.mxu0 0
      %8731 = vmatpush1.bf16.msra.mxu0 %v6233
      %8732 = vmatprep.subr.bf16.mxu0 0
      %8733 = vmatpush1.bf16.msra.mxu0 %v6232
      %8734 = vmatprep.subr.bf16.mxu0 0
      %8735 = vmatpush1.bf16.msra.mxu0 %v6231
      %8736 = vmatprep.subr.bf16.mxu0 0
      %8737 = vmatpush1.bf16.msra.mxu0 %v6230
      %8738 = vmatprep.subr.bf16.mxu0 0
      %8739 = vmatpush1.bf16.msra.mxu0 %v6229
      %8740 = vmatprep.subr.bf16.mxu0 0
      %8741 = vmatpush1.bf16.msra.mxu0 %v6228
      %8742 = vmatprep.subr.bf16.mxu0 0
      %8743 = vmatpush1.bf16.msra.mxu0 %v6227
      %8744 = vmatprep.subr.bf16.mxu0 0
      %8745 = vmatpush1.bf16.msra.mxu0 %v6226
      %8746 = vmatprep.subr.bf16.mxu0 0
      %8747 = vmatpush2.bf16.msra.mxu0 %v6241
      %8748 = vmatprep.subr.bf16.mxu0 0
      %8749 = vmatpush2.bf16.msra.mxu0 %v6240
      %8750 = vmatprep.subr.bf16.mxu0 0
      %8751 = vmatpush2.bf16.msra.mxu0 %v6239
      %8752 = vmatprep.subr.bf16.mxu0 0
      %8753 = vmatpush2.bf16.msra.mxu0 %v6238
      %8754 = vmatprep.subr.bf16.mxu0 0
      %8755 = vmatpush2.bf16.msra.mxu0 %v6237
      %8756 = vmatprep.subr.bf16.mxu0 0
      %8757 = vmatpush2.bf16.msra.mxu0 %v6236
      %8758 = vmatprep.subr.bf16.mxu0 0
      %8759 = vmatpush2.bf16.msra.mxu0 %v6235
      %8760 = vmatprep.subr.bf16.mxu0 0
      %8761 = vmatpush2.bf16.msra.mxu0 %v6234
      %8762 = vmatprep.mubr.bf16.mxu0 %v2247
      %8763 = vmatmul.mubr.bf16.gmra.mxu0 %v2245
      %v8764 = vpop.f32.mrf.mxu0
      %v8765 = vadd.f32 %v8725, %v8764
      %v8766 = vpop.f32.mrf.mxu0
      %v8767 = vpop.f32.mrf.mxu0
      %v8768 = vpop.f32.mrf.mxu0
      %8769 = vdwg.mxu0
      %8770 = vmatprep.subr.bf16.mxu0 0
      %8771 = vmatpush1.bf16.msra.mxu0 %v6249
      %8772 = vmatprep.subr.bf16.mxu0 0
      %8773 = vmatpush1.bf16.msra.mxu0 %v6248
      %8774 = vmatprep.subr.bf16.mxu0 0
      %8775 = vmatpush1.bf16.msra.mxu0 %v6247
      %8776 = vmatprep.subr.bf16.mxu0 0
      %8777 = vmatpush1.bf16.msra.mxu0 %v6246
      %8778 = vmatprep.subr.bf16.mxu0 0
      %8779 = vmatpush1.bf16.msra.mxu0 %v6245
      %8780 = vmatprep.subr.bf16.mxu0 0
      %8781 = vmatpush1.bf16.msra.mxu0 %v6244
      %8782 = vmatprep.subr.bf16.mxu0 0
      %8783 = vmatpush1.bf16.msra.mxu0 %v6243
      %8784 = vmatprep.subr.bf16.mxu0 0
      %8785 = vmatpush1.bf16.msra.mxu0 %v6242
      %8786 = vmatprep.subr.bf16.mxu0 0
      %8787 = vmatpush2.bf16.msra.mxu0 %v6257
      %8788 = vmatprep.subr.bf16.mxu0 0
      %8789 = vmatpush2.bf16.msra.mxu0 %v6256
      %8790 = vmatprep.subr.bf16.mxu0 0
      %8791 = vmatpush2.bf16.msra.mxu0 %v6255
      %8792 = vmatprep.subr.bf16.mxu0 0
      %8793 = vmatpush2.bf16.msra.mxu0 %v6254
      %8794 = vmatprep.subr.bf16.mxu0 0
      %8795 = vmatpush2.bf16.msra.mxu0 %v6253
      %8796 = vmatprep.subr.bf16.mxu0 0
      %8797 = vmatpush2.bf16.msra.mxu0 %v6252
      %8798 = vmatprep.subr.bf16.mxu0 0
      %8799 = vmatpush2.bf16.msra.mxu0 %v6251
      %8800 = vmatprep.subr.bf16.mxu0 0
      %8801 = vmatpush2.bf16.msra.mxu0 %v6250
      %8802 = vmatprep.mubr.bf16.mxu0 %v2285
      %8803 = vmatmul.mubr.bf16.gmra.mxu0 %v2271
      %v8804 = vpop.f32.mrf.mxu0
      %v8805 = vadd.f32 %v8765, %v8804
      %v8806 = vpop.f32.mrf.mxu0
      %v8807 = vpop.f32.mrf.mxu0
      %v8808 = vpop.f32.mrf.mxu0
      %8809 = vdwg.mxu0
      %8810 = vmatprep.subr.bf16.mxu0 0
      %8811 = vmatpush1.bf16.msra.mxu0 %v6265
      %8812 = vmatprep.subr.bf16.mxu0 0
      %8813 = vmatpush1.bf16.msra.mxu0 %v6264
      %8814 = vmatprep.subr.bf16.mxu0 0
      %8815 = vmatpush1.bf16.msra.mxu0 %v6263
      %8816 = vmatprep.subr.bf16.mxu0 0
      %8817 = vmatpush1.bf16.msra.mxu0 %v6262
      %8818 = vmatprep.subr.bf16.mxu0 0
      %8819 = vmatpush1.bf16.msra.mxu0 %v6261
      %8820 = vmatprep.subr.bf16.mxu0 0
      %8821 = vmatpush1.bf16.msra.mxu0 %v6260
      %8822 = vmatprep.subr.bf16.mxu0 0
      %8823 = vmatpush1.bf16.msra.mxu0 %v6259
      %8824 = vmatprep.subr.bf16.mxu0 0
      %8825 = vmatpush1.bf16.msra.mxu0 %v6258
      %8826 = vmatprep.subr.bf16.mxu0 0
      %8827 = vmatpush2.bf16.msra.mxu0 %v6273
      %8828 = vmatprep.subr.bf16.mxu0 0
      %8829 = vmatpush2.bf16.msra.mxu0 %v6272
      %8830 = vmatprep.subr.bf16.mxu0 0
      %8831 = vmatpush2.bf16.msra.mxu0 %v6271
      %8832 = vmatprep.subr.bf16.mxu0 0
      %8833 = vmatpush2.bf16.msra.mxu0 %v6270
      %8834 = vmatprep.subr.bf16.mxu0 0
      %8835 = vmatpush2.bf16.msra.mxu0 %v6269
      %8836 = vmatprep.subr.bf16.mxu0 0
      %8837 = vmatpush2.bf16.msra.mxu0 %v6268
      %8838 = vmatprep.subr.bf16.mxu0 0
      %8839 = vmatpush2.bf16.msra.mxu0 %v6267
      %8840 = vmatprep.subr.bf16.mxu0 0
      %8841 = vmatpush2.bf16.msra.mxu0 %v6266
      %8842 = vmatprep.mubr.bf16.mxu0 %v2295
      %8843 = vmatmul.mubr.bf16.gmra.mxu0 %v2293
      %v8844 = vpop.f32.mrf.mxu0
      %v8845 = vadd.f32 %v8805, %v8844
      %v8846 = vpop.f32.mrf.mxu0
      %v8847 = vpop.f32.mrf.mxu0
      %v8848 = vpop.f32.mrf.mxu0
      %8849 = vdwg.mxu0
      %8850 = vmatprep.subr.bf16.mxu0 0
      %8851 = vmatpush1.bf16.msra.mxu0 %v6281
      %8852 = vmatprep.subr.bf16.mxu0 0
      %8853 = vmatpush1.bf16.msra.mxu0 %v6280
      %8854 = vmatprep.subr.bf16.mxu0 0
      %8855 = vmatpush1.bf16.msra.mxu0 %v6279
      %8856 = vmatprep.subr.bf16.mxu0 0
      %8857 = vmatpush1.bf16.msra.mxu0 %v6278
      %8858 = vmatprep.subr.bf16.mxu0 0
      %8859 = vmatpush1.bf16.msra.mxu0 %v6277
      %8860 = vmatprep.subr.bf16.mxu0 0
      %8861 = vmatpush1.bf16.msra.mxu0 %v6276
      %8862 = vmatprep.subr.bf16.mxu0 0
      %8863 = vmatpush1.bf16.msra.mxu0 %v6275
      %8864 = vmatprep.subr.bf16.mxu0 0
      %8865 = vmatpush1.bf16.msra.mxu0 %v6274
      %8866 = vmatprep.subr.bf16.mxu0 0
      %8867 = vmatpush2.bf16.msra.mxu0 %v6289
      %8868 = vmatprep.subr.bf16.mxu0 0
      %8869 = vmatpush2.bf16.msra.mxu0 %v6288
      %8870 = vmatprep.subr.bf16.mxu0 0
      %8871 = vmatpush2.bf16.msra.mxu0 %v6287
      %8872 = vmatprep.subr.bf16.mxu0 0
      %8873 = vmatpush2.bf16.msra.mxu0 %v6286
      %8874 = vmatprep.subr.bf16.mxu0 0
      %8875 = vmatpush2.bf16.msra.mxu0 %v6285
      %8876 = vmatprep.subr.bf16.mxu0 0
      %8877 = vmatpush2.bf16.msra.mxu0 %v6284
      %8878 = vmatprep.subr.bf16.mxu0 0
      %8879 = vmatpush2.bf16.msra.mxu0 %v6283
      %8880 = vmatprep.subr.bf16.mxu0 0
      %8881 = vmatpush2.bf16.msra.mxu0 %v6282
      %8882 = vmatprep.mubr.bf16.mxu0 %v2292
      %8883 = vmatmul.mubr.bf16.gmra.mxu0 %v2278
      %v8884 = vpop.f32.mrf.mxu0
      %v8885 = vadd.f32 %v8845, %v8884
      %v8886 = vpop.f32.mrf.mxu0
      %v8887 = vpop.f32.mrf.mxu0
      %v8888 = vpop.f32.mrf.mxu0
      %8889 = vdwg.mxu0
      %8890 = vmatprep.subr.bf16.mxu0 0
      %8891 = vmatpush1.bf16.msra.mxu0 %v6297
      %8892 = vmatprep.subr.bf16.mxu0 0
      %8893 = vmatpush1.bf16.msra.mxu0 %v6296
      %8894 = vmatprep.subr.bf16.mxu0 0
      %8895 = vmatpush1.bf16.msra.mxu0 %v6295
      %8896 = vmatprep.subr.bf16.mxu0 0
      %8897 = vmatpush1.bf16.msra.mxu0 %v6294
      %8898 = vmatprep.subr.bf16.mxu0 0
      %8899 = vmatpush1.bf16.msra.mxu0 %v6293
      %8900 = vmatprep.subr.bf16.mxu0 0
      %8901 = vmatpush1.bf16.msra.mxu0 %v6292
      %8902 = vmatprep.subr.bf16.mxu0 0
      %8903 = vmatpush1.bf16.msra.mxu0 %v6291
      %8904 = vmatprep.subr.bf16.mxu0 0
      %8905 = vmatpush1.bf16.msra.mxu0 %v6290
      %8906 = vmatprep.subr.bf16.mxu0 0
      %8907 = vmatpush2.bf16.msra.mxu0 %v6305
      %8908 = vmatprep.subr.bf16.mxu0 0
      %8909 = vmatpush2.bf16.msra.mxu0 %v6304
      %8910 = vmatprep.subr.bf16.mxu0 0
      %8911 = vmatpush2.bf16.msra.mxu0 %v6303
      %8912 = vmatprep.subr.bf16.mxu0 0
      %8913 = vmatpush2.bf16.msra.mxu0 %v6302
      %8914 = vmatprep.subr.bf16.mxu0 0
      %8915 = vmatpush2.bf16.msra.mxu0 %v6301
      %8916 = vmatprep.subr.bf16.mxu0 0
      %8917 = vmatpush2.bf16.msra.mxu0 %v6300
      %8918 = vmatprep.subr.bf16.mxu0 0
      %8919 = vmatpush2.bf16.msra.mxu0 %v6299
      %8920 = vmatprep.subr.bf16.mxu0 0
      %8921 = vmatpush2.bf16.msra.mxu0 %v6298
      %8922 = vmatprep.mubr.bf16.mxu0 %v2296
      %8923 = vmatmul.mubr.bf16.gmra.mxu0 %v2294
      %v8924 = vpop.f32.mrf.mxu0
      %v8925 = vadd.f32 %v8885, %v8924
      %v8926 = vpop.f32.mrf.mxu0
      %v8927 = vpop.f32.mrf.mxu0
      %v8928 = vpop.f32.mrf.mxu0
      %8929 = vdwg.mxu0
      %8930 = vmatprep.subr.bf16.mxu0 0
      %8931 = vmatpush1.bf16.msra.mxu0 %v6313
      %8932 = vmatprep.subr.bf16.mxu0 0
      %8933 = vmatpush1.bf16.msra.mxu0 %v6312
      %8934 = vmatprep.subr.bf16.mxu0 0
      %8935 = vmatpush1.bf16.msra.mxu0 %v6311
      %8936 = vmatprep.subr.bf16.mxu0 0
      %8937 = vmatpush1.bf16.msra.mxu0 %v6310
      %8938 = vmatprep.subr.bf16.mxu0 0
      %8939 = vmatpush1.bf16.msra.mxu0 %v6309
      %8940 = vmatprep.subr.bf16.mxu0 0
      %8941 = vmatpush1.bf16.msra.mxu0 %v6308
      %8942 = vmatprep.subr.bf16.mxu0 0
      %8943 = vmatpush1.bf16.msra.mxu0 %v6307
      %8944 = vmatprep.subr.bf16.mxu0 0
      %8945 = vmatpush1.bf16.msra.mxu0 %v6306
      %8946 = vmatprep.subr.bf16.mxu0 0
      %8947 = vmatpush2.bf16.msra.mxu0 %v6321
      %8948 = vmatprep.subr.bf16.mxu0 0
      %8949 = vmatpush2.bf16.msra.mxu0 %v6320
      %8950 = vmatprep.subr.bf16.mxu0 0
      %8951 = vmatpush2.bf16.msra.mxu0 %v6319
      %8952 = vmatprep.subr.bf16.mxu0 0
      %8953 = vmatpush2.bf16.msra.mxu0 %v6318
      %8954 = vmatprep.subr.bf16.mxu0 0
      %8955 = vmatpush2.bf16.msra.mxu0 %v6317
      %8956 = vmatprep.subr.bf16.mxu0 0
      %8957 = vmatpush2.bf16.msra.mxu0 %v6316
      %8958 = vmatprep.subr.bf16.mxu0 0
      %8959 = vmatpush2.bf16.msra.mxu0 %v6315
      %8960 = vmatprep.subr.bf16.mxu0 0
      %8961 = vmatpush2.bf16.msra.mxu0 %v6314
      %8962 = vmatprep.mubr.bf16.mxu0 %v2334
      %8963 = vmatmul.mubr.bf16.gmra.mxu0 %v2320
      %v8964 = vpop.f32.mrf.mxu0
      %v8965 = vadd.f32 %v8925, %v8964
      %v8966 = vpop.f32.mrf.mxu0
      %v8967 = vpop.f32.mrf.mxu0
      %v8968 = vpop.f32.mrf.mxu0
      %8969 = vdwg.mxu0
      %8970 = vmatprep.subr.bf16.mxu0 0
      %8971 = vmatpush1.bf16.msra.mxu0 %v6329
      %8972 = vmatprep.subr.bf16.mxu0 0
      %8973 = vmatpush1.bf16.msra.mxu0 %v6328
      %8974 = vmatprep.subr.bf16.mxu0 0
      %8975 = vmatpush1.bf16.msra.mxu0 %v6327
      %8976 = vmatprep.subr.bf16.mxu0 0
      %8977 = vmatpush1.bf16.msra.mxu0 %v6326
      %8978 = vmatprep.subr.bf16.mxu0 0
      %8979 = vmatpush1.bf16.msra.mxu0 %v6325
      %8980 = vmatprep.subr.bf16.mxu0 0
      %8981 = vmatpush1.bf16.msra.mxu0 %v6324
      %8982 = vmatprep.subr.bf16.mxu0 0
      %8983 = vmatpush1.bf16.msra.mxu0 %v6323
      %8984 = vmatprep.subr.bf16.mxu0 0
      %8985 = vmatpush1.bf16.msra.mxu0 %v6322
      %8986 = vmatprep.subr.bf16.mxu0 0
      %8987 = vmatpush2.bf16.msra.mxu0 %v6337
      %8988 = vmatprep.subr.bf16.mxu0 0
      %8989 = vmatpush2.bf16.msra.mxu0 %v6336
      %8990 = vmatprep.subr.bf16.mxu0 0
      %8991 = vmatpush2.bf16.msra.mxu0 %v6335
      %8992 = vmatprep.subr.bf16.mxu0 0
      %8993 = vmatpush2.bf16.msra.mxu0 %v6334
      %8994 = vmatprep.subr.bf16.mxu0 0
      %8995 = vmatpush2.bf16.msra.mxu0 %v6333
      %8996 = vmatprep.subr.bf16.mxu0 0
      %8997 = vmatpush2.bf16.msra.mxu0 %v6332
      %8998 = vmatprep.subr.bf16.mxu0 0
      %8999 = vmatpush2.bf16.msra.mxu0 %v6331
      %9000 = vmatprep.subr.bf16.mxu0 0
      %9001 = vmatpush2.bf16.msra.mxu0 %v6330
      %9002 = vmatprep.mubr.bf16.mxu0 %v2344
      %9003 = vmatmul.mubr.bf16.gmra.mxu0 %v2342
      %v9004 = vpop.f32.mrf.mxu0
      %v9005 = vadd.f32 %v8965, %v9004
      %v9006 = vpop.f32.mrf.mxu0
      %v9007 = vpop.f32.mrf.mxu0
      %v9008 = vpop.f32.mrf.mxu0
      %9009 = vdwg.mxu0
      %9010 = vmatprep.subr.bf16.mxu0 0
      %9011 = vmatpush1.bf16.msra.mxu0 %v6345
      %9012 = vmatprep.subr.bf16.mxu0 0
      %9013 = vmatpush1.bf16.msra.mxu0 %v6344
      %9014 = vmatprep.subr.bf16.mxu0 0
      %9015 = vmatpush1.bf16.msra.mxu0 %v6343
      %9016 = vmatprep.subr.bf16.mxu0 0
      %9017 = vmatpush1.bf16.msra.mxu0 %v6342
      %9018 = vmatprep.subr.bf16.mxu0 0
      %9019 = vmatpush1.bf16.msra.mxu0 %v6341
      %9020 = vmatprep.subr.bf16.mxu0 0
      %9021 = vmatpush1.bf16.msra.mxu0 %v6340
      %9022 = vmatprep.subr.bf16.mxu0 0
      %9023 = vmatpush1.bf16.msra.mxu0 %v6339
      %9024 = vmatprep.subr.bf16.mxu0 0
      %9025 = vmatpush1.bf16.msra.mxu0 %v6338
      %9026 = vmatprep.subr.bf16.mxu0 0
      %9027 = vmatpush2.bf16.msra.mxu0 %v6353
      %9028 = vmatprep.subr.bf16.mxu0 0
      %9029 = vmatpush2.bf16.msra.mxu0 %v6352
      %9030 = vmatprep.subr.bf16.mxu0 0
      %9031 = vmatpush2.bf16.msra.mxu0 %v6351
      %9032 = vmatprep.subr.bf16.mxu0 0
      %9033 = vmatpush2.bf16.msra.mxu0 %v6350
      %9034 = vmatprep.subr.bf16.mxu0 0
      %9035 = vmatpush2.bf16.msra.mxu0 %v6349
      %9036 = vmatprep.subr.bf16.mxu0 0
      %9037 = vmatpush2.bf16.msra.mxu0 %v6348
      %9038 = vmatprep.subr.bf16.mxu0 0
      %9039 = vmatpush2.bf16.msra.mxu0 %v6347
      %9040 = vmatprep.subr.bf16.mxu0 0
      %9041 = vmatpush2.bf16.msra.mxu0 %v6346
      %9042 = vmatprep.mubr.bf16.mxu0 %v2341
      %9043 = vmatmul.mubr.bf16.gmra.mxu0 %v2327
      %v9044 = vpop.f32.mrf.mxu0
      %v9045 = vadd.f32 %v9005, %v9044
      %v9046 = vpop.f32.mrf.mxu0
      %v9047 = vpop.f32.mrf.mxu0
      %v9048 = vpop.f32.mrf.mxu0
      %9049 = vdwg.mxu0
      %9050 = vmatprep.subr.bf16.mxu0 0
      %9051 = vmatpush1.bf16.msra.mxu0 %v6361
      %9052 = vmatprep.subr.bf16.mxu0 0
      %9053 = vmatpush1.bf16.msra.mxu0 %v6360
      %9054 = vmatprep.subr.bf16.mxu0 0
      %9055 = vmatpush1.bf16.msra.mxu0 %v6359
      %9056 = vmatprep.subr.bf16.mxu0 0
      %9057 = vmatpush1.bf16.msra.mxu0 %v6358
      %9058 = vmatprep.subr.bf16.mxu0 0
      %9059 = vmatpush1.bf16.msra.mxu0 %v6357
      %9060 = vmatprep.subr.bf16.mxu0 0
      %9061 = vmatpush1.bf16.msra.mxu0 %v6356
      %9062 = vmatprep.subr.bf16.mxu0 0
      %9063 = vmatpush1.bf16.msra.mxu0 %v6355
      %9064 = vmatprep.subr.bf16.mxu0 0
      %9065 = vmatpush1.bf16.msra.mxu0 %v6354
      %9066 = vmatprep.subr.bf16.mxu0 0
      %9067 = vmatpush2.bf16.msra.mxu0 %v6369
      %9068 = vmatprep.subr.bf16.mxu0 0
      %9069 = vmatpush2.bf16.msra.mxu0 %v6368
      %9070 = vmatprep.subr.bf16.mxu0 0
      %9071 = vmatpush2.bf16.msra.mxu0 %v6367
      %9072 = vmatprep.subr.bf16.mxu0 0
      %9073 = vmatpush2.bf16.msra.mxu0 %v6366
      %9074 = vmatprep.subr.bf16.mxu0 0
      %9075 = vmatpush2.bf16.msra.mxu0 %v6365
      %9076 = vmatprep.subr.bf16.mxu0 0
      %9077 = vmatpush2.bf16.msra.mxu0 %v6364
      %9078 = vmatprep.subr.bf16.mxu0 0
      %9079 = vmatpush2.bf16.msra.mxu0 %v6363
      %9080 = vmatprep.subr.bf16.mxu0 0
      %9081 = vmatpush2.bf16.msra.mxu0 %v6362
      %9082 = vmatprep.mubr.bf16.mxu0 %v2345
      %9083 = vmatmul.mubr.bf16.gmra.mxu0 %v2343
      %v9084 = vpop.f32.mrf.mxu0
      %v9085 = vadd.f32 %v9045, %v9084
      %v9086 = vpop.f32.mrf.mxu0
      %v9087 = vpop.f32.mrf.mxu0
      %v9088 = vpop.f32.mrf.mxu0
      %9089 = vdwg.mxu0
      %9090 = vmatprep.subr.bf16.mxu0 0
      %9091 = vmatpush1.bf16.msra.mxu0 %v6377
      %9092 = vmatprep.subr.bf16.mxu0 0
      %9093 = vmatpush1.bf16.msra.mxu0 %v6376
      %9094 = vmatprep.subr.bf16.mxu0 0
      %9095 = vmatpush1.bf16.msra.mxu0 %v6375
      %9096 = vmatprep.subr.bf16.mxu0 0
      %9097 = vmatpush1.bf16.msra.mxu0 %v6374
      %9098 = vmatprep.subr.bf16.mxu0 0
      %9099 = vmatpush1.bf16.msra.mxu0 %v6373
      %9100 = vmatprep.subr.bf16.mxu0 0
      %9101 = vmatpush1.bf16.msra.mxu0 %v6372
      %9102 = vmatprep.subr.bf16.mxu0 0
      %9103 = vmatpush1.bf16.msra.mxu0 %v6371
      %9104 = vmatprep.subr.bf16.mxu0 0
      %9105 = vmatpush1.bf16.msra.mxu0 %v6370
      %9106 = vmatprep.subr.bf16.mxu0 0
      %9107 = vmatpush2.bf16.msra.mxu0 %v6385
      %9108 = vmatprep.subr.bf16.mxu0 0
      %9109 = vmatpush2.bf16.msra.mxu0 %v6384
      %9110 = vmatprep.subr.bf16.mxu0 0
      %9111 = vmatpush2.bf16.msra.mxu0 %v6383
      %9112 = vmatprep.subr.bf16.mxu0 0
      %9113 = vmatpush2.bf16.msra.mxu0 %v6382
      %9114 = vmatprep.subr.bf16.mxu0 0
      %9115 = vmatpush2.bf16.msra.mxu0 %v6381
      %9116 = vmatprep.subr.bf16.mxu0 0
      %9117 = vmatpush2.bf16.msra.mxu0 %v6380
      %9118 = vmatprep.subr.bf16.mxu0 0
      %9119 = vmatpush2.bf16.msra.mxu0 %v6379
      %9120 = vmatprep.subr.bf16.mxu0 0
      %9121 = vmatpush2.bf16.msra.mxu0 %v6378
      %9122 = vmatprep.mubr.bf16.mxu0 %v2367
      %9123 = vmatmul.mubr.bf16.gmra.mxu0 %v2360
      %v9124 = vpop.f32.mrf.mxu0
      %v9125 = vadd.f32 %v9085, %v9124
      %v9126 = vpop.f32.mrf.mxu0
      %v9127 = vpop.f32.mrf.mxu0
      %v9128 = vpop.f32.mrf.mxu0
      %9129 = vdwg.mxu0
      %9130 = vst [vmem:[%s162] sm:$0x3] %v9125
      %p9131 = scmp.lt.s32.totalorder %s13, 4
      %s9132 = scalar_select %p9131, %s13, 4
      %s9133 = smul.addr %s9132, 2
      %s9134 = scalar_lea.vmem %s2, %s9133
      // Predicated region
      $region29: #{image_embedding_head.1} parent=27 // pred_check
        %p9135 = pneg %p83
      $region30: #{image_embedding_head.1} parent=27 // pred_check_branch
        %9137 = sbr.rel (%p9135) target = $region32
      $region31: #{image_embedding_head.1} parent=27 // pred_region
        _
      $region32: #{image_embedding_head.1} parent=27 // pred_fallthru
        _
    $region28: #{image_embedding_head.1} parent=5 // pred_fallthru
      _
    %p9138 = scmp.le.s32.totalorder 2, %s8
    // Predicated region
    $region33: #{image_embedding_head.1} parent=5 // pred_check
      %p9139 = pneg %p9138
    $region34: #{image_embedding_head.1} parent=5 // pred_check_branch
      %9141 = sbr.rel (%p9139) target = $region36
    $region35: #{image_embedding_head.1} parent=5 // pred_region
      %s9142 = ssub.s32 %s8, 2
      // Predicated region
      $region37: #{image_embedding_head.1} parent=35 // pred_check
        %p9143 = pneg %p89
      $region38: #{image_embedding_head.1} parent=35 // pred_check_branch
        %9145 = sbr.rel (%p9143) target = $region40
      $region39: #{image_embedding_head.1} parent=35 // pred_region
        %p9146 = scmp.lt.s32.totalorder %s14, 4
        %s9147 = scalar_select %p9146, %s14, 4
        %s9148 = smul.addr %s9147, 2
        %s9149 = scalar_lea.vmem %s2, %s9148
      $region40: #{image_embedding_head.1} parent=35 // pred_fallthru
        _
    $region36: #{image_embedding_head.1} parent=5 // pred_fallthru
      _
  $region6: #{image_embedding_head.1} parent=0 // loop_footer
    %s12 = sadd.s32 1, %s8
  $region7: #{image_embedding_head.1} parent=0 // loop_footer_branch
    %7 = sbr.rel target = $region3
  $region8: #{image_embedding_head.1} parent=0 // loop_exit
    _

</llo_original>
